<compile_context>
chip_gen: v6e
topology: v6e:2x2x1
jax: 0.10.0
libtpu: 0.0.40
codegen_flags: <defaults>
</compile_context>

<pallas_src>
import jax
import jax.numpy as jnp
from jax.experimental import pallas as pl
from jax.experimental.pallas import tpu as pltpu


# --------------------------------------------------------------------------
# Fused Pallas kernel: Linear+ReLU -> Linear+ReLU -> Linear(head), eval dropout
# --------------------------------------------------------------------------

def _disc_fused_kernel(x_ref, w1_ref, b1_ref, w2_ref, b2_ref, w3t_ref, b3_ref,
                       o_ref, h1_ref):
    j = pl.program_id(1)          # layer-2 weight-chunk index (reduction axis)

    # ---- Layer 1 (+ReLU): computed once per batch tile, kept in VMEM scratch.
    @pl.when(j == 0)
    def _():
        x = x_ref[...].astype(jnp.bfloat16)               # in-kernel cast (VPU)
        h1 = jnp.dot(x, w1_ref[...], preferred_element_type=jnp.float32)
        h1 = jnp.maximum(h1 + b1_ref[...], 0.0)
        h1_ref[...] = h1.astype(h1_ref.dtype)             # bf16 intermediate
        # Initialize the resident output block with the head bias.
        o_ref[...] = jnp.zeros(o_ref.shape, o_ref.dtype) + b3_ref[...]
    # (Dropout = identity: eval mode.)

    # ---- Layer 2 (+ReLU) on this chunk of output columns.
    h2 = jnp.dot(h1_ref[...], w2_ref[...], preferred_element_type=jnp.float32)
    h2 = jnp.maximum(h2 + b2_ref[...], 0.0)
    # (Dropout = identity: eval mode.)

    # ---- Layer 3 head folded in: partial dot against this chunk's slice of
    #      w3 (stored transposed, lane-dense) as multiply + cross-lane reduce.
    w3t = w3t_ref[...].astype(jnp.float32)                # (n_out, tn2)
    n_out = w3t_ref.shape[0]
    cols = [jnp.sum(h2 * w3t[o:o + 1, :], axis=-1, keepdims=True)
            for o in range(n_out)]
    partial = cols[0] if n_out == 1 else jnp.concatenate(cols, axis=-1)
    o_ref[...] += partial


# --------------------------------------------------------------------------
# Wrapper
# --------------------------------------------------------------------------

def discriminator_forward(params, x):
    """x: (M, input_dims) f32 -> (M, output_dims) f32 logits (eval mode)."""
    w1, b1 = params['w1'], params['b1']
    w2, b2 = params['w2'], params['b2']
    w3t, b3 = params['w3t'], params['b3']

    M, K = x.shape
    H1 = w1.shape[1]              # hidden_dims (3072)
    H2 = w2.shape[1]              # 2048
    n_out = w3t.shape[0]          # output_dims (1)

    # Batch tile: full batch if small (rows are independent), else 256-row tiles.
    tm = M if M <= 256 else 256
    # Layer-2 weight chunk width: largest clean divisor (>=2 steps for 2048).
    tn2 = next(t for t in (1024, 512, 256, 128, H2) if H2 % t == 0)

    grid = (pl.cdiv(M, tm), H2 // tn2)

    return pl.pallas_call(
        _disc_fused_kernel,
        out_shape=jax.ShapeDtypeStruct((M, n_out), jnp.float32),
        grid=grid,
        in_specs=[
            pl.BlockSpec((tm, K), lambda i, j: (i, 0)),       # x (per batch tile)
            pl.BlockSpec((K, H1), lambda i, j: (0, 0)),       # w1 (VMEM resident)
            pl.BlockSpec((1, H1), lambda i, j: (0, 0)),       # b1
            pl.BlockSpec((H1, tn2), lambda i, j: (0, j)),     # w2 (streamed chunks)
            pl.BlockSpec((1, tn2), lambda i, j: (0, j)),      # b2
            pl.BlockSpec((n_out, tn2), lambda i, j: (0, j)),  # w3 (transposed, lane-dense)
            pl.BlockSpec((1, n_out), lambda i, j: (0, 0)),    # b3
        ],
        out_specs=pl.BlockSpec((tm, n_out), lambda i, j: (i, 0)),
        scratch_shapes=[pltpu.VMEM((tm, H1), jnp.bfloat16)],  # layer-1 activation
        compiler_params=pltpu.CompilerParams(
            dimension_semantics=("parallel", "arbitrary"),
            vmem_limit_bytes=48 * 1024 * 1024),
    )(x, w1, b1, w2, b2, w3t, b3)


# --------------------------------------------------------------------------
# Deterministic synthetic parameters (PyTorch nn.Linear-style init).
# Weights stored bf16 (MXU operand dtype); biases f32; w3 stored transposed.
# --------------------------------------------------------------------------

def _linear_params(key, fan_in, fan_out):
    kw, kb = jax.random.split(key)
    bound = 1.0 / (fan_in ** 0.5)
    w = jax.random.uniform(kw, (fan_in, fan_out), jnp.float32, -bound, bound)
    b = jax.random.uniform(kb, (fan_out,), jnp.float32, -bound, bound)
    return w, b


def init_params(key, input_dims, hidden_dims=3072, output_dims=1):
    k1, k2, k3 = jax.random.split(key, 3)
    w1, b1 = _linear_params(k1, input_dims, hidden_dims)
    w2, b2 = _linear_params(k2, hidden_dims, 2048)
    w3, b3 = _linear_params(k3, 2048, output_dims)
    return {
        'w1': w1.astype(jnp.bfloat16),
        'b1': b1.reshape(1, hidden_dims),
        'w2': w2.astype(jnp.bfloat16),
        'b2': b2.reshape(1, 2048),
        'w3t': w3.T.astype(jnp.bfloat16),      # (output_dims, 2048), lane-dense
        'b3': b3.reshape(1, output_dims),
    }


# --------------------------------------------------------------------------

if __name__ == "__main__":
    key = jax.random.PRNGKey(0)
    pkey, xkey = jax.random.split(key)

    batch = 4
    input_dims = 128          # small input width; hidden widths (3072/2048/1)
                              # follow the module defaults.
    params = init_params(pkey, input_dims=input_dims, hidden_dims=3072,
                         output_dims=1)
    x = jax.random.normal(xkey, (batch, input_dims), jnp.float32)

    fwd = jax.jit(lambda inp: discriminator_forward(params, inp))
    out = jax.block_until_ready(fwd(x))

    assert out.shape == (batch, 1), out.shape
    assert bool(jnp.all(jnp.isfinite(out)))

    # Plain-JAX reference (same bf16 weight path, eval-mode dropout).
    ref_h1 = jax.nn.relu(
        jnp.dot(x.astype(jnp.bfloat16), params['w1'],
                preferred_element_type=jnp.float32) + params['b1'])
    ref_h2 = jax.nn.relu(
        jnp.dot(ref_h1.astype(jnp.bfloat16), params['w2'],
                preferred_element_type=jnp.float32) + params['b2'])
    ref = ref_h2 @ params['w3t'].astype(jnp.float32).T + params['b3']
    assert bool(jnp.allclose(out, ref, rtol=1e-2, atol=1e-2))

    print("KERNEL_OK")
</pallas_src>

<mosaic_0001>
module attributes {stable_mosaic.version = 11 : i64} {
  func.func @_disc_fused_kernel(%arg0: i32, %arg1: i32, %arg2: memref<4x128xf32, #tpu.memory_space<vmem>>, %arg3: memref<128x3072xbf16, #tpu.memory_space<vmem>>, %arg4: memref<1x3072xf32, #tpu.memory_space<vmem>>, %arg5: memref<3072x1024xbf16, #tpu.memory_space<vmem>>, %arg6: memref<1x1024xf32, #tpu.memory_space<vmem>>, %arg7: memref<1x1024xbf16, #tpu.memory_space<vmem>>, %arg8: memref<1x1xf32, #tpu.memory_space<vmem>>, %arg9: memref<4x1xf32, #tpu.memory_space<vmem>>, %arg10: memref<4x3072xbf16, #tpu.memory_space<vmem>>) attributes {dimension_semantics = [#tpu.dimension_semantics<parallel>, #tpu.dimension_semantics<arbitrary>], iteration_bounds = array<i64: 1, 2>, scalar_prefetch = 0 : i64, scratch_operands = 1 : i64, tpu.core_type = #tpu.core_type<tc>, window_params = [{transform_indices = @transform_0, window_bounds = array<i64: 4, 128>}, {pipeline_mode = #tpu.pipeline_mode<synchronous>, transform_indices = @transform_1, window_bounds = array<i64: 128, 3072>}, {pipeline_mode = #tpu.pipeline_mode<synchronous>, transform_indices = @transform_2, window_bounds = array<i64: 1, 3072>}, {transform_indices = @transform_3, window_bounds = array<i64: 3072, 1024>}, {transform_indices = @transform_4, window_bounds = array<i64: 1, 1024>}, {transform_indices = @transform_5, window_bounds = array<i64: 1, 1024>}, {pipeline_mode = #tpu.pipeline_mode<synchronous>, transform_indices = @transform_6, window_bounds = array<i64: 1, 1>}, {transform_indices = @transform_7, window_bounds = array<i64: 4, 1>}]} {
    %c0_i32 = arith.constant 0 : i32
    %0 = arith.cmpi eq, %arg1, %c0_i32 : i32
    %1 = arith.extui %0 : i1 to i32
    %c0_i32_0 = arith.constant 0 : i32
    %2 = arith.cmpi ne, %1, %c0_i32_0 : i32
    scf.if %2 {
      %c0_14 = arith.constant 0 : index
      %c0_15 = arith.constant 0 : index
      %20 = vector.load %arg2[%c0_14, %c0_15] : memref<4x128xf32, #tpu.memory_space<vmem>>, vector<4x128xf32>
      %21 = arith.truncf %20 : vector<4x128xf32> to vector<4x128xbf16>
      %c0_16 = arith.constant 0 : index
      %c0_17 = arith.constant 0 : index
      %22 = vector.load %arg3[%c0_16, %c0_17] : memref<128x3072xbf16, #tpu.memory_space<vmem>>, vector<128x3072xbf16>
      %cst_18 = arith.constant dense<0.000000e+00> : vector<4x3072xf32>
      %23 = tpu.matmul %21, %22, %cst_18 {dimension_numbers = #tpu.dot_dimension_numbers<[1], [0], [0], [1], [0, 0, 1, 1], [], []>} : vector<4x128xbf16>, vector<128x3072xbf16>, vector<4x3072xf32> -> vector<4x3072xf32>
      %c0_19 = arith.constant 0 : index
      %c0_20 = arith.constant 0 : index
      %24 = vector.load %arg4[%c0_19, %c0_20] : memref<1x3072xf32, #tpu.memory_space<vmem>>, vector<1x3072xf32>
      %25 = vector.broadcast %24 : vector<1x3072xf32> to vector<4x3072xf32>
      %26 = arith.addf %23, %25 : vector<4x3072xf32>
      %cst_21 = arith.constant 0.000000e+00 : f32
      %27 = vector.broadcast %cst_21 : f32 to vector<4x3072xf32>
      %28 = arith.maximumf %26, %27 : vector<4x3072xf32>
      %29 = arith.truncf %28 : vector<4x3072xf32> to vector<4x3072xbf16>
      %c0_22 = arith.constant 0 : index
      %c0_23 = arith.constant 0 : index
      %30 = vector.load %arg10[%c0_22, %c0_23] : memref<4x3072xbf16, #tpu.memory_space<vmem>>, vector<4x3072xbf16>
      tpu.vector_store %arg10[%c0_22, %c0_23], %29 {strides = array<i32>} : memref<4x3072xbf16, #tpu.memory_space<vmem>>, vector<4x3072xbf16>,
      %cst_24 = arith.constant 0.000000e+00 : f32
      %31 = vector.broadcast %cst_24 : f32 to vector<4x1xf32>
      %c0_25 = arith.constant 0 : index
      %c0_26 = arith.constant 0 : index
      %32 = vector.load %arg8[%c0_25, %c0_26] : memref<1x1xf32, #tpu.memory_space<vmem>>, vector<1x1xf32>
      %33 = vector.broadcast %32 : vector<1x1xf32> to vector<4x1xf32>
      %34 = arith.addf %31, %33 : vector<4x1xf32>
      %c0_27 = arith.constant 0 : index
      %c0_28 = arith.constant 0 : index
      %35 = vector.load %arg9[%c0_27, %c0_28] : memref<4x1xf32, #tpu.memory_space<vmem>>, vector<4x1xf32>
      tpu.vector_store %arg9[%c0_27, %c0_28], %34 {strides = array<i32>} : memref<4x1xf32, #tpu.memory_space<vmem>>, vector<4x1xf32>,
    } else {
    }
    %c0 = arith.constant 0 : index
    %c0_1 = arith.constant 0 : index
    %3 = vector.load %arg10[%c0, %c0_1] : memref<4x3072xbf16, #tpu.memory_space<vmem>>, vector<4x3072xbf16>
    %c0_2 = arith.constant 0 : index
    %c0_3 = arith.constant 0 : index
    %4 = vector.load %arg5[%c0_2, %c0_3] : memref<3072x1024xbf16, #tpu.memory_space<vmem>>, vector<3072x1024xbf16>
    %cst = arith.constant dense<0.000000e+00> : vector<4x1024xf32>
    %5 = tpu.matmul %3, %4, %cst {dimension_numbers = #tpu.dot_dimension_numbers<[1], [0], [0], [1], [0, 0, 1, 1], [], []>} : vector<4x3072xbf16>, vector<3072x1024xbf16>, vector<4x1024xf32> -> vector<4x1024xf32>
    %c0_4 = arith.constant 0 : index
    %c0_5 = arith.constant 0 : index
    %6 = vector.load %arg6[%c0_4, %c0_5] : memref<1x1024xf32, #tpu.memory_space<vmem>>, vector<1x1024xf32>
    %7 = vector.broadcast %6 : vector<1x1024xf32> to vector<4x1024xf32>
    %8 = arith.addf %5, %7 : vector<4x1024xf32>
    %cst_6 = arith.constant 0.000000e+00 : f32
    %9 = vector.broadcast %cst_6 : f32 to vector<4x1024xf32>
    %10 = arith.maximumf %8, %9 : vector<4x1024xf32>
    %c0_7 = arith.constant 0 : index
    %c0_8 = arith.constant 0 : index
    %11 = vector.load %arg7[%c0_7, %c0_8] : memref<1x1024xbf16, #tpu.memory_space<vmem>>, vector<1x1024xbf16>
    %12 = arith.extf %11 : vector<1x1024xbf16> to vector<1x1024xf32>
    %13 = vector.broadcast %12 : vector<1x1024xf32> to vector<4x1024xf32>
    %14 = arith.mulf %10, %13 : vector<4x1024xf32>
    %cst_9 = arith.constant dense<0.000000e+00> : vector<4xf32>
    %15 = vector.multi_reduction <add>, %14, %cst_9 [1] : vector<4x1024xf32> to vector<4xf32>
    %16 = vector.shape_cast %15 : vector<4xf32> to vector<4x1xf32>
    %c0_10 = arith.constant 0 : index
    %c0_11 = arith.constant 0 : index
    %17 = vector.load %arg9[%c0_10, %c0_11] : memref<4x1xf32, #tpu.memory_space<vmem>>, vector<4x1xf32>
    %18 = arith.addf %17, %16 : vector<4x1xf32>
    %c0_12 = arith.constant 0 : index
    %c0_13 = arith.constant 0 : index
    %19 = vector.load %arg9[%c0_12, %c0_13] : memref<4x1xf32, #tpu.memory_space<vmem>>, vector<4x1xf32>
    tpu.vector_store %arg9[%c0_12, %c0_13], %18 {strides = array<i32>} : memref<4x1xf32, #tpu.memory_space<vmem>>, vector<4x1xf32>,
    return
  }
  func.func @transform_0(%arg0: i32, %arg1: i32) -> (i32, i32) {
    %c0_i32 = arith.constant 0 : i32
    %c0_i32_0 = arith.constant 0 : i32
    return %arg0, %c0_i32 : i32, i32
  }
  func.func @transform_1(%arg0: i32, %arg1: i32) -> (i32, i32) {
    %c0_i32 = arith.constant 0 : i32
    %c0_i32_0 = arith.constant 0 : i32
    %c0_i32_1 = arith.constant 0 : i32
    return %c0_i32, %c0_i32_0 : i32, i32
  }
  func.func @transform_2(%arg0: i32, %arg1: i32) -> (i32, i32) {
    %c0_i32 = arith.constant 0 : i32
    %c0_i32_0 = arith.constant 0 : i32
    %c0_i32_1 = arith.constant 0 : i32
    return %c0_i32, %c0_i32_0 : i32, i32
  }
  func.func @transform_3(%arg0: i32, %arg1: i32) -> (i32, i32) {
    %c0_i32 = arith.constant 0 : i32
    %c0_i32_0 = arith.constant 0 : i32
    return %c0_i32, %arg1 : i32, i32
  }
  func.func @transform_4(%arg0: i32, %arg1: i32) -> (i32, i32) {
    %c0_i32 = arith.constant 0 : i32
    %c0_i32_0 = arith.constant 0 : i32
    return %c0_i32, %arg1 : i32, i32
  }
  func.func @transform_5(%arg0: i32, %arg1: i32) -> (i32, i32) {
    %c0_i32 = arith.constant 0 : i32
    %c0_i32_0 = arith.constant 0 : i32
    return %c0_i32, %arg1 : i32, i32
  }
  func.func @transform_6(%arg0: i32, %arg1: i32) -> (i32, i32) {
    %c0_i32 = arith.constant 0 : i32
    %c0_i32_0 = arith.constant 0 : i32
    %c0_i32_1 = arith.constant 0 : i32
    return %c0_i32, %c0_i32_0 : i32, i32
  }
  func.func @transform_7(%arg0: i32, %arg1: i32) -> (i32, i32) {
    %c0_i32 = arith.constant 0 : i32
    %c0_i32_0 = arith.constant 0 : i32
    return %arg0, %c0_i32 : i32, i32
  }
}

</mosaic_0001>

<llo_original>
// kernel: _lambda_.1
$region0: #{_lambda_.1}
  #allocation0 [shape = 'u32[]', space=smem, size = 0x4, offset = 0x4, fixed_abs, tag = 'smem constant byte address 0x4 - core index']
  #allocation1 [shape = 'u32[144,128]{1,0:T(1,128)}', space=vmem, size = 0x12000, scoped, tag = 'internal scratch']
  #allocation2 [shape = 'bf16[4,3072]{1,0:T(4,128)(2,1)}', space=vmem, size = 0x6000, scoped, tag = 'scratch operand']
  #allocation3 [shape = 'f32[1,1]{1,0:T(1,128)S(1)}', space=vmem, size = 0x200, scoped, tag = 'scoped memory for _lambda_.1']
  %s0 = inlined_call_operand.hbm [shape: f32[4,128], index: 0, kind: input, shape index: {}]
  %s1 = inlined_call_operand.hbm [shape: bf16[128,3072], index: 1, kind: input, shape index: {}]
  %s2 = inlined_call_operand.hbm [shape: f32[1,3072], index: 2, kind: input, shape index: {}]
  %s3 = inlined_call_operand.hbm [shape: bf16[3072,2048], index: 3, kind: input, shape index: {}]
  %s4 = inlined_call_operand.hbm [shape: f32[1,2048], index: 4, kind: input, shape index: {}]
  %s5 = inlined_call_operand.hbm [shape: bf16[1,2048], index: 5, kind: input, shape index: {}]
  %s6 = inlined_call_operand.<no memory space> [shape: f32[1,1], index: 6, kind: input, shape index: {}]
  %s7 = inlined_call_operand.vmem [shape: f32[4,1], index: 7, kind: output, shape index: {}]
  %s8 = sld [smem:[#allocation0]]
  $region89: #{_lambda_.1} parent=0
    _
  %s10 = ssub.s32 1, %s8
  %s11 = scalar_select 0, %s10, %s8
  %v12 = vstv %s6
  %13 = vst [vmem:[#allocation3] sm:$0x1] %v12
  $region1: #{_lambda_.1} parent=0
    #allocation4 [shape = 'u8[2048]{0}', space=vmem, size = 0x800, scoped, tag = 'input window, operand 0, single buffered']
    #allocation5 [shape = 's32[2]{0}', space=sflag, size = 0x8, scoped, tag = 'scoped memory for _lambda_.1']
    #allocation6 [shape = 'u8[786432]{0}', space=vmem, size = 0xc0000, scoped, tag = 'input window, operand 1, single buffered']
    #allocation7 [shape = 's32[1]{0}', space=sflag, size = 0x4, scoped, tag = 'scoped memory for _lambda_.1']
    #allocation8 [shape = 'u8[12288]{0}', space=vmem, size = 0x3000, scoped, tag = 'input window, operand 2, single buffered']
    #allocation9 [shape = 'u8[12582912]{0}', space=vmem, size = 0xc00000, scoped, tag = 'input window, operand 3']
    #allocation10 [shape = 's32[2]{0}', space=sflag, size = 0x8, scoped, tag = 'scoped memory for _lambda_.1']
    #allocation11 [shape = 'u8[8192]{0}', space=vmem, size = 0x2000, scoped, tag = 'input window, operand 4']
    #allocation12 [shape = 'u8[8192]{0}', space=vmem, size = 0x2000, scoped, tag = 'input window, operand 5']
    #allocation13 [shape = 's32[2]{0}', space=sflag, size = 0x8, scoped, tag = 'scoped memory for _lambda_.1']
    %14 = vsyncpa [#allocation5], 0
    %15 = vsyncpa [#allocation7], 0
    %16 = vsyncpa [#allocation10], 0
    %s17 = scalar_lea.sflag [#allocation10], 1
    %18 = vsyncpa %s17, 0
    %19 = vsyncpa [#allocation13], 0
    %s20 = scalar_lea.sflag [#allocation13], 1
    %21 = vsyncpa %s20, 0
    loop: start=0, step=1, limit=4
    $region2: #{_lambda_.1} parent=1 // loop_pre_header
      _
    $region3: #{_lambda_.1} parent=1 // loop_header
      %s23 = sphi 0, %s27
      %p24 = scmp.ge.s32.totalorder %s23, 4
      %s30 = sphi 0, %s42
      %s31 = sphi 0, %s38
      %s32 = sphi 0, %s30
      %s33 = sphi 0, %s31
      %s34 = sphi 0, %s32
      %s35 = sphi 0, %s33
      %s45 = sphi 0, %s47
      %s48 = sphi 0, %s45
      %s49 = sphi 0, %s48
      %s65 = sphi 0, %s49
      %s69 = sphi 0, %s69
      %s71 = sphi 0, %s69
      %s72 = sphi 0, %s71
      %s86 = sphi 0, %s72
      %s90 = sphi 0, %s90
      %s92 = sphi 0, %s90
      %s93 = sphi 0, %s92
      %s107 = sphi 0, %s93
      %s113 = sphi 0, %s115
      %s116 = sphi 0, %s113
      %s117 = sphi 0, %s116
      %s133 = sphi 0, %s117
      %s139 = sphi 0, %s141
      %s142 = sphi 0, %s139
      %s143 = sphi 0, %s142
      %s159 = sphi 0, %s143
      %s165 = sphi 0, %s167
      %s168 = sphi 0, %s165
      %s169 = sphi 0, %s168
      %s185 = sphi 0, %s169
      %s189 = sphi 0, %s189
      %s191 = sphi 0, %s189
      %s192 = sphi 0, %s191
      %s206 = sphi 0, %s192
      %s212 = sphi 0, %s214
      %s215 = sphi 0, %s212
      %s216 = sphi 0, %s215
      %s232 = sphi 0, %s216
    $region4: #{_lambda_.1} parent=1 // loop_header_branch
      %26 = sbr.rel (%p24) target = $region8
    $region5: #{_lambda_.1} parent=1 // loop_body
      %s28 = ssub.s32 %s23, 1
      %s29 = ssub.s32 %s23, 2
      %s36 = sadd.s32 1, %s31
      %p37 = scmp.ge.s32.totalorder %s36, 2
      %s38 = scalar_select %p37, 0, %s36
      %s39 = sadd.s32 1, %s30
      %s40 = scalar_select %p37, %s39, %s30
      %p41 = scmp.ge.s32.totalorder %s40, 1
      %s42 = scalar_select %p41, 0, %s40
      %s43 = ssub.s32 %s30, %s42
      %p44 = scmp.eq.s32.totalorder %s43, 0
      %s46 = sadd.s32 %s45, 1
      %s47 = scalar_select %p44, %s45, %s46
      %p50 = pneg %p44
      %p51 = scmp.eq.s32.totalorder %s23, 1
      %p52 = por %p50, %p51
      %p53 = scmp.ne.s32.totalorder %s45, %s48
      %p54 = scmp.eq.s32.totalorder %s23, 0
      %p55 = por %p53, %p54
      %p56 = scmp.ne.s32.totalorder %s45, %s48
      %p57 = scmp.eq.s32.totalorder %s28, 1
      %p58 = por %p56, %p57
      %p59 = scmp.ne.s32.totalorder %s48, %s49
      %p60 = scmp.eq.s32.totalorder %s28, 0
      %p61 = por %p59, %p60
      %p62 = scmp.ne.s32.totalorder %s48, %s49
      %p63 = scmp.eq.s32.totalorder %s29, 1
      %p64 = por %p62, %p63
      %p66 = scmp.ne.s32.totalorder %s49, %s65
      %p67 = scmp.eq.s32.totalorder %s29, 0
      %p68 = por %p66, %p67
      %s70 = sadd.s32 %s69, 1
      %p73 = scmp.eq.s32.totalorder %s23, 1
      %p74 = scmp.ne.s32.totalorder %s69, %s71
      %p75 = scmp.eq.s32.totalorder %s23, 0
      %p76 = por %p74, %p75
      %p77 = scmp.ne.s32.totalorder %s69, %s71
      %p78 = scmp.eq.s32.totalorder %s28, 1
      %p79 = por %p77, %p78
      %p80 = scmp.ne.s32.totalorder %s71, %s72
      %p81 = scmp.eq.s32.totalorder %s28, 0
      %p82 = por %p80, %p81
      %p83 = scmp.ne.s32.totalorder %s71, %s72
      %p84 = scmp.eq.s32.totalorder %s29, 1
      %p85 = por %p83, %p84
      %p87 = scmp.ne.s32.totalorder %s72, %s86
      %p88 = scmp.eq.s32.totalorder %s29, 0
      %p89 = por %p87, %p88
      %s91 = sadd.s32 %s90, 1
      %p94 = scmp.eq.s32.totalorder %s23, 1
      %p95 = scmp.ne.s32.totalorder %s90, %s92
      %p96 = scmp.eq.s32.totalorder %s23, 0
      %p97 = por %p95, %p96
      %p98 = scmp.ne.s32.totalorder %s90, %s92
      %p99 = scmp.eq.s32.totalorder %s28, 1
      %p100 = por %p98, %p99
      %p101 = scmp.ne.s32.totalorder %s92, %s93
      %p102 = scmp.eq.s32.totalorder %s28, 0
      %p103 = por %p101, %p102
      %p104 = scmp.ne.s32.totalorder %s92, %s93
      %p105 = scmp.eq.s32.totalorder %s29, 1
      %p106 = por %p104, %p105
      %p108 = scmp.ne.s32.totalorder %s93, %s107
      %p109 = scmp.eq.s32.totalorder %s29, 0
      %p110 = por %p108, %p109
      %s111 = ssub.s32 %s31, %s38
      %p112 = scmp.eq.s32.totalorder %s111, 0
      %s114 = sadd.s32 %s113, 1
      %s115 = scalar_select %p112, %s113, %s114
      %p118 = pneg %p112
      %p119 = scmp.eq.s32.totalorder %s23, 1
      %p120 = por %p118, %p119
      %p121 = scmp.ne.s32.totalorder %s113, %s116
      %p122 = scmp.eq.s32.totalorder %s23, 0
      %p123 = por %p121, %p122
      %p124 = scmp.ne.s32.totalorder %s113, %s116
      %p125 = scmp.eq.s32.totalorder %s28, 1
      %p126 = por %p124, %p125
      %p127 = scmp.ne.s32.totalorder %s116, %s117
      %p128 = scmp.eq.s32.totalorder %s28, 0
      %p129 = por %p127, %p128
      %p130 = scmp.ne.s32.totalorder %s116, %s117
      %p131 = scmp.eq.s32.totalorder %s29, 1
      %p132 = por %p130, %p131
      %p134 = scmp.ne.s32.totalorder %s117, %s133
      %p135 = scmp.eq.s32.totalorder %s29, 0
      %p136 = por %p134, %p135
      %s137 = ssub.s32 %s31, %s38
      %p138 = scmp.eq.s32.totalorder %s137, 0
      %s140 = sadd.s32 %s139, 1
      %s141 = scalar_select %p138, %s139, %s140
      %p144 = pneg %p138
      %p145 = scmp.eq.s32.totalorder %s23, 1
      %p146 = por %p144, %p145
      %p147 = scmp.ne.s32.totalorder %s139, %s142
      %p148 = scmp.eq.s32.totalorder %s23, 0
      %p149 = por %p147, %p148
      %p150 = scmp.ne.s32.totalorder %s139, %s142
      %p151 = scmp.eq.s32.totalorder %s28, 1
      %p152 = por %p150, %p151
      %p153 = scmp.ne.s32.totalorder %s142, %s143
      %p154 = scmp.eq.s32.totalorder %s28, 0
      %p155 = por %p153, %p154
      %p156 = scmp.ne.s32.totalorder %s142, %s143
      %p157 = scmp.eq.s32.totalorder %s29, 1
      %p158 = por %p156, %p157
      %p160 = scmp.ne.s32.totalorder %s143, %s159
      %p161 = scmp.eq.s32.totalorder %s29, 0
      %p162 = por %p160, %p161
      %s163 = ssub.s32 %s31, %s38
      %p164 = scmp.eq.s32.totalorder %s163, 0
      %s166 = sadd.s32 %s165, 1
      %s167 = scalar_select %p164, %s165, %s166
      %p170 = pneg %p164
      %p171 = scmp.eq.s32.totalorder %s23, 1
      %p172 = por %p170, %p171
      %p173 = scmp.ne.s32.totalorder %s165, %s168
      %p174 = scmp.eq.s32.totalorder %s23, 0
      %p175 = por %p173, %p174
      %p176 = scmp.ne.s32.totalorder %s165, %s168
      %p177 = scmp.eq.s32.totalorder %s28, 1
      %p178 = por %p176, %p177
      %p179 = scmp.ne.s32.totalorder %s168, %s169
      %p180 = scmp.eq.s32.totalorder %s28, 0
      %p181 = por %p179, %p180
      %p182 = scmp.ne.s32.totalorder %s168, %s169
      %p183 = scmp.eq.s32.totalorder %s29, 1
      %p184 = por %p182, %p183
      %p186 = scmp.ne.s32.totalorder %s169, %s185
      %p187 = scmp.eq.s32.totalorder %s29, 0
      %p188 = por %p186, %p187
      %s190 = sadd.s32 %s189, 1
      %p193 = scmp.eq.s32.totalorder %s23, 1
      %p194 = scmp.ne.s32.totalorder %s189, %s191
      %p195 = scmp.eq.s32.totalorder %s23, 0
      %p196 = por %p194, %p195
      %p197 = scmp.ne.s32.totalorder %s189, %s191
      %p198 = scmp.eq.s32.totalorder %s28, 1
      %p199 = por %p197, %p198
      %p200 = scmp.ne.s32.totalorder %s191, %s192
      %p201 = scmp.eq.s32.totalorder %s28, 0
      %p202 = por %p200, %p201
      %p203 = scmp.ne.s32.totalorder %s191, %s192
      %p204 = scmp.eq.s32.totalorder %s29, 1
      %p205 = por %p203, %p204
      %p207 = scmp.ne.s32.totalorder %s192, %s206
      %p208 = scmp.eq.s32.totalorder %s29, 0
      %p209 = por %p207, %p208
      %s210 = ssub.s32 %s30, %s42
      %p211 = scmp.eq.s32.totalorder %s210, 0
      %s213 = sadd.s32 %s212, 1
      %s214 = scalar_select %p211, %s212, %s213
      %p217 = pneg %p211
      %p218 = scmp.eq.s32.totalorder %s23, 1
      %p219 = por %p217, %p218
      %p220 = scmp.ne.s32.totalorder %s212, %s215
      %p221 = scmp.eq.s32.totalorder %s23, 0
      %p222 = por %p220, %p221
      %p223 = scmp.ne.s32.totalorder %s212, %s215
      %p224 = scmp.eq.s32.totalorder %s28, 1
      %p225 = por %p223, %p224
      %p226 = scmp.ne.s32.totalorder %s215, %s216
      %p227 = scmp.eq.s32.totalorder %s28, 0
      %p228 = por %p226, %p227
      %p229 = scmp.ne.s32.totalorder %s215, %s216
      %p230 = scmp.eq.s32.totalorder %s29, 1
      %p231 = por %p229, %p230
      %p233 = scmp.ne.s32.totalorder %s216, %s232
      %p234 = scmp.eq.s32.totalorder %s29, 0
      %p235 = por %p233, %p234
      %p236 = scmp.le.s32.totalorder 1, %s23
      %p237 = scmp.lt.s32.totalorder %s23, 3
      %p238 = pnand %p236, %p237
      %p239 = pneg %p238
      // Predicated region
      $region9: #{_lambda_.1} parent=5 // pred_check
        _
      $region10: #{_lambda_.1} parent=5 // pred_check_branch
        %241 = sbr.rel (%p238) target = $region12
      $region11: #{_lambda_.1} parent=5 // pred_region
        %s242 = ssub.s32 %s23, 1
        // Predicated region
        $region13: #{_lambda_.1} parent=11 // pred_check
          %p243 = pneg %p61
        $region14: #{_lambda_.1} parent=11 // pred_check_branch
          %245 = sbr.rel (%p243) target = $region16
        $region15: #{_lambda_.1} parent=11 // pred_region
          %s247 = ssub.s32 64, 64
          %248 = vsyncadd [#allocation5], %s247
          %s249 = smul.addr %s32, 64
          %s250 = scalar_lea.hbm %s0, %s249
          %s252 = sshll.u32 [#allocation4], 4
          %s253 = int_to_ptr.vmem [resolvable:$true] %s252
          %255 = dma.hbm_to_vmem [thread:$0]  %s250, 64, %s253, [#allocation5]
        $region16: #{_lambda_.1} parent=11 // pred_fallthru
          _
        // Predicated region
        $region17: #{_lambda_.1} parent=11 // pred_check
          %p256 = pneg %p82
        $region18: #{_lambda_.1} parent=11 // pred_check_branch
          %258 = sbr.rel (%p256) target = $region20
        $region19: #{_lambda_.1} parent=11 // pred_region
          %s260 = ssub.s32 24576, 24576
          %261 = vsyncadd [#allocation7], %s260
          %s262 = sshll.u32 [#allocation6], 4
          %s263 = int_to_ptr.vmem [resolvable:$true] %s262
          %268 = dma.hbm_to_vmem [thread:$0]  %s1, 24576, %s263, [#allocation7], 1536, 1536, 96
        $region20: #{_lambda_.1} parent=11 // pred_fallthru
          _
        // Predicated region
        $region21: #{_lambda_.1} parent=11 // pred_check
          %p269 = pneg %p103
        $region22: #{_lambda_.1} parent=11 // pred_check_branch
          %271 = sbr.rel (%p269) target = $region24
        $region23: #{_lambda_.1} parent=11 // pred_region
          %s273 = ssub.s32 384, 384
          %274 = vsyncadd [#allocation7], %s273
          %s276 = sshll.u32 [#allocation8], 4
          %s277 = int_to_ptr.vmem [resolvable:$true] %s276
          %279 = dma.hbm_to_vmem [thread:$0]  %s2, 384, %s277, [#allocation7]
        $region24: #{_lambda_.1} parent=11 // pred_fallthru
          _
        // Predicated region
        $region25: #{_lambda_.1} parent=11 // pred_check
          %p280 = pneg %p202
        $region26: #{_lambda_.1} parent=11 // pred_check_branch
          %282 = sbr.rel (%p280) target = $region28
        $region27: #{_lambda_.1} parent=11 // pred_region
          _
        $region28: #{_lambda_.1} parent=11 // pred_fallthru
          _
      $region12: #{_lambda_.1} parent=5 // pred_fallthru
        _
      %p283 = scmp.lt.s32.totalorder %s23, 2
      // Predicated region
      $region29: #{_lambda_.1} parent=5 // pred_check
        %p284 = pneg %p283
      $region30: #{_lambda_.1} parent=5 // pred_check_branch
        %286 = sbr.rel (%p284) target = $region32
      $region31: #{_lambda_.1} parent=5 // pred_region
        // Predicated region
        $region33: #{_lambda_.1} parent=31 // pred_check
          %p287 = pneg %p123
        $region34: #{_lambda_.1} parent=31 // pred_check_branch
          %289 = sbr.rel (%p287) target = $region36
        $region35: #{_lambda_.1} parent=31 // pred_region
          %s290 = sand.u32 %s23, 1
          %s291 = scalar_lea.sflag [#allocation10], %s290
          %s292 = sand.u32 %s113, 1
          %s293 = smul.addr %s292, 12288
          %s294 = scalar_lea.vmem [#allocation9], %s293
          %s295 = smul.u32 8, %s31
          %s297 = ssub.s32 196608, 196608
          %298 = vsyncadd %s291, %s297
          %s299 = smul.addr %s295, 64
          %s300 = scalar_lea.hbm %s3, %s299
          %s301 = sshll.u32 %s294, 4
          %s302 = int_to_ptr.vmem [resolvable:$true] %s301
          %307 = dma.hbm_to_vmem [thread:$0]  %s300, 196608, %s302, %s291, 1024, 512, 32
        $region36: #{_lambda_.1} parent=31 // pred_fallthru
          _
        // Predicated region
        $region37: #{_lambda_.1} parent=31 // pred_check
          %p308 = pneg %p149
        $region38: #{_lambda_.1} parent=31 // pred_check_branch
          %310 = sbr.rel (%p308) target = $region40
        $region39: #{_lambda_.1} parent=31 // pred_region
          %s311 = sand.u32 %s23, 1
          %s312 = scalar_lea.sflag [#allocation10], %s311
          %s313 = sand.u32 %s139, 1
          %s314 = smul.addr %s313, 8
          %s315 = scalar_lea.vmem [#allocation11], %s314
          %s316 = smul.u32 8, %s31
          %s318 = ssub.s32 128, 128
          %319 = vsyncadd %s312, %s318
          %s320 = smul.addr %s316, 16
          %s321 = scalar_lea.hbm %s4, %s320
          %s323 = sshll.u32 %s315, 4
          %s324 = int_to_ptr.vmem [resolvable:$true] %s323
          %326 = dma.hbm_to_vmem [thread:$0]  %s321, 128, %s324, %s312
        $region40: #{_lambda_.1} parent=31 // pred_fallthru
          _
        // Predicated region
        $region41: #{_lambda_.1} parent=31 // pred_check
          %p327 = pneg %p175
        $region42: #{_lambda_.1} parent=31 // pred_check_branch
          %329 = sbr.rel (%p327) target = $region44
        $region43: #{_lambda_.1} parent=31 // pred_region
          %s330 = sand.u32 %s165, 1
          %s331 = scalar_lea.sflag [#allocation13], %s330
          %s332 = sand.u32 %s165, 1
          %s333 = smul.addr %s332, 8
          %s334 = scalar_lea.vmem [#allocation12], %s333
          %s335 = smul.u32 8, %s31
          %s337 = ssub.s32 128, 128
          %338 = vsyncadd %s331, %s337
          %s339 = smul.addr %s335, 16
          %s340 = scalar_lea.hbm %s5, %s339
          %s342 = sshll.u32 %s334, 4
          %s343 = int_to_ptr.vmem [resolvable:$true] %s342
          %345 = dma.hbm_to_vmem [thread:$0]  %s340, 128, %s343, %s331
        $region44: #{_lambda_.1} parent=31 // pred_fallthru
          _
      $region32: #{_lambda_.1} parent=5 // pred_fallthru
        _
      %p346 = scmp.le.s32.totalorder 1, %s23
      %p347 = scmp.lt.s32.totalorder %s23, 3
      %p348 = pnand %p346, %p347
      %p349 = pneg %p348
      // Predicated region
      $region45: #{_lambda_.1} parent=5 // pred_check
        _
      $region46: #{_lambda_.1} parent=5 // pred_check_branch
        %351 = sbr.rel (%p348) target = $region48
      $region47: #{_lambda_.1} parent=5 // pred_region
        %s352 = ssub.s32 %s23, 1
        // Predicated region
        $region49: #{_lambda_.1} parent=47 // pred_check
          %p353 = pneg %p61
        $region50: #{_lambda_.1} parent=47 // pred_check_branch
          %355 = sbr.rel (%p353) target = $region52
        $region51: #{_lambda_.1} parent=47 // pred_region
          %356 = dma.done [#allocation5], 64
        $region52: #{_lambda_.1} parent=47 // pred_fallthru
          _
        // Predicated region
        $region53: #{_lambda_.1} parent=47 // pred_check
          %p357 = pneg %p82
        $region54: #{_lambda_.1} parent=47 // pred_check_branch
          %359 = sbr.rel (%p357) target = $region56
        $region55: #{_lambda_.1} parent=47 // pred_region
          %360 = dma.done [#allocation7], 24576
        $region56: #{_lambda_.1} parent=47 // pred_fallthru
          _
        // Predicated region
        $region57: #{_lambda_.1} parent=47 // pred_check
          %p361 = pneg %p103
        $region58: #{_lambda_.1} parent=47 // pred_check_branch
          %363 = sbr.rel (%p361) target = $region60
        $region59: #{_lambda_.1} parent=47 // pred_region
          %364 = dma.done [#allocation7], 384
        $region60: #{_lambda_.1} parent=47 // pred_fallthru
          _
        %s365 = sand.u32 %s28, 1
        %s366 = scalar_lea.sflag [#allocation10], %s365
        %s367 = sand.u32 %s116, 1
        %s368 = smul.addr %s367, 12288
        %s369 = scalar_lea.vmem [#allocation9], %s368
        // Predicated region
        $region61: #{_lambda_.1} parent=47 // pred_check
          %p370 = pneg %p129
        $region62: #{_lambda_.1} parent=47 // pred_check_branch
          %372 = sbr.rel (%p370) target = $region64
        $region63: #{_lambda_.1} parent=47 // pred_region
          %373 = dma.done %s366, 196608
        $region64: #{_lambda_.1} parent=47 // pred_fallthru
          _
        %s374 = sand.u32 %s28, 1
        %s375 = scalar_lea.sflag [#allocation10], %s374
        %s376 = sand.u32 %s142, 1
        %s377 = smul.addr %s376, 8
        %s378 = scalar_lea.vmem [#allocation11], %s377
        // Predicated region
        $region65: #{_lambda_.1} parent=47 // pred_check
          %p379 = pneg %p155
        $region66: #{_lambda_.1} parent=47 // pred_check_branch
          %381 = sbr.rel (%p379) target = $region68
        $region67: #{_lambda_.1} parent=47 // pred_region
          %382 = dma.done %s375, 128
        $region68: #{_lambda_.1} parent=47 // pred_fallthru
          _
        %s383 = sand.u32 %s168, 1
        %s384 = scalar_lea.sflag [#allocation13], %s383
        %s385 = sand.u32 %s168, 1
        %s386 = smul.addr %s385, 8
        %s387 = scalar_lea.vmem [#allocation12], %s386
        // Predicated region
        $region69: #{_lambda_.1} parent=47 // pred_check
          %p388 = pneg %p181
        $region70: #{_lambda_.1} parent=47 // pred_check_branch
          %390 = sbr.rel (%p388) target = $region72
        $region71: #{_lambda_.1} parent=47 // pred_region
          %391 = dma.done %s384, 128
        $region72: #{_lambda_.1} parent=47 // pred_fallthru
          _
        %p392 = pneg %p61
        %p393 = pneg %p58
        %p394 = pneg %p82
        %p395 = pneg %p79
        %p396 = pneg %p103
        %p397 = pneg %p100
        %s398 = sand.u32 %s28, 1
        %s399 = scalar_lea.sflag [#allocation10], %s398
        %s400 = sand.u32 %s116, 1
        %s401 = smul.addr %s400, 12288
        %s402 = scalar_lea.vmem [#allocation9], %s401
        %p403 = pneg %p129
        %p404 = pneg %p126
        %s405 = sand.u32 %s28, 1
        %s406 = scalar_lea.sflag [#allocation10], %s405
        %s407 = sand.u32 %s142, 1
        %s408 = smul.addr %s407, 8
        %s409 = scalar_lea.vmem [#allocation11], %s408
        %p410 = pneg %p155
        %p411 = pneg %p152
        %s412 = sand.u32 %s168, 1
        %s413 = scalar_lea.sflag [#allocation13], %s412
        %s414 = sand.u32 %s168, 1
        %s415 = smul.addr %s414, 8
        %s416 = scalar_lea.vmem [#allocation12], %s415
        %p417 = pneg %p181
        %p418 = pneg %p178
        %p419 = pneg %p202
        %p420 = pneg %p199
        %p421 = pneg %p228
        %p422 = pneg %p225
        %p423 = scmp.lt.s32.totalorder %s32, 0
        %s424 = scalar_select %p423, %s32, 0
        %s425 = smul.addr %s424, 4
        %s426 = scalar_lea.vmem %s7, %s425
        %s427 = smul.u32 8, %s33
        %s428 = smul.u32 8, %s33
        %s429 = smul.u32 8, %s33
        %p430 = scmp.lt.s32.totalorder %s32, 0
        %s431 = scalar_select %p430, %s32, 0
        %s432 = smul.addr %s431, 4
        %s433 = scalar_lea.vmem %s7, %s432
        %p435 = scmp.eq.s32.totalorder %s33, 0
        // Predicated region
        $region73: #{_lambda_.1} parent=47 // pred_check
          %p436 = pneg %p435
        $region74: #{_lambda_.1} parent=47 // pred_check_branch
          %438 = sbr.rel (%p436) target = $region76
        $region75: #{_lambda_.1} parent=47 // pred_region
          %v439 = vld [vmem:[#allocation4] sm:$0xf]
          %v440 = vpack.c.bf16 %v439, %v439
          %v441 = vld [vmem:[#allocation6] sm:$0xff]
          %v442 = vld [vmem:[#allocation6 + $0x8] sm:$0xff]
          %v443 = vld [vmem:[#allocation6 + $0x10] sm:$0xff]
          %v444 = vld [vmem:[#allocation6 + $0x18] sm:$0xff]
          %v445 = vld [vmem:[#allocation6 + $0x20] sm:$0xff]
          %v446 = vld [vmem:[#allocation6 + $0x28] sm:$0xff]
          %v447 = vld [vmem:[#allocation6 + $0x30] sm:$0xff]
          %v448 = vld [vmem:[#allocation6 + $0x38] sm:$0xff]
          %v449 = vld [vmem:[#allocation6 + $0x40] sm:$0xff]
          %v450 = vld [vmem:[#allocation6 + $0x48] sm:$0xff]
          %v451 = vld [vmem:[#allocation6 + $0x50] sm:$0xff]
          %v452 = vld [vmem:[#allocation6 + $0x58] sm:$0xff]
          %v453 = vld [vmem:[#allocation6 + $0x60] sm:$0xff]
          %v454 = vld [vmem:[#allocation6 + $0x68] sm:$0xff]
          %v455 = vld [vmem:[#allocation6 + $0x70] sm:$0xff]
          %v456 = vld [vmem:[#allocation6 + $0x78] sm:$0xff]
          %v457 = vld [vmem:[#allocation6 + $0x80] sm:$0xff]
          %v458 = vld [vmem:[#allocation6 + $0x88] sm:$0xff]
          %v459 = vld [vmem:[#allocation6 + $0x90] sm:$0xff]
          %v460 = vld [vmem:[#allocation6 + $0x98] sm:$0xff]
          %v461 = vld [vmem:[#allocation6 + $0xa0] sm:$0xff]
          %v462 = vld [vmem:[#allocation6 + $0xa8] sm:$0xff]
          %v463 = vld [vmem:[#allocation6 + $0xb0] sm:$0xff]
          %v464 = vld [vmem:[#allocation6 + $0xb8] sm:$0xff]
          %v465 = vld [vmem:[#allocation6 + $0xc0] sm:$0xff]
          %v466 = vld [vmem:[#allocation6 + $0xc8] sm:$0xff]
          %v467 = vld [vmem:[#allocation6 + $0xd0] sm:$0xff]
          %v468 = vld [vmem:[#allocation6 + $0xd8] sm:$0xff]
          %v469 = vld [vmem:[#allocation6 + $0xe0] sm:$0xff]
          %v470 = vld [vmem:[#allocation6 + $0xe8] sm:$0xff]
          %v471 = vld [vmem:[#allocation6 + $0xf0] sm:$0xff]
          %v472 = vld [vmem:[#allocation6 + $0xf8] sm:$0xff]
          %v473 = vld [vmem:[#allocation6 + $0x100] sm:$0xff]
          %v474 = vld [vmem:[#allocation6 + $0x108] sm:$0xff]
          %v475 = vld [vmem:[#allocation6 + $0x110] sm:$0xff]
          %v476 = vld [vmem:[#allocation6 + $0x118] sm:$0xff]
          %v477 = vld [vmem:[#allocation6 + $0x120] sm:$0xff]
          %v478 = vld [vmem:[#allocation6 + $0x128] sm:$0xff]
          %v479 = vld [vmem:[#allocation6 + $0x130] sm:$0xff]
          %v480 = vld [vmem:[#allocation6 + $0x138] sm:$0xff]
          %v481 = vld [vmem:[#allocation6 + $0x140] sm:$0xff]
          %v482 = vld [vmem:[#allocation6 + $0x148] sm:$0xff]
          %v483 = vld [vmem:[#allocation6 + $0x150] sm:$0xff]
          %v484 = vld [vmem:[#allocation6 + $0x158] sm:$0xff]
          %v485 = vld [vmem:[#allocation6 + $0x160] sm:$0xff]
          %v486 = vld [vmem:[#allocation6 + $0x168] sm:$0xff]
          %v487 = vld [vmem:[#allocation6 + $0x170] sm:$0xff]
          %v488 = vld [vmem:[#allocation6 + $0x178] sm:$0xff]
          %v489 = vld [vmem:[#allocation6 + $0x180] sm:$0xff]
          %v490 = vld [vmem:[#allocation6 + $0x188] sm:$0xff]
          %v491 = vld [vmem:[#allocation6 + $0x190] sm:$0xff]
          %v492 = vld [vmem:[#allocation6 + $0x198] sm:$0xff]
          %v493 = vld [vmem:[#allocation6 + $0x1a0] sm:$0xff]
          %v494 = vld [vmem:[#allocation6 + $0x1a8] sm:$0xff]
          %v495 = vld [vmem:[#allocation6 + $0x1b0] sm:$0xff]
          %v496 = vld [vmem:[#allocation6 + $0x1b8] sm:$0xff]
          %v497 = vld [vmem:[#allocation6 + $0x1c0] sm:$0xff]
          %v498 = vld [vmem:[#allocation6 + $0x1c8] sm:$0xff]
          %v499 = vld [vmem:[#allocation6 + $0x1d0] sm:$0xff]
          %v500 = vld [vmem:[#allocation6 + $0x1d8] sm:$0xff]
          %v501 = vld [vmem:[#allocation6 + $0x1e0] sm:$0xff]
          %v502 = vld [vmem:[#allocation6 + $0x1e8] sm:$0xff]
          %v503 = vld [vmem:[#allocation6 + $0x1f0] sm:$0xff]
          %v504 = vld [vmem:[#allocation6 + $0x1f8] sm:$0xff]
          %v505 = vld [vmem:[#allocation6 + $0x200] sm:$0xff]
          %v506 = vld [vmem:[#allocation6 + $0x208] sm:$0xff]
          %v507 = vld [vmem:[#allocation6 + $0x210] sm:$0xff]
          %v508 = vld [vmem:[#allocation6 + $0x218] sm:$0xff]
          %v509 = vld [vmem:[#allocation6 + $0x220] sm:$0xff]
          %v510 = vld [vmem:[#allocation6 + $0x228] sm:$0xff]
          %v511 = vld [vmem:[#allocation6 + $0x230] sm:$0xff]
          %v512 = vld [vmem:[#allocation6 + $0x238] sm:$0xff]
          %v513 = vld [vmem:[#allocation6 + $0x240] sm:$0xff]
          %v514 = vld [vmem:[#allocation6 + $0x248] sm:$0xff]
          %v515 = vld [vmem:[#allocation6 + $0x250] sm:$0xff]
          %v516 = vld [vmem:[#allocation6 + $0x258] sm:$0xff]
          %v517 = vld [vmem:[#allocation6 + $0x260] sm:$0xff]
          %v518 = vld [vmem:[#allocation6 + $0x268] sm:$0xff]
          %v519 = vld [vmem:[#allocation6 + $0x270] sm:$0xff]
          %v520 = vld [vmem:[#allocation6 + $0x278] sm:$0xff]
          %v521 = vld [vmem:[#allocation6 + $0x280] sm:$0xff]
          %v522 = vld [vmem:[#allocation6 + $0x288] sm:$0xff]
          %v523 = vld [vmem:[#allocation6 + $0x290] sm:$0xff]
          %v524 = vld [vmem:[#allocation6 + $0x298] sm:$0xff]
          %v525 = vld [vmem:[#allocation6 + $0x2a0] sm:$0xff]
          %v526 = vld [vmem:[#allocation6 + $0x2a8] sm:$0xff]
          %v527 = vld [vmem:[#allocation6 + $0x2b0] sm:$0xff]
          %v528 = vld [vmem:[#allocation6 + $0x2b8] sm:$0xff]
          %v529 = vld [vmem:[#allocation6 + $0x2c0] sm:$0xff]
          %v530 = vld [vmem:[#allocation6 + $0x2c8] sm:$0xff]
          %v531 = vld [vmem:[#allocation6 + $0x2d0] sm:$0xff]
          %v532 = vld [vmem:[#allocation6 + $0x2d8] sm:$0xff]
          %v533 = vld [vmem:[#allocation6 + $0x2e0] sm:$0xff]
          %v534 = vld [vmem:[#allocation6 + $0x2e8] sm:$0xff]
          %v535 = vld [vmem:[#allocation6 + $0x2f0] sm:$0xff]
          %v536 = vld [vmem:[#allocation6 + $0x2f8] sm:$0xff]
          %v537 = vld [vmem:[#allocation6 + $0x300] sm:$0xff]
          %v538 = vld [vmem:[#allocation6 + $0x308] sm:$0xff]
          %v539 = vld [vmem:[#allocation6 + $0x310] sm:$0xff]
          %v540 = vld [vmem:[#allocation6 + $0x318] sm:$0xff]
          %v541 = vld [vmem:[#allocation6 + $0x320] sm:$0xff]
          %v542 = vld [vmem:[#allocation6 + $0x328] sm:$0xff]
          %v543 = vld [vmem:[#allocation6 + $0x330] sm:$0xff]
          %v544 = vld [vmem:[#allocation6 + $0x338] sm:$0xff]
          %v545 = vld [vmem:[#allocation6 + $0x340] sm:$0xff]
          %v546 = vld [vmem:[#allocation6 + $0x348] sm:$0xff]
          %v547 = vld [vmem:[#allocation6 + $0x350] sm:$0xff]
          %v548 = vld [vmem:[#allocation6 + $0x358] sm:$0xff]
          %v549 = vld [vmem:[#allocation6 + $0x360] sm:$0xff]
          %v550 = vld [vmem:[#allocation6 + $0x368] sm:$0xff]
          %v551 = vld [vmem:[#allocation6 + $0x370] sm:$0xff]
          %v552 = vld [vmem:[#allocation6 + $0x378] sm:$0xff]
          %v553 = vld [vmem:[#allocation6 + $0x380] sm:$0xff]
          %v554 = vld [vmem:[#allocation6 + $0x388] sm:$0xff]
          %v555 = vld [vmem:[#allocation6 + $0x390] sm:$0xff]
          %v556 = vld [vmem:[#allocation6 + $0x398] sm:$0xff]
          %v557 = vld [vmem:[#allocation6 + $0x3a0] sm:$0xff]
          %v558 = vld [vmem:[#allocation6 + $0x3a8] sm:$0xff]
          %v559 = vld [vmem:[#allocation6 + $0x3b0] sm:$0xff]
          %v560 = vld [vmem:[#allocation6 + $0x3b8] sm:$0xff]
          %v561 = vld [vmem:[#allocation6 + $0x3c0] sm:$0xff]
          %v562 = vld [vmem:[#allocation6 + $0x3c8] sm:$0xff]
          %v563 = vld [vmem:[#allocation6 + $0x3d0] sm:$0xff]
          %v564 = vld [vmem:[#allocation6 + $0x3d8] sm:$0xff]
          %v565 = vld [vmem:[#allocation6 + $0x3e0] sm:$0xff]
          %v566 = vld [vmem:[#allocation6 + $0x3e8] sm:$0xff]
          %v567 = vld [vmem:[#allocation6 + $0x3f0] sm:$0xff]
          %v568 = vld [vmem:[#allocation6 + $0x3f8] sm:$0xff]
          %v569 = vld [vmem:[#allocation6 + $0x400] sm:$0xff]
          %v570 = vld [vmem:[#allocation6 + $0x408] sm:$0xff]
          %v571 = vld [vmem:[#allocation6 + $0x410] sm:$0xff]
          %v572 = vld [vmem:[#allocation6 + $0x418] sm:$0xff]
          %v573 = vld [vmem:[#allocation6 + $0x420] sm:$0xff]
          %v574 = vld [vmem:[#allocation6 + $0x428] sm:$0xff]
          %v575 = vld [vmem:[#allocation6 + $0x430] sm:$0xff]
          %v576 = vld [vmem:[#allocation6 + $0x438] sm:$0xff]
          %v577 = vld [vmem:[#allocation6 + $0x440] sm:$0xff]
          %v578 = vld [vmem:[#allocation6 + $0x448] sm:$0xff]
          %v579 = vld [vmem:[#allocation6 + $0x450] sm:$0xff]
          %v580 = vld [vmem:[#allocation6 + $0x458] sm:$0xff]
          %v581 = vld [vmem:[#allocation6 + $0x460] sm:$0xff]
          %v582 = vld [vmem:[#allocation6 + $0x468] sm:$0xff]
          %v583 = vld [vmem:[#allocation6 + $0x470] sm:$0xff]
          %v584 = vld [vmem:[#allocation6 + $0x478] sm:$0xff]
          %v585 = vld [vmem:[#allocation6 + $0x480] sm:$0xff]
          %v586 = vld [vmem:[#allocation6 + $0x488] sm:$0xff]
          %v587 = vld [vmem:[#allocation6 + $0x490] sm:$0xff]
          %v588 = vld [vmem:[#allocation6 + $0x498] sm:$0xff]
          %v589 = vld [vmem:[#allocation6 + $0x4a0] sm:$0xff]
          %v590 = vld [vmem:[#allocation6 + $0x4a8] sm:$0xff]
          %v591 = vld [vmem:[#allocation6 + $0x4b0] sm:$0xff]
          %v592 = vld [vmem:[#allocation6 + $0x4b8] sm:$0xff]
          %v593 = vld [vmem:[#allocation6 + $0x4c0] sm:$0xff]
          %v594 = vld [vmem:[#allocation6 + $0x4c8] sm:$0xff]
          %v595 = vld [vmem:[#allocation6 + $0x4d0] sm:$0xff]
          %v596 = vld [vmem:[#allocation6 + $0x4d8] sm:$0xff]
          %v597 = vld [vmem:[#allocation6 + $0x4e0] sm:$0xff]
          %v598 = vld [vmem:[#allocation6 + $0x4e8] sm:$0xff]
          %v599 = vld [vmem:[#allocation6 + $0x4f0] sm:$0xff]
          %v600 = vld [vmem:[#allocation6 + $0x4f8] sm:$0xff]
          %v601 = vld [vmem:[#allocation6 + $0x500] sm:$0xff]
          %v602 = vld [vmem:[#allocation6 + $0x508] sm:$0xff]
          %v603 = vld [vmem:[#allocation6 + $0x510] sm:$0xff]
          %v604 = vld [vmem:[#allocation6 + $0x518] sm:$0xff]
          %v605 = vld [vmem:[#allocation6 + $0x520] sm:$0xff]
          %v606 = vld [vmem:[#allocation6 + $0x528] sm:$0xff]
          %v607 = vld [vmem:[#allocation6 + $0x530] sm:$0xff]
          %v608 = vld [vmem:[#allocation6 + $0x538] sm:$0xff]
          %v609 = vld [vmem:[#allocation6 + $0x540] sm:$0xff]
          %v610 = vld [vmem:[#allocation6 + $0x548] sm:$0xff]
          %v611 = vld [vmem:[#allocation6 + $0x550] sm:$0xff]
          %v612 = vld [vmem:[#allocation6 + $0x558] sm:$0xff]
          %v613 = vld [vmem:[#allocation6 + $0x560] sm:$0xff]
          %v614 = vld [vmem:[#allocation6 + $0x568] sm:$0xff]
          %v615 = vld [vmem:[#allocation6 + $0x570] sm:$0xff]
          %v616 = vld [vmem:[#allocation6 + $0x578] sm:$0xff]
          %v617 = vld [vmem:[#allocation6 + $0x580] sm:$0xff]
          %v618 = vld [vmem:[#allocation6 + $0x588] sm:$0xff]
          %v619 = vld [vmem:[#allocation6 + $0x590] sm:$0xff]
          %v620 = vld [vmem:[#allocation6 + $0x598] sm:$0xff]
          %v621 = vld [vmem:[#allocation6 + $0x5a0] sm:$0xff]
          %v622 = vld [vmem:[#allocation6 + $0x5a8] sm:$0xff]
          %v623 = vld [vmem:[#allocation6 + $0x5b0] sm:$0xff]
          %v624 = vld [vmem:[#allocation6 + $0x5b8] sm:$0xff]
          %v625 = vld [vmem:[#allocation6 + $0x5c0] sm:$0xff]
          %v626 = vld [vmem:[#allocation6 + $0x5c8] sm:$0xff]
          %v627 = vld [vmem:[#allocation6 + $0x5d0] sm:$0xff]
          %v628 = vld [vmem:[#allocation6 + $0x5d8] sm:$0xff]
          %v629 = vld [vmem:[#allocation6 + $0x5e0] sm:$0xff]
          %v630 = vld [vmem:[#allocation6 + $0x5e8] sm:$0xff]
          %v631 = vld [vmem:[#allocation6 + $0x5f0] sm:$0xff]
          %v632 = vld [vmem:[#allocation6 + $0x5f8] sm:$0xff]
          %v633 = vld [vmem:[#allocation8] sm:$0xff]
          %v634 = vld [vmem:[#allocation8 + $0x8] sm:$0xff]
          %v635 = vld [vmem:[#allocation8 + $0x10] sm:$0xff]
          %v639 = vlaneseq
          %v640 = vshrl.u32 %v639, 7
          %v641 = vsub.s32 0, %v640
          %v642 = vrot.slane %v633, %v641
          %v643 = vlaneseq
          %v644 = vshrl.u32 %v643, 7
          %v645 = vsub.s32 1, %v644
          %v646 = vrot.slane %v633, %v645
          %v647 = vlaneseq
          %v648 = vshrl.u32 %v647, 7
          %v649 = vsub.s32 2, %v648
          %v650 = vrot.slane %v633, %v649
          %v651 = vlaneseq
          %v652 = vshrl.u32 %v651, 7
          %v653 = vsub.s32 3, %v652
          %v654 = vrot.slane %v633, %v653
          %v655 = vlaneseq
          %v656 = vshrl.u32 %v655, 7
          %v657 = vsub.s32 4, %v656
          %v658 = vrot.slane %v633, %v657
          %v659 = vlaneseq
          %v660 = vshrl.u32 %v659, 7
          %v661 = vsub.s32 5, %v660
          %v662 = vrot.slane %v633, %v661
          %v663 = vlaneseq
          %v664 = vshrl.u32 %v663, 7
          %v665 = vsub.s32 6, %v664
          %v666 = vrot.slane %v633, %v665
          %v667 = vlaneseq
          %v668 = vshrl.u32 %v667, 7
          %v669 = vsub.s32 7, %v668
          %v670 = vrot.slane %v633, %v669
          %v671 = vlaneseq
          %v672 = vshrl.u32 %v671, 7
          %v673 = vsub.s32 0, %v672
          %v674 = vrot.slane %v634, %v673
          %v675 = vlaneseq
          %v676 = vshrl.u32 %v675, 7
          %v677 = vsub.s32 1, %v676
          %v678 = vrot.slane %v634, %v677
          %v679 = vlaneseq
          %v680 = vshrl.u32 %v679, 7
          %v681 = vsub.s32 2, %v680
          %v682 = vrot.slane %v634, %v681
          %v683 = vlaneseq
          %v684 = vshrl.u32 %v683, 7
          %v685 = vsub.s32 3, %v684
          %v686 = vrot.slane %v634, %v685
          %v687 = vlaneseq
          %v688 = vshrl.u32 %v687, 7
          %v689 = vsub.s32 4, %v688
          %v690 = vrot.slane %v634, %v689
          %v691 = vlaneseq
          %v692 = vshrl.u32 %v691, 7
          %v693 = vsub.s32 5, %v692
          %v694 = vrot.slane %v634, %v693
          %v695 = vlaneseq
          %v696 = vshrl.u32 %v695, 7
          %v697 = vsub.s32 6, %v696
          %v698 = vrot.slane %v634, %v697
          %v699 = vlaneseq
          %v700 = vshrl.u32 %v699, 7
          %v701 = vsub.s32 7, %v700
          %v702 = vrot.slane %v634, %v701
          %v703 = vlaneseq
          %v704 = vshrl.u32 %v703, 7
          %v705 = vsub.s32 0, %v704
          %v706 = vrot.slane %v635, %v705
          %v707 = vlaneseq
          %v708 = vshrl.u32 %v707, 7
          %v709 = vsub.s32 1, %v708
          %v710 = vrot.slane %v635, %v709
          %v711 = vlaneseq
          %v712 = vshrl.u32 %v711, 7
          %v713 = vsub.s32 2, %v712
          %v714 = vrot.slane %v635, %v713
          %v715 = vlaneseq
          %v716 = vshrl.u32 %v715, 7
          %v717 = vsub.s32 3, %v716
          %v718 = vrot.slane %v635, %v717
          %v719 = vlaneseq
          %v720 = vshrl.u32 %v719, 7
          %v721 = vsub.s32 4, %v720
          %v722 = vrot.slane %v635, %v721
          %v723 = vlaneseq
          %v724 = vshrl.u32 %v723, 7
          %v725 = vsub.s32 5, %v724
          %v726 = vrot.slane %v635, %v725
          %v727 = vlaneseq
          %v728 = vshrl.u32 %v727, 7
          %v729 = vsub.s32 6, %v728
          %v730 = vrot.slane %v635, %v729
          %v731 = vlaneseq
          %v732 = vshrl.u32 %v731, 7
          %v733 = vsub.s32 7, %v732
          %v734 = vrot.slane %v635, %v733
          %v951 = vunpack.c.l.b16 %v441
          %v952 = vunpack.c.h.b16 %v441
          %v953 = vunpack.c.l.b16 %v442
          %v954 = vunpack.c.h.b16 %v442
          %v955 = vunpack.c.l.b16 %v443
          %v956 = vunpack.c.h.b16 %v443
          %v957 = vunpack.c.l.b16 %v444
          %v958 = vunpack.c.h.b16 %v444
          %v959 = vunpack.c.l.b16 %v445
          %v960 = vunpack.c.h.b16 %v445
          %v961 = vunpack.c.l.b16 %v446
          %v962 = vunpack.c.h.b16 %v446
          %v963 = vunpack.c.l.b16 %v447
          %v964 = vunpack.c.h.b16 %v447
          %v965 = vunpack.c.l.b16 %v448
          %v966 = vunpack.c.h.b16 %v448
          %v967 = vunpack.c.l.b16 %v449
          %v968 = vunpack.c.h.b16 %v449
          %v969 = vunpack.c.l.b16 %v450
          %v970 = vunpack.c.h.b16 %v450
          %v971 = vunpack.c.l.b16 %v451
          %v972 = vunpack.c.h.b16 %v451
          %v973 = vunpack.c.l.b16 %v452
          %v974 = vunpack.c.h.b16 %v452
          %v975 = vunpack.c.l.b16 %v453
          %v976 = vunpack.c.h.b16 %v453
          %v977 = vunpack.c.l.b16 %v454
          %v978 = vunpack.c.h.b16 %v454
          %v979 = vunpack.c.l.b16 %v455
          %v980 = vunpack.c.h.b16 %v455
          %v981 = vunpack.c.l.b16 %v456
          %v982 = vunpack.c.h.b16 %v456
          %v983 = vunpack.c.l.b16 %v457
          %v984 = vunpack.c.h.b16 %v457
          %v985 = vunpack.c.l.b16 %v458
          %v986 = vunpack.c.h.b16 %v458
          %v987 = vunpack.c.l.b16 %v459
          %v988 = vunpack.c.h.b16 %v459
          %v989 = vunpack.c.l.b16 %v460
          %v990 = vunpack.c.h.b16 %v460
          %v991 = vunpack.c.l.b16 %v461
          %v992 = vunpack.c.h.b16 %v461
          %v993 = vunpack.c.l.b16 %v462
          %v994 = vunpack.c.h.b16 %v462
          %v995 = vunpack.c.l.b16 %v463
          %v996 = vunpack.c.h.b16 %v463
          %v997 = vunpack.c.l.b16 %v464
          %v998 = vunpack.c.h.b16 %v464
          %v999 = vunpack.c.l.b16 %v465
          %v1000 = vunpack.c.h.b16 %v465
          %v1001 = vunpack.c.l.b16 %v466
          %v1002 = vunpack.c.h.b16 %v466
          %v1003 = vunpack.c.l.b16 %v467
          %v1004 = vunpack.c.h.b16 %v467
          %v1005 = vunpack.c.l.b16 %v468
          %v1006 = vunpack.c.h.b16 %v468
          %v1007 = vunpack.c.l.b16 %v469
          %v1008 = vunpack.c.h.b16 %v469
          %v1009 = vunpack.c.l.b16 %v470
          %v1010 = vunpack.c.h.b16 %v470
          %v1011 = vunpack.c.l.b16 %v471
          %v1012 = vunpack.c.h.b16 %v471
          %v1013 = vunpack.c.l.b16 %v472
          %v1014 = vunpack.c.h.b16 %v472
          %v1015 = vunpack.c.l.b16 %v473
          %v1016 = vunpack.c.h.b16 %v473
          %v1017 = vunpack.c.l.b16 %v474
          %v1018 = vunpack.c.h.b16 %v474
          %v1019 = vunpack.c.l.b16 %v475
          %v1020 = vunpack.c.h.b16 %v475
          %v1021 = vunpack.c.l.b16 %v476
          %v1022 = vunpack.c.h.b16 %v476
          %v1023 = vunpack.c.l.b16 %v477
          %v1024 = vunpack.c.h.b16 %v477
          %v1025 = vunpack.c.l.b16 %v478
          %v1026 = vunpack.c.h.b16 %v478
          %v1027 = vunpack.c.l.b16 %v479
          %v1028 = vunpack.c.h.b16 %v479
          %v1029 = vunpack.c.l.b16 %v480
          %v1030 = vunpack.c.h.b16 %v480
          %v1031 = vunpack.c.l.b16 %v481
          %v1032 = vunpack.c.h.b16 %v481
          %v1033 = vunpack.c.l.b16 %v482
          %v1034 = vunpack.c.h.b16 %v482
          %v1035 = vunpack.c.l.b16 %v483
          %v1036 = vunpack.c.h.b16 %v483
          %v1037 = vunpack.c.l.b16 %v484
          %v1038 = vunpack.c.h.b16 %v484
          %v1039 = vunpack.c.l.b16 %v485
          %v1040 = vunpack.c.h.b16 %v485
          %v1041 = vunpack.c.l.b16 %v486
          %v1042 = vunpack.c.h.b16 %v486
          %v1043 = vunpack.c.l.b16 %v487
          %v1044 = vunpack.c.h.b16 %v487
          %v1045 = vunpack.c.l.b16 %v488
          %v1046 = vunpack.c.h.b16 %v488
          %v1047 = vunpack.c.l.b16 %v489
          %v1048 = vunpack.c.h.b16 %v489
          %v1049 = vunpack.c.l.b16 %v490
          %v1050 = vunpack.c.h.b16 %v490
          %v1051 = vunpack.c.l.b16 %v491
          %v1052 = vunpack.c.h.b16 %v491
          %v1053 = vunpack.c.l.b16 %v492
          %v1054 = vunpack.c.h.b16 %v492
          %v1055 = vunpack.c.l.b16 %v493
          %v1056 = vunpack.c.h.b16 %v493
          %v1057 = vunpack.c.l.b16 %v494
          %v1058 = vunpack.c.h.b16 %v494
          %v1059 = vunpack.c.l.b16 %v495
          %v1060 = vunpack.c.h.b16 %v495
          %v1061 = vunpack.c.l.b16 %v496
          %v1062 = vunpack.c.h.b16 %v496
          %v1063 = vunpack.c.l.b16 %v497
          %v1064 = vunpack.c.h.b16 %v497
          %v1065 = vunpack.c.l.b16 %v498
          %v1066 = vunpack.c.h.b16 %v498
          %v1067 = vunpack.c.l.b16 %v499
          %v1068 = vunpack.c.h.b16 %v499
          %v1069 = vunpack.c.l.b16 %v500
          %v1070 = vunpack.c.h.b16 %v500
          %v1071 = vunpack.c.l.b16 %v501
          %v1072 = vunpack.c.h.b16 %v501
          %v1073 = vunpack.c.l.b16 %v502
          %v1074 = vunpack.c.h.b16 %v502
          %v1075 = vunpack.c.l.b16 %v503
          %v1076 = vunpack.c.h.b16 %v503
          %v1077 = vunpack.c.l.b16 %v504
          %v1078 = vunpack.c.h.b16 %v504
          %v1079 = vunpack.c.l.b16 %v505
          %v1080 = vunpack.c.h.b16 %v505
          %v1081 = vunpack.c.l.b16 %v506
          %v1082 = vunpack.c.h.b16 %v506
          %v1083 = vunpack.c.l.b16 %v507
          %v1084 = vunpack.c.h.b16 %v507
          %v1085 = vunpack.c.l.b16 %v508
          %v1086 = vunpack.c.h.b16 %v508
          %v1087 = vunpack.c.l.b16 %v509
          %v1088 = vunpack.c.h.b16 %v509
          %v1089 = vunpack.c.l.b16 %v510
          %v1090 = vunpack.c.h.b16 %v510
          %v1091 = vunpack.c.l.b16 %v511
          %v1092 = vunpack.c.h.b16 %v511
          %v1093 = vunpack.c.l.b16 %v512
          %v1094 = vunpack.c.h.b16 %v512
          %v1095 = vunpack.c.l.b16 %v513
          %v1096 = vunpack.c.h.b16 %v513
          %v1097 = vunpack.c.l.b16 %v514
          %v1098 = vunpack.c.h.b16 %v514
          %v1099 = vunpack.c.l.b16 %v515
          %v1100 = vunpack.c.h.b16 %v515
          %v1101 = vunpack.c.l.b16 %v516
          %v1102 = vunpack.c.h.b16 %v516
          %v1103 = vunpack.c.l.b16 %v517
          %v1104 = vunpack.c.h.b16 %v517
          %v1105 = vunpack.c.l.b16 %v518
          %v1106 = vunpack.c.h.b16 %v518
          %v1107 = vunpack.c.l.b16 %v519
          %v1108 = vunpack.c.h.b16 %v519
          %v1109 = vunpack.c.l.b16 %v520
          %v1110 = vunpack.c.h.b16 %v520
          %v1111 = vunpack.c.l.b16 %v521
          %v1112 = vunpack.c.h.b16 %v521
          %v1113 = vunpack.c.l.b16 %v522
          %v1114 = vunpack.c.h.b16 %v522
          %v1115 = vunpack.c.l.b16 %v523
          %v1116 = vunpack.c.h.b16 %v523
          %v1117 = vunpack.c.l.b16 %v524
          %v1118 = vunpack.c.h.b16 %v524
          %v1119 = vunpack.c.l.b16 %v525
          %v1120 = vunpack.c.h.b16 %v525
          %v1121 = vunpack.c.l.b16 %v526
          %v1122 = vunpack.c.h.b16 %v526
          %v1123 = vunpack.c.l.b16 %v527
          %v1124 = vunpack.c.h.b16 %v527
          %v1125 = vunpack.c.l.b16 %v528
          %v1126 = vunpack.c.h.b16 %v528
          %v1127 = vunpack.c.l.b16 %v529
          %v1128 = vunpack.c.h.b16 %v529
          %v1129 = vunpack.c.l.b16 %v530
          %v1130 = vunpack.c.h.b16 %v530
          %v1131 = vunpack.c.l.b16 %v531
          %v1132 = vunpack.c.h.b16 %v531
          %v1133 = vunpack.c.l.b16 %v532
          %v1134 = vunpack.c.h.b16 %v532
          %v1135 = vunpack.c.l.b16 %v533
          %v1136 = vunpack.c.h.b16 %v533
          %v1137 = vunpack.c.l.b16 %v534
          %v1138 = vunpack.c.h.b16 %v534
          %v1139 = vunpack.c.l.b16 %v535
          %v1140 = vunpack.c.h.b16 %v535
          %v1141 = vunpack.c.l.b16 %v536
          %v1142 = vunpack.c.h.b16 %v536
          %v1143 = vunpack.c.l.b16 %v537
          %v1144 = vunpack.c.h.b16 %v537
          %v1145 = vunpack.c.l.b16 %v538
          %v1146 = vunpack.c.h.b16 %v538
          %v1147 = vunpack.c.l.b16 %v539
          %v1148 = vunpack.c.h.b16 %v539
          %v1149 = vunpack.c.l.b16 %v540
          %v1150 = vunpack.c.h.b16 %v540
          %v1151 = vunpack.c.l.b16 %v541
          %v1152 = vunpack.c.h.b16 %v541
          %v1153 = vunpack.c.l.b16 %v542
          %v1154 = vunpack.c.h.b16 %v542
          %v1155 = vunpack.c.l.b16 %v543
          %v1156 = vunpack.c.h.b16 %v543
          %v1157 = vunpack.c.l.b16 %v544
          %v1158 = vunpack.c.h.b16 %v544
          %v1159 = vunpack.c.l.b16 %v545
          %v1160 = vunpack.c.h.b16 %v545
          %v1161 = vunpack.c.l.b16 %v546
          %v1162 = vunpack.c.h.b16 %v546
          %v1163 = vunpack.c.l.b16 %v547
          %v1164 = vunpack.c.h.b16 %v547
          %v1165 = vunpack.c.l.b16 %v548
          %v1166 = vunpack.c.h.b16 %v548
          %v1167 = vunpack.c.l.b16 %v549
          %v1168 = vunpack.c.h.b16 %v549
          %v1169 = vunpack.c.l.b16 %v550
          %v1170 = vunpack.c.h.b16 %v550
          %v1171 = vunpack.c.l.b16 %v551
          %v1172 = vunpack.c.h.b16 %v551
          %v1173 = vunpack.c.l.b16 %v552
          %v1174 = vunpack.c.h.b16 %v552
          %v1175 = vunpack.c.l.b16 %v553
          %v1176 = vunpack.c.h.b16 %v553
          %v1177 = vunpack.c.l.b16 %v554
          %v1178 = vunpack.c.h.b16 %v554
          %v1179 = vunpack.c.l.b16 %v555
          %v1180 = vunpack.c.h.b16 %v555
          %v1181 = vunpack.c.l.b16 %v556
          %v1182 = vunpack.c.h.b16 %v556
          %v1183 = vunpack.c.l.b16 %v557
          %v1184 = vunpack.c.h.b16 %v557
          %v1185 = vunpack.c.l.b16 %v558
          %v1186 = vunpack.c.h.b16 %v558
          %v1187 = vunpack.c.l.b16 %v559
          %v1188 = vunpack.c.h.b16 %v559
          %v1189 = vunpack.c.l.b16 %v560
          %v1190 = vunpack.c.h.b16 %v560
          %v1191 = vunpack.c.l.b16 %v561
          %v1192 = vunpack.c.h.b16 %v561
          %v1193 = vunpack.c.l.b16 %v562
          %v1194 = vunpack.c.h.b16 %v562
          %v1195 = vunpack.c.l.b16 %v563
          %v1196 = vunpack.c.h.b16 %v563
          %v1197 = vunpack.c.l.b16 %v564
          %v1198 = vunpack.c.h.b16 %v564
          %v1199 = vunpack.c.l.b16 %v565
          %v1200 = vunpack.c.h.b16 %v565
          %v1201 = vunpack.c.l.b16 %v566
          %v1202 = vunpack.c.h.b16 %v566
          %v1203 = vunpack.c.l.b16 %v567
          %v1204 = vunpack.c.h.b16 %v567
          %v1205 = vunpack.c.l.b16 %v568
          %v1206 = vunpack.c.h.b16 %v568
          %v1207 = vunpack.c.l.b16 %v569
          %v1208 = vunpack.c.h.b16 %v569
          %v1209 = vunpack.c.l.b16 %v570
          %v1210 = vunpack.c.h.b16 %v570
          %v1211 = vunpack.c.l.b16 %v571
          %v1212 = vunpack.c.h.b16 %v571
          %v1213 = vunpack.c.l.b16 %v572
          %v1214 = vunpack.c.h.b16 %v572
          %v1215 = vunpack.c.l.b16 %v573
          %v1216 = vunpack.c.h.b16 %v573
          %v1217 = vunpack.c.l.b16 %v574
          %v1218 = vunpack.c.h.b16 %v574
          %v1219 = vunpack.c.l.b16 %v575
          %v1220 = vunpack.c.h.b16 %v575
          %v1221 = vunpack.c.l.b16 %v576
          %v1222 = vunpack.c.h.b16 %v576
          %v1223 = vunpack.c.l.b16 %v577
          %v1224 = vunpack.c.h.b16 %v577
          %v1225 = vunpack.c.l.b16 %v578
          %v1226 = vunpack.c.h.b16 %v578
          %v1227 = vunpack.c.l.b16 %v579
          %v1228 = vunpack.c.h.b16 %v579
          %v1229 = vunpack.c.l.b16 %v580
          %v1230 = vunpack.c.h.b16 %v580
          %v1231 = vunpack.c.l.b16 %v581
          %v1232 = vunpack.c.h.b16 %v581
          %v1233 = vunpack.c.l.b16 %v582
          %v1234 = vunpack.c.h.b16 %v582
          %v1235 = vunpack.c.l.b16 %v583
          %v1236 = vunpack.c.h.b16 %v583
          %v1237 = vunpack.c.l.b16 %v584
          %v1238 = vunpack.c.h.b16 %v584
          %v1239 = vunpack.c.l.b16 %v585
          %v1240 = vunpack.c.h.b16 %v585
          %v1241 = vunpack.c.l.b16 %v586
          %v1242 = vunpack.c.h.b16 %v586
          %v1243 = vunpack.c.l.b16 %v587
          %v1244 = vunpack.c.h.b16 %v587
          %v1245 = vunpack.c.l.b16 %v588
          %v1246 = vunpack.c.h.b16 %v588
          %v1247 = vunpack.c.l.b16 %v589
          %v1248 = vunpack.c.h.b16 %v589
          %v1249 = vunpack.c.l.b16 %v590
          %v1250 = vunpack.c.h.b16 %v590
          %v1251 = vunpack.c.l.b16 %v591
          %v1252 = vunpack.c.h.b16 %v591
          %v1253 = vunpack.c.l.b16 %v592
          %v1254 = vunpack.c.h.b16 %v592
          %v1255 = vunpack.c.l.b16 %v593
          %v1256 = vunpack.c.h.b16 %v593
          %v1257 = vunpack.c.l.b16 %v594
          %v1258 = vunpack.c.h.b16 %v594
          %v1259 = vunpack.c.l.b16 %v595
          %v1260 = vunpack.c.h.b16 %v595
          %v1261 = vunpack.c.l.b16 %v596
          %v1262 = vunpack.c.h.b16 %v596
          %v1263 = vunpack.c.l.b16 %v597
          %v1264 = vunpack.c.h.b16 %v597
          %v1265 = vunpack.c.l.b16 %v598
          %v1266 = vunpack.c.h.b16 %v598
          %v1267 = vunpack.c.l.b16 %v599
          %v1268 = vunpack.c.h.b16 %v599
          %v1269 = vunpack.c.l.b16 %v600
          %v1270 = vunpack.c.h.b16 %v600
          %v1271 = vunpack.c.l.b16 %v601
          %v1272 = vunpack.c.h.b16 %v601
          %v1273 = vunpack.c.l.b16 %v602
          %v1274 = vunpack.c.h.b16 %v602
          %v1275 = vunpack.c.l.b16 %v603
          %v1276 = vunpack.c.h.b16 %v603
          %v1277 = vunpack.c.l.b16 %v604
          %v1278 = vunpack.c.h.b16 %v604
          %v1279 = vunpack.c.l.b16 %v605
          %v1280 = vunpack.c.h.b16 %v605
          %v1281 = vunpack.c.l.b16 %v606
          %v1282 = vunpack.c.h.b16 %v606
          %v1283 = vunpack.c.l.b16 %v607
          %v1284 = vunpack.c.h.b16 %v607
          %v1285 = vunpack.c.l.b16 %v608
          %v1286 = vunpack.c.h.b16 %v608
          %v1287 = vunpack.c.l.b16 %v609
          %v1288 = vunpack.c.h.b16 %v609
          %v1289 = vunpack.c.l.b16 %v610
          %v1290 = vunpack.c.h.b16 %v610
          %v1291 = vunpack.c.l.b16 %v611
          %v1292 = vunpack.c.h.b16 %v611
          %v1293 = vunpack.c.l.b16 %v612
          %v1294 = vunpack.c.h.b16 %v612
          %v1295 = vunpack.c.l.b16 %v613
          %v1296 = vunpack.c.h.b16 %v613
          %v1297 = vunpack.c.l.b16 %v614
          %v1298 = vunpack.c.h.b16 %v614
          %v1299 = vunpack.c.l.b16 %v615
          %v1300 = vunpack.c.h.b16 %v615
          %v1301 = vunpack.c.l.b16 %v616
          %v1302 = vunpack.c.h.b16 %v616
          %v1303 = vunpack.c.l.b16 %v617
          %v1304 = vunpack.c.h.b16 %v617
          %v1305 = vunpack.c.l.b16 %v618
          %v1306 = vunpack.c.h.b16 %v618
          %v1307 = vunpack.c.l.b16 %v619
          %v1308 = vunpack.c.h.b16 %v619
          %v1309 = vunpack.c.l.b16 %v620
          %v1310 = vunpack.c.h.b16 %v620
          %v1311 = vunpack.c.l.b16 %v621
          %v1312 = vunpack.c.h.b16 %v621
          %v1313 = vunpack.c.l.b16 %v622
          %v1314 = vunpack.c.h.b16 %v622
          %v1315 = vunpack.c.l.b16 %v623
          %v1316 = vunpack.c.h.b16 %v623
          %v1317 = vunpack.c.l.b16 %v624
          %v1318 = vunpack.c.h.b16 %v624
          %v1319 = vunpack.c.l.b16 %v625
          %v1320 = vunpack.c.h.b16 %v625
          %v1321 = vunpack.c.l.b16 %v626
          %v1322 = vunpack.c.h.b16 %v626
          %v1323 = vunpack.c.l.b16 %v627
          %v1324 = vunpack.c.h.b16 %v627
          %v1325 = vunpack.c.l.b16 %v628
          %v1326 = vunpack.c.h.b16 %v628
          %v1327 = vunpack.c.l.b16 %v629
          %v1328 = vunpack.c.h.b16 %v629
          %v1329 = vunpack.c.l.b16 %v630
          %v1330 = vunpack.c.h.b16 %v630
          %v1331 = vunpack.c.l.b16 %v631
          %v1332 = vunpack.c.h.b16 %v631
          %v1333 = vunpack.c.l.b16 %v632
          %v1334 = vunpack.c.h.b16 %v632
          %v1335 = vpack.c.b16 %v975, %v951
          %v1336 = vpack.c.b16 %v976, %v952
          %v1337 = vpack.c.b16 %v977, %v953
          %v1338 = vpack.c.b16 %v978, %v954
          %v1339 = vpack.c.b16 %v979, %v955
          %v1340 = vpack.c.b16 %v980, %v956
          %v1341 = vpack.c.b16 %v981, %v957
          %v1342 = vpack.c.b16 %v982, %v958
          %v1343 = vpack.c.b16 %v983, %v959
          %v1344 = vpack.c.b16 %v984, %v960
          %v1345 = vpack.c.b16 %v985, %v961
          %v1346 = vpack.c.b16 %v986, %v962
          %v1347 = vpack.c.b16 %v987, %v963
          %v1348 = vpack.c.b16 %v988, %v964
          %v1349 = vpack.c.b16 %v989, %v965
          %v1350 = vpack.c.b16 %v990, %v966
          %v1351 = vpack.c.b16 %v991, %v967
          %v1352 = vpack.c.b16 %v992, %v968
          %v1353 = vpack.c.b16 %v993, %v969
          %v1354 = vpack.c.b16 %v994, %v970
          %v1355 = vpack.c.b16 %v995, %v971
          %v1356 = vpack.c.b16 %v996, %v972
          %v1357 = vpack.c.b16 %v997, %v973
          %v1358 = vpack.c.b16 %v998, %v974
          %v1359 = vpack.c.b16 %v1023, %v999
          %v1360 = vpack.c.b16 %v1024, %v1000
          %v1361 = vpack.c.b16 %v1025, %v1001
          %v1362 = vpack.c.b16 %v1026, %v1002
          %v1363 = vpack.c.b16 %v1027, %v1003
          %v1364 = vpack.c.b16 %v1028, %v1004
          %v1365 = vpack.c.b16 %v1029, %v1005
          %v1366 = vpack.c.b16 %v1030, %v1006
          %v1367 = vpack.c.b16 %v1031, %v1007
          %v1368 = vpack.c.b16 %v1032, %v1008
          %v1369 = vpack.c.b16 %v1033, %v1009
          %v1370 = vpack.c.b16 %v1034, %v1010
          %v1371 = vpack.c.b16 %v1035, %v1011
          %v1372 = vpack.c.b16 %v1036, %v1012
          %v1373 = vpack.c.b16 %v1037, %v1013
          %v1374 = vpack.c.b16 %v1038, %v1014
          %v1375 = vpack.c.b16 %v1039, %v1015
          %v1376 = vpack.c.b16 %v1040, %v1016
          %v1377 = vpack.c.b16 %v1041, %v1017
          %v1378 = vpack.c.b16 %v1042, %v1018
          %v1379 = vpack.c.b16 %v1043, %v1019
          %v1380 = vpack.c.b16 %v1044, %v1020
          %v1381 = vpack.c.b16 %v1045, %v1021
          %v1382 = vpack.c.b16 %v1046, %v1022
          %v1383 = vpack.c.b16 %v1071, %v1047
          %v1384 = vpack.c.b16 %v1072, %v1048
          %v1385 = vpack.c.b16 %v1073, %v1049
          %v1386 = vpack.c.b16 %v1074, %v1050
          %v1387 = vpack.c.b16 %v1075, %v1051
          %v1388 = vpack.c.b16 %v1076, %v1052
          %v1389 = vpack.c.b16 %v1077, %v1053
          %v1390 = vpack.c.b16 %v1078, %v1054
          %v1391 = vpack.c.b16 %v1079, %v1055
          %v1392 = vpack.c.b16 %v1080, %v1056
          %v1393 = vpack.c.b16 %v1081, %v1057
          %v1394 = vpack.c.b16 %v1082, %v1058
          %v1395 = vpack.c.b16 %v1083, %v1059
          %v1396 = vpack.c.b16 %v1084, %v1060
          %v1397 = vpack.c.b16 %v1085, %v1061
          %v1398 = vpack.c.b16 %v1086, %v1062
          %v1399 = vpack.c.b16 %v1087, %v1063
          %v1400 = vpack.c.b16 %v1088, %v1064
          %v1401 = vpack.c.b16 %v1089, %v1065
          %v1402 = vpack.c.b16 %v1090, %v1066
          %v1403 = vpack.c.b16 %v1091, %v1067
          %v1404 = vpack.c.b16 %v1092, %v1068
          %v1405 = vpack.c.b16 %v1093, %v1069
          %v1406 = vpack.c.b16 %v1094, %v1070
          %v1407 = vpack.c.b16 %v1119, %v1095
          %v1408 = vpack.c.b16 %v1120, %v1096
          %v1409 = vpack.c.b16 %v1121, %v1097
          %v1410 = vpack.c.b16 %v1122, %v1098
          %v1411 = vpack.c.b16 %v1123, %v1099
          %v1412 = vpack.c.b16 %v1124, %v1100
          %v1413 = vpack.c.b16 %v1125, %v1101
          %v1414 = vpack.c.b16 %v1126, %v1102
          %v1415 = vpack.c.b16 %v1127, %v1103
          %v1416 = vpack.c.b16 %v1128, %v1104
          %v1417 = vpack.c.b16 %v1129, %v1105
          %v1418 = vpack.c.b16 %v1130, %v1106
          %v1419 = vpack.c.b16 %v1131, %v1107
          %v1420 = vpack.c.b16 %v1132, %v1108
          %v1421 = vpack.c.b16 %v1133, %v1109
          %v1422 = vpack.c.b16 %v1134, %v1110
          %v1423 = vpack.c.b16 %v1135, %v1111
          %v1424 = vpack.c.b16 %v1136, %v1112
          %v1425 = vpack.c.b16 %v1137, %v1113
          %v1426 = vpack.c.b16 %v1138, %v1114
          %v1427 = vpack.c.b16 %v1139, %v1115
          %v1428 = vpack.c.b16 %v1140, %v1116
          %v1429 = vpack.c.b16 %v1141, %v1117
          %v1430 = vpack.c.b16 %v1142, %v1118
          %v1431 = vpack.c.b16 %v1167, %v1143
          %v1432 = vpack.c.b16 %v1168, %v1144
          %v1433 = vpack.c.b16 %v1169, %v1145
          %v1434 = vpack.c.b16 %v1170, %v1146
          %v1435 = vpack.c.b16 %v1171, %v1147
          %v1436 = vpack.c.b16 %v1172, %v1148
          %v1437 = vpack.c.b16 %v1173, %v1149
          %v1438 = vpack.c.b16 %v1174, %v1150
          %v1439 = vpack.c.b16 %v1175, %v1151
          %v1440 = vpack.c.b16 %v1176, %v1152
          %v1441 = vpack.c.b16 %v1177, %v1153
          %v1442 = vpack.c.b16 %v1178, %v1154
          %v1443 = vpack.c.b16 %v1179, %v1155
          %v1444 = vpack.c.b16 %v1180, %v1156
          %v1445 = vpack.c.b16 %v1181, %v1157
          %v1446 = vpack.c.b16 %v1182, %v1158
          %v1447 = vpack.c.b16 %v1183, %v1159
          %v1448 = vpack.c.b16 %v1184, %v1160
          %v1449 = vpack.c.b16 %v1185, %v1161
          %v1450 = vpack.c.b16 %v1186, %v1162
          %v1451 = vpack.c.b16 %v1187, %v1163
          %v1452 = vpack.c.b16 %v1188, %v1164
          %v1453 = vpack.c.b16 %v1189, %v1165
          %v1454 = vpack.c.b16 %v1190, %v1166
          %v1455 = vpack.c.b16 %v1215, %v1191
          %v1456 = vpack.c.b16 %v1216, %v1192
          %v1457 = vpack.c.b16 %v1217, %v1193
          %v1458 = vpack.c.b16 %v1218, %v1194
          %v1459 = vpack.c.b16 %v1219, %v1195
          %v1460 = vpack.c.b16 %v1220, %v1196
          %v1461 = vpack.c.b16 %v1221, %v1197
          %v1462 = vpack.c.b16 %v1222, %v1198
          %v1463 = vpack.c.b16 %v1223, %v1199
          %v1464 = vpack.c.b16 %v1224, %v1200
          %v1465 = vpack.c.b16 %v1225, %v1201
          %v1466 = vpack.c.b16 %v1226, %v1202
          %v1467 = vpack.c.b16 %v1227, %v1203
          %v1468 = vpack.c.b16 %v1228, %v1204
          %v1469 = vpack.c.b16 %v1229, %v1205
          %v1470 = vpack.c.b16 %v1230, %v1206
          %v1471 = vpack.c.b16 %v1231, %v1207
          %v1472 = vpack.c.b16 %v1232, %v1208
          %v1473 = vpack.c.b16 %v1233, %v1209
          %v1474 = vpack.c.b16 %v1234, %v1210
          %v1475 = vpack.c.b16 %v1235, %v1211
          %v1476 = vpack.c.b16 %v1236, %v1212
          %v1477 = vpack.c.b16 %v1237, %v1213
          %v1478 = vpack.c.b16 %v1238, %v1214
          %v1479 = vpack.c.b16 %v1263, %v1239
          %v1480 = vpack.c.b16 %v1264, %v1240
          %v1481 = vpack.c.b16 %v1265, %v1241
          %v1482 = vpack.c.b16 %v1266, %v1242
          %v1483 = vpack.c.b16 %v1267, %v1243
          %v1484 = vpack.c.b16 %v1268, %v1244
          %v1485 = vpack.c.b16 %v1269, %v1245
          %v1486 = vpack.c.b16 %v1270, %v1246
          %v1487 = vpack.c.b16 %v1271, %v1247
          %v1488 = vpack.c.b16 %v1272, %v1248
          %v1489 = vpack.c.b16 %v1273, %v1249
          %v1490 = vpack.c.b16 %v1274, %v1250
          %v1491 = vpack.c.b16 %v1275, %v1251
          %v1492 = vpack.c.b16 %v1276, %v1252
          %v1493 = vpack.c.b16 %v1277, %v1253
          %v1494 = vpack.c.b16 %v1278, %v1254
          %v1495 = vpack.c.b16 %v1279, %v1255
          %v1496 = vpack.c.b16 %v1280, %v1256
          %v1497 = vpack.c.b16 %v1281, %v1257
          %v1498 = vpack.c.b16 %v1282, %v1258
          %v1499 = vpack.c.b16 %v1283, %v1259
          %v1500 = vpack.c.b16 %v1284, %v1260
          %v1501 = vpack.c.b16 %v1285, %v1261
          %v1502 = vpack.c.b16 %v1286, %v1262
          %v1503 = vpack.c.b16 %v1311, %v1287
          %v1504 = vpack.c.b16 %v1312, %v1288
          %v1505 = vpack.c.b16 %v1313, %v1289
          %v1506 = vpack.c.b16 %v1314, %v1290
          %v1507 = vpack.c.b16 %v1315, %v1291
          %v1508 = vpack.c.b16 %v1316, %v1292
          %v1509 = vpack.c.b16 %v1317, %v1293
          %v1510 = vpack.c.b16 %v1318, %v1294
          %v1511 = vpack.c.b16 %v1319, %v1295
          %v1512 = vpack.c.b16 %v1320, %v1296
          %v1513 = vpack.c.b16 %v1321, %v1297
          %v1514 = vpack.c.b16 %v1322, %v1298
          %v1515 = vpack.c.b16 %v1323, %v1299
          %v1516 = vpack.c.b16 %v1324, %v1300
          %v1517 = vpack.c.b16 %v1325, %v1301
          %v1518 = vpack.c.b16 %v1326, %v1302
          %v1519 = vpack.c.b16 %v1327, %v1303
          %v1520 = vpack.c.b16 %v1328, %v1304
          %v1521 = vpack.c.b16 %v1329, %v1305
          %v1522 = vpack.c.b16 %v1330, %v1306
          %v1523 = vpack.c.b16 %v1331, %v1307
          %v1524 = vpack.c.b16 %v1332, %v1308
          %v1525 = vpack.c.b16 %v1333, %v1309
          %v1526 = vpack.c.b16 %v1334, %v1310
          %1719 = vmatprep.subr.bf16.mxu0 %v1504
          %1720 = vmatpush1.bf16.msra.mxu0 %v1503
          %1721 = vmatprep.subr.bf16.mxu0 %v1480
          %1722 = vmatpush1.bf16.msra.mxu0 %v1479
          %1723 = vmatprep.subr.bf16.mxu0 %v1456
          %1724 = vmatpush1.bf16.msra.mxu0 %v1455
          %1725 = vmatprep.subr.bf16.mxu0 %v1432
          %1726 = vmatpush1.bf16.msra.mxu0 %v1431
          %1727 = vmatprep.subr.bf16.mxu0 %v1408
          %1728 = vmatpush1.bf16.msra.mxu0 %v1407
          %1729 = vmatprep.subr.bf16.mxu0 %v1384
          %1730 = vmatpush1.bf16.msra.mxu0 %v1383
          %1731 = vmatprep.subr.bf16.mxu0 %v1360
          %1732 = vmatpush1.bf16.msra.mxu0 %v1359
          %1733 = vmatprep.subr.bf16.mxu0 %v1336
          %1734 = vmatpush1.bf16.msra.mxu0 %v1335
          %1735 = vmatprep.subr.bf16.mxu0 0
          %1736 = vmatpush2.bf16.msra.mxu0 0
          %1737 = vmatprep.subr.bf16.mxu0 0
          %1738 = vmatpush2.bf16.msra.mxu0 0
          %1739 = vmatprep.subr.bf16.mxu0 0
          %1740 = vmatpush2.bf16.msra.mxu0 0
          %1741 = vmatprep.subr.bf16.mxu0 0
          %1742 = vmatpush2.bf16.msra.mxu0 0
          %1743 = vmatprep.subr.bf16.mxu0 0
          %1744 = vmatpush2.bf16.msra.mxu0 0
          %1745 = vmatprep.subr.bf16.mxu0 0
          %1746 = vmatpush2.bf16.msra.mxu0 0
          %1747 = vmatprep.subr.bf16.mxu0 0
          %1748 = vmatpush2.bf16.msra.mxu0 0
          %1749 = vmatprep.subr.bf16.mxu0 0
          %1750 = vmatpush2.bf16.msra.mxu0 0
          %1751 = vmatprep.mubr.bf16.mxu0 0
          %1752 = vmatmul.mubr.bf16.gmra.mxu0 %v440
          %v1753 = vpop.f32.mrf.mxu0
          %v1754 = vadd.f32 %v642, %v1753
          %v1755 = vpop.f32.mrf.mxu0
          %v1756 = vadd.f32 %v646, %v1755
          %v1757 = vpop.f32.mrf.mxu0
          %v1758 = vpop.f32.mrf.mxu0
          %1759 = vdwg.mxu0
          %1760 = vmatprep.subr.bf16.mxu0 %v1506
          %1761 = vmatpush1.bf16.msra.mxu0 %v1505
          %1762 = vmatprep.subr.bf16.mxu0 %v1482
          %1763 = vmatpush1.bf16.msra.mxu0 %v1481
          %1764 = vmatprep.subr.bf16.mxu0 %v1458
          %1765 = vmatpush1.bf16.msra.mxu0 %v1457
          %1766 = vmatprep.subr.bf16.mxu0 %v1434
          %1767 = vmatpush1.bf16.msra.mxu0 %v1433
          %1768 = vmatprep.subr.bf16.mxu0 %v1410
          %1769 = vmatpush1.bf16.msra.mxu0 %v1409
          %1770 = vmatprep.subr.bf16.mxu0 %v1386
          %1771 = vmatpush1.bf16.msra.mxu0 %v1385
          %1772 = vmatprep.subr.bf16.mxu0 %v1362
          %1773 = vmatpush1.bf16.msra.mxu0 %v1361
          %1774 = vmatprep.subr.bf16.mxu0 %v1338
          %1775 = vmatpush1.bf16.msra.mxu0 %v1337
          %1776 = vmatprep.subr.bf16.mxu0 0
          %1777 = vmatpush2.bf16.msra.mxu0 0
          %1778 = vmatprep.subr.bf16.mxu0 0
          %1779 = vmatpush2.bf16.msra.mxu0 0
          %1780 = vmatprep.subr.bf16.mxu0 0
          %1781 = vmatpush2.bf16.msra.mxu0 0
          %1782 = vmatprep.subr.bf16.mxu0 0
          %1783 = vmatpush2.bf16.msra.mxu0 0
          %1784 = vmatprep.subr.bf16.mxu0 0
          %1785 = vmatpush2.bf16.msra.mxu0 0
          %1786 = vmatprep.subr.bf16.mxu0 0
          %1787 = vmatpush2.bf16.msra.mxu0 0
          %1788 = vmatprep.subr.bf16.mxu0 0
          %1789 = vmatpush2.bf16.msra.mxu0 0
          %1790 = vmatprep.subr.bf16.mxu0 0
          %1791 = vmatpush2.bf16.msra.mxu0 0
          %1792 = vmatprep.mubr.bf16.mxu0 0
          %1793 = vmatmul.mubr.bf16.gmra.mxu0 %v440
          %v1794 = vpop.f32.mrf.mxu0
          %v1795 = vadd.f32 %v650, %v1794
          %v1796 = vpop.f32.mrf.mxu0
          %v1797 = vadd.f32 %v654, %v1796
          %v1798 = vpop.f32.mrf.mxu0
          %v1799 = vpop.f32.mrf.mxu0
          %1800 = vdwg.mxu0
          %1801 = vmatprep.subr.bf16.mxu0 %v1508
          %1802 = vmatpush1.bf16.msra.mxu0 %v1507
          %1803 = vmatprep.subr.bf16.mxu0 %v1484
          %1804 = vmatpush1.bf16.msra.mxu0 %v1483
          %1805 = vmatprep.subr.bf16.mxu0 %v1460
          %1806 = vmatpush1.bf16.msra.mxu0 %v1459
          %1807 = vmatprep.subr.bf16.mxu0 %v1436
          %1808 = vmatpush1.bf16.msra.mxu0 %v1435
          %1809 = vmatprep.subr.bf16.mxu0 %v1412
          %1810 = vmatpush1.bf16.msra.mxu0 %v1411
          %1811 = vmatprep.subr.bf16.mxu0 %v1388
          %1812 = vmatpush1.bf16.msra.mxu0 %v1387
          %1813 = vmatprep.subr.bf16.mxu0 %v1364
          %1814 = vmatpush1.bf16.msra.mxu0 %v1363
          %1815 = vmatprep.subr.bf16.mxu0 %v1340
          %1816 = vmatpush1.bf16.msra.mxu0 %v1339
          %1817 = vmatprep.subr.bf16.mxu0 0
          %1818 = vmatpush2.bf16.msra.mxu0 0
          %1819 = vmatprep.subr.bf16.mxu0 0
          %1820 = vmatpush2.bf16.msra.mxu0 0
          %1821 = vmatprep.subr.bf16.mxu0 0
          %1822 = vmatpush2.bf16.msra.mxu0 0
          %1823 = vmatprep.subr.bf16.mxu0 0
          %1824 = vmatpush2.bf16.msra.mxu0 0
          %1825 = vmatprep.subr.bf16.mxu0 0
          %1826 = vmatpush2.bf16.msra.mxu0 0
          %1827 = vmatprep.subr.bf16.mxu0 0
          %1828 = vmatpush2.bf16.msra.mxu0 0
          %1829 = vmatprep.subr.bf16.mxu0 0
          %1830 = vmatpush2.bf16.msra.mxu0 0
          %1831 = vmatprep.subr.bf16.mxu0 0
          %1832 = vmatpush2.bf16.msra.mxu0 0
          %1833 = vmatprep.mubr.bf16.mxu0 0
          %1834 = vmatmul.mubr.bf16.gmra.mxu0 %v440
          %v1835 = vpop.f32.mrf.mxu0
          %v1836 = vadd.f32 %v658, %v1835
          %v1837 = vpop.f32.mrf.mxu0
          %v1838 = vadd.f32 %v662, %v1837
          %v1839 = vpop.f32.mrf.mxu0
          %v1840 = vpop.f32.mrf.mxu0
          %1841 = vdwg.mxu0
          %1842 = vmatprep.subr.bf16.mxu0 %v1510
          %1843 = vmatpush1.bf16.msra.mxu0 %v1509
          %1844 = vmatprep.subr.bf16.mxu0 %v1486
          %1845 = vmatpush1.bf16.msra.mxu0 %v1485
          %1846 = vmatprep.subr.bf16.mxu0 %v1462
          %1847 = vmatpush1.bf16.msra.mxu0 %v1461
          %1848 = vmatprep.subr.bf16.mxu0 %v1438
          %1849 = vmatpush1.bf16.msra.mxu0 %v1437
          %1850 = vmatprep.subr.bf16.mxu0 %v1414
          %1851 = vmatpush1.bf16.msra.mxu0 %v1413
          %1852 = vmatprep.subr.bf16.mxu0 %v1390
          %1853 = vmatpush1.bf16.msra.mxu0 %v1389
          %1854 = vmatprep.subr.bf16.mxu0 %v1366
          %1855 = vmatpush1.bf16.msra.mxu0 %v1365
          %1856 = vmatprep.subr.bf16.mxu0 %v1342
          %1857 = vmatpush1.bf16.msra.mxu0 %v1341
          %1858 = vmatprep.subr.bf16.mxu0 0
          %1859 = vmatpush2.bf16.msra.mxu0 0
          %1860 = vmatprep.subr.bf16.mxu0 0
          %1861 = vmatpush2.bf16.msra.mxu0 0
          %1862 = vmatprep.subr.bf16.mxu0 0
          %1863 = vmatpush2.bf16.msra.mxu0 0
          %1864 = vmatprep.subr.bf16.mxu0 0
          %1865 = vmatpush2.bf16.msra.mxu0 0
          %1866 = vmatprep.subr.bf16.mxu0 0
          %1867 = vmatpush2.bf16.msra.mxu0 0
          %1868 = vmatprep.subr.bf16.mxu0 0
          %1869 = vmatpush2.bf16.msra.mxu0 0
          %1870 = vmatprep.subr.bf16.mxu0 0
          %1871 = vmatpush2.bf16.msra.mxu0 0
          %1872 = vmatprep.subr.bf16.mxu0 0
          %1873 = vmatpush2.bf16.msra.mxu0 0
          %1874 = vmatprep.mubr.bf16.mxu0 0
          %1875 = vmatmul.mubr.bf16.gmra.mxu0 %v440
          %v1876 = vpop.f32.mrf.mxu0
          %v1877 = vadd.f32 %v666, %v1876
          %v1878 = vpop.f32.mrf.mxu0
          %v1879 = vadd.f32 %v670, %v1878
          %v1880 = vpop.f32.mrf.mxu0
          %v1881 = vpop.f32.mrf.mxu0
          %1882 = vdwg.mxu0
          %1883 = vmatprep.subr.bf16.mxu0 %v1512
          %1884 = vmatpush1.bf16.msra.mxu0 %v1511
          %1885 = vmatprep.subr.bf16.mxu0 %v1488
          %1886 = vmatpush1.bf16.msra.mxu0 %v1487
          %1887 = vmatprep.subr.bf16.mxu0 %v1464
          %1888 = vmatpush1.bf16.msra.mxu0 %v1463
          %1889 = vmatprep.subr.bf16.mxu0 %v1440
          %1890 = vmatpush1.bf16.msra.mxu0 %v1439
          %1891 = vmatprep.subr.bf16.mxu0 %v1416
          %1892 = vmatpush1.bf16.msra.mxu0 %v1415
          %1893 = vmatprep.subr.bf16.mxu0 %v1392
          %1894 = vmatpush1.bf16.msra.mxu0 %v1391
          %1895 = vmatprep.subr.bf16.mxu0 %v1368
          %1896 = vmatpush1.bf16.msra.mxu0 %v1367
          %1897 = vmatprep.subr.bf16.mxu0 %v1344
          %1898 = vmatpush1.bf16.msra.mxu0 %v1343
          %1899 = vmatprep.subr.bf16.mxu0 0
          %1900 = vmatpush2.bf16.msra.mxu0 0
          %1901 = vmatprep.subr.bf16.mxu0 0
          %1902 = vmatpush2.bf16.msra.mxu0 0
          %1903 = vmatprep.subr.bf16.mxu0 0
          %1904 = vmatpush2.bf16.msra.mxu0 0
          %1905 = vmatprep.subr.bf16.mxu0 0
          %1906 = vmatpush2.bf16.msra.mxu0 0
          %1907 = vmatprep.subr.bf16.mxu0 0
          %1908 = vmatpush2.bf16.msra.mxu0 0
          %1909 = vmatprep.subr.bf16.mxu0 0
          %1910 = vmatpush2.bf16.msra.mxu0 0
          %1911 = vmatprep.subr.bf16.mxu0 0
          %1912 = vmatpush2.bf16.msra.mxu0 0
          %1913 = vmatprep.subr.bf16.mxu0 0
          %1914 = vmatpush2.bf16.msra.mxu0 0
          %1915 = vmatprep.mubr.bf16.mxu0 0
          %1916 = vmatmul.mubr.bf16.gmra.mxu0 %v440
          %v1917 = vpop.f32.mrf.mxu0
          %v1918 = vadd.f32 %v674, %v1917
          %v1919 = vpop.f32.mrf.mxu0
          %v1920 = vadd.f32 %v678, %v1919
          %v1921 = vpop.f32.mrf.mxu0
          %v1922 = vpop.f32.mrf.mxu0
          %1923 = vdwg.mxu0
          %1924 = vmatprep.subr.bf16.mxu0 %v1514
          %1925 = vmatpush1.bf16.msra.mxu0 %v1513
          %1926 = vmatprep.subr.bf16.mxu0 %v1490
          %1927 = vmatpush1.bf16.msra.mxu0 %v1489
          %1928 = vmatprep.subr.bf16.mxu0 %v1466
          %1929 = vmatpush1.bf16.msra.mxu0 %v1465
          %1930 = vmatprep.subr.bf16.mxu0 %v1442
          %1931 = vmatpush1.bf16.msra.mxu0 %v1441
          %1932 = vmatprep.subr.bf16.mxu0 %v1418
          %1933 = vmatpush1.bf16.msra.mxu0 %v1417
          %1934 = vmatprep.subr.bf16.mxu0 %v1394
          %1935 = vmatpush1.bf16.msra.mxu0 %v1393
          %1936 = vmatprep.subr.bf16.mxu0 %v1370
          %1937 = vmatpush1.bf16.msra.mxu0 %v1369
          %1938 = vmatprep.subr.bf16.mxu0 %v1346
          %1939 = vmatpush1.bf16.msra.mxu0 %v1345
          %1940 = vmatprep.subr.bf16.mxu0 0
          %1941 = vmatpush2.bf16.msra.mxu0 0
          %1942 = vmatprep.subr.bf16.mxu0 0
          %1943 = vmatpush2.bf16.msra.mxu0 0
          %1944 = vmatprep.subr.bf16.mxu0 0
          %1945 = vmatpush2.bf16.msra.mxu0 0
          %1946 = vmatprep.subr.bf16.mxu0 0
          %1947 = vmatpush2.bf16.msra.mxu0 0
          %1948 = vmatprep.subr.bf16.mxu0 0
          %1949 = vmatpush2.bf16.msra.mxu0 0
          %1950 = vmatprep.subr.bf16.mxu0 0
          %1951 = vmatpush2.bf16.msra.mxu0 0
          %1952 = vmatprep.subr.bf16.mxu0 0
          %1953 = vmatpush2.bf16.msra.mxu0 0
          %1954 = vmatprep.subr.bf16.mxu0 0
          %1955 = vmatpush2.bf16.msra.mxu0 0
          %1956 = vmatprep.mubr.bf16.mxu0 0
          %1957 = vmatmul.mubr.bf16.gmra.mxu0 %v440
          %v1958 = vpop.f32.mrf.mxu0
          %v1959 = vadd.f32 %v682, %v1958
          %v1960 = vpop.f32.mrf.mxu0
          %v1961 = vadd.f32 %v686, %v1960
          %v1962 = vpop.f32.mrf.mxu0
          %v1963 = vpop.f32.mrf.mxu0
          %1964 = vdwg.mxu0
          %1965 = vmatprep.subr.bf16.mxu0 %v1516
          %1966 = vmatpush1.bf16.msra.mxu0 %v1515
          %1967 = vmatprep.subr.bf16.mxu0 %v1492
          %1968 = vmatpush1.bf16.msra.mxu0 %v1491
          %1969 = vmatprep.subr.bf16.mxu0 %v1468
          %1970 = vmatpush1.bf16.msra.mxu0 %v1467
          %1971 = vmatprep.subr.bf16.mxu0 %v1444
          %1972 = vmatpush1.bf16.msra.mxu0 %v1443
          %1973 = vmatprep.subr.bf16.mxu0 %v1420
          %1974 = vmatpush1.bf16.msra.mxu0 %v1419
          %1975 = vmatprep.subr.bf16.mxu0 %v1396
          %1976 = vmatpush1.bf16.msra.mxu0 %v1395
          %1977 = vmatprep.subr.bf16.mxu0 %v1372
          %1978 = vmatpush1.bf16.msra.mxu0 %v1371
          %1979 = vmatprep.subr.bf16.mxu0 %v1348
          %1980 = vmatpush1.bf16.msra.mxu0 %v1347
          %1981 = vmatprep.subr.bf16.mxu0 0
          %1982 = vmatpush2.bf16.msra.mxu0 0
          %1983 = vmatprep.subr.bf16.mxu0 0
          %1984 = vmatpush2.bf16.msra.mxu0 0
          %1985 = vmatprep.subr.bf16.mxu0 0
          %1986 = vmatpush2.bf16.msra.mxu0 0
          %1987 = vmatprep.subr.bf16.mxu0 0
          %1988 = vmatpush2.bf16.msra.mxu0 0
          %1989 = vmatprep.subr.bf16.mxu0 0
          %1990 = vmatpush2.bf16.msra.mxu0 0
          %1991 = vmatprep.subr.bf16.mxu0 0
          %1992 = vmatpush2.bf16.msra.mxu0 0
          %1993 = vmatprep.subr.bf16.mxu0 0
          %1994 = vmatpush2.bf16.msra.mxu0 0
          %1995 = vmatprep.subr.bf16.mxu0 0
          %1996 = vmatpush2.bf16.msra.mxu0 0
          %1997 = vmatprep.mubr.bf16.mxu0 0
          %1998 = vmatmul.mubr.bf16.gmra.mxu0 %v440
          %v1999 = vpop.f32.mrf.mxu0
          %v2000 = vadd.f32 %v690, %v1999
          %v2001 = vpop.f32.mrf.mxu0
          %v2002 = vadd.f32 %v694, %v2001
          %v2003 = vpop.f32.mrf.mxu0
          %v2004 = vpop.f32.mrf.mxu0
          %2005 = vdwg.mxu0
          %2006 = vmatprep.subr.bf16.mxu0 %v1518
          %2007 = vmatpush1.bf16.msra.mxu0 %v1517
          %2008 = vmatprep.subr.bf16.mxu0 %v1494
          %2009 = vmatpush1.bf16.msra.mxu0 %v1493
          %2010 = vmatprep.subr.bf16.mxu0 %v1470
          %2011 = vmatpush1.bf16.msra.mxu0 %v1469
          %2012 = vmatprep.subr.bf16.mxu0 %v1446
          %2013 = vmatpush1.bf16.msra.mxu0 %v1445
          %2014 = vmatprep.subr.bf16.mxu0 %v1422
          %2015 = vmatpush1.bf16.msra.mxu0 %v1421
          %2016 = vmatprep.subr.bf16.mxu0 %v1398
          %2017 = vmatpush1.bf16.msra.mxu0 %v1397
          %2018 = vmatprep.subr.bf16.mxu0 %v1374
          %2019 = vmatpush1.bf16.msra.mxu0 %v1373
          %2020 = vmatprep.subr.bf16.mxu0 %v1350
          %2021 = vmatpush1.bf16.msra.mxu0 %v1349
          %2022 = vmatprep.subr.bf16.mxu0 0
          %2023 = vmatpush2.bf16.msra.mxu0 0
          %2024 = vmatprep.subr.bf16.mxu0 0
          %2025 = vmatpush2.bf16.msra.mxu0 0
          %2026 = vmatprep.subr.bf16.mxu0 0
          %2027 = vmatpush2.bf16.msra.mxu0 0
          %2028 = vmatprep.subr.bf16.mxu0 0
          %2029 = vmatpush2.bf16.msra.mxu0 0
          %2030 = vmatprep.subr.bf16.mxu0 0
          %2031 = vmatpush2.bf16.msra.mxu0 0
          %2032 = vmatprep.subr.bf16.mxu0 0
          %2033 = vmatpush2.bf16.msra.mxu0 0
          %2034 = vmatprep.subr.bf16.mxu0 0
          %2035 = vmatpush2.bf16.msra.mxu0 0
          %2036 = vmatprep.subr.bf16.mxu0 0
          %2037 = vmatpush2.bf16.msra.mxu0 0
          %2038 = vmatprep.mubr.bf16.mxu0 0
          %2039 = vmatmul.mubr.bf16.gmra.mxu0 %v440
          %v2040 = vpop.f32.mrf.mxu0
          %v2041 = vadd.f32 %v698, %v2040
          %v2042 = vpop.f32.mrf.mxu0
          %v2043 = vadd.f32 %v702, %v2042
          %v2044 = vpop.f32.mrf.mxu0
          %v2045 = vpop.f32.mrf.mxu0
          %2046 = vdwg.mxu0
          %2047 = vmatprep.subr.bf16.mxu0 %v1520
          %2048 = vmatpush1.bf16.msra.mxu0 %v1519
          %2049 = vmatprep.subr.bf16.mxu0 %v1496
          %2050 = vmatpush1.bf16.msra.mxu0 %v1495
          %2051 = vmatprep.subr.bf16.mxu0 %v1472
          %2052 = vmatpush1.bf16.msra.mxu0 %v1471
          %2053 = vmatprep.subr.bf16.mxu0 %v1448
          %2054 = vmatpush1.bf16.msra.mxu0 %v1447
          %2055 = vmatprep.subr.bf16.mxu0 %v1424
          %2056 = vmatpush1.bf16.msra.mxu0 %v1423
          %2057 = vmatprep.subr.bf16.mxu0 %v1400
          %2058 = vmatpush1.bf16.msra.mxu0 %v1399
          %2059 = vmatprep.subr.bf16.mxu0 %v1376
          %2060 = vmatpush1.bf16.msra.mxu0 %v1375
          %2061 = vmatprep.subr.bf16.mxu0 %v1352
          %2062 = vmatpush1.bf16.msra.mxu0 %v1351
          %2063 = vmatprep.subr.bf16.mxu0 0
          %2064 = vmatpush2.bf16.msra.mxu0 0
          %2065 = vmatprep.subr.bf16.mxu0 0
          %2066 = vmatpush2.bf16.msra.mxu0 0
          %2067 = vmatprep.subr.bf16.mxu0 0
          %2068 = vmatpush2.bf16.msra.mxu0 0
          %2069 = vmatprep.subr.bf16.mxu0 0
          %2070 = vmatpush2.bf16.msra.mxu0 0
          %2071 = vmatprep.subr.bf16.mxu0 0
          %2072 = vmatpush2.bf16.msra.mxu0 0
          %2073 = vmatprep.subr.bf16.mxu0 0
          %2074 = vmatpush2.bf16.msra.mxu0 0
          %2075 = vmatprep.subr.bf16.mxu0 0
          %2076 = vmatpush2.bf16.msra.mxu0 0
          %2077 = vmatprep.subr.bf16.mxu0 0
          %2078 = vmatpush2.bf16.msra.mxu0 0
          %2079 = vmatprep.mubr.bf16.mxu0 0
          %2080 = vmatmul.mubr.bf16.gmra.mxu0 %v440
          %v2081 = vpop.f32.mrf.mxu0
          %v2082 = vadd.f32 %v706, %v2081
          %v2083 = vpop.f32.mrf.mxu0
          %v2084 = vadd.f32 %v710, %v2083
          %v2085 = vpop.f32.mrf.mxu0
          %v2086 = vpop.f32.mrf.mxu0
          %2087 = vdwg.mxu0
          %2088 = vmatprep.subr.bf16.mxu0 %v1522
          %2089 = vmatpush1.bf16.msra.mxu0 %v1521
          %2090 = vmatprep.subr.bf16.mxu0 %v1498
          %2091 = vmatpush1.bf16.msra.mxu0 %v1497
          %2092 = vmatprep.subr.bf16.mxu0 %v1474
          %2093 = vmatpush1.bf16.msra.mxu0 %v1473
          %2094 = vmatprep.subr.bf16.mxu0 %v1450
          %2095 = vmatpush1.bf16.msra.mxu0 %v1449
          %2096 = vmatprep.subr.bf16.mxu0 %v1426
          %2097 = vmatpush1.bf16.msra.mxu0 %v1425
          %2098 = vmatprep.subr.bf16.mxu0 %v1402
          %2099 = vmatpush1.bf16.msra.mxu0 %v1401
          %2100 = vmatprep.subr.bf16.mxu0 %v1378
          %2101 = vmatpush1.bf16.msra.mxu0 %v1377
          %2102 = vmatprep.subr.bf16.mxu0 %v1354
          %2103 = vmatpush1.bf16.msra.mxu0 %v1353
          %2104 = vmatprep.subr.bf16.mxu0 0
          %2105 = vmatpush2.bf16.msra.mxu0 0
          %2106 = vmatprep.subr.bf16.mxu0 0
          %2107 = vmatpush2.bf16.msra.mxu0 0
          %2108 = vmatprep.subr.bf16.mxu0 0
          %2109 = vmatpush2.bf16.msra.mxu0 0
          %2110 = vmatprep.subr.bf16.mxu0 0
          %2111 = vmatpush2.bf16.msra.mxu0 0
          %2112 = vmatprep.subr.bf16.mxu0 0
          %2113 = vmatpush2.bf16.msra.mxu0 0
          %2114 = vmatprep.subr.bf16.mxu0 0
          %2115 = vmatpush2.bf16.msra.mxu0 0
          %2116 = vmatprep.subr.bf16.mxu0 0
          %2117 = vmatpush2.bf16.msra.mxu0 0
          %2118 = vmatprep.subr.bf16.mxu0 0
          %2119 = vmatpush2.bf16.msra.mxu0 0
          %2120 = vmatprep.mubr.bf16.mxu0 0
          %2121 = vmatmul.mubr.bf16.gmra.mxu0 %v440
          %v2122 = vpop.f32.mrf.mxu0
          %v2123 = vadd.f32 %v714, %v2122
          %v2124 = vpop.f32.mrf.mxu0
          %v2125 = vadd.f32 %v718, %v2124
          %v2126 = vpop.f32.mrf.mxu0
          %v2127 = vpop.f32.mrf.mxu0
          %2128 = vdwg.mxu0
          %2129 = vmatprep.subr.bf16.mxu0 %v1524
          %2130 = vmatpush1.bf16.msra.mxu0 %v1523
          %2131 = vmatprep.subr.bf16.mxu0 %v1500
          %2132 = vmatpush1.bf16.msra.mxu0 %v1499
          %2133 = vmatprep.subr.bf16.mxu0 %v1476
          %2134 = vmatpush1.bf16.msra.mxu0 %v1475
          %2135 = vmatprep.subr.bf16.mxu0 %v1452
          %2136 = vmatpush1.bf16.msra.mxu0 %v1451
          %2137 = vmatprep.subr.bf16.mxu0 %v1428
          %2138 = vmatpush1.bf16.msra.mxu0 %v1427
          %2139 = vmatprep.subr.bf16.mxu0 %v1404
          %2140 = vmatpush1.bf16.msra.mxu0 %v1403
          %2141 = vmatprep.subr.bf16.mxu0 %v1380
          %2142 = vmatpush1.bf16.msra.mxu0 %v1379
          %2143 = vmatprep.subr.bf16.mxu0 %v1356
          %2144 = vmatpush1.bf16.msra.mxu0 %v1355
          %2145 = vmatprep.subr.bf16.mxu0 0
          %2146 = vmatpush2.bf16.msra.mxu0 0
          %2147 = vmatprep.subr.bf16.mxu0 0
          %2148 = vmatpush2.bf16.msra.mxu0 0
          %2149 = vmatprep.subr.bf16.mxu0 0
          %2150 = vmatpush2.bf16.msra.mxu0 0
          %2151 = vmatprep.subr.bf16.mxu0 0
          %2152 = vmatpush2.bf16.msra.mxu0 0
          %2153 = vmatprep.subr.bf16.mxu0 0
          %2154 = vmatpush2.bf16.msra.mxu0 0
          %2155 = vmatprep.subr.bf16.mxu0 0
          %2156 = vmatpush2.bf16.msra.mxu0 0
          %2157 = vmatprep.subr.bf16.mxu0 0
          %2158 = vmatpush2.bf16.msra.mxu0 0
          %2159 = vmatprep.subr.bf16.mxu0 0
          %2160 = vmatpush2.bf16.msra.mxu0 0
          %2161 = vmatprep.mubr.bf16.mxu0 0
          %2162 = vmatmul.mubr.bf16.gmra.mxu0 %v440
          %v2163 = vpop.f32.mrf.mxu0
          %v2164 = vadd.f32 %v722, %v2163
          %v2165 = vpop.f32.mrf.mxu0
          %v2166 = vadd.f32 %v726, %v2165
          %v2167 = vpop.f32.mrf.mxu0
          %v2168 = vpop.f32.mrf.mxu0
          %2169 = vdwg.mxu0
          %2170 = vmatprep.subr.bf16.mxu0 %v1526
          %2171 = vmatpush1.bf16.msra.mxu0 %v1525
          %2172 = vmatprep.subr.bf16.mxu0 %v1502
          %2173 = vmatpush1.bf16.msra.mxu0 %v1501
          %2174 = vmatprep.subr.bf16.mxu0 %v1478
          %2175 = vmatpush1.bf16.msra.mxu0 %v1477
          %2176 = vmatprep.subr.bf16.mxu0 %v1454
          %2177 = vmatpush1.bf16.msra.mxu0 %v1453
          %2178 = vmatprep.subr.bf16.mxu0 %v1430
          %2179 = vmatpush1.bf16.msra.mxu0 %v1429
          %2180 = vmatprep.subr.bf16.mxu0 %v1406
          %2181 = vmatpush1.bf16.msra.mxu0 %v1405
          %2182 = vmatprep.subr.bf16.mxu0 %v1382
          %2183 = vmatpush1.bf16.msra.mxu0 %v1381
          %2184 = vmatprep.subr.bf16.mxu0 %v1358
          %2185 = vmatpush1.bf16.msra.mxu0 %v1357
          %2186 = vmatprep.subr.bf16.mxu0 0
          %2187 = vmatpush2.bf16.msra.mxu0 0
          %2188 = vmatprep.subr.bf16.mxu0 0
          %2189 = vmatpush2.bf16.msra.mxu0 0
          %2190 = vmatprep.subr.bf16.mxu0 0
          %2191 = vmatpush2.bf16.msra.mxu0 0
          %2192 = vmatprep.subr.bf16.mxu0 0
          %2193 = vmatpush2.bf16.msra.mxu0 0
          %2194 = vmatprep.subr.bf16.mxu0 0
          %2195 = vmatpush2.bf16.msra.mxu0 0
          %2196 = vmatprep.subr.bf16.mxu0 0
          %2197 = vmatpush2.bf16.msra.mxu0 0
          %2198 = vmatprep.subr.bf16.mxu0 0
          %2199 = vmatpush2.bf16.msra.mxu0 0
          %2200 = vmatprep.subr.bf16.mxu0 0
          %2201 = vmatpush2.bf16.msra.mxu0 0
          %2202 = vmatprep.mubr.bf16.mxu0 0
          %2203 = vmatmul.mubr.bf16.gmra.mxu0 %v440
          %v2204 = vpop.f32.mrf.mxu0
          %v2205 = vadd.f32 %v730, %v2204
          %v2206 = vpop.f32.mrf.mxu0
          %v2207 = vadd.f32 %v734, %v2206
          %v2208 = vpop.f32.mrf.mxu0
          %v2209 = vpop.f32.mrf.mxu0
          %2210 = vdwg.mxu0
          %v2211 = vmax.f32 %v1754, 0.0
          %v2212 = vmax.f32 %v1756, 0.0
          %v2213 = vmax.f32 %v1795, 0.0
          %v2214 = vmax.f32 %v1797, 0.0
          %v2215 = vmax.f32 %v1836, 0.0
          %v2216 = vmax.f32 %v1838, 0.0
          %v2217 = vmax.f32 %v1877, 0.0
          %v2218 = vmax.f32 %v1879, 0.0
          %v2219 = vmax.f32 %v1918, 0.0
          %v2220 = vmax.f32 %v1920, 0.0
          %v2221 = vmax.f32 %v1959, 0.0
          %v2222 = vmax.f32 %v1961, 0.0
          %v2223 = vmax.f32 %v2000, 0.0
          %v2224 = vmax.f32 %v2002, 0.0
          %v2225 = vmax.f32 %v2041, 0.0
          %v2226 = vmax.f32 %v2043, 0.0
          %v2227 = vmax.f32 %v2082, 0.0
          %v2228 = vmax.f32 %v2084, 0.0
          %v2229 = vmax.f32 %v2123, 0.0
          %v2230 = vmax.f32 %v2125, 0.0
          %v2231 = vmax.f32 %v2164, 0.0
          %v2232 = vmax.f32 %v2166, 0.0
          %v2233 = vmax.f32 %v2205, 0.0
          %v2234 = vmax.f32 %v2207, 0.0
          %v2235 = vpack.c.bf16 %v2211, %v2211
          %v2236 = vpack.c.bf16 %v2212, %v2212
          %v2237 = vpack.c.bf16 %v2213, %v2213
          %v2238 = vpack.c.bf16 %v2214, %v2214
          %v2239 = vpack.c.bf16 %v2215, %v2215
          %v2240 = vpack.c.bf16 %v2216, %v2216
          %v2241 = vpack.c.bf16 %v2217, %v2217
          %v2242 = vpack.c.bf16 %v2218, %v2218
          %v2243 = vpack.c.bf16 %v2219, %v2219
          %v2244 = vpack.c.bf16 %v2220, %v2220
          %v2245 = vpack.c.bf16 %v2221, %v2221
          %v2246 = vpack.c.bf16 %v2222, %v2222
          %v2247 = vpack.c.bf16 %v2223, %v2223
          %v2248 = vpack.c.bf16 %v2224, %v2224
          %v2249 = vpack.c.bf16 %v2225, %v2225
          %v2250 = vpack.c.bf16 %v2226, %v2226
          %v2251 = vpack.c.bf16 %v2227, %v2227
          %v2252 = vpack.c.bf16 %v2228, %v2228
          %v2253 = vpack.c.bf16 %v2229, %v2229
          %v2254 = vpack.c.bf16 %v2230, %v2230
          %v2255 = vpack.c.bf16 %v2231, %v2231
          %v2256 = vpack.c.bf16 %v2232, %v2232
          %v2257 = vpack.c.bf16 %v2233, %v2233
          %v2258 = vpack.c.bf16 %v2234, %v2234
          %v2283 = vcombine.low %v2235, %v2236
          %v2284 = vcombine.low %v2237, %v2238
          %v2286 = vunpack.c.l.s4 1983009808
          %v2287 = vunpack.c.0.s8 %v2286
          %v2288 = vlaneseq
          %v2289 = vshrl.u32 %v2288, 7
          %v2290 = vsub.s32 %v2287, %v2289
          %v2291 = vrot.slane %v2283, %v2290
          %v2293 = vunpack.c.l.s4 1983009808
          %v2294 = vunpack.c.0.s8 %v2293
          %v2295 = vlaneseq
          %v2296 = vshrl.u32 %v2295, 7
          %v2297 = vsub.s32 %v2294, %v2296
          %v2298 = vrot.slane %v2284, %v2297
          %v2299 = vcombine.low %v2291, %v2298
          %v2300 = vcombine.low %v2239, %v2240
          %v2301 = vcombine.low %v2241, %v2242
          %v2303 = vunpack.c.l.s4 1983009808
          %v2304 = vunpack.c.0.s8 %v2303
          %v2305 = vlaneseq
          %v2306 = vshrl.u32 %v2305, 7
          %v2307 = vsub.s32 %v2304, %v2306
          %v2308 = vrot.slane %v2300, %v2307
          %v2310 = vunpack.c.l.s4 1983009808
          %v2311 = vunpack.c.0.s8 %v2310
          %v2312 = vlaneseq
          %v2313 = vshrl.u32 %v2312, 7
          %v2314 = vsub.s32 %v2311, %v2313
          %v2315 = vrot.slane %v2301, %v2314
          %v2316 = vcombine.low %v2308, %v2315
          %v2317 = vcombine.low %v2243, %v2244
          %v2318 = vcombine.low %v2245, %v2246
          %v2320 = vunpack.c.l.s4 1983009808
          %v2321 = vunpack.c.0.s8 %v2320
          %v2322 = vlaneseq
          %v2323 = vshrl.u32 %v2322, 7
          %v2324 = vsub.s32 %v2321, %v2323
          %v2325 = vrot.slane %v2317, %v2324
          %v2327 = vunpack.c.l.s4 1983009808
          %v2328 = vunpack.c.0.s8 %v2327
          %v2329 = vlaneseq
          %v2330 = vshrl.u32 %v2329, 7
          %v2331 = vsub.s32 %v2328, %v2330
          %v2332 = vrot.slane %v2318, %v2331
          %v2333 = vcombine.low %v2325, %v2332
          %v2334 = vcombine.low %v2247, %v2248
          %v2335 = vcombine.low %v2249, %v2250
          %v2337 = vunpack.c.l.s4 1983009808
          %v2338 = vunpack.c.0.s8 %v2337
          %v2339 = vlaneseq
          %v2340 = vshrl.u32 %v2339, 7
          %v2341 = vsub.s32 %v2338, %v2340
          %v2342 = vrot.slane %v2334, %v2341
          %v2344 = vunpack.c.l.s4 1983009808
          %v2345 = vunpack.c.0.s8 %v2344
          %v2346 = vlaneseq
          %v2347 = vshrl.u32 %v2346, 7
          %v2348 = vsub.s32 %v2345, %v2347
          %v2349 = vrot.slane %v2335, %v2348
          %v2350 = vcombine.low %v2342, %v2349
          %v2351 = vcombine.low %v2251, %v2252
          %v2352 = vcombine.low %v2253, %v2254
          %v2354 = vunpack.c.l.s4 1983009808
          %v2355 = vunpack.c.0.s8 %v2354
          %v2356 = vlaneseq
          %v2357 = vshrl.u32 %v2356, 7
          %v2358 = vsub.s32 %v2355, %v2357
          %v2359 = vrot.slane %v2351, %v2358
          %v2361 = vunpack.c.l.s4 1983009808
          %v2362 = vunpack.c.0.s8 %v2361
          %v2363 = vlaneseq
          %v2364 = vshrl.u32 %v2363, 7
          %v2365 = vsub.s32 %v2362, %v2364
          %v2366 = vrot.slane %v2352, %v2365
          %v2367 = vcombine.low %v2359, %v2366
          %v2368 = vcombine.low %v2255, %v2256
          %v2369 = vcombine.low %v2257, %v2258
          %v2371 = vunpack.c.l.s4 1983009808
          %v2372 = vunpack.c.0.s8 %v2371
          %v2373 = vlaneseq
          %v2374 = vshrl.u32 %v2373, 7
          %v2375 = vsub.s32 %v2372, %v2374
          %v2376 = vrot.slane %v2368, %v2375
          %v2378 = vunpack.c.l.s4 1983009808
          %v2379 = vunpack.c.0.s8 %v2378
          %v2380 = vlaneseq
          %v2381 = vshrl.u32 %v2380, 7
          %v2382 = vsub.s32 %v2379, %v2381
          %v2383 = vrot.slane %v2369, %v2382
          %v2384 = vcombine.low %v2376, %v2383
          %2391 = vst [vmem:[#allocation2] sm:$0xff] %v2299
          %2392 = vst [vmem:[#allocation2 + $0x8] sm:$0xff] %v2316
          %2393 = vst [vmem:[#allocation2 + $0x10] sm:$0xff] %v2333
          %2394 = vst [vmem:[#allocation2 + $0x18] sm:$0xff] %v2350
          %2395 = vst [vmem:[#allocation2 + $0x20] sm:$0xff] %v2367
          %2396 = vst [vmem:[#allocation2 + $0x28] sm:$0xff] %v2384
          %v2397 = vld [vmem:[#allocation3] sm:$0x1]
          %v2399 = vlaneseq
          %v2400 = vshrl.u32 %v2399, 7
          %v2401 = vsub.s32 0, %v2400
          %v2402 = vrot.slane %v2397, %v2401
          %v2404 = vadd.f32 %v2402, 0.0
          %vm2405 = vcmask 3072
          %2406 = vst.msk [vmem:[%s433] sm:$0xf] %vm2405, %v2404
        $region76: #{_lambda_.1} parent=47 // pred_fallthru
          _
        %v2407 = vld [vmem:[#allocation2] sm:$0xff]
        %v2408 = vld [vmem:[#allocation2 + $0x8] sm:$0xff]
        %v2409 = vld [vmem:[#allocation2 + $0x10] sm:$0xff]
        %v2410 = vld [vmem:[#allocation2 + $0x18] sm:$0xff]
        %v2411 = vld [vmem:[#allocation2 + $0x20] sm:$0xff]
        %v2412 = vld [vmem:[#allocation2 + $0x28] sm:$0xff]
        %v2413 = vld [vmem:[%s369] sm:$0xff]
        %v2414 = vld [vmem:[%s369 + $0x8] sm:$0xff]
        %v2415 = vld [vmem:[%s369 + $0x10] sm:$0xff]
        %v2416 = vld [vmem:[%s369 + $0x18] sm:$0xff]
        %v2417 = vld [vmem:[%s369 + $0x20] sm:$0xff]
        %v2418 = vld [vmem:[%s369 + $0x28] sm:$0xff]
        %v2419 = vld [vmem:[%s369 + $0x30] sm:$0xff]
        %v2420 = vld [vmem:[%s369 + $0x38] sm:$0xff]
        %v2421 = vld [vmem:[%s369 + $0x40] sm:$0xff]
        %v2422 = vld [vmem:[%s369 + $0x48] sm:$0xff]
        %v2423 = vld [vmem:[%s369 + $0x50] sm:$0xff]
        %v2424 = vld [vmem:[%s369 + $0x58] sm:$0xff]
        %v2425 = vld [vmem:[%s369 + $0x60] sm:$0xff]
        %v2426 = vld [vmem:[%s369 + $0x68] sm:$0xff]
        %v2427 = vld [vmem:[%s369 + $0x70] sm:$0xff]
        %v2428 = vld [vmem:[%s369 + $0x78] sm:$0xff]
        %v2429 = vld [vmem:[%s369 + $0x80] sm:$0xff]
        %v2430 = vld [vmem:[%s369 + $0x88] sm:$0xff]
        %v2431 = vld [vmem:[%s369 + $0x90] sm:$0xff]
        %v2432 = vld [vmem:[%s369 + $0x98] sm:$0xff]
        %v2433 = vld [vmem:[%s369 + $0xa0] sm:$0xff]
        %v2434 = vld [vmem:[%s369 + $0xa8] sm:$0xff]
        %v2435 = vld [vmem:[%s369 + $0xb0] sm:$0xff]
        %v2436 = vld [vmem:[%s369 + $0xb8] sm:$0xff]
        %v2437 = vld [vmem:[%s369 + $0xc0] sm:$0xff]
        %v2438 = vld [vmem:[%s369 + $0xc8] sm:$0xff]
        %v2439 = vld [vmem:[%s369 + $0xd0] sm:$0xff]
        %v2440 = vld [vmem:[%s369 + $0xd8] sm:$0xff]
        %v2441 = vld [vmem:[%s369 + $0xe0] sm:$0xff]
        %v2442 = vld [vmem:[%s369 + $0xe8] sm:$0xff]
        %v2443 = vld [vmem:[%s369 + $0xf0] sm:$0xff]
        %v2444 = vld [vmem:[%s369 + $0xf8] sm:$0xff]
        %v2445 = vld [vmem:[%s369 + $0x100] sm:$0xff]
        %v2446 = vld [vmem:[%s369 + $0x108] sm:$0xff]
        %v2447 = vld [vmem:[%s369 + $0x110] sm:$0xff]
        %v2448 = vld [vmem:[%s369 + $0x118] sm:$0xff]
        %v2449 = vld [vmem:[%s369 + $0x120] sm:$0xff]
        %v2450 = vld [vmem:[%s369 + $0x128] sm:$0xff]
        %v2451 = vld [vmem:[%s369 + $0x130] sm:$0xff]
        %v2452 = vld [vmem:[%s369 + $0x138] sm:$0xff]
        %v2453 = vld [vmem:[%s369 + $0x140] sm:$0xff]
        %v2454 = vld [vmem:[%s369 + $0x148] sm:$0xff]
        %v2455 = vld [vmem:[%s369 + $0x150] sm:$0xff]
        %v2456 = vld [vmem:[%s369 + $0x158] sm:$0xff]
        %v2457 = vld [vmem:[%s369 + $0x160] sm:$0xff]
        %v2458 = vld [vmem:[%s369 + $0x168] sm:$0xff]
        %v2459 = vld [vmem:[%s369 + $0x170] sm:$0xff]
        %v2460 = vld [vmem:[%s369 + $0x178] sm:$0xff]
        %v2461 = vld [vmem:[%s369 + $0x180] sm:$0xff]
        %v2462 = vld [vmem:[%s369 + $0x188] sm:$0xff]
        %v2463 = vld [vmem:[%s369 + $0x190] sm:$0xff]
        %v2464 = vld [vmem:[%s369 + $0x198] sm:$0xff]
        %v2465 = vld [vmem:[%s369 + $0x1a0] sm:$0xff]
        %v2466 = vld [vmem:[%s369 + $0x1a8] sm:$0xff]
        %v2467 = vld [vmem:[%s369 + $0x1b0] sm:$0xff]
        %v2468 = vld [vmem:[%s369 + $0x1b8] sm:$0xff]
        %v2469 = vld [vmem:[%s369 + $0x1c0] sm:$0xff]
        %v2470 = vld [vmem:[%s369 + $0x1c8] sm:$0xff]
        %v2471 = vld [vmem:[%s369 + $0x1d0] sm:$0xff]
        %v2472 = vld [vmem:[%s369 + $0x1d8] sm:$0xff]
        %v2473 = vld [vmem:[%s369 + $0x1e0] sm:$0xff]
        %v2474 = vld [vmem:[%s369 + $0x1e8] sm:$0xff]
        %v2475 = vld [vmem:[%s369 + $0x1f0] sm:$0xff]
        %v2476 = vld [vmem:[%s369 + $0x1f8] sm:$0xff]
        %v2477 = vld [vmem:[%s369 + $0x200] sm:$0xff]
        %v2478 = vld [vmem:[%s369 + $0x208] sm:$0xff]
        %v2479 = vld [vmem:[%s369 + $0x210] sm:$0xff]
        %v2480 = vld [vmem:[%s369 + $0x218] sm:$0xff]
        %v2481 = vld [vmem:[%s369 + $0x220] sm:$0xff]
        %v2482 = vld [vmem:[%s369 + $0x228] sm:$0xff]
        %v2483 = vld [vmem:[%s369 + $0x230] sm:$0xff]
        %v2484 = vld [vmem:[%s369 + $0x238] sm:$0xff]
        %v2485 = vld [vmem:[%s369 + $0x240] sm:$0xff]
        %v2486 = vld [vmem:[%s369 + $0x248] sm:$0xff]
        %v2487 = vld [vmem:[%s369 + $0x250] sm:$0xff]
        %v2488 = vld [vmem:[%s369 + $0x258] sm:$0xff]
        %v2489 = vld [vmem:[%s369 + $0x260] sm:$0xff]
        %v2490 = vld [vmem:[%s369 + $0x268] sm:$0xff]
        %v2491 = vld [vmem:[%s369 + $0x270] sm:$0xff]
        %v2492 = vld [vmem:[%s369 + $0x278] sm:$0xff]
        %v2493 = vld [vmem:[%s369 + $0x280] sm:$0xff]
        %v2494 = vld [vmem:[%s369 + $0x288] sm:$0xff]
        %v2495 = vld [vmem:[%s369 + $0x290] sm:$0xff]
        %v2496 = vld [vmem:[%s369 + $0x298] sm:$0xff]
        %v2497 = vld [vmem:[%s369 + $0x2a0] sm:$0xff]
        %v2498 = vld [vmem:[%s369 + $0x2a8] sm:$0xff]
        %v2499 = vld [vmem:[%s369 + $0x2b0] sm:$0xff]
        %v2500 = vld [vmem:[%s369 + $0x2b8] sm:$0xff]
        %v2501 = vld [vmem:[%s369 + $0x2c0] sm:$0xff]
        %v2502 = vld [vmem:[%s369 + $0x2c8] sm:$0xff]
        %v2503 = vld [vmem:[%s369 + $0x2d0] sm:$0xff]
        %v2504 = vld [vmem:[%s369 + $0x2d8] sm:$0xff]
        %v2505 = vld [vmem:[%s369 + $0x2e0] sm:$0xff]
        %v2506 = vld [vmem:[%s369 + $0x2e8] sm:$0xff]
        %v2507 = vld [vmem:[%s369 + $0x2f0] sm:$0xff]
        %v2508 = vld [vmem:[%s369 + $0x2f8] sm:$0xff]
        %v2509 = vld [vmem:[%s369 + $0x300] sm:$0xff]
        %v2510 = vld [vmem:[%s369 + $0x308] sm:$0xff]
        %v2511 = vld [vmem:[%s369 + $0x310] sm:$0xff]
        %v2512 = vld [vmem:[%s369 + $0x318] sm:$0xff]
        %v2513 = vld [vmem:[%s369 + $0x320] sm:$0xff]
        %v2514 = vld [vmem:[%s369 + $0x328] sm:$0xff]
        %v2515 = vld [vmem:[%s369 + $0x330] sm:$0xff]
        %v2516 = vld [vmem:[%s369 + $0x338] sm:$0xff]
        %v2517 = vld [vmem:[%s369 + $0x340] sm:$0xff]
        %v2518 = vld [vmem:[%s369 + $0x348] sm:$0xff]
        %v2519 = vld [vmem:[%s369 + $0x350] sm:$0xff]
        %v2520 = vld [vmem:[%s369 + $0x358] sm:$0xff]
        %v2521 = vld [vmem:[%s369 + $0x360] sm:$0xff]
        %v2522 = vld [vmem:[%s369 + $0x368] sm:$0xff]
        %v2523 = vld [vmem:[%s369 + $0x370] sm:$0xff]
        %v2524 = vld [vmem:[%s369 + $0x378] sm:$0xff]
        %v2525 = vld [vmem:[%s369 + $0x380] sm:$0xff]
        %v2526 = vld [vmem:[%s369 + $0x388] sm:$0xff]
        %v2527 = vld [vmem:[%s369 + $0x390] sm:$0xff]
        %v2528 = vld [vmem:[%s369 + $0x398] sm:$0xff]
        %v2529 = vld [vmem:[%s369 + $0x3a0] sm:$0xff]
        %v2530 = vld [vmem:[%s369 + $0x3a8] sm:$0xff]
        %v2531 = vld [vmem:[%s369 + $0x3b0] sm:$0xff]
        %v2532 = vld [vmem:[%s369 + $0x3b8] sm:$0xff]
        %v2533 = vld [vmem:[%s369 + $0x3c0] sm:$0xff]
        %v2534 = vld [vmem:[%s369 + $0x3c8] sm:$0xff]
        %v2535 = vld [vmem:[%s369 + $0x3d0] sm:$0xff]
        %v2536 = vld [vmem:[%s369 + $0x3d8] sm:$0xff]
        %v2537 = vld [vmem:[%s369 + $0x3e0] sm:$0xff]
        %v2538 = vld [vmem:[%s369 + $0x3e8] sm:$0xff]
        %v2539 = vld [vmem:[%s369 + $0x3f0] sm:$0xff]
        %v2540 = vld [vmem:[%s369 + $0x3f8] sm:$0xff]
        %v2541 = vld [vmem:[%s369 + $0x400] sm:$0xff]
        %v2542 = vld [vmem:[%s369 + $0x408] sm:$0xff]
        %v2543 = vld [vmem:[%s369 + $0x410] sm:$0xff]
        %v2544 = vld [vmem:[%s369 + $0x418] sm:$0xff]
        %v2545 = vld [vmem:[%s369 + $0x420] sm:$0xff]
        %v2546 = vld [vmem:[%s369 + $0x428] sm:$0xff]
        %v2547 = vld [vmem:[%s369 + $0x430] sm:$0xff]
        %v2548 = vld [vmem:[%s369 + $0x438] sm:$0xff]
        %v2549 = vld [vmem:[%s369 + $0x440] sm:$0xff]
        %v2550 = vld [vmem:[%s369 + $0x448] sm:$0xff]
        %v2551 = vld [vmem:[%s369 + $0x450] sm:$0xff]
        %v2552 = vld [vmem:[%s369 + $0x458] sm:$0xff]
        %v2553 = vld [vmem:[%s369 + $0x460] sm:$0xff]
        %v2554 = vld [vmem:[%s369 + $0x468] sm:$0xff]
        %v2555 = vld [vmem:[%s369 + $0x470] sm:$0xff]
        %v2556 = vld [vmem:[%s369 + $0x478] sm:$0xff]
        %v2557 = vld [vmem:[%s369 + $0x480] sm:$0xff]
        %v2558 = vld [vmem:[%s369 + $0x488] sm:$0xff]
        %v2559 = vld [vmem:[%s369 + $0x490] sm:$0xff]
        %v2560 = vld [vmem:[%s369 + $0x498] sm:$0xff]
        %v2561 = vld [vmem:[%s369 + $0x4a0] sm:$0xff]
        %v2562 = vld [vmem:[%s369 + $0x4a8] sm:$0xff]
        %v2563 = vld [vmem:[%s369 + $0x4b0] sm:$0xff]
        %v2564 = vld [vmem:[%s369 + $0x4b8] sm:$0xff]
        %v2565 = vld [vmem:[%s369 + $0x4c0] sm:$0xff]
        %v2566 = vld [vmem:[%s369 + $0x4c8] sm:$0xff]
        %v2567 = vld [vmem:[%s369 + $0x4d0] sm:$0xff]
        %v2568 = vld [vmem:[%s369 + $0x4d8] sm:$0xff]
        %v2569 = vld [vmem:[%s369 + $0x4e0] sm:$0xff]
        %v2570 = vld [vmem:[%s369 + $0x4e8] sm:$0xff]
        %v2571 = vld [vmem:[%s369 + $0x4f0] sm:$0xff]
        %v2572 = vld [vmem:[%s369 + $0x4f8] sm:$0xff]
        %v2573 = vld [vmem:[%s369 + $0x500] sm:$0xff]
        %v2574 = vld [vmem:[%s369 + $0x508] sm:$0xff]
        %v2575 = vld [vmem:[%s369 + $0x510] sm:$0xff]
        %v2576 = vld [vmem:[%s369 + $0x518] sm:$0xff]
        %v2577 = vld [vmem:[%s369 + $0x520] sm:$0xff]
        %v2578 = vld [vmem:[%s369 + $0x528] sm:$0xff]
        %v2579 = vld [vmem:[%s369 + $0x530] sm:$0xff]
        %v2580 = vld [vmem:[%s369 + $0x538] sm:$0xff]
        %v2581 = vld [vmem:[%s369 + $0x540] sm:$0xff]
        %v2582 = vld [vmem:[%s369 + $0x548] sm:$0xff]
        %v2583 = vld [vmem:[%s369 + $0x550] sm:$0xff]
        %v2584 = vld [vmem:[%s369 + $0x558] sm:$0xff]
        %v2585 = vld [vmem:[%s369 + $0x560] sm:$0xff]
        %v2586 = vld [vmem:[%s369 + $0x568] sm:$0xff]
        %v2587 = vld [vmem:[%s369 + $0x570] sm:$0xff]
        %v2588 = vld [vmem:[%s369 + $0x578] sm:$0xff]
        %v2589 = vld [vmem:[%s369 + $0x580] sm:$0xff]
        %v2590 = vld [vmem:[%s369 + $0x588] sm:$0xff]
        %v2591 = vld [vmem:[%s369 + $0x590] sm:$0xff]
        %v2592 = vld [vmem:[%s369 + $0x598] sm:$0xff]
        %v2593 = vld [vmem:[%s369 + $0x5a0] sm:$0xff]
        %v2594 = vld [vmem:[%s369 + $0x5a8] sm:$0xff]
        %v2595 = vld [vmem:[%s369 + $0x5b0] sm:$0xff]
        %v2596 = vld [vmem:[%s369 + $0x5b8] sm:$0xff]
        %v2597 = vld [vmem:[%s369 + $0x5c0] sm:$0xff]
        %v2598 = vld [vmem:[%s369 + $0x5c8] sm:$0xff]
        %v2599 = vld [vmem:[%s369 + $0x5d0] sm:$0xff]
        %v2600 = vld [vmem:[%s369 + $0x5d8] sm:$0xff]
        %v2601 = vld [vmem:[%s369 + $0x5e0] sm:$0xff]
        %v2602 = vld [vmem:[%s369 + $0x5e8] sm:$0xff]
        %v2603 = vld [vmem:[%s369 + $0x5f0] sm:$0xff]
        %v2604 = vld [vmem:[%s369 + $0x5f8] sm:$0xff]
        %v2605 = vld [vmem:[%s369 + $0x600] sm:$0xff]
        %v2606 = vld [vmem:[%s369 + $0x608] sm:$0xff]
        %v2607 = vld [vmem:[%s369 + $0x610] sm:$0xff]
        %v2608 = vld [vmem:[%s369 + $0x618] sm:$0xff]
        %v2609 = vld [vmem:[%s369 + $0x620] sm:$0xff]
        %v2610 = vld [vmem:[%s369 + $0x628] sm:$0xff]
        %v2611 = vld [vmem:[%s369 + $0x630] sm:$0xff]
        %v2612 = vld [vmem:[%s369 + $0x638] sm:$0xff]
        %v2613 = vld [vmem:[%s369 + $0x640] sm:$0xff]
        %v2614 = vld [vmem:[%s369 + $0x648] sm:$0xff]
        %v2615 = vld [vmem:[%s369 + $0x650] sm:$0xff]
        %v2616 = vld [vmem:[%s369 + $0x658] sm:$0xff]
        %v2617 = vld [vmem:[%s369 + $0x660] sm:$0xff]
        %v2618 = vld [vmem:[%s369 + $0x668] sm:$0xff]
        %v2619 = vld [vmem:[%s369 + $0x670] sm:$0xff]
        %v2620 = vld [vmem:[%s369 + $0x678] sm:$0xff]
        %v2621 = vld [vmem:[%s369 + $0x680] sm:$0xff]
        %v2622 = vld [vmem:[%s369 + $0x688] sm:$0xff]
        %v2623 = vld [vmem:[%s369 + $0x690] sm:$0xff]
        %v2624 = vld [vmem:[%s369 + $0x698] sm:$0xff]
        %v2625 = vld [vmem:[%s369 + $0x6a0] sm:$0xff]
        %v2626 = vld [vmem:[%s369 + $0x6a8] sm:$0xff]
        %v2627 = vld [vmem:[%s369 + $0x6b0] sm:$0xff]
        %v2628 = vld [vmem:[%s369 + $0x6b8] sm:$0xff]
        %v2629 = vld [vmem:[%s369 + $0x6c0] sm:$0xff]
        %v2630 = vld [vmem:[%s369 + $0x6c8] sm:$0xff]
        %v2631 = vld [vmem:[%s369 + $0x6d0] sm:$0xff]
        %v2632 = vld [vmem:[%s369 + $0x6d8] sm:$0xff]
        %v2633 = vld [vmem:[%s369 + $0x6e0] sm:$0xff]
        %v2634 = vld [vmem:[%s369 + $0x6e8] sm:$0xff]
        %v2635 = vld [vmem:[%s369 + $0x6f0] sm:$0xff]
        %v2636 = vld [vmem:[%s369 + $0x6f8] sm:$0xff]
        %v2637 = vld [vmem:[%s369 + $0x700] sm:$0xff]
        %v2638 = vld [vmem:[%s369 + $0x708] sm:$0xff]
        %v2639 = vld [vmem:[%s369 + $0x710] sm:$0xff]
        %v2640 = vld [vmem:[%s369 + $0x718] sm:$0xff]
        %v2641 = vld [vmem:[%s369 + $0x720] sm:$0xff]
        %v2642 = vld [vmem:[%s369 + $0x728] sm:$0xff]
        %v2643 = vld [vmem:[%s369 + $0x730] sm:$0xff]
        %v2644 = vld [vmem:[%s369 + $0x738] sm:$0xff]
        %v2645 = vld [vmem:[%s369 + $0x740] sm:$0xff]
        %v2646 = vld [vmem:[%s369 + $0x748] sm:$0xff]
        %v2647 = vld [vmem:[%s369 + $0x750] sm:$0xff]
        %v2648 = vld [vmem:[%s369 + $0x758] sm:$0xff]
        %v2649 = vld [vmem:[%s369 + $0x760] sm:$0xff]
        %v2650 = vld [vmem:[%s369 + $0x768] sm:$0xff]
        %v2651 = vld [vmem:[%s369 + $0x770] sm:$0xff]
        %v2652 = vld [vmem:[%s369 + $0x778] sm:$0xff]
        %v2653 = vld [vmem:[%s369 + $0x780] sm:$0xff]
        %v2654 = vld [vmem:[%s369 + $0x788] sm:$0xff]
        %v2655 = vld [vmem:[%s369 + $0x790] sm:$0xff]
        %v2656 = vld [vmem:[%s369 + $0x798] sm:$0xff]
        %v2657 = vld [vmem:[%s369 + $0x7a0] sm:$0xff]
        %v2658 = vld [vmem:[%s369 + $0x7a8] sm:$0xff]
        %v2659 = vld [vmem:[%s369 + $0x7b0] sm:$0xff]
        %v2660 = vld [vmem:[%s369 + $0x7b8] sm:$0xff]
        %v2661 = vld [vmem:[%s369 + $0x7c0] sm:$0xff]
        %v2662 = vld [vmem:[%s369 + $0x7c8] sm:$0xff]
        %v2663 = vld [vmem:[%s369 + $0x7d0] sm:$0xff]
        %v2664 = vld [vmem:[%s369 + $0x7d8] sm:$0xff]
        %v2665 = vld [vmem:[%s369 + $0x7e0] sm:$0xff]
        %v2666 = vld [vmem:[%s369 + $0x7e8] sm:$0xff]
        %v2667 = vld [vmem:[%s369 + $0x7f0] sm:$0xff]
        %v2668 = vld [vmem:[%s369 + $0x7f8] sm:$0xff]
        %v2669 = vld [vmem:[%s369 + $0x800] sm:$0xff]
        %v2670 = vld [vmem:[%s369 + $0x808] sm:$0xff]
        %v2671 = vld [vmem:[%s369 + $0x810] sm:$0xff]
        %v2672 = vld [vmem:[%s369 + $0x818] sm:$0xff]
        %v2673 = vld [vmem:[%s369 + $0x820] sm:$0xff]
        %v2674 = vld [vmem:[%s369 + $0x828] sm:$0xff]
        %v2675 = vld [vmem:[%s369 + $0x830] sm:$0xff]
        %v2676 = vld [vmem:[%s369 + $0x838] sm:$0xff]
        %v2677 = vld [vmem:[%s369 + $0x840] sm:$0xff]
        %v2678 = vld [vmem:[%s369 + $0x848] sm:$0xff]
        %v2679 = vld [vmem:[%s369 + $0x850] sm:$0xff]
        %v2680 = vld [vmem:[%s369 + $0x858] sm:$0xff]
        %v2681 = vld [vmem:[%s369 + $0x860] sm:$0xff]
        %v2682 = vld [vmem:[%s369 + $0x868] sm:$0xff]
        %v2683 = vld [vmem:[%s369 + $0x870] sm:$0xff]
        %v2684 = vld [vmem:[%s369 + $0x878] sm:$0xff]
        %v2685 = vld [vmem:[%s369 + $0x880] sm:$0xff]
        %v2686 = vld [vmem:[%s369 + $0x888] sm:$0xff]
        %v2687 = vld [vmem:[%s369 + $0x890] sm:$0xff]
        %v2688 = vld [vmem:[%s369 + $0x898] sm:$0xff]
        %v2689 = vld [vmem:[%s369 + $0x8a0] sm:$0xff]
        %v2690 = vld [vmem:[%s369 + $0x8a8] sm:$0xff]
        %v2691 = vld [vmem:[%s369 + $0x8b0] sm:$0xff]
        %v2692 = vld [vmem:[%s369 + $0x8b8] sm:$0xff]
        %v2693 = vld [vmem:[%s369 + $0x8c0] sm:$0xff]
        %v2694 = vld [vmem:[%s369 + $0x8c8] sm:$0xff]
        %v2695 = vld [vmem:[%s369 + $0x8d0] sm:$0xff]
        %v2696 = vld [vmem:[%s369 + $0x8d8] sm:$0xff]
        %v2697 = vld [vmem:[%s369 + $0x8e0] sm:$0xff]
        %v2698 = vld [vmem:[%s369 + $0x8e8] sm:$0xff]
        %v2699 = vld [vmem:[%s369 + $0x8f0] sm:$0xff]
        %v2700 = vld [vmem:[%s369 + $0x8f8] sm:$0xff]
        %v2701 = vld [vmem:[%s369 + $0x900] sm:$0xff]
        %v2702 = vld [vmem:[%s369 + $0x908] sm:$0xff]
        %v2703 = vld [vmem:[%s369 + $0x910] sm:$0xff]
        %v2704 = vld [vmem:[%s369 + $0x918] sm:$0xff]
        %v2705 = vld [vmem:[%s369 + $0x920] sm:$0xff]
        %v2706 = vld [vmem:[%s369 + $0x928] sm:$0xff]
        %v2707 = vld [vmem:[%s369 + $0x930] sm:$0xff]
        %v2708 = vld [vmem:[%s369 + $0x938] sm:$0xff]
        %v2709 = vld [vmem:[%s369 + $0x940] sm:$0xff]
        %v2710 = vld [vmem:[%s369 + $0x948] sm:$0xff]
        %v2711 = vld [vmem:[%s369 + $0x950] sm:$0xff]
        %v2712 = vld [vmem:[%s369 + $0x958] sm:$0xff]
        %v2713 = vld [vmem:[%s369 + $0x960] sm:$0xff]
        %v2714 = vld [vmem:[%s369 + $0x968] sm:$0xff]
        %v2715 = vld [vmem:[%s369 + $0x970] sm:$0xff]
        %v2716 = vld [vmem:[%s369 + $0x978] sm:$0xff]
        %v2717 = vld [vmem:[%s369 + $0x980] sm:$0xff]
        %v2718 = vld [vmem:[%s369 + $0x988] sm:$0xff]
        %v2719 = vld [vmem:[%s369 + $0x990] sm:$0xff]
        %v2720 = vld [vmem:[%s369 + $0x998] sm:$0xff]
        %v2721 = vld [vmem:[%s369 + $0x9a0] sm:$0xff]
        %v2722 = vld [vmem:[%s369 + $0x9a8] sm:$0xff]
        %v2723 = vld [vmem:[%s369 + $0x9b0] sm:$0xff]
        %v2724 = vld [vmem:[%s369 + $0x9b8] sm:$0xff]
        %v2725 = vld [vmem:[%s369 + $0x9c0] sm:$0xff]
        %v2726 = vld [vmem:[%s369 + $0x9c8] sm:$0xff]
        %v2727 = vld [vmem:[%s369 + $0x9d0] sm:$0xff]
        %v2728 = vld [vmem:[%s369 + $0x9d8] sm:$0xff]
        %v2729 = vld [vmem:[%s369 + $0x9e0] sm:$0xff]
        %v2730 = vld [vmem:[%s369 + $0x9e8] sm:$0xff]
        %v2731 = vld [vmem:[%s369 + $0x9f0] sm:$0xff]
        %v2732 = vld [vmem:[%s369 + $0x9f8] sm:$0xff]
        %v2733 = vld [vmem:[%s369 + $0xa00] sm:$0xff]
        %v2734 = vld [vmem:[%s369 + $0xa08] sm:$0xff]
        %v2735 = vld [vmem:[%s369 + $0xa10] sm:$0xff]
        %v2736 = vld [vmem:[%s369 + $0xa18] sm:$0xff]
        %v2737 = vld [vmem:[%s369 + $0xa20] sm:$0xff]
        %v2738 = vld [vmem:[%s369 + $0xa28] sm:$0xff]
        %v2739 = vld [vmem:[%s369 + $0xa30] sm:$0xff]
        %v2740 = vld [vmem:[%s369 + $0xa38] sm:$0xff]
        %v2741 = vld [vmem:[%s369 + $0xa40] sm:$0xff]
        %v2742 = vld [vmem:[%s369 + $0xa48] sm:$0xff]
        %v2743 = vld [vmem:[%s369 + $0xa50] sm:$0xff]
        %v2744 = vld [vmem:[%s369 + $0xa58] sm:$0xff]
        %v2745 = vld [vmem:[%s369 + $0xa60] sm:$0xff]
        %v2746 = vld [vmem:[%s369 + $0xa68] sm:$0xff]
        %v2747 = vld [vmem:[%s369 + $0xa70] sm:$0xff]
        %v2748 = vld [vmem:[%s369 + $0xa78] sm:$0xff]
        %v2749 = vld [vmem:[%s369 + $0xa80] sm:$0xff]
        %v2750 = vld [vmem:[%s369 + $0xa88] sm:$0xff]
        %v2751 = vld [vmem:[%s369 + $0xa90] sm:$0xff]
        %v2752 = vld [vmem:[%s369 + $0xa98] sm:$0xff]
        %v2753 = vld [vmem:[%s369 + $0xaa0] sm:$0xff]
        %v2754 = vld [vmem:[%s369 + $0xaa8] sm:$0xff]
        %v2755 = vld [vmem:[%s369 + $0xab0] sm:$0xff]
        %v2756 = vld [vmem:[%s369 + $0xab8] sm:$0xff]
        %v2757 = vld [vmem:[%s369 + $0xac0] sm:$0xff]
        %v2758 = vld [vmem:[%s369 + $0xac8] sm:$0xff]
        %v2759 = vld [vmem:[%s369 + $0xad0] sm:$0xff]
        %v2760 = vld [vmem:[%s369 + $0xad8] sm:$0xff]
        %v2761 = vld [vmem:[%s369 + $0xae0] sm:$0xff]
        %v2762 = vld [vmem:[%s369 + $0xae8] sm:$0xff]
        %v2763 = vld [vmem:[%s369 + $0xaf0] sm:$0xff]
        %v2764 = vld [vmem:[%s369 + $0xaf8] sm:$0xff]
        %v2765 = vld [vmem:[%s369 + $0xb00] sm:$0xff]
        %v2766 = vld [vmem:[%s369 + $0xb08] sm:$0xff]
        %v2767 = vld [vmem:[%s369 + $0xb10] sm:$0xff]
        %v2768 = vld [vmem:[%s369 + $0xb18] sm:$0xff]
        %v2769 = vld [vmem:[%s369 + $0xb20] sm:$0xff]
        %v2770 = vld [vmem:[%s369 + $0xb28] sm:$0xff]
        %v2771 = vld [vmem:[%s369 + $0xb30] sm:$0xff]
        %v2772 = vld [vmem:[%s369 + $0xb38] sm:$0xff]
        %v2773 = vld [vmem:[%s369 + $0xb40] sm:$0xff]
        %v2774 = vld [vmem:[%s369 + $0xb48] sm:$0xff]
        %v2775 = vld [vmem:[%s369 + $0xb50] sm:$0xff]
        %v2776 = vld [vmem:[%s369 + $0xb58] sm:$0xff]
        %v2777 = vld [vmem:[%s369 + $0xb60] sm:$0xff]
        %v2778 = vld [vmem:[%s369 + $0xb68] sm:$0xff]
        %v2779 = vld [vmem:[%s369 + $0xb70] sm:$0xff]
        %v2780 = vld [vmem:[%s369 + $0xb78] sm:$0xff]
        %v2781 = vld [vmem:[%s369 + $0xb80] sm:$0xff]
        %v2782 = vld [vmem:[%s369 + $0xb88] sm:$0xff]
        %v2783 = vld [vmem:[%s369 + $0xb90] sm:$0xff]
        %v2784 = vld [vmem:[%s369 + $0xb98] sm:$0xff]
        %v2785 = vld [vmem:[%s369 + $0xba0] sm:$0xff]
        %v2786 = vld [vmem:[%s369 + $0xba8] sm:$0xff]
        %v2787 = vld [vmem:[%s369 + $0xbb0] sm:$0xff]
        %v2788 = vld [vmem:[%s369 + $0xbb8] sm:$0xff]
        %v2789 = vld [vmem:[%s369 + $0xbc0] sm:$0xff]
        %v2790 = vld [vmem:[%s369 + $0xbc8] sm:$0xff]
        %v2791 = vld [vmem:[%s369 + $0xbd0] sm:$0xff]
        %v2792 = vld [vmem:[%s369 + $0xbd8] sm:$0xff]
        %v2793 = vld [vmem:[%s369 + $0xbe0] sm:$0xff]
        %v2794 = vld [vmem:[%s369 + $0xbe8] sm:$0xff]
        %v2795 = vld [vmem:[%s369 + $0xbf0] sm:$0xff]
        %v2796 = vld [vmem:[%s369 + $0xbf8] sm:$0xff]
        %v2797 = vld [vmem:[%s369 + $0xc00] sm:$0xff]
        %v2798 = vld [vmem:[%s369 + $0xc08] sm:$0xff]
        %v2799 = vld [vmem:[%s369 + $0xc10] sm:$0xff]
        %v2800 = vld [vmem:[%s369 + $0xc18] sm:$0xff]
        %v2801 = vld [vmem:[%s369 + $0xc20] sm:$0xff]
        %v2802 = vld [vmem:[%s369 + $0xc28] sm:$0xff]
        %v2803 = vld [vmem:[%s369 + $0xc30] sm:$0xff]
        %v2804 = vld [vmem:[%s369 + $0xc38] sm:$0xff]
        %v2805 = vld [vmem:[%s369 + $0xc40] sm:$0xff]
        %v2806 = vld [vmem:[%s369 + $0xc48] sm:$0xff]
        %v2807 = vld [vmem:[%s369 + $0xc50] sm:$0xff]
        %v2808 = vld [vmem:[%s369 + $0xc58] sm:$0xff]
        %v2809 = vld [vmem:[%s369 + $0xc60] sm:$0xff]
        %v2810 = vld [vmem:[%s369 + $0xc68] sm:$0xff]
        %v2811 = vld [vmem:[%s369 + $0xc70] sm:$0xff]
        %v2812 = vld [vmem:[%s369 + $0xc78] sm:$0xff]
        %v2813 = vld [vmem:[%s369 + $0xc80] sm:$0xff]
        %v2814 = vld [vmem:[%s369 + $0xc88] sm:$0xff]
        %v2815 = vld [vmem:[%s369 + $0xc90] sm:$0xff]
        %v2816 = vld [vmem:[%s369 + $0xc98] sm:$0xff]
        %v2817 = vld [vmem:[%s369 + $0xca0] sm:$0xff]
        %v2818 = vld [vmem:[%s369 + $0xca8] sm:$0xff]
        %v2819 = vld [vmem:[%s369 + $0xcb0] sm:$0xff]
        %v2820 = vld [vmem:[%s369 + $0xcb8] sm:$0xff]
        %v2821 = vld [vmem:[%s369 + $0xcc0] sm:$0xff]
        %v2822 = vld [vmem:[%s369 + $0xcc8] sm:$0xff]
        %v2823 = vld [vmem:[%s369 + $0xcd0] sm:$0xff]
        %v2824 = vld [vmem:[%s369 + $0xcd8] sm:$0xff]
        %v2825 = vld [vmem:[%s369 + $0xce0] sm:$0xff]
        %v2826 = vld [vmem:[%s369 + $0xce8] sm:$0xff]
        %v2827 = vld [vmem:[%s369 + $0xcf0] sm:$0xff]
        %v2828 = vld [vmem:[%s369 + $0xcf8] sm:$0xff]
        %v2829 = vld [vmem:[%s369 + $0xd00] sm:$0xff]
        %v2830 = vld [vmem:[%s369 + $0xd08] sm:$0xff]
        %v2831 = vld [vmem:[%s369 + $0xd10] sm:$0xff]
        %v2832 = vld [vmem:[%s369 + $0xd18] sm:$0xff]
        %v2833 = vld [vmem:[%s369 + $0xd20] sm:$0xff]
        %v2834 = vld [vmem:[%s369 + $0xd28] sm:$0xff]
        %v2835 = vld [vmem:[%s369 + $0xd30] sm:$0xff]
        %v2836 = vld [vmem:[%s369 + $0xd38] sm:$0xff]
        %v2837 = vld [vmem:[%s369 + $0xd40] sm:$0xff]
        %v2838 = vld [vmem:[%s369 + $0xd48] sm:$0xff]
        %v2839 = vld [vmem:[%s369 + $0xd50] sm:$0xff]
        %v2840 = vld [vmem:[%s369 + $0xd58] sm:$0xff]
        %v2841 = vld [vmem:[%s369 + $0xd60] sm:$0xff]
        %v2842 = vld [vmem:[%s369 + $0xd68] sm:$0xff]
        %v2843 = vld [vmem:[%s369 + $0xd70] sm:$0xff]
        %v2844 = vld [vmem:[%s369 + $0xd78] sm:$0xff]
        %v2845 = vld [vmem:[%s369 + $0xd80] sm:$0xff]
        %v2846 = vld [vmem:[%s369 + $0xd88] sm:$0xff]
        %v2847 = vld [vmem:[%s369 + $0xd90] sm:$0xff]
        %v2848 = vld [vmem:[%s369 + $0xd98] sm:$0xff]
        %v2849 = vld [vmem:[%s369 + $0xda0] sm:$0xff]
        %v2850 = vld [vmem:[%s369 + $0xda8] sm:$0xff]
        %v2851 = vld [vmem:[%s369 + $0xdb0] sm:$0xff]
        %v2852 = vld [vmem:[%s369 + $0xdb8] sm:$0xff]
        %v2853 = vld [vmem:[%s369 + $0xdc0] sm:$0xff]
        %v2854 = vld [vmem:[%s369 + $0xdc8] sm:$0xff]
        %v2855 = vld [vmem:[%s369 + $0xdd0] sm:$0xff]
        %v2856 = vld [vmem:[%s369 + $0xdd8] sm:$0xff]
        %v2857 = vld [vmem:[%s369 + $0xde0] sm:$0xff]
        %v2858 = vld [vmem:[%s369 + $0xde8] sm:$0xff]
        %v2859 = vld [vmem:[%s369 + $0xdf0] sm:$0xff]
        %v2860 = vld [vmem:[%s369 + $0xdf8] sm:$0xff]
        %v2861 = vld [vmem:[%s369 + $0xe00] sm:$0xff]
        %v2862 = vld [vmem:[%s369 + $0xe08] sm:$0xff]
        %v2863 = vld [vmem:[%s369 + $0xe10] sm:$0xff]
        %v2864 = vld [vmem:[%s369 + $0xe18] sm:$0xff]
        %v2865 = vld [vmem:[%s369 + $0xe20] sm:$0xff]
        %v2866 = vld [vmem:[%s369 + $0xe28] sm:$0xff]
        %v2867 = vld [vmem:[%s369 + $0xe30] sm:$0xff]
        %v2868 = vld [vmem:[%s369 + $0xe38] sm:$0xff]
        %v2869 = vld [vmem:[%s369 + $0xe40] sm:$0xff]
        %v2870 = vld [vmem:[%s369 + $0xe48] sm:$0xff]
        %v2871 = vld [vmem:[%s369 + $0xe50] sm:$0xff]
        %v2872 = vld [vmem:[%s369 + $0xe58] sm:$0xff]
        %v2873 = vld [vmem:[%s369 + $0xe60] sm:$0xff]
        %v2874 = vld [vmem:[%s369 + $0xe68] sm:$0xff]
        %v2875 = vld [vmem:[%s369 + $0xe70] sm:$0xff]
        %v2876 = vld [vmem:[%s369 + $0xe78] sm:$0xff]
        %v2877 = vld [vmem:[%s369 + $0xe80] sm:$0xff]
        %v2878 = vld [vmem:[%s369 + $0xe88] sm:$0xff]
        %v2879 = vld [vmem:[%s369 + $0xe90] sm:$0xff]
        %v2880 = vld [vmem:[%s369 + $0xe98] sm:$0xff]
        %v2881 = vld [vmem:[%s369 + $0xea0] sm:$0xff]
        %v2882 = vld [vmem:[%s369 + $0xea8] sm:$0xff]
        %v2883 = vld [vmem:[%s369 + $0xeb0] sm:$0xff]
        %v2884 = vld [vmem:[%s369 + $0xeb8] sm:$0xff]
        %v2885 = vld [vmem:[%s369 + $0xec0] sm:$0xff]
        %v2886 = vld [vmem:[%s369 + $0xec8] sm:$0xff]
        %v2887 = vld [vmem:[%s369 + $0xed0] sm:$0xff]
        %v2888 = vld [vmem:[%s369 + $0xed8] sm:$0xff]
        %v2889 = vld [vmem:[%s369 + $0xee0] sm:$0xff]
        %v2890 = vld [vmem:[%s369 + $0xee8] sm:$0xff]
        %v2891 = vld [vmem:[%s369 + $0xef0] sm:$0xff]
        %v2892 = vld [vmem:[%s369 + $0xef8] sm:$0xff]
        %v2893 = vld [vmem:[%s369 + $0xf00] sm:$0xff]
        %v2894 = vld [vmem:[%s369 + $0xf08] sm:$0xff]
        %v2895 = vld [vmem:[%s369 + $0xf10] sm:$0xff]
        %v2896 = vld [vmem:[%s369 + $0xf18] sm:$0xff]
        %v2897 = vld [vmem:[%s369 + $0xf20] sm:$0xff]
        %v2898 = vld [vmem:[%s369 + $0xf28] sm:$0xff]
        %v2899 = vld [vmem:[%s369 + $0xf30] sm:$0xff]
        %v2900 = vld [vmem:[%s369 + $0xf38] sm:$0xff]
        %v2901 = vld [vmem:[%s369 + $0xf40] sm:$0xff]
        %v2902 = vld [vmem:[%s369 + $0xf48] sm:$0xff]
        %v2903 = vld [vmem:[%s369 + $0xf50] sm:$0xff]
        %v2904 = vld [vmem:[%s369 + $0xf58] sm:$0xff]
        %v2905 = vld [vmem:[%s369 + $0xf60] sm:$0xff]
        %v2906 = vld [vmem:[%s369 + $0xf68] sm:$0xff]
        %v2907 = vld [vmem:[%s369 + $0xf70] sm:$0xff]
        %v2908 = vld [vmem:[%s369 + $0xf78] sm:$0xff]
        %v2909 = vld [vmem:[%s369 + $0xf80] sm:$0xff]
        %v2910 = vld [vmem:[%s369 + $0xf88] sm:$0xff]
        %v2911 = vld [vmem:[%s369 + $0xf90] sm:$0xff]
        %v2912 = vld [vmem:[%s369 + $0xf98] sm:$0xff]
        %v2913 = vld [vmem:[%s369 + $0xfa0] sm:$0xff]
        %v2914 = vld [vmem:[%s369 + $0xfa8] sm:$0xff]
        %v2915 = vld [vmem:[%s369 + $0xfb0] sm:$0xff]
        %v2916 = vld [vmem:[%s369 + $0xfb8] sm:$0xff]
        %v2917 = vld [vmem:[%s369 + $0xfc0] sm:$0xff]
        %v2918 = vld [vmem:[%s369 + $0xfc8] sm:$0xff]
        %v2919 = vld [vmem:[%s369 + $0xfd0] sm:$0xff]
        %v2920 = vld [vmem:[%s369 + $0xfd8] sm:$0xff]
        %v2921 = vld [vmem:[%s369 + $0xfe0] sm:$0xff]
        %v2922 = vld [vmem:[%s369 + $0xfe8] sm:$0xff]
        %v2923 = vld [vmem:[%s369 + $0xff0] sm:$0xff]
        %v2924 = vld [vmem:[%s369 + $0xff8] sm:$0xff]
        %v2925 = vld [vmem:[%s369 + $0x1000] sm:$0xff]
        %v2926 = vld [vmem:[%s369 + $0x1008] sm:$0xff]
        %v2927 = vld [vmem:[%s369 + $0x1010] sm:$0xff]
        %v2928 = vld [vmem:[%s369 + $0x1018] sm:$0xff]
        %v2929 = vld [vmem:[%s369 + $0x1020] sm:$0xff]
        %v2930 = vld [vmem:[%s369 + $0x1028] sm:$0xff]
        %v2931 = vld [vmem:[%s369 + $0x1030] sm:$0xff]
        %v2932 = vld [vmem:[%s369 + $0x1038] sm:$0xff]
        %v2933 = vld [vmem:[%s369 + $0x1040] sm:$0xff]
        %v2934 = vld [vmem:[%s369 + $0x1048] sm:$0xff]
        %v2935 = vld [vmem:[%s369 + $0x1050] sm:$0xff]
        %v2936 = vld [vmem:[%s369 + $0x1058] sm:$0xff]
        %v2937 = vld [vmem:[%s369 + $0x1060] sm:$0xff]
        %v2938 = vld [vmem:[%s369 + $0x1068] sm:$0xff]
        %v2939 = vld [vmem:[%s369 + $0x1070] sm:$0xff]
        %v2940 = vld [vmem:[%s369 + $0x1078] sm:$0xff]
        %v2941 = vld [vmem:[%s369 + $0x1080] sm:$0xff]
        %v2942 = vld [vmem:[%s369 + $0x1088] sm:$0xff]
        %v2943 = vld [vmem:[%s369 + $0x1090] sm:$0xff]
        %v2944 = vld [vmem:[%s369 + $0x1098] sm:$0xff]
        %v2945 = vld [vmem:[%s369 + $0x10a0] sm:$0xff]
        %v2946 = vld [vmem:[%s369 + $0x10a8] sm:$0xff]
        %v2947 = vld [vmem:[%s369 + $0x10b0] sm:$0xff]
        %v2948 = vld [vmem:[%s369 + $0x10b8] sm:$0xff]
        %v2949 = vld [vmem:[%s369 + $0x10c0] sm:$0xff]
        %v2950 = vld [vmem:[%s369 + $0x10c8] sm:$0xff]
        %v2951 = vld [vmem:[%s369 + $0x10d0] sm:$0xff]
        %v2952 = vld [vmem:[%s369 + $0x10d8] sm:$0xff]
        %v2953 = vld [vmem:[%s369 + $0x10e0] sm:$0xff]
        %v2954 = vld [vmem:[%s369 + $0x10e8] sm:$0xff]
        %v2955 = vld [vmem:[%s369 + $0x10f0] sm:$0xff]
        %v2956 = vld [vmem:[%s369 + $0x10f8] sm:$0xff]
        %v2957 = vld [vmem:[%s369 + $0x1100] sm:$0xff]
        %v2958 = vld [vmem:[%s369 + $0x1108] sm:$0xff]
        %v2959 = vld [vmem:[%s369 + $0x1110] sm:$0xff]
        %v2960 = vld [vmem:[%s369 + $0x1118] sm:$0xff]
        %v2961 = vld [vmem:[%s369 + $0x1120] sm:$0xff]
        %v2962 = vld [vmem:[%s369 + $0x1128] sm:$0xff]
        %v2963 = vld [vmem:[%s369 + $0x1130] sm:$0xff]
        %v2964 = vld [vmem:[%s369 + $0x1138] sm:$0xff]
        %v2965 = vld [vmem:[%s369 + $0x1140] sm:$0xff]
        %v2966 = vld [vmem:[%s369 + $0x1148] sm:$0xff]
        %v2967 = vld [vmem:[%s369 + $0x1150] sm:$0xff]
        %v2968 = vld [vmem:[%s369 + $0x1158] sm:$0xff]
        %v2969 = vld [vmem:[%s369 + $0x1160] sm:$0xff]
        %v2970 = vld [vmem:[%s369 + $0x1168] sm:$0xff]
        %v2971 = vld [vmem:[%s369 + $0x1170] sm:$0xff]
        %v2972 = vld [vmem:[%s369 + $0x1178] sm:$0xff]
        %v2973 = vld [vmem:[%s369 + $0x1180] sm:$0xff]
        %v2974 = vld [vmem:[%s369 + $0x1188] sm:$0xff]
        %v2975 = vld [vmem:[%s369 + $0x1190] sm:$0xff]
        %v2976 = vld [vmem:[%s369 + $0x1198] sm:$0xff]
        %v2977 = vld [vmem:[%s369 + $0x11a0] sm:$0xff]
        %v2978 = vld [vmem:[%s369 + $0x11a8] sm:$0xff]
        %v2979 = vld [vmem:[%s369 + $0x11b0] sm:$0xff]
        %v2980 = vld [vmem:[%s369 + $0x11b8] sm:$0xff]
        %v2981 = vld [vmem:[%s369 + $0x11c0] sm:$0xff]
        %v2982 = vld [vmem:[%s369 + $0x11c8] sm:$0xff]
        %v2983 = vld [vmem:[%s369 + $0x11d0] sm:$0xff]
        %v2984 = vld [vmem:[%s369 + $0x11d8] sm:$0xff]
        %v2985 = vld [vmem:[%s369 + $0x11e0] sm:$0xff]
        %v2986 = vld [vmem:[%s369 + $0x11e8] sm:$0xff]
        %v2987 = vld [vmem:[%s369 + $0x11f0] sm:$0xff]
        %v2988 = vld [vmem:[%s369 + $0x11f8] sm:$0xff]
        %v2989 = vld [vmem:[%s369 + $0x1200] sm:$0xff]
        %v2990 = vld [vmem:[%s369 + $0x1208] sm:$0xff]
        %v2991 = vld [vmem:[%s369 + $0x1210] sm:$0xff]
        %v2992 = vld [vmem:[%s369 + $0x1218] sm:$0xff]
        %v2993 = vld [vmem:[%s369 + $0x1220] sm:$0xff]
        %v2994 = vld [vmem:[%s369 + $0x1228] sm:$0xff]
        %v2995 = vld [vmem:[%s369 + $0x1230] sm:$0xff]
        %v2996 = vld [vmem:[%s369 + $0x1238] sm:$0xff]
        %v2997 = vld [vmem:[%s369 + $0x1240] sm:$0xff]
        %v2998 = vld [vmem:[%s369 + $0x1248] sm:$0xff]
        %v2999 = vld [vmem:[%s369 + $0x1250] sm:$0xff]
        %v3000 = vld [vmem:[%s369 + $0x1258] sm:$0xff]
        %v3001 = vld [vmem:[%s369 + $0x1260] sm:$0xff]
        %v3002 = vld [vmem:[%s369 + $0x1268] sm:$0xff]
        %v3003 = vld [vmem:[%s369 + $0x1270] sm:$0xff]
        %v3004 = vld [vmem:[%s369 + $0x1278] sm:$0xff]
        %v3005 = vld [vmem:[%s369 + $0x1280] sm:$0xff]
        %v3006 = vld [vmem:[%s369 + $0x1288] sm:$0xff]
        %v3007 = vld [vmem:[%s369 + $0x1290] sm:$0xff]
        %v3008 = vld [vmem:[%s369 + $0x1298] sm:$0xff]
        %v3009 = vld [vmem:[%s369 + $0x12a0] sm:$0xff]
        %v3010 = vld [vmem:[%s369 + $0x12a8] sm:$0xff]
        %v3011 = vld [vmem:[%s369 + $0x12b0] sm:$0xff]
        %v3012 = vld [vmem:[%s369 + $0x12b8] sm:$0xff]
        %v3013 = vld [vmem:[%s369 + $0x12c0] sm:$0xff]
        %v3014 = vld [vmem:[%s369 + $0x12c8] sm:$0xff]
        %v3015 = vld [vmem:[%s369 + $0x12d0] sm:$0xff]
        %v3016 = vld [vmem:[%s369 + $0x12d8] sm:$0xff]
        %v3017 = vld [vmem:[%s369 + $0x12e0] sm:$0xff]
        %v3018 = vld [vmem:[%s369 + $0x12e8] sm:$0xff]
        %v3019 = vld [vmem:[%s369 + $0x12f0] sm:$0xff]
        %v3020 = vld [vmem:[%s369 + $0x12f8] sm:$0xff]
        %v3021 = vld [vmem:[%s369 + $0x1300] sm:$0xff]
        %v3022 = vld [vmem:[%s369 + $0x1308] sm:$0xff]
        %v3023 = vld [vmem:[%s369 + $0x1310] sm:$0xff]
        %v3024 = vld [vmem:[%s369 + $0x1318] sm:$0xff]
        %v3025 = vld [vmem:[%s369 + $0x1320] sm:$0xff]
        %v3026 = vld [vmem:[%s369 + $0x1328] sm:$0xff]
        %v3027 = vld [vmem:[%s369 + $0x1330] sm:$0xff]
        %v3028 = vld [vmem:[%s369 + $0x1338] sm:$0xff]
        %v3029 = vld [vmem:[%s369 + $0x1340] sm:$0xff]
        %v3030 = vld [vmem:[%s369 + $0x1348] sm:$0xff]
        %v3031 = vld [vmem:[%s369 + $0x1350] sm:$0xff]
        %v3032 = vld [vmem:[%s369 + $0x1358] sm:$0xff]
        %v3033 = vld [vmem:[%s369 + $0x1360] sm:$0xff]
        %v3034 = vld [vmem:[%s369 + $0x1368] sm:$0xff]
        %v3035 = vld [vmem:[%s369 + $0x1370] sm:$0xff]
        %v3036 = vld [vmem:[%s369 + $0x1378] sm:$0xff]
        %v3037 = vld [vmem:[%s369 + $0x1380] sm:$0xff]
        %v3038 = vld [vmem:[%s369 + $0x1388] sm:$0xff]
        %v3039 = vld [vmem:[%s369 + $0x1390] sm:$0xff]
        %v3040 = vld [vmem:[%s369 + $0x1398] sm:$0xff]
        %v3041 = vld [vmem:[%s369 + $0x13a0] sm:$0xff]
        %v3042 = vld [vmem:[%s369 + $0x13a8] sm:$0xff]
        %v3043 = vld [vmem:[%s369 + $0x13b0] sm:$0xff]
        %v3044 = vld [vmem:[%s369 + $0x13b8] sm:$0xff]
        %v3045 = vld [vmem:[%s369 + $0x13c0] sm:$0xff]
        %v3046 = vld [vmem:[%s369 + $0x13c8] sm:$0xff]
        %v3047 = vld [vmem:[%s369 + $0x13d0] sm:$0xff]
        %v3048 = vld [vmem:[%s369 + $0x13d8] sm:$0xff]
        %v3049 = vld [vmem:[%s369 + $0x13e0] sm:$0xff]
        %v3050 = vld [vmem:[%s369 + $0x13e8] sm:$0xff]
        %v3051 = vld [vmem:[%s369 + $0x13f0] sm:$0xff]
        %v3052 = vld [vmem:[%s369 + $0x13f8] sm:$0xff]
        %v3053 = vld [vmem:[%s369 + $0x1400] sm:$0xff]
        %v3054 = vld [vmem:[%s369 + $0x1408] sm:$0xff]
        %v3055 = vld [vmem:[%s369 + $0x1410] sm:$0xff]
        %v3056 = vld [vmem:[%s369 + $0x1418] sm:$0xff]
        %v3057 = vld [vmem:[%s369 + $0x1420] sm:$0xff]
        %v3058 = vld [vmem:[%s369 + $0x1428] sm:$0xff]
        %v3059 = vld [vmem:[%s369 + $0x1430] sm:$0xff]
        %v3060 = vld [vmem:[%s369 + $0x1438] sm:$0xff]
        %v3061 = vld [vmem:[%s369 + $0x1440] sm:$0xff]
        %v3062 = vld [vmem:[%s369 + $0x1448] sm:$0xff]
        %v3063 = vld [vmem:[%s369 + $0x1450] sm:$0xff]
        %v3064 = vld [vmem:[%s369 + $0x1458] sm:$0xff]
        %v3065 = vld [vmem:[%s369 + $0x1460] sm:$0xff]
        %v3066 = vld [vmem:[%s369 + $0x1468] sm:$0xff]
        %v3067 = vld [vmem:[%s369 + $0x1470] sm:$0xff]
        %v3068 = vld [vmem:[%s369 + $0x1478] sm:$0xff]
        %v3069 = vld [vmem:[%s369 + $0x1480] sm:$0xff]
        %v3070 = vld [vmem:[%s369 + $0x1488] sm:$0xff]
        %v3071 = vld [vmem:[%s369 + $0x1490] sm:$0xff]
        %v3072 = vld [vmem:[%s369 + $0x1498] sm:$0xff]
        %v3073 = vld [vmem:[%s369 + $0x14a0] sm:$0xff]
        %v3074 = vld [vmem:[%s369 + $0x14a8] sm:$0xff]
        %v3075 = vld [vmem:[%s369 + $0x14b0] sm:$0xff]
        %v3076 = vld [vmem:[%s369 + $0x14b8] sm:$0xff]
        %v3077 = vld [vmem:[%s369 + $0x14c0] sm:$0xff]
        %v3078 = vld [vmem:[%s369 + $0x14c8] sm:$0xff]
        %v3079 = vld [vmem:[%s369 + $0x14d0] sm:$0xff]
        %v3080 = vld [vmem:[%s369 + $0x14d8] sm:$0xff]
        %v3081 = vld [vmem:[%s369 + $0x14e0] sm:$0xff]
        %v3082 = vld [vmem:[%s369 + $0x14e8] sm:$0xff]
        %v3083 = vld [vmem:[%s369 + $0x14f0] sm:$0xff]
        %v3084 = vld [vmem:[%s369 + $0x14f8] sm:$0xff]
        %v3085 = vld [vmem:[%s369 + $0x1500] sm:$0xff]
        %v3086 = vld [vmem:[%s369 + $0x1508] sm:$0xff]
        %v3087 = vld [vmem:[%s369 + $0x1510] sm:$0xff]
        %v3088 = vld [vmem:[%s369 + $0x1518] sm:$0xff]
        %v3089 = vld [vmem:[%s369 + $0x1520] sm:$0xff]
        %v3090 = vld [vmem:[%s369 + $0x1528] sm:$0xff]
        %v3091 = vld [vmem:[%s369 + $0x1530] sm:$0xff]
        %v3092 = vld [vmem:[%s369 + $0x1538] sm:$0xff]
        %v3093 = vld [vmem:[%s369 + $0x1540] sm:$0xff]
        %v3094 = vld [vmem:[%s369 + $0x1548] sm:$0xff]
        %v3095 = vld [vmem:[%s369 + $0x1550] sm:$0xff]
        %v3096 = vld [vmem:[%s369 + $0x1558] sm:$0xff]
        %v3097 = vld [vmem:[%s369 + $0x1560] sm:$0xff]
        %v3098 = vld [vmem:[%s369 + $0x1568] sm:$0xff]
        %v3099 = vld [vmem:[%s369 + $0x1570] sm:$0xff]
        %v3100 = vld [vmem:[%s369 + $0x1578] sm:$0xff]
        %v3101 = vld [vmem:[%s369 + $0x1580] sm:$0xff]
        %v3102 = vld [vmem:[%s369 + $0x1588] sm:$0xff]
        %v3103 = vld [vmem:[%s369 + $0x1590] sm:$0xff]
        %v3104 = vld [vmem:[%s369 + $0x1598] sm:$0xff]
        %v3105 = vld [vmem:[%s369 + $0x15a0] sm:$0xff]
        %v3106 = vld [vmem:[%s369 + $0x15a8] sm:$0xff]
        %v3107 = vld [vmem:[%s369 + $0x15b0] sm:$0xff]
        %v3108 = vld [vmem:[%s369 + $0x15b8] sm:$0xff]
        %v3109 = vld [vmem:[%s369 + $0x15c0] sm:$0xff]
        %v3110 = vld [vmem:[%s369 + $0x15c8] sm:$0xff]
        %v3111 = vld [vmem:[%s369 + $0x15d0] sm:$0xff]
        %v3112 = vld [vmem:[%s369 + $0x15d8] sm:$0xff]
        %v3113 = vld [vmem:[%s369 + $0x15e0] sm:$0xff]
        %v3114 = vld [vmem:[%s369 + $0x15e8] sm:$0xff]
        %v3115 = vld [vmem:[%s369 + $0x15f0] sm:$0xff]
        %v3116 = vld [vmem:[%s369 + $0x15f8] sm:$0xff]
        %v3117 = vld [vmem:[%s369 + $0x1600] sm:$0xff]
        %v3118 = vld [vmem:[%s369 + $0x1608] sm:$0xff]
        %v3119 = vld [vmem:[%s369 + $0x1610] sm:$0xff]
        %v3120 = vld [vmem:[%s369 + $0x1618] sm:$0xff]
        %v3121 = vld [vmem:[%s369 + $0x1620] sm:$0xff]
        %v3122 = vld [vmem:[%s369 + $0x1628] sm:$0xff]
        %v3123 = vld [vmem:[%s369 + $0x1630] sm:$0xff]
        %v3124 = vld [vmem:[%s369 + $0x1638] sm:$0xff]
        %v3125 = vld [vmem:[%s369 + $0x1640] sm:$0xff]
        %v3126 = vld [vmem:[%s369 + $0x1648] sm:$0xff]
        %v3127 = vld [vmem:[%s369 + $0x1650] sm:$0xff]
        %v3128 = vld [vmem:[%s369 + $0x1658] sm:$0xff]
        %v3129 = vld [vmem:[%s369 + $0x1660] sm:$0xff]
        %v3130 = vld [vmem:[%s369 + $0x1668] sm:$0xff]
        %v3131 = vld [vmem:[%s369 + $0x1670] sm:$0xff]
        %v3132 = vld [vmem:[%s369 + $0x1678] sm:$0xff]
        %v3133 = vld [vmem:[%s369 + $0x1680] sm:$0xff]
        %v3134 = vld [vmem:[%s369 + $0x1688] sm:$0xff]
        %v3135 = vld [vmem:[%s369 + $0x1690] sm:$0xff]
        %v3136 = vld [vmem:[%s369 + $0x1698] sm:$0xff]
        %v3137 = vld [vmem:[%s369 + $0x16a0] sm:$0xff]
        %v3138 = vld [vmem:[%s369 + $0x16a8] sm:$0xff]
        %v3139 = vld [vmem:[%s369 + $0x16b0] sm:$0xff]
        %v3140 = vld [vmem:[%s369 + $0x16b8] sm:$0xff]
        %v3141 = vld [vmem:[%s369 + $0x16c0] sm:$0xff]
        %v3142 = vld [vmem:[%s369 + $0x16c8] sm:$0xff]
        %v3143 = vld [vmem:[%s369 + $0x16d0] sm:$0xff]
        %v3144 = vld [vmem:[%s369 + $0x16d8] sm:$0xff]
        %v3145 = vld [vmem:[%s369 + $0x16e0] sm:$0xff]
        %v3146 = vld [vmem:[%s369 + $0x16e8] sm:$0xff]
        %v3147 = vld [vmem:[%s369 + $0x16f0] sm:$0xff]
        %v3148 = vld [vmem:[%s369 + $0x16f8] sm:$0xff]
        %v3149 = vld [vmem:[%s369 + $0x1700] sm:$0xff]
        %v3150 = vld [vmem:[%s369 + $0x1708] sm:$0xff]
        %v3151 = vld [vmem:[%s369 + $0x1710] sm:$0xff]
        %v3152 = vld [vmem:[%s369 + $0x1718] sm:$0xff]
        %v3153 = vld [vmem:[%s369 + $0x1720] sm:$0xff]
        %v3154 = vld [vmem:[%s369 + $0x1728] sm:$0xff]
        %v3155 = vld [vmem:[%s369 + $0x1730] sm:$0xff]
        %v3156 = vld [vmem:[%s369 + $0x1738] sm:$0xff]
        %v3157 = vld [vmem:[%s369 + $0x1740] sm:$0xff]
        %v3158 = vld [vmem:[%s369 + $0x1748] sm:$0xff]
        %v3159 = vld [vmem:[%s369 + $0x1750] sm:$0xff]
        %v3160 = vld [vmem:[%s369 + $0x1758] sm:$0xff]
        %v3161 = vld [vmem:[%s369 + $0x1760] sm:$0xff]
        %v3162 = vld [vmem:[%s369 + $0x1768] sm:$0xff]
        %v3163 = vld [vmem:[%s369 + $0x1770] sm:$0xff]
        %v3164 = vld [vmem:[%s369 + $0x1778] sm:$0xff]
        %v3165 = vld [vmem:[%s369 + $0x1780] sm:$0xff]
        %v3166 = vld [vmem:[%s369 + $0x1788] sm:$0xff]
        %v3167 = vld [vmem:[%s369 + $0x1790] sm:$0xff]
        %v3168 = vld [vmem:[%s369 + $0x1798] sm:$0xff]
        %v3169 = vld [vmem:[%s369 + $0x17a0] sm:$0xff]
        %v3170 = vld [vmem:[%s369 + $0x17a8] sm:$0xff]
        %v3171 = vld [vmem:[%s369 + $0x17b0] sm:$0xff]
        %v3172 = vld [vmem:[%s369 + $0x17b8] sm:$0xff]
        %v3173 = vld [vmem:[%s369 + $0x17c0] sm:$0xff]
        %v3174 = vld [vmem:[%s369 + $0x17c8] sm:$0xff]
        %v3175 = vld [vmem:[%s369 + $0x17d0] sm:$0xff]
        %v3176 = vld [vmem:[%s369 + $0x17d8] sm:$0xff]
        %v3177 = vld [vmem:[%s369 + $0x17e0] sm:$0xff]
        %v3178 = vld [vmem:[%s369 + $0x17e8] sm:$0xff]
        %v3179 = vld [vmem:[%s369 + $0x17f0] sm:$0xff]
        %v3180 = vld [vmem:[%s369 + $0x17f8] sm:$0xff]
        %v3181 = vld [vmem:[%s369 + $0x1800] sm:$0xff]
        %v3182 = vld [vmem:[%s369 + $0x1808] sm:$0xff]
        %v3183 = vld [vmem:[%s369 + $0x1810] sm:$0xff]
        %v3184 = vld [vmem:[%s369 + $0x1818] sm:$0xff]
        %v3185 = vld [vmem:[%s369 + $0x1820] sm:$0xff]
        %v3186 = vld [vmem:[%s369 + $0x1828] sm:$0xff]
        %v3187 = vld [vmem:[%s369 + $0x1830] sm:$0xff]
        %v3188 = vld [vmem:[%s369 + $0x1838] sm:$0xff]
        %v3189 = vld [vmem:[%s369 + $0x1840] sm:$0xff]
        %v3190 = vld [vmem:[%s369 + $0x1848] sm:$0xff]
        %v3191 = vld [vmem:[%s369 + $0x1850] sm:$0xff]
        %v3192 = vld [vmem:[%s369 + $0x1858] sm:$0xff]
        %v3193 = vld [vmem:[%s369 + $0x1860] sm:$0xff]
        %v3194 = vld [vmem:[%s369 + $0x1868] sm:$0xff]
        %v3195 = vld [vmem:[%s369 + $0x1870] sm:$0xff]
        %v3196 = vld [vmem:[%s369 + $0x1878] sm:$0xff]
        %v3197 = vld [vmem:[%s369 + $0x1880] sm:$0xff]
        %v3198 = vld [vmem:[%s369 + $0x1888] sm:$0xff]
        %v3199 = vld [vmem:[%s369 + $0x1890] sm:$0xff]
        %v3200 = vld [vmem:[%s369 + $0x1898] sm:$0xff]
        %v3201 = vld [vmem:[%s369 + $0x18a0] sm:$0xff]
        %v3202 = vld [vmem:[%s369 + $0x18a8] sm:$0xff]
        %v3203 = vld [vmem:[%s369 + $0x18b0] sm:$0xff]
        %v3204 = vld [vmem:[%s369 + $0x18b8] sm:$0xff]
        %v3205 = vld [vmem:[%s369 + $0x18c0] sm:$0xff]
        %v3206 = vld [vmem:[%s369 + $0x18c8] sm:$0xff]
        %v3207 = vld [vmem:[%s369 + $0x18d0] sm:$0xff]
        %v3208 = vld [vmem:[%s369 + $0x18d8] sm:$0xff]
        %v3209 = vld [vmem:[%s369 + $0x18e0] sm:$0xff]
        %v3210 = vld [vmem:[%s369 + $0x18e8] sm:$0xff]
        %v3211 = vld [vmem:[%s369 + $0x18f0] sm:$0xff]
        %v3212 = vld [vmem:[%s369 + $0x18f8] sm:$0xff]
        %v3213 = vld [vmem:[%s369 + $0x1900] sm:$0xff]
        %v3214 = vld [vmem:[%s369 + $0x1908] sm:$0xff]
        %v3215 = vld [vmem:[%s369 + $0x1910] sm:$0xff]
        %v3216 = vld [vmem:[%s369 + $0x1918] sm:$0xff]
        %v3217 = vld [vmem:[%s369 + $0x1920] sm:$0xff]
        %v3218 = vld [vmem:[%s369 + $0x1928] sm:$0xff]
        %v3219 = vld [vmem:[%s369 + $0x1930] sm:$0xff]
        %v3220 = vld [vmem:[%s369 + $0x1938] sm:$0xff]
        %v3221 = vld [vmem:[%s369 + $0x1940] sm:$0xff]
        %v3222 = vld [vmem:[%s369 + $0x1948] sm:$0xff]
        %v3223 = vld [vmem:[%s369 + $0x1950] sm:$0xff]
        %v3224 = vld [vmem:[%s369 + $0x1958] sm:$0xff]
        %v3225 = vld [vmem:[%s369 + $0x1960] sm:$0xff]
        %v3226 = vld [vmem:[%s369 + $0x1968] sm:$0xff]
        %v3227 = vld [vmem:[%s369 + $0x1970] sm:$0xff]
        %v3228 = vld [vmem:[%s369 + $0x1978] sm:$0xff]
        %v3229 = vld [vmem:[%s369 + $0x1980] sm:$0xff]
        %v3230 = vld [vmem:[%s369 + $0x1988] sm:$0xff]
        %v3231 = vld [vmem:[%s369 + $0x1990] sm:$0xff]
        %v3232 = vld [vmem:[%s369 + $0x1998] sm:$0xff]
        %v3233 = vld [vmem:[%s369 + $0x19a0] sm:$0xff]
        %v3234 = vld [vmem:[%s369 + $0x19a8] sm:$0xff]
        %v3235 = vld [vmem:[%s369 + $0x19b0] sm:$0xff]
        %v3236 = vld [vmem:[%s369 + $0x19b8] sm:$0xff]
        %v3237 = vld [vmem:[%s369 + $0x19c0] sm:$0xff]
        %v3238 = vld [vmem:[%s369 + $0x19c8] sm:$0xff]
        %v3239 = vld [vmem:[%s369 + $0x19d0] sm:$0xff]
        %v3240 = vld [vmem:[%s369 + $0x19d8] sm:$0xff]
        %v3241 = vld [vmem:[%s369 + $0x19e0] sm:$0xff]
        %v3242 = vld [vmem:[%s369 + $0x19e8] sm:$0xff]
        %v3243 = vld [vmem:[%s369 + $0x19f0] sm:$0xff]
        %v3244 = vld [vmem:[%s369 + $0x19f8] sm:$0xff]
        %v3245 = vld [vmem:[%s369 + $0x1a00] sm:$0xff]
        %v3246 = vld [vmem:[%s369 + $0x1a08] sm:$0xff]
        %v3247 = vld [vmem:[%s369 + $0x1a10] sm:$0xff]
        %v3248 = vld [vmem:[%s369 + $0x1a18] sm:$0xff]
        %v3249 = vld [vmem:[%s369 + $0x1a20] sm:$0xff]
        %v3250 = vld [vmem:[%s369 + $0x1a28] sm:$0xff]
        %v3251 = vld [vmem:[%s369 + $0x1a30] sm:$0xff]
        %v3252 = vld [vmem:[%s369 + $0x1a38] sm:$0xff]
        %v3253 = vld [vmem:[%s369 + $0x1a40] sm:$0xff]
        %v3254 = vld [vmem:[%s369 + $0x1a48] sm:$0xff]
        %v3255 = vld [vmem:[%s369 + $0x1a50] sm:$0xff]
        %v3256 = vld [vmem:[%s369 + $0x1a58] sm:$0xff]
        %v3257 = vld [vmem:[%s369 + $0x1a60] sm:$0xff]
        %v3258 = vld [vmem:[%s369 + $0x1a68] sm:$0xff]
        %v3259 = vld [vmem:[%s369 + $0x1a70] sm:$0xff]
        %v3260 = vld [vmem:[%s369 + $0x1a78] sm:$0xff]
        %v3261 = vld [vmem:[%s369 + $0x1a80] sm:$0xff]
        %v3262 = vld [vmem:[%s369 + $0x1a88] sm:$0xff]
        %v3263 = vld [vmem:[%s369 + $0x1a90] sm:$0xff]
        %v3264 = vld [vmem:[%s369 + $0x1a98] sm:$0xff]
        %v3265 = vld [vmem:[%s369 + $0x1aa0] sm:$0xff]
        %v3266 = vld [vmem:[%s369 + $0x1aa8] sm:$0xff]
        %v3267 = vld [vmem:[%s369 + $0x1ab0] sm:$0xff]
        %v3268 = vld [vmem:[%s369 + $0x1ab8] sm:$0xff]
        %v3269 = vld [vmem:[%s369 + $0x1ac0] sm:$0xff]
        %v3270 = vld [vmem:[%s369 + $0x1ac8] sm:$0xff]
        %v3271 = vld [vmem:[%s369 + $0x1ad0] sm:$0xff]
        %v3272 = vld [vmem:[%s369 + $0x1ad8] sm:$0xff]
        %v3273 = vld [vmem:[%s369 + $0x1ae0] sm:$0xff]
        %v3274 = vld [vmem:[%s369 + $0x1ae8] sm:$0xff]
        %v3275 = vld [vmem:[%s369 + $0x1af0] sm:$0xff]
        %v3276 = vld [vmem:[%s369 + $0x1af8] sm:$0xff]
        %v3277 = vld [vmem:[%s369 + $0x1b00] sm:$0xff]
        %v3278 = vld [vmem:[%s369 + $0x1b08] sm:$0xff]
        %v3279 = vld [vmem:[%s369 + $0x1b10] sm:$0xff]
        %v3280 = vld [vmem:[%s369 + $0x1b18] sm:$0xff]
        %v3281 = vld [vmem:[%s369 + $0x1b20] sm:$0xff]
        %v3282 = vld [vmem:[%s369 + $0x1b28] sm:$0xff]
        %v3283 = vld [vmem:[%s369 + $0x1b30] sm:$0xff]
        %v3284 = vld [vmem:[%s369 + $0x1b38] sm:$0xff]
        %v3285 = vld [vmem:[%s369 + $0x1b40] sm:$0xff]
        %v3286 = vld [vmem:[%s369 + $0x1b48] sm:$0xff]
        %v3287 = vld [vmem:[%s369 + $0x1b50] sm:$0xff]
        %v3288 = vld [vmem:[%s369 + $0x1b58] sm:$0xff]
        %v3289 = vld [vmem:[%s369 + $0x1b60] sm:$0xff]
        %v3290 = vld [vmem:[%s369 + $0x1b68] sm:$0xff]
        %v3291 = vld [vmem:[%s369 + $0x1b70] sm:$0xff]
        %v3292 = vld [vmem:[%s369 + $0x1b78] sm:$0xff]
        %v3293 = vld [vmem:[%s369 + $0x1b80] sm:$0xff]
        %v3294 = vld [vmem:[%s369 + $0x1b88] sm:$0xff]
        %v3295 = vld [vmem:[%s369 + $0x1b90] sm:$0xff]
        %v3296 = vld [vmem:[%s369 + $0x1b98] sm:$0xff]
        %v3297 = vld [vmem:[%s369 + $0x1ba0] sm:$0xff]
        %v3298 = vld [vmem:[%s369 + $0x1ba8] sm:$0xff]
        %v3299 = vld [vmem:[%s369 + $0x1bb0] sm:$0xff]
        %v3300 = vld [vmem:[%s369 + $0x1bb8] sm:$0xff]
        %v3301 = vld [vmem:[%s369 + $0x1bc0] sm:$0xff]
        %v3302 = vld [vmem:[%s369 + $0x1bc8] sm:$0xff]
        %v3303 = vld [vmem:[%s369 + $0x1bd0] sm:$0xff]
        %v3304 = vld [vmem:[%s369 + $0x1bd8] sm:$0xff]
        %v3305 = vld [vmem:[%s369 + $0x1be0] sm:$0xff]
        %v3306 = vld [vmem:[%s369 + $0x1be8] sm:$0xff]
        %v3307 = vld [vmem:[%s369 + $0x1bf0] sm:$0xff]
        %v3308 = vld [vmem:[%s369 + $0x1bf8] sm:$0xff]
        %v3309 = vld [vmem:[%s369 + $0x1c00] sm:$0xff]
        %v3310 = vld [vmem:[%s369 + $0x1c08] sm:$0xff]
        %v3311 = vld [vmem:[%s369 + $0x1c10] sm:$0xff]
        %v3312 = vld [vmem:[%s369 + $0x1c18] sm:$0xff]
        %v3313 = vld [vmem:[%s369 + $0x1c20] sm:$0xff]
        %v3314 = vld [vmem:[%s369 + $0x1c28] sm:$0xff]
        %v3315 = vld [vmem:[%s369 + $0x1c30] sm:$0xff]
        %v3316 = vld [vmem:[%s369 + $0x1c38] sm:$0xff]
        %v3317 = vld [vmem:[%s369 + $0x1c40] sm:$0xff]
        %v3318 = vld [vmem:[%s369 + $0x1c48] sm:$0xff]
        %v3319 = vld [vmem:[%s369 + $0x1c50] sm:$0xff]
        %v3320 = vld [vmem:[%s369 + $0x1c58] sm:$0xff]
        %v3321 = vld [vmem:[%s369 + $0x1c60] sm:$0xff]
        %v3322 = vld [vmem:[%s369 + $0x1c68] sm:$0xff]
        %v3323 = vld [vmem:[%s369 + $0x1c70] sm:$0xff]
        %v3324 = vld [vmem:[%s369 + $0x1c78] sm:$0xff]
        %v3325 = vld [vmem:[%s369 + $0x1c80] sm:$0xff]
        %v3326 = vld [vmem:[%s369 + $0x1c88] sm:$0xff]
        %v3327 = vld [vmem:[%s369 + $0x1c90] sm:$0xff]
        %v3328 = vld [vmem:[%s369 + $0x1c98] sm:$0xff]
        %v3329 = vld [vmem:[%s369 + $0x1ca0] sm:$0xff]
        %v3330 = vld [vmem:[%s369 + $0x1ca8] sm:$0xff]
        %v3331 = vld [vmem:[%s369 + $0x1cb0] sm:$0xff]
        %v3332 = vld [vmem:[%s369 + $0x1cb8] sm:$0xff]
        %v3333 = vld [vmem:[%s369 + $0x1cc0] sm:$0xff]
        %v3334 = vld [vmem:[%s369 + $0x1cc8] sm:$0xff]
        %v3335 = vld [vmem:[%s369 + $0x1cd0] sm:$0xff]
        %v3336 = vld [vmem:[%s369 + $0x1cd8] sm:$0xff]
        %v3337 = vld [vmem:[%s369 + $0x1ce0] sm:$0xff]
        %v3338 = vld [vmem:[%s369 + $0x1ce8] sm:$0xff]
        %v3339 = vld [vmem:[%s369 + $0x1cf0] sm:$0xff]
        %v3340 = vld [vmem:[%s369 + $0x1cf8] sm:$0xff]
        %v3341 = vld [vmem:[%s369 + $0x1d00] sm:$0xff]
        %v3342 = vld [vmem:[%s369 + $0x1d08] sm:$0xff]
        %v3343 = vld [vmem:[%s369 + $0x1d10] sm:$0xff]
        %v3344 = vld [vmem:[%s369 + $0x1d18] sm:$0xff]
        %v3345 = vld [vmem:[%s369 + $0x1d20] sm:$0xff]
        %v3346 = vld [vmem:[%s369 + $0x1d28] sm:$0xff]
        %v3347 = vld [vmem:[%s369 + $0x1d30] sm:$0xff]
        %v3348 = vld [vmem:[%s369 + $0x1d38] sm:$0xff]
        %v3349 = vld [vmem:[%s369 + $0x1d40] sm:$0xff]
        %v3350 = vld [vmem:[%s369 + $0x1d48] sm:$0xff]
        %v3351 = vld [vmem:[%s369 + $0x1d50] sm:$0xff]
        %v3352 = vld [vmem:[%s369 + $0x1d58] sm:$0xff]
        %v3353 = vld [vmem:[%s369 + $0x1d60] sm:$0xff]
        %v3354 = vld [vmem:[%s369 + $0x1d68] sm:$0xff]
        %v3355 = vld [vmem:[%s369 + $0x1d70] sm:$0xff]
        %v3356 = vld [vmem:[%s369 + $0x1d78] sm:$0xff]
        %v3357 = vld [vmem:[%s369 + $0x1d80] sm:$0xff]
        %v3358 = vld [vmem:[%s369 + $0x1d88] sm:$0xff]
        %v3359 = vld [vmem:[%s369 + $0x1d90] sm:$0xff]
        %v3360 = vld [vmem:[%s369 + $0x1d98] sm:$0xff]
        %v3361 = vld [vmem:[%s369 + $0x1da0] sm:$0xff]
        %v3362 = vld [vmem:[%s369 + $0x1da8] sm:$0xff]
        %v3363 = vld [vmem:[%s369 + $0x1db0] sm:$0xff]
        %v3364 = vld [vmem:[%s369 + $0x1db8] sm:$0xff]
        %v3365 = vld [vmem:[%s369 + $0x1dc0] sm:$0xff]
        %v3366 = vld [vmem:[%s369 + $0x1dc8] sm:$0xff]
        %v3367 = vld [vmem:[%s369 + $0x1dd0] sm:$0xff]
        %v3368 = vld [vmem:[%s369 + $0x1dd8] sm:$0xff]
        %v3369 = vld [vmem:[%s369 + $0x1de0] sm:$0xff]
        %v3370 = vld [vmem:[%s369 + $0x1de8] sm:$0xff]
        %v3371 = vld [vmem:[%s369 + $0x1df0] sm:$0xff]
        %v3372 = vld [vmem:[%s369 + $0x1df8] sm:$0xff]
        %v3373 = vld [vmem:[%s369 + $0x1e00] sm:$0xff]
        %v3374 = vld [vmem:[%s369 + $0x1e08] sm:$0xff]
        %v3375 = vld [vmem:[%s369 + $0x1e10] sm:$0xff]
        %v3376 = vld [vmem:[%s369 + $0x1e18] sm:$0xff]
        %v3377 = vld [vmem:[%s369 + $0x1e20] sm:$0xff]
        %v3378 = vld [vmem:[%s369 + $0x1e28] sm:$0xff]
        %v3379 = vld [vmem:[%s369 + $0x1e30] sm:$0xff]
        %v3380 = vld [vmem:[%s369 + $0x1e38] sm:$0xff]
        %v3381 = vld [vmem:[%s369 + $0x1e40] sm:$0xff]
        %v3382 = vld [vmem:[%s369 + $0x1e48] sm:$0xff]
        %v3383 = vld [vmem:[%s369 + $0x1e50] sm:$0xff]
        %v3384 = vld [vmem:[%s369 + $0x1e58] sm:$0xff]
        %v3385 = vld [vmem:[%s369 + $0x1e60] sm:$0xff]
        %v3386 = vld [vmem:[%s369 + $0x1e68] sm:$0xff]
        %v3387 = vld [vmem:[%s369 + $0x1e70] sm:$0xff]
        %v3388 = vld [vmem:[%s369 + $0x1e78] sm:$0xff]
        %v3389 = vld [vmem:[%s369 + $0x1e80] sm:$0xff]
        %v3390 = vld [vmem:[%s369 + $0x1e88] sm:$0xff]
        %v3391 = vld [vmem:[%s369 + $0x1e90] sm:$0xff]
        %v3392 = vld [vmem:[%s369 + $0x1e98] sm:$0xff]
        %v3393 = vld [vmem:[%s369 + $0x1ea0] sm:$0xff]
        %v3394 = vld [vmem:[%s369 + $0x1ea8] sm:$0xff]
        %v3395 = vld [vmem:[%s369 + $0x1eb0] sm:$0xff]
        %v3396 = vld [vmem:[%s369 + $0x1eb8] sm:$0xff]
        %v3397 = vld [vmem:[%s369 + $0x1ec0] sm:$0xff]
        %v3398 = vld [vmem:[%s369 + $0x1ec8] sm:$0xff]
        %v3399 = vld [vmem:[%s369 + $0x1ed0] sm:$0xff]
        %v3400 = vld [vmem:[%s369 + $0x1ed8] sm:$0xff]
        %v3401 = vld [vmem:[%s369 + $0x1ee0] sm:$0xff]
        %v3402 = vld [vmem:[%s369 + $0x1ee8] sm:$0xff]
        %v3403 = vld [vmem:[%s369 + $0x1ef0] sm:$0xff]
        %v3404 = vld [vmem:[%s369 + $0x1ef8] sm:$0xff]
        %v3405 = vld [vmem:[%s369 + $0x1f00] sm:$0xff]
        %v3406 = vld [vmem:[%s369 + $0x1f08] sm:$0xff]
        %v3407 = vld [vmem:[%s369 + $0x1f10] sm:$0xff]
        %v3408 = vld [vmem:[%s369 + $0x1f18] sm:$0xff]
        %v3409 = vld [vmem:[%s369 + $0x1f20] sm:$0xff]
        %v3410 = vld [vmem:[%s369 + $0x1f28] sm:$0xff]
        %v3411 = vld [vmem:[%s369 + $0x1f30] sm:$0xff]
        %v3412 = vld [vmem:[%s369 + $0x1f38] sm:$0xff]
        %v3413 = vld [vmem:[%s369 + $0x1f40] sm:$0xff]
        %v3414 = vld [vmem:[%s369 + $0x1f48] sm:$0xff]
        %v3415 = vld [vmem:[%s369 + $0x1f50] sm:$0xff]
        %v3416 = vld [vmem:[%s369 + $0x1f58] sm:$0xff]
        %v3417 = vld [vmem:[%s369 + $0x1f60] sm:$0xff]
        %v3418 = vld [vmem:[%s369 + $0x1f68] sm:$0xff]
        %v3419 = vld [vmem:[%s369 + $0x1f70] sm:$0xff]
        %v3420 = vld [vmem:[%s369 + $0x1f78] sm:$0xff]
        %v3421 = vld [vmem:[%s369 + $0x1f80] sm:$0xff]
        %v3422 = vld [vmem:[%s369 + $0x1f88] sm:$0xff]
        %v3423 = vld [vmem:[%s369 + $0x1f90] sm:$0xff]
        %v3424 = vld [vmem:[%s369 + $0x1f98] sm:$0xff]
        %v3425 = vld [vmem:[%s369 + $0x1fa0] sm:$0xff]
        %v3426 = vld [vmem:[%s369 + $0x1fa8] sm:$0xff]
        %v3427 = vld [vmem:[%s369 + $0x1fb0] sm:$0xff]
        %v3428 = vld [vmem:[%s369 + $0x1fb8] sm:$0xff]
        %v3429 = vld [vmem:[%s369 + $0x1fc0] sm:$0xff]
        %v3430 = vld [vmem:[%s369 + $0x1fc8] sm:$0xff]
        %v3431 = vld [vmem:[%s369 + $0x1fd0] sm:$0xff]
        %v3432 = vld [vmem:[%s369 + $0x1fd8] sm:$0xff]
        %v3433 = vld [vmem:[%s369 + $0x1fe0] sm:$0xff]
        %v3434 = vld [vmem:[%s369 + $0x1fe8] sm:$0xff]
        %v3435 = vld [vmem:[%s369 + $0x1ff0] sm:$0xff]
        %v3436 = vld [vmem:[%s369 + $0x1ff8] sm:$0xff]
        %v3437 = vld [vmem:[%s369 + $0x2000] sm:$0xff]
        %v3438 = vld [vmem:[%s369 + $0x2008] sm:$0xff]
        %v3439 = vld [vmem:[%s369 + $0x2010] sm:$0xff]
        %v3440 = vld [vmem:[%s369 + $0x2018] sm:$0xff]
        %v3441 = vld [vmem:[%s369 + $0x2020] sm:$0xff]
        %v3442 = vld [vmem:[%s369 + $0x2028] sm:$0xff]
        %v3443 = vld [vmem:[%s369 + $0x2030] sm:$0xff]
        %v3444 = vld [vmem:[%s369 + $0x2038] sm:$0xff]
        %v3445 = vld [vmem:[%s369 + $0x2040] sm:$0xff]
        %v3446 = vld [vmem:[%s369 + $0x2048] sm:$0xff]
        %v3447 = vld [vmem:[%s369 + $0x2050] sm:$0xff]
        %v3448 = vld [vmem:[%s369 + $0x2058] sm:$0xff]
        %v3449 = vld [vmem:[%s369 + $0x2060] sm:$0xff]
        %v3450 = vld [vmem:[%s369 + $0x2068] sm:$0xff]
        %v3451 = vld [vmem:[%s369 + $0x2070] sm:$0xff]
        %v3452 = vld [vmem:[%s369 + $0x2078] sm:$0xff]
        %v3453 = vld [vmem:[%s369 + $0x2080] sm:$0xff]
        %v3454 = vld [vmem:[%s369 + $0x2088] sm:$0xff]
        %v3455 = vld [vmem:[%s369 + $0x2090] sm:$0xff]
        %v3456 = vld [vmem:[%s369 + $0x2098] sm:$0xff]
        %v3457 = vld [vmem:[%s369 + $0x20a0] sm:$0xff]
        %v3458 = vld [vmem:[%s369 + $0x20a8] sm:$0xff]
        %v3459 = vld [vmem:[%s369 + $0x20b0] sm:$0xff]
        %v3460 = vld [vmem:[%s369 + $0x20b8] sm:$0xff]
        %v3461 = vld [vmem:[%s369 + $0x20c0] sm:$0xff]
        %v3462 = vld [vmem:[%s369 + $0x20c8] sm:$0xff]
        %v3463 = vld [vmem:[%s369 + $0x20d0] sm:$0xff]
        %v3464 = vld [vmem:[%s369 + $0x20d8] sm:$0xff]
        %v3465 = vld [vmem:[%s369 + $0x20e0] sm:$0xff]
        %v3466 = vld [vmem:[%s369 + $0x20e8] sm:$0xff]
        %v3467 = vld [vmem:[%s369 + $0x20f0] sm:$0xff]
        %v3468 = vld [vmem:[%s369 + $0x20f8] sm:$0xff]
        %v3469 = vld [vmem:[%s369 + $0x2100] sm:$0xff]
        %v3470 = vld [vmem:[%s369 + $0x2108] sm:$0xff]
        %v3471 = vld [vmem:[%s369 + $0x2110] sm:$0xff]
        %v3472 = vld [vmem:[%s369 + $0x2118] sm:$0xff]
        %v3473 = vld [vmem:[%s369 + $0x2120] sm:$0xff]
        %v3474 = vld [vmem:[%s369 + $0x2128] sm:$0xff]
        %v3475 = vld [vmem:[%s369 + $0x2130] sm:$0xff]
        %v3476 = vld [vmem:[%s369 + $0x2138] sm:$0xff]
        %v3477 = vld [vmem:[%s369 + $0x2140] sm:$0xff]
        %v3478 = vld [vmem:[%s369 + $0x2148] sm:$0xff]
        %v3479 = vld [vmem:[%s369 + $0x2150] sm:$0xff]
        %v3480 = vld [vmem:[%s369 + $0x2158] sm:$0xff]
        %v3481 = vld [vmem:[%s369 + $0x2160] sm:$0xff]
        %v3482 = vld [vmem:[%s369 + $0x2168] sm:$0xff]
        %v3483 = vld [vmem:[%s369 + $0x2170] sm:$0xff]
        %v3484 = vld [vmem:[%s369 + $0x2178] sm:$0xff]
        %v3485 = vld [vmem:[%s369 + $0x2180] sm:$0xff]
        %v3486 = vld [vmem:[%s369 + $0x2188] sm:$0xff]
        %v3487 = vld [vmem:[%s369 + $0x2190] sm:$0xff]
        %v3488 = vld [vmem:[%s369 + $0x2198] sm:$0xff]
        %v3489 = vld [vmem:[%s369 + $0x21a0] sm:$0xff]
        %v3490 = vld [vmem:[%s369 + $0x21a8] sm:$0xff]
        %v3491 = vld [vmem:[%s369 + $0x21b0] sm:$0xff]
        %v3492 = vld [vmem:[%s369 + $0x21b8] sm:$0xff]
        %v3493 = vld [vmem:[%s369 + $0x21c0] sm:$0xff]
        %v3494 = vld [vmem:[%s369 + $0x21c8] sm:$0xff]
        %v3495 = vld [vmem:[%s369 + $0x21d0] sm:$0xff]
        %v3496 = vld [vmem:[%s369 + $0x21d8] sm:$0xff]
        %v3497 = vld [vmem:[%s369 + $0x21e0] sm:$0xff]
        %v3498 = vld [vmem:[%s369 + $0x21e8] sm:$0xff]
        %v3499 = vld [vmem:[%s369 + $0x21f0] sm:$0xff]
        %v3500 = vld [vmem:[%s369 + $0x21f8] sm:$0xff]
        %v3501 = vld [vmem:[%s369 + $0x2200] sm:$0xff]
        %v3502 = vld [vmem:[%s369 + $0x2208] sm:$0xff]
        %v3503 = vld [vmem:[%s369 + $0x2210] sm:$0xff]
        %v3504 = vld [vmem:[%s369 + $0x2218] sm:$0xff]
        %v3505 = vld [vmem:[%s369 + $0x2220] sm:$0xff]
        %v3506 = vld [vmem:[%s369 + $0x2228] sm:$0xff]
        %v3507 = vld [vmem:[%s369 + $0x2230] sm:$0xff]
        %v3508 = vld [vmem:[%s369 + $0x2238] sm:$0xff]
        %v3509 = vld [vmem:[%s369 + $0x2240] sm:$0xff]
        %v3510 = vld [vmem:[%s369 + $0x2248] sm:$0xff]
        %v3511 = vld [vmem:[%s369 + $0x2250] sm:$0xff]
        %v3512 = vld [vmem:[%s369 + $0x2258] sm:$0xff]
        %v3513 = vld [vmem:[%s369 + $0x2260] sm:$0xff]
        %v3514 = vld [vmem:[%s369 + $0x2268] sm:$0xff]
        %v3515 = vld [vmem:[%s369 + $0x2270] sm:$0xff]
        %v3516 = vld [vmem:[%s369 + $0x2278] sm:$0xff]
        %v3517 = vld [vmem:[%s369 + $0x2280] sm:$0xff]
        %v3518 = vld [vmem:[%s369 + $0x2288] sm:$0xff]
        %v3519 = vld [vmem:[%s369 + $0x2290] sm:$0xff]
        %v3520 = vld [vmem:[%s369 + $0x2298] sm:$0xff]
        %v3521 = vld [vmem:[%s369 + $0x22a0] sm:$0xff]
        %v3522 = vld [vmem:[%s369 + $0x22a8] sm:$0xff]
        %v3523 = vld [vmem:[%s369 + $0x22b0] sm:$0xff]
        %v3524 = vld [vmem:[%s369 + $0x22b8] sm:$0xff]
        %v3525 = vld [vmem:[%s369 + $0x22c0] sm:$0xff]
        %v3526 = vld [vmem:[%s369 + $0x22c8] sm:$0xff]
        %v3527 = vld [vmem:[%s369 + $0x22d0] sm:$0xff]
        %v3528 = vld [vmem:[%s369 + $0x22d8] sm:$0xff]
        %v3529 = vld [vmem:[%s369 + $0x22e0] sm:$0xff]
        %v3530 = vld [vmem:[%s369 + $0x22e8] sm:$0xff]
        %v3531 = vld [vmem:[%s369 + $0x22f0] sm:$0xff]
        %v3532 = vld [vmem:[%s369 + $0x22f8] sm:$0xff]
        %v3533 = vld [vmem:[%s369 + $0x2300] sm:$0xff]
        %v3534 = vld [vmem:[%s369 + $0x2308] sm:$0xff]
        %v3535 = vld [vmem:[%s369 + $0x2310] sm:$0xff]
        %v3536 = vld [vmem:[%s369 + $0x2318] sm:$0xff]
        %v3537 = vld [vmem:[%s369 + $0x2320] sm:$0xff]
        %v3538 = vld [vmem:[%s369 + $0x2328] sm:$0xff]
        %v3539 = vld [vmem:[%s369 + $0x2330] sm:$0xff]
        %v3540 = vld [vmem:[%s369 + $0x2338] sm:$0xff]
        %v3541 = vld [vmem:[%s369 + $0x2340] sm:$0xff]
        %v3542 = vld [vmem:[%s369 + $0x2348] sm:$0xff]
        %v3543 = vld [vmem:[%s369 + $0x2350] sm:$0xff]
        %v3544 = vld [vmem:[%s369 + $0x2358] sm:$0xff]
        %v3545 = vld [vmem:[%s369 + $0x2360] sm:$0xff]
        %v3546 = vld [vmem:[%s369 + $0x2368] sm:$0xff]
        %v3547 = vld [vmem:[%s369 + $0x2370] sm:$0xff]
        %v3548 = vld [vmem:[%s369 + $0x2378] sm:$0xff]
        %v3549 = vld [vmem:[%s369 + $0x2380] sm:$0xff]
        %v3550 = vld [vmem:[%s369 + $0x2388] sm:$0xff]
        %v3551 = vld [vmem:[%s369 + $0x2390] sm:$0xff]
        %v3552 = vld [vmem:[%s369 + $0x2398] sm:$0xff]
        %v3553 = vld [vmem:[%s369 + $0x23a0] sm:$0xff]
        %v3554 = vld [vmem:[%s369 + $0x23a8] sm:$0xff]
        %v3555 = vld [vmem:[%s369 + $0x23b0] sm:$0xff]
        %v3556 = vld [vmem:[%s369 + $0x23b8] sm:$0xff]
        %v3557 = vld [vmem:[%s369 + $0x23c0] sm:$0xff]
        %v3558 = vld [vmem:[%s369 + $0x23c8] sm:$0xff]
        %v3559 = vld [vmem:[%s369 + $0x23d0] sm:$0xff]
        %v3560 = vld [vmem:[%s369 + $0x23d8] sm:$0xff]
        %v3561 = vld [vmem:[%s369 + $0x23e0] sm:$0xff]
        %v3562 = vld [vmem:[%s369 + $0x23e8] sm:$0xff]
        %v3563 = vld [vmem:[%s369 + $0x23f0] sm:$0xff]
        %v3564 = vld [vmem:[%s369 + $0x23f8] sm:$0xff]
        %v3565 = vld [vmem:[%s369 + $0x2400] sm:$0xff]
        %v3566 = vld [vmem:[%s369 + $0x2408] sm:$0xff]
        %v3567 = vld [vmem:[%s369 + $0x2410] sm:$0xff]
        %v3568 = vld [vmem:[%s369 + $0x2418] sm:$0xff]
        %v3569 = vld [vmem:[%s369 + $0x2420] sm:$0xff]
        %v3570 = vld [vmem:[%s369 + $0x2428] sm:$0xff]
        %v3571 = vld [vmem:[%s369 + $0x2430] sm:$0xff]
        %v3572 = vld [vmem:[%s369 + $0x2438] sm:$0xff]
        %v3573 = vld [vmem:[%s369 + $0x2440] sm:$0xff]
        %v3574 = vld [vmem:[%s369 + $0x2448] sm:$0xff]
        %v3575 = vld [vmem:[%s369 + $0x2450] sm:$0xff]
        %v3576 = vld [vmem:[%s369 + $0x2458] sm:$0xff]
        %v3577 = vld [vmem:[%s369 + $0x2460] sm:$0xff]
        %v3578 = vld [vmem:[%s369 + $0x2468] sm:$0xff]
        %v3579 = vld [vmem:[%s369 + $0x2470] sm:$0xff]
        %v3580 = vld [vmem:[%s369 + $0x2478] sm:$0xff]
        %v3581 = vld [vmem:[%s369 + $0x2480] sm:$0xff]
        %v3582 = vld [vmem:[%s369 + $0x2488] sm:$0xff]
        %v3583 = vld [vmem:[%s369 + $0x2490] sm:$0xff]
        %v3584 = vld [vmem:[%s369 + $0x2498] sm:$0xff]
        %v3585 = vld [vmem:[%s369 + $0x24a0] sm:$0xff]
        %v3586 = vld [vmem:[%s369 + $0x24a8] sm:$0xff]
        %v3587 = vld [vmem:[%s369 + $0x24b0] sm:$0xff]
        %v3588 = vld [vmem:[%s369 + $0x24b8] sm:$0xff]
        %v3589 = vld [vmem:[%s369 + $0x24c0] sm:$0xff]
        %v3590 = vld [vmem:[%s369 + $0x24c8] sm:$0xff]
        %v3591 = vld [vmem:[%s369 + $0x24d0] sm:$0xff]
        %v3592 = vld [vmem:[%s369 + $0x24d8] sm:$0xff]
        %v3593 = vld [vmem:[%s369 + $0x24e0] sm:$0xff]
        %v3594 = vld [vmem:[%s369 + $0x24e8] sm:$0xff]
        %v3595 = vld [vmem:[%s369 + $0x24f0] sm:$0xff]
        %v3596 = vld [vmem:[%s369 + $0x24f8] sm:$0xff]
        %v3597 = vld [vmem:[%s369 + $0x2500] sm:$0xff]
        %v3598 = vld [vmem:[%s369 + $0x2508] sm:$0xff]
        %v3599 = vld [vmem:[%s369 + $0x2510] sm:$0xff]
        %v3600 = vld [vmem:[%s369 + $0x2518] sm:$0xff]
        %v3601 = vld [vmem:[%s369 + $0x2520] sm:$0xff]
        %v3602 = vld [vmem:[%s369 + $0x2528] sm:$0xff]
        %v3603 = vld [vmem:[%s369 + $0x2530] sm:$0xff]
        %v3604 = vld [vmem:[%s369 + $0x2538] sm:$0xff]
        %v3605 = vld [vmem:[%s369 + $0x2540] sm:$0xff]
        %v3606 = vld [vmem:[%s369 + $0x2548] sm:$0xff]
        %v3607 = vld [vmem:[%s369 + $0x2550] sm:$0xff]
        %v3608 = vld [vmem:[%s369 + $0x2558] sm:$0xff]
        %v3609 = vld [vmem:[%s369 + $0x2560] sm:$0xff]
        %v3610 = vld [vmem:[%s369 + $0x2568] sm:$0xff]
        %v3611 = vld [vmem:[%s369 + $0x2570] sm:$0xff]
        %v3612 = vld [vmem:[%s369 + $0x2578] sm:$0xff]
        %v3613 = vld [vmem:[%s369 + $0x2580] sm:$0xff]
        %v3614 = vld [vmem:[%s369 + $0x2588] sm:$0xff]
        %v3615 = vld [vmem:[%s369 + $0x2590] sm:$0xff]
        %v3616 = vld [vmem:[%s369 + $0x2598] sm:$0xff]
        %v3617 = vld [vmem:[%s369 + $0x25a0] sm:$0xff]
        %v3618 = vld [vmem:[%s369 + $0x25a8] sm:$0xff]
        %v3619 = vld [vmem:[%s369 + $0x25b0] sm:$0xff]
        %v3620 = vld [vmem:[%s369 + $0x25b8] sm:$0xff]
        %v3621 = vld [vmem:[%s369 + $0x25c0] sm:$0xff]
        %v3622 = vld [vmem:[%s369 + $0x25c8] sm:$0xff]
        %v3623 = vld [vmem:[%s369 + $0x25d0] sm:$0xff]
        %v3624 = vld [vmem:[%s369 + $0x25d8] sm:$0xff]
        %v3625 = vld [vmem:[%s369 + $0x25e0] sm:$0xff]
        %v3626 = vld [vmem:[%s369 + $0x25e8] sm:$0xff]
        %v3627 = vld [vmem:[%s369 + $0x25f0] sm:$0xff]
        %v3628 = vld [vmem:[%s369 + $0x25f8] sm:$0xff]
        %v3629 = vld [vmem:[%s369 + $0x2600] sm:$0xff]
        %v3630 = vld [vmem:[%s369 + $0x2608] sm:$0xff]
        %v3631 = vld [vmem:[%s369 + $0x2610] sm:$0xff]
        %v3632 = vld [vmem:[%s369 + $0x2618] sm:$0xff]
        %v3633 = vld [vmem:[%s369 + $0x2620] sm:$0xff]
        %v3634 = vld [vmem:[%s369 + $0x2628] sm:$0xff]
        %v3635 = vld [vmem:[%s369 + $0x2630] sm:$0xff]
        %v3636 = vld [vmem:[%s369 + $0x2638] sm:$0xff]
        %v3637 = vld [vmem:[%s369 + $0x2640] sm:$0xff]
        %v3638 = vld [vmem:[%s369 + $0x2648] sm:$0xff]
        %v3639 = vld [vmem:[%s369 + $0x2650] sm:$0xff]
        %v3640 = vld [vmem:[%s369 + $0x2658] sm:$0xff]
        %v3641 = vld [vmem:[%s369 + $0x2660] sm:$0xff]
        %v3642 = vld [vmem:[%s369 + $0x2668] sm:$0xff]
        %v3643 = vld [vmem:[%s369 + $0x2670] sm:$0xff]
        %v3644 = vld [vmem:[%s369 + $0x2678] sm:$0xff]
        %v3645 = vld [vmem:[%s369 + $0x2680] sm:$0xff]
        %v3646 = vld [vmem:[%s369 + $0x2688] sm:$0xff]
        %v3647 = vld [vmem:[%s369 + $0x2690] sm:$0xff]
        %v3648 = vld [vmem:[%s369 + $0x2698] sm:$0xff]
        %v3649 = vld [vmem:[%s369 + $0x26a0] sm:$0xff]
        %v3650 = vld [vmem:[%s369 + $0x26a8] sm:$0xff]
        %v3651 = vld [vmem:[%s369 + $0x26b0] sm:$0xff]
        %v3652 = vld [vmem:[%s369 + $0x26b8] sm:$0xff]
        %v3653 = vld [vmem:[%s369 + $0x26c0] sm:$0xff]
        %v3654 = vld [vmem:[%s369 + $0x26c8] sm:$0xff]
        %v3655 = vld [vmem:[%s369 + $0x26d0] sm:$0xff]
        %v3656 = vld [vmem:[%s369 + $0x26d8] sm:$0xff]
        %v3657 = vld [vmem:[%s369 + $0x26e0] sm:$0xff]
        %v3658 = vld [vmem:[%s369 + $0x26e8] sm:$0xff]
        %v3659 = vld [vmem:[%s369 + $0x26f0] sm:$0xff]
        %v3660 = vld [vmem:[%s369 + $0x26f8] sm:$0xff]
        %v3661 = vld [vmem:[%s369 + $0x2700] sm:$0xff]
        %v3662 = vld [vmem:[%s369 + $0x2708] sm:$0xff]
        %v3663 = vld [vmem:[%s369 + $0x2710] sm:$0xff]
        %v3664 = vld [vmem:[%s369 + $0x2718] sm:$0xff]
        %v3665 = vld [vmem:[%s369 + $0x2720] sm:$0xff]
        %v3666 = vld [vmem:[%s369 + $0x2728] sm:$0xff]
        %v3667 = vld [vmem:[%s369 + $0x2730] sm:$0xff]
        %v3668 = vld [vmem:[%s369 + $0x2738] sm:$0xff]
        %v3669 = vld [vmem:[%s369 + $0x2740] sm:$0xff]
        %v3670 = vld [vmem:[%s369 + $0x2748] sm:$0xff]
        %v3671 = vld [vmem:[%s369 + $0x2750] sm:$0xff]
        %v3672 = vld [vmem:[%s369 + $0x2758] sm:$0xff]
        %v3673 = vld [vmem:[%s369 + $0x2760] sm:$0xff]
        %v3674 = vld [vmem:[%s369 + $0x2768] sm:$0xff]
        %v3675 = vld [vmem:[%s369 + $0x2770] sm:$0xff]
        %v3676 = vld [vmem:[%s369 + $0x2778] sm:$0xff]
        %v3677 = vld [vmem:[%s369 + $0x2780] sm:$0xff]
        %v3678 = vld [vmem:[%s369 + $0x2788] sm:$0xff]
        %v3679 = vld [vmem:[%s369 + $0x2790] sm:$0xff]
        %v3680 = vld [vmem:[%s369 + $0x2798] sm:$0xff]
        %v3681 = vld [vmem:[%s369 + $0x27a0] sm:$0xff]
        %v3682 = vld [vmem:[%s369 + $0x27a8] sm:$0xff]
        %v3683 = vld [vmem:[%s369 + $0x27b0] sm:$0xff]
        %v3684 = vld [vmem:[%s369 + $0x27b8] sm:$0xff]
        %v3685 = vld [vmem:[%s369 + $0x27c0] sm:$0xff]
        %v3686 = vld [vmem:[%s369 + $0x27c8] sm:$0xff]
        %v3687 = vld [vmem:[%s369 + $0x27d0] sm:$0xff]
        %v3688 = vld [vmem:[%s369 + $0x27d8] sm:$0xff]
        %v3689 = vld [vmem:[%s369 + $0x27e0] sm:$0xff]
        %v3690 = vld [vmem:[%s369 + $0x27e8] sm:$0xff]
        %v3691 = vld [vmem:[%s369 + $0x27f0] sm:$0xff]
        %v3692 = vld [vmem:[%s369 + $0x27f8] sm:$0xff]
        %v3693 = vld [vmem:[%s369 + $0x2800] sm:$0xff]
        %v3694 = vld [vmem:[%s369 + $0x2808] sm:$0xff]
        %v3695 = vld [vmem:[%s369 + $0x2810] sm:$0xff]
        %v3696 = vld [vmem:[%s369 + $0x2818] sm:$0xff]
        %v3697 = vld [vmem:[%s369 + $0x2820] sm:$0xff]
        %v3698 = vld [vmem:[%s369 + $0x2828] sm:$0xff]
        %v3699 = vld [vmem:[%s369 + $0x2830] sm:$0xff]
        %v3700 = vld [vmem:[%s369 + $0x2838] sm:$0xff]
        %v3701 = vld [vmem:[%s369 + $0x2840] sm:$0xff]
        %v3702 = vld [vmem:[%s369 + $0x2848] sm:$0xff]
        %v3703 = vld [vmem:[%s369 + $0x2850] sm:$0xff]
        %v3704 = vld [vmem:[%s369 + $0x2858] sm:$0xff]
        %v3705 = vld [vmem:[%s369 + $0x2860] sm:$0xff]
        %v3706 = vld [vmem:[%s369 + $0x2868] sm:$0xff]
        %v3707 = vld [vmem:[%s369 + $0x2870] sm:$0xff]
        %v3708 = vld [vmem:[%s369 + $0x2878] sm:$0xff]
        %v3709 = vld [vmem:[%s369 + $0x2880] sm:$0xff]
        %v3710 = vld [vmem:[%s369 + $0x2888] sm:$0xff]
        %v3711 = vld [vmem:[%s369 + $0x2890] sm:$0xff]
        %v3712 = vld [vmem:[%s369 + $0x2898] sm:$0xff]
        %v3713 = vld [vmem:[%s369 + $0x28a0] sm:$0xff]
        %v3714 = vld [vmem:[%s369 + $0x28a8] sm:$0xff]
        %v3715 = vld [vmem:[%s369 + $0x28b0] sm:$0xff]
        %v3716 = vld [vmem:[%s369 + $0x28b8] sm:$0xff]
        %v3717 = vld [vmem:[%s369 + $0x28c0] sm:$0xff]
        %v3718 = vld [vmem:[%s369 + $0x28c8] sm:$0xff]
        %v3719 = vld [vmem:[%s369 + $0x28d0] sm:$0xff]
        %v3720 = vld [vmem:[%s369 + $0x28d8] sm:$0xff]
        %v3721 = vld [vmem:[%s369 + $0x28e0] sm:$0xff]
        %v3722 = vld [vmem:[%s369 + $0x28e8] sm:$0xff]
        %v3723 = vld [vmem:[%s369 + $0x28f0] sm:$0xff]
        %v3724 = vld [vmem:[%s369 + $0x28f8] sm:$0xff]
        %v3725 = vld [vmem:[%s369 + $0x2900] sm:$0xff]
        %v3726 = vld [vmem:[%s369 + $0x2908] sm:$0xff]
        %v3727 = vld [vmem:[%s369 + $0x2910] sm:$0xff]
        %v3728 = vld [vmem:[%s369 + $0x2918] sm:$0xff]
        %v3729 = vld [vmem:[%s369 + $0x2920] sm:$0xff]
        %v3730 = vld [vmem:[%s369 + $0x2928] sm:$0xff]
        %v3731 = vld [vmem:[%s369 + $0x2930] sm:$0xff]
        %v3732 = vld [vmem:[%s369 + $0x2938] sm:$0xff]
        %v3733 = vld [vmem:[%s369 + $0x2940] sm:$0xff]
        %v3734 = vld [vmem:[%s369 + $0x2948] sm:$0xff]
        %v3735 = vld [vmem:[%s369 + $0x2950] sm:$0xff]
        %v3736 = vld [vmem:[%s369 + $0x2958] sm:$0xff]
        %v3737 = vld [vmem:[%s369 + $0x2960] sm:$0xff]
        %v3738 = vld [vmem:[%s369 + $0x2968] sm:$0xff]
        %v3739 = vld [vmem:[%s369 + $0x2970] sm:$0xff]
        %v3740 = vld [vmem:[%s369 + $0x2978] sm:$0xff]
        %v3741 = vld [vmem:[%s369 + $0x2980] sm:$0xff]
        %v3742 = vld [vmem:[%s369 + $0x2988] sm:$0xff]
        %v3743 = vld [vmem:[%s369 + $0x2990] sm:$0xff]
        %v3744 = vld [vmem:[%s369 + $0x2998] sm:$0xff]
        %v3745 = vld [vmem:[%s369 + $0x29a0] sm:$0xff]
        %v3746 = vld [vmem:[%s369 + $0x29a8] sm:$0xff]
        %v3747 = vld [vmem:[%s369 + $0x29b0] sm:$0xff]
        %v3748 = vld [vmem:[%s369 + $0x29b8] sm:$0xff]
        %v3749 = vld [vmem:[%s369 + $0x29c0] sm:$0xff]
        %v3750 = vld [vmem:[%s369 + $0x29c8] sm:$0xff]
        %v3751 = vld [vmem:[%s369 + $0x29d0] sm:$0xff]
        %v3752 = vld [vmem:[%s369 + $0x29d8] sm:$0xff]
        %v3753 = vld [vmem:[%s369 + $0x29e0] sm:$0xff]
        %v3754 = vld [vmem:[%s369 + $0x29e8] sm:$0xff]
        %v3755 = vld [vmem:[%s369 + $0x29f0] sm:$0xff]
        %v3756 = vld [vmem:[%s369 + $0x29f8] sm:$0xff]
        %v3757 = vld [vmem:[%s369 + $0x2a00] sm:$0xff]
        %v3758 = vld [vmem:[%s369 + $0x2a08] sm:$0xff]
        %v3759 = vld [vmem:[%s369 + $0x2a10] sm:$0xff]
        %v3760 = vld [vmem:[%s369 + $0x2a18] sm:$0xff]
        %v3761 = vld [vmem:[%s369 + $0x2a20] sm:$0xff]
        %v3762 = vld [vmem:[%s369 + $0x2a28] sm:$0xff]
        %v3763 = vld [vmem:[%s369 + $0x2a30] sm:$0xff]
        %v3764 = vld [vmem:[%s369 + $0x2a38] sm:$0xff]
        %v3765 = vld [vmem:[%s369 + $0x2a40] sm:$0xff]
        %v3766 = vld [vmem:[%s369 + $0x2a48] sm:$0xff]
        %v3767 = vld [vmem:[%s369 + $0x2a50] sm:$0xff]
        %v3768 = vld [vmem:[%s369 + $0x2a58] sm:$0xff]
        %v3769 = vld [vmem:[%s369 + $0x2a60] sm:$0xff]
        %v3770 = vld [vmem:[%s369 + $0x2a68] sm:$0xff]
        %v3771 = vld [vmem:[%s369 + $0x2a70] sm:$0xff]
        %v3772 = vld [vmem:[%s369 + $0x2a78] sm:$0xff]
        %v3773 = vld [vmem:[%s369 + $0x2a80] sm:$0xff]
        %v3774 = vld [vmem:[%s369 + $0x2a88] sm:$0xff]
        %v3775 = vld [vmem:[%s369 + $0x2a90] sm:$0xff]
        %v3776 = vld [vmem:[%s369 + $0x2a98] sm:$0xff]
        %v3777 = vld [vmem:[%s369 + $0x2aa0] sm:$0xff]
        %v3778 = vld [vmem:[%s369 + $0x2aa8] sm:$0xff]
        %v3779 = vld [vmem:[%s369 + $0x2ab0] sm:$0xff]
        %v3780 = vld [vmem:[%s369 + $0x2ab8] sm:$0xff]
        %v3781 = vld [vmem:[%s369 + $0x2ac0] sm:$0xff]
        %v3782 = vld [vmem:[%s369 + $0x2ac8] sm:$0xff]
        %v3783 = vld [vmem:[%s369 + $0x2ad0] sm:$0xff]
        %v3784 = vld [vmem:[%s369 + $0x2ad8] sm:$0xff]
        %v3785 = vld [vmem:[%s369 + $0x2ae0] sm:$0xff]
        %v3786 = vld [vmem:[%s369 + $0x2ae8] sm:$0xff]
        %v3787 = vld [vmem:[%s369 + $0x2af0] sm:$0xff]
        %v3788 = vld [vmem:[%s369 + $0x2af8] sm:$0xff]
        %v3789 = vld [vmem:[%s369 + $0x2b00] sm:$0xff]
        %v3790 = vld [vmem:[%s369 + $0x2b08] sm:$0xff]
        %v3791 = vld [vmem:[%s369 + $0x2b10] sm:$0xff]
        %v3792 = vld [vmem:[%s369 + $0x2b18] sm:$0xff]
        %v3793 = vld [vmem:[%s369 + $0x2b20] sm:$0xff]
        %v3794 = vld [vmem:[%s369 + $0x2b28] sm:$0xff]
        %v3795 = vld [vmem:[%s369 + $0x2b30] sm:$0xff]
        %v3796 = vld [vmem:[%s369 + $0x2b38] sm:$0xff]
        %v3797 = vld [vmem:[%s369 + $0x2b40] sm:$0xff]
        %v3798 = vld [vmem:[%s369 + $0x2b48] sm:$0xff]
        %v3799 = vld [vmem:[%s369 + $0x2b50] sm:$0xff]
        %v3800 = vld [vmem:[%s369 + $0x2b58] sm:$0xff]
        %v3801 = vld [vmem:[%s369 + $0x2b60] sm:$0xff]
        %v3802 = vld [vmem:[%s369 + $0x2b68] sm:$0xff]
        %v3803 = vld [vmem:[%s369 + $0x2b70] sm:$0xff]
        %v3804 = vld [vmem:[%s369 + $0x2b78] sm:$0xff]
        %v3805 = vld [vmem:[%s369 + $0x2b80] sm:$0xff]
        %v3806 = vld [vmem:[%s369 + $0x2b88] sm:$0xff]
        %v3807 = vld [vmem:[%s369 + $0x2b90] sm:$0xff]
        %v3808 = vld [vmem:[%s369 + $0x2b98] sm:$0xff]
        %v3809 = vld [vmem:[%s369 + $0x2ba0] sm:$0xff]
        %v3810 = vld [vmem:[%s369 + $0x2ba8] sm:$0xff]
        %v3811 = vld [vmem:[%s369 + $0x2bb0] sm:$0xff]
        %v3812 = vld [vmem:[%s369 + $0x2bb8] sm:$0xff]
        %v3813 = vld [vmem:[%s369 + $0x2bc0] sm:$0xff]
        %v3814 = vld [vmem:[%s369 + $0x2bc8] sm:$0xff]
        %v3815 = vld [vmem:[%s369 + $0x2bd0] sm:$0xff]
        %v3816 = vld [vmem:[%s369 + $0x2bd8] sm:$0xff]
        %v3817 = vld [vmem:[%s369 + $0x2be0] sm:$0xff]
        %v3818 = vld [vmem:[%s369 + $0x2be8] sm:$0xff]
        %v3819 = vld [vmem:[%s369 + $0x2bf0] sm:$0xff]
        %v3820 = vld [vmem:[%s369 + $0x2bf8] sm:$0xff]
        %v3821 = vld [vmem:[%s369 + $0x2c00] sm:$0xff]
        %v3822 = vld [vmem:[%s369 + $0x2c08] sm:$0xff]
        %v3823 = vld [vmem:[%s369 + $0x2c10] sm:$0xff]
        %v3824 = vld [vmem:[%s369 + $0x2c18] sm:$0xff]
        %v3825 = vld [vmem:[%s369 + $0x2c20] sm:$0xff]
        %v3826 = vld [vmem:[%s369 + $0x2c28] sm:$0xff]
        %v3827 = vld [vmem:[%s369 + $0x2c30] sm:$0xff]
        %v3828 = vld [vmem:[%s369 + $0x2c38] sm:$0xff]
        %v3829 = vld [vmem:[%s369 + $0x2c40] sm:$0xff]
        %v3830 = vld [vmem:[%s369 + $0x2c48] sm:$0xff]
        %v3831 = vld [vmem:[%s369 + $0x2c50] sm:$0xff]
        %v3832 = vld [vmem:[%s369 + $0x2c58] sm:$0xff]
        %v3833 = vld [vmem:[%s369 + $0x2c60] sm:$0xff]
        %v3834 = vld [vmem:[%s369 + $0x2c68] sm:$0xff]
        %v3835 = vld [vmem:[%s369 + $0x2c70] sm:$0xff]
        %v3836 = vld [vmem:[%s369 + $0x2c78] sm:$0xff]
        %v3837 = vld [vmem:[%s369 + $0x2c80] sm:$0xff]
        %v3838 = vld [vmem:[%s369 + $0x2c88] sm:$0xff]
        %v3839 = vld [vmem:[%s369 + $0x2c90] sm:$0xff]
        %v3840 = vld [vmem:[%s369 + $0x2c98] sm:$0xff]
        %v3841 = vld [vmem:[%s369 + $0x2ca0] sm:$0xff]
        %v3842 = vld [vmem:[%s369 + $0x2ca8] sm:$0xff]
        %v3843 = vld [vmem:[%s369 + $0x2cb0] sm:$0xff]
        %v3844 = vld [vmem:[%s369 + $0x2cb8] sm:$0xff]
        %v3845 = vld [vmem:[%s369 + $0x2cc0] sm:$0xff]
        %v3846 = vld [vmem:[%s369 + $0x2cc8] sm:$0xff]
        %v3847 = vld [vmem:[%s369 + $0x2cd0] sm:$0xff]
        %v3848 = vld [vmem:[%s369 + $0x2cd8] sm:$0xff]
        %v3849 = vld [vmem:[%s369 + $0x2ce0] sm:$0xff]
        %v3850 = vld [vmem:[%s369 + $0x2ce8] sm:$0xff]
        %v3851 = vld [vmem:[%s369 + $0x2cf0] sm:$0xff]
        %v3852 = vld [vmem:[%s369 + $0x2cf8] sm:$0xff]
        %v3853 = vld [vmem:[%s369 + $0x2d00] sm:$0xff]
        %v3854 = vld [vmem:[%s369 + $0x2d08] sm:$0xff]
        %v3855 = vld [vmem:[%s369 + $0x2d10] sm:$0xff]
        %v3856 = vld [vmem:[%s369 + $0x2d18] sm:$0xff]
        %v3857 = vld [vmem:[%s369 + $0x2d20] sm:$0xff]
        %v3858 = vld [vmem:[%s369 + $0x2d28] sm:$0xff]
        %v3859 = vld [vmem:[%s369 + $0x2d30] sm:$0xff]
        %v3860 = vld [vmem:[%s369 + $0x2d38] sm:$0xff]
        %v3861 = vld [vmem:[%s369 + $0x2d40] sm:$0xff]
        %v3862 = vld [vmem:[%s369 + $0x2d48] sm:$0xff]
        %v3863 = vld [vmem:[%s369 + $0x2d50] sm:$0xff]
        %v3864 = vld [vmem:[%s369 + $0x2d58] sm:$0xff]
        %v3865 = vld [vmem:[%s369 + $0x2d60] sm:$0xff]
        %v3866 = vld [vmem:[%s369 + $0x2d68] sm:$0xff]
        %v3867 = vld [vmem:[%s369 + $0x2d70] sm:$0xff]
        %v3868 = vld [vmem:[%s369 + $0x2d78] sm:$0xff]
        %v3869 = vld [vmem:[%s369 + $0x2d80] sm:$0xff]
        %v3870 = vld [vmem:[%s369 + $0x2d88] sm:$0xff]
        %v3871 = vld [vmem:[%s369 + $0x2d90] sm:$0xff]
        %v3872 = vld [vmem:[%s369 + $0x2d98] sm:$0xff]
        %v3873 = vld [vmem:[%s369 + $0x2da0] sm:$0xff]
        %v3874 = vld [vmem:[%s369 + $0x2da8] sm:$0xff]
        %v3875 = vld [vmem:[%s369 + $0x2db0] sm:$0xff]
        %v3876 = vld [vmem:[%s369 + $0x2db8] sm:$0xff]
        %v3877 = vld [vmem:[%s369 + $0x2dc0] sm:$0xff]
        %v3878 = vld [vmem:[%s369 + $0x2dc8] sm:$0xff]
        %v3879 = vld [vmem:[%s369 + $0x2dd0] sm:$0xff]
        %v3880 = vld [vmem:[%s369 + $0x2dd8] sm:$0xff]
        %v3881 = vld [vmem:[%s369 + $0x2de0] sm:$0xff]
        %v3882 = vld [vmem:[%s369 + $0x2de8] sm:$0xff]
        %v3883 = vld [vmem:[%s369 + $0x2df0] sm:$0xff]
        %v3884 = vld [vmem:[%s369 + $0x2df8] sm:$0xff]
        %v3885 = vld [vmem:[%s369 + $0x2e00] sm:$0xff]
        %v3886 = vld [vmem:[%s369 + $0x2e08] sm:$0xff]
        %v3887 = vld [vmem:[%s369 + $0x2e10] sm:$0xff]
        %v3888 = vld [vmem:[%s369 + $0x2e18] sm:$0xff]
        %v3889 = vld [vmem:[%s369 + $0x2e20] sm:$0xff]
        %v3890 = vld [vmem:[%s369 + $0x2e28] sm:$0xff]
        %v3891 = vld [vmem:[%s369 + $0x2e30] sm:$0xff]
        %v3892 = vld [vmem:[%s369 + $0x2e38] sm:$0xff]
        %v3893 = vld [vmem:[%s369 + $0x2e40] sm:$0xff]
        %v3894 = vld [vmem:[%s369 + $0x2e48] sm:$0xff]
        %v3895 = vld [vmem:[%s369 + $0x2e50] sm:$0xff]
        %v3896 = vld [vmem:[%s369 + $0x2e58] sm:$0xff]
        %v3897 = vld [vmem:[%s369 + $0x2e60] sm:$0xff]
        %v3898 = vld [vmem:[%s369 + $0x2e68] sm:$0xff]
        %v3899 = vld [vmem:[%s369 + $0x2e70] sm:$0xff]
        %v3900 = vld [vmem:[%s369 + $0x2e78] sm:$0xff]
        %v3901 = vld [vmem:[%s369 + $0x2e80] sm:$0xff]
        %v3902 = vld [vmem:[%s369 + $0x2e88] sm:$0xff]
        %v3903 = vld [vmem:[%s369 + $0x2e90] sm:$0xff]
        %v3904 = vld [vmem:[%s369 + $0x2e98] sm:$0xff]
        %v3905 = vld [vmem:[%s369 + $0x2ea0] sm:$0xff]
        %v3906 = vld [vmem:[%s369 + $0x2ea8] sm:$0xff]
        %v3907 = vld [vmem:[%s369 + $0x2eb0] sm:$0xff]
        %v3908 = vld [vmem:[%s369 + $0x2eb8] sm:$0xff]
        %v3909 = vld [vmem:[%s369 + $0x2ec0] sm:$0xff]
        %v3910 = vld [vmem:[%s369 + $0x2ec8] sm:$0xff]
        %v3911 = vld [vmem:[%s369 + $0x2ed0] sm:$0xff]
        %v3912 = vld [vmem:[%s369 + $0x2ed8] sm:$0xff]
        %v3913 = vld [vmem:[%s369 + $0x2ee0] sm:$0xff]
        %v3914 = vld [vmem:[%s369 + $0x2ee8] sm:$0xff]
        %v3915 = vld [vmem:[%s369 + $0x2ef0] sm:$0xff]
        %v3916 = vld [vmem:[%s369 + $0x2ef8] sm:$0xff]
        %v3917 = vld [vmem:[%s369 + $0x2f00] sm:$0xff]
        %v3918 = vld [vmem:[%s369 + $0x2f08] sm:$0xff]
        %v3919 = vld [vmem:[%s369 + $0x2f10] sm:$0xff]
        %v3920 = vld [vmem:[%s369 + $0x2f18] sm:$0xff]
        %v3921 = vld [vmem:[%s369 + $0x2f20] sm:$0xff]
        %v3922 = vld [vmem:[%s369 + $0x2f28] sm:$0xff]
        %v3923 = vld [vmem:[%s369 + $0x2f30] sm:$0xff]
        %v3924 = vld [vmem:[%s369 + $0x2f38] sm:$0xff]
        %v3925 = vld [vmem:[%s369 + $0x2f40] sm:$0xff]
        %v3926 = vld [vmem:[%s369 + $0x2f48] sm:$0xff]
        %v3927 = vld [vmem:[%s369 + $0x2f50] sm:$0xff]
        %v3928 = vld [vmem:[%s369 + $0x2f58] sm:$0xff]
        %v3929 = vld [vmem:[%s369 + $0x2f60] sm:$0xff]
        %v3930 = vld [vmem:[%s369 + $0x2f68] sm:$0xff]
        %v3931 = vld [vmem:[%s369 + $0x2f70] sm:$0xff]
        %v3932 = vld [vmem:[%s369 + $0x2f78] sm:$0xff]
        %v3933 = vld [vmem:[%s369 + $0x2f80] sm:$0xff]
        %v3934 = vld [vmem:[%s369 + $0x2f88] sm:$0xff]
        %v3935 = vld [vmem:[%s369 + $0x2f90] sm:$0xff]
        %v3936 = vld [vmem:[%s369 + $0x2f98] sm:$0xff]
        %v3937 = vld [vmem:[%s369 + $0x2fa0] sm:$0xff]
        %v3938 = vld [vmem:[%s369 + $0x2fa8] sm:$0xff]
        %v3939 = vld [vmem:[%s369 + $0x2fb0] sm:$0xff]
        %v3940 = vld [vmem:[%s369 + $0x2fb8] sm:$0xff]
        %v3941 = vld [vmem:[%s369 + $0x2fc0] sm:$0xff]
        %v3942 = vld [vmem:[%s369 + $0x2fc8] sm:$0xff]
        %v3943 = vld [vmem:[%s369 + $0x2fd0] sm:$0xff]
        %v3944 = vld [vmem:[%s369 + $0x2fd8] sm:$0xff]
        %v3945 = vld [vmem:[%s369 + $0x2fe0] sm:$0xff]
        %v3946 = vld [vmem:[%s369 + $0x2fe8] sm:$0xff]
        %v3947 = vld [vmem:[%s369 + $0x2ff0] sm:$0xff]
        %v3948 = vld [vmem:[%s369 + $0x2ff8] sm:$0xff]
        %v3949 = vld [vmem:[%s378] sm:$0xff]
        %v3951 = vlaneseq
        %v3952 = vshrl.u32 %v3951, 7
        %v3953 = vsub.s32 0, %v3952
        %v3954 = vrot.slane %v3949, %v3953
        %v3955 = vlaneseq
        %v3956 = vshrl.u32 %v3955, 7
        %v3957 = vsub.s32 1, %v3956
        %v3958 = vrot.slane %v3949, %v3957
        %v3959 = vlaneseq
        %v3960 = vshrl.u32 %v3959, 7
        %v3961 = vsub.s32 2, %v3960
        %v3962 = vrot.slane %v3949, %v3961
        %v3963 = vlaneseq
        %v3964 = vshrl.u32 %v3963, 7
        %v3965 = vsub.s32 3, %v3964
        %v3966 = vrot.slane %v3949, %v3965
        %v3967 = vlaneseq
        %v3968 = vshrl.u32 %v3967, 7
        %v3969 = vsub.s32 4, %v3968
        %v3970 = vrot.slane %v3949, %v3969
        %v3971 = vlaneseq
        %v3972 = vshrl.u32 %v3971, 7
        %v3973 = vsub.s32 5, %v3972
        %v3974 = vrot.slane %v3949, %v3973
        %v3975 = vlaneseq
        %v3976 = vshrl.u32 %v3975, 7
        %v3977 = vsub.s32 6, %v3976
        %v3978 = vrot.slane %v3949, %v3977
        %v3979 = vlaneseq
        %v3980 = vshrl.u32 %v3979, 7
        %v3981 = vsub.s32 7, %v3980
        %v3982 = vrot.slane %v3949, %v3981
        %v3997 = vcombine.high %v2407, %v2407
        %v3999 = vunpack.c.l.s4 1983009808
        %v4000 = vunpack.c.0.s8 %v3999
        %v4001 = vlaneseq
        %v4002 = vshrl.u32 %v4001, 7
        %v4003 = vsub.s32 %v4000, %v4002
        %v4004 = vrot.slane %v2407, %v4003
        %v4006 = vunpack.c.l.s4 1983009808
        %v4007 = vunpack.c.0.s8 %v4006
        %v4008 = vlaneseq
        %v4009 = vshrl.u32 %v4008, 7
        %v4010 = vsub.s32 %v4007, %v4009
        %v4011 = vrot.slane %v3997, %v4010
        %v4012 = vcombine.high %v4004, %v4004
        %v4013 = vcombine.high %v4011, %v4011
        %v4014 = vcombine.high %v2408, %v2408
        %v4016 = vunpack.c.l.s4 1983009808
        %v4017 = vunpack.c.0.s8 %v4016
        %v4018 = vlaneseq
        %v4019 = vshrl.u32 %v4018, 7
        %v4020 = vsub.s32 %v4017, %v4019
        %v4021 = vrot.slane %v2408, %v4020
        %v4023 = vunpack.c.l.s4 1983009808
        %v4024 = vunpack.c.0.s8 %v4023
        %v4025 = vlaneseq
        %v4026 = vshrl.u32 %v4025, 7
        %v4027 = vsub.s32 %v4024, %v4026
        %v4028 = vrot.slane %v4014, %v4027
        %v4029 = vcombine.high %v4021, %v4021
        %v4030 = vcombine.high %v4028, %v4028
        %v4031 = vcombine.high %v2409, %v2409
        %v4033 = vunpack.c.l.s4 1983009808
        %v4034 = vunpack.c.0.s8 %v4033
        %v4035 = vlaneseq
        %v4036 = vshrl.u32 %v4035, 7
        %v4037 = vsub.s32 %v4034, %v4036
        %v4038 = vrot.slane %v2409, %v4037
        %v4040 = vunpack.c.l.s4 1983009808
        %v4041 = vunpack.c.0.s8 %v4040
        %v4042 = vlaneseq
        %v4043 = vshrl.u32 %v4042, 7
        %v4044 = vsub.s32 %v4041, %v4043
        %v4045 = vrot.slane %v4031, %v4044
        %v4046 = vcombine.high %v4038, %v4038
        %v4047 = vcombine.high %v4045, %v4045
        %v4048 = vcombine.high %v2410, %v2410
        %v4050 = vunpack.c.l.s4 1983009808
        %v4051 = vunpack.c.0.s8 %v4050
        %v4052 = vlaneseq
        %v4053 = vshrl.u32 %v4052, 7
        %v4054 = vsub.s32 %v4051, %v4053
        %v4055 = vrot.slane %v2410, %v4054
        %v4057 = vunpack.c.l.s4 1983009808
        %v4058 = vunpack.c.0.s8 %v4057
        %v4059 = vlaneseq
        %v4060 = vshrl.u32 %v4059, 7
        %v4061 = vsub.s32 %v4058, %v4060
        %v4062 = vrot.slane %v4048, %v4061
        %v4063 = vcombine.high %v4055, %v4055
        %v4064 = vcombine.high %v4062, %v4062
        %v4065 = vcombine.high %v2411, %v2411
        %v4067 = vunpack.c.l.s4 1983009808
        %v4068 = vunpack.c.0.s8 %v4067
        %v4069 = vlaneseq
        %v4070 = vshrl.u32 %v4069, 7
        %v4071 = vsub.s32 %v4068, %v4070
        %v4072 = vrot.slane %v2411, %v4071
        %v4074 = vunpack.c.l.s4 1983009808
        %v4075 = vunpack.c.0.s8 %v4074
        %v4076 = vlaneseq
        %v4077 = vshrl.u32 %v4076, 7
        %v4078 = vsub.s32 %v4075, %v4077
        %v4079 = vrot.slane %v4065, %v4078
        %v4080 = vcombine.high %v4072, %v4072
        %v4081 = vcombine.high %v4079, %v4079
        %v4082 = vcombine.high %v2412, %v2412
        %v4084 = vunpack.c.l.s4 1983009808
        %v4085 = vunpack.c.0.s8 %v4084
        %v4086 = vlaneseq
        %v4087 = vshrl.u32 %v4086, 7
        %v4088 = vsub.s32 %v4085, %v4087
        %v4089 = vrot.slane %v2412, %v4088
        %v4091 = vunpack.c.l.s4 1983009808
        %v4092 = vunpack.c.0.s8 %v4091
        %v4093 = vlaneseq
        %v4094 = vshrl.u32 %v4093, 7
        %v4095 = vsub.s32 %v4092, %v4094
        %v4096 = vrot.slane %v4082, %v4095
        %v4097 = vcombine.high %v4089, %v4089
        %v4098 = vcombine.high %v4096, %v4096
        %v5659 = vunpack.c.l.b16 %v2413
        %v5660 = vunpack.c.h.b16 %v2413
        %v5661 = vunpack.c.l.b16 %v2414
        %v5662 = vunpack.c.h.b16 %v2414
        %v5663 = vunpack.c.l.b16 %v2415
        %v5664 = vunpack.c.h.b16 %v2415
        %v5665 = vunpack.c.l.b16 %v2416
        %v5666 = vunpack.c.h.b16 %v2416
        %v5667 = vunpack.c.l.b16 %v2417
        %v5668 = vunpack.c.h.b16 %v2417
        %v5669 = vunpack.c.l.b16 %v2418
        %v5670 = vunpack.c.h.b16 %v2418
        %v5671 = vunpack.c.l.b16 %v2419
        %v5672 = vunpack.c.h.b16 %v2419
        %v5673 = vunpack.c.l.b16 %v2420
        %v5674 = vunpack.c.h.b16 %v2420
        %v5675 = vunpack.c.l.b16 %v2421
        %v5676 = vunpack.c.h.b16 %v2421
        %v5677 = vunpack.c.l.b16 %v2422
        %v5678 = vunpack.c.h.b16 %v2422
        %v5679 = vunpack.c.l.b16 %v2423
        %v5680 = vunpack.c.h.b16 %v2423
        %v5681 = vunpack.c.l.b16 %v2424
        %v5682 = vunpack.c.h.b16 %v2424
        %v5683 = vunpack.c.l.b16 %v2425
        %v5684 = vunpack.c.h.b16 %v2425
        %v5685 = vunpack.c.l.b16 %v2426
        %v5686 = vunpack.c.h.b16 %v2426
        %v5687 = vunpack.c.l.b16 %v2427
        %v5688 = vunpack.c.h.b16 %v2427
        %v5689 = vunpack.c.l.b16 %v2428
        %v5690 = vunpack.c.h.b16 %v2428
        %v5691 = vunpack.c.l.b16 %v2429
        %v5692 = vunpack.c.h.b16 %v2429
        %v5693 = vunpack.c.l.b16 %v2430
        %v5694 = vunpack.c.h.b16 %v2430
        %v5695 = vunpack.c.l.b16 %v2431
        %v5696 = vunpack.c.h.b16 %v2431
        %v5697 = vunpack.c.l.b16 %v2432
        %v5698 = vunpack.c.h.b16 %v2432
        %v5699 = vunpack.c.l.b16 %v2433
        %v5700 = vunpack.c.h.b16 %v2433
        %v5701 = vunpack.c.l.b16 %v2434
        %v5702 = vunpack.c.h.b16 %v2434
        %v5703 = vunpack.c.l.b16 %v2435
        %v5704 = vunpack.c.h.b16 %v2435
        %v5705 = vunpack.c.l.b16 %v2436
        %v5706 = vunpack.c.h.b16 %v2436
        %v5707 = vunpack.c.l.b16 %v2437
        %v5708 = vunpack.c.h.b16 %v2437
        %v5709 = vunpack.c.l.b16 %v2438
        %v5710 = vunpack.c.h.b16 %v2438
        %v5711 = vunpack.c.l.b16 %v2439
        %v5712 = vunpack.c.h.b16 %v2439
        %v5713 = vunpack.c.l.b16 %v2440
        %v5714 = vunpack.c.h.b16 %v2440
        %v5715 = vunpack.c.l.b16 %v2441
        %v5716 = vunpack.c.h.b16 %v2441
        %v5717 = vunpack.c.l.b16 %v2442
        %v5718 = vunpack.c.h.b16 %v2442
        %v5719 = vunpack.c.l.b16 %v2443
        %v5720 = vunpack.c.h.b16 %v2443
        %v5721 = vunpack.c.l.b16 %v2444
        %v5722 = vunpack.c.h.b16 %v2444
        %v5723 = vunpack.c.l.b16 %v2445
        %v5724 = vunpack.c.h.b16 %v2445
        %v5725 = vunpack.c.l.b16 %v2446
        %v5726 = vunpack.c.h.b16 %v2446
        %v5727 = vunpack.c.l.b16 %v2447
        %v5728 = vunpack.c.h.b16 %v2447
        %v5729 = vunpack.c.l.b16 %v2448
        %v5730 = vunpack.c.h.b16 %v2448
        %v5731 = vunpack.c.l.b16 %v2449
        %v5732 = vunpack.c.h.b16 %v2449
        %v5733 = vunpack.c.l.b16 %v2450
        %v5734 = vunpack.c.h.b16 %v2450
        %v5735 = vunpack.c.l.b16 %v2451
        %v5736 = vunpack.c.h.b16 %v2451
        %v5737 = vunpack.c.l.b16 %v2452
        %v5738 = vunpack.c.h.b16 %v2452
        %v5739 = vunpack.c.l.b16 %v2453
        %v5740 = vunpack.c.h.b16 %v2453
        %v5741 = vunpack.c.l.b16 %v2454
        %v5742 = vunpack.c.h.b16 %v2454
        %v5743 = vunpack.c.l.b16 %v2455
        %v5744 = vunpack.c.h.b16 %v2455
        %v5745 = vunpack.c.l.b16 %v2456
        %v5746 = vunpack.c.h.b16 %v2456
        %v5747 = vunpack.c.l.b16 %v2457
        %v5748 = vunpack.c.h.b16 %v2457
        %v5749 = vunpack.c.l.b16 %v2458
        %v5750 = vunpack.c.h.b16 %v2458
        %v5751 = vunpack.c.l.b16 %v2459
        %v5752 = vunpack.c.h.b16 %v2459
        %v5753 = vunpack.c.l.b16 %v2460
        %v5754 = vunpack.c.h.b16 %v2460
        %v5755 = vunpack.c.l.b16 %v2461
        %v5756 = vunpack.c.h.b16 %v2461
        %v5757 = vunpack.c.l.b16 %v2462
        %v5758 = vunpack.c.h.b16 %v2462
        %v5759 = vunpack.c.l.b16 %v2463
        %v5760 = vunpack.c.h.b16 %v2463
        %v5761 = vunpack.c.l.b16 %v2464
        %v5762 = vunpack.c.h.b16 %v2464
        %v5763 = vunpack.c.l.b16 %v2465
        %v5764 = vunpack.c.h.b16 %v2465
        %v5765 = vunpack.c.l.b16 %v2466
        %v5766 = vunpack.c.h.b16 %v2466
        %v5767 = vunpack.c.l.b16 %v2467
        %v5768 = vunpack.c.h.b16 %v2467
        %v5769 = vunpack.c.l.b16 %v2468
        %v5770 = vunpack.c.h.b16 %v2468
        %v5771 = vunpack.c.l.b16 %v2469
        %v5772 = vunpack.c.h.b16 %v2469
        %v5773 = vunpack.c.l.b16 %v2470
        %v5774 = vunpack.c.h.b16 %v2470
        %v5775 = vunpack.c.l.b16 %v2471
        %v5776 = vunpack.c.h.b16 %v2471
        %v5777 = vunpack.c.l.b16 %v2472
        %v5778 = vunpack.c.h.b16 %v2472
        %v5779 = vunpack.c.l.b16 %v2473
        %v5780 = vunpack.c.h.b16 %v2473
        %v5781 = vunpack.c.l.b16 %v2474
        %v5782 = vunpack.c.h.b16 %v2474
        %v5783 = vunpack.c.l.b16 %v2475
        %v5784 = vunpack.c.h.b16 %v2475
        %v5785 = vunpack.c.l.b16 %v2476
        %v5786 = vunpack.c.h.b16 %v2476
        %v5787 = vunpack.c.l.b16 %v2477
        %v5788 = vunpack.c.h.b16 %v2477
        %v5789 = vunpack.c.l.b16 %v2478
        %v5790 = vunpack.c.h.b16 %v2478
        %v5791 = vunpack.c.l.b16 %v2479
        %v5792 = vunpack.c.h.b16 %v2479
        %v5793 = vunpack.c.l.b16 %v2480
        %v5794 = vunpack.c.h.b16 %v2480
        %v5795 = vunpack.c.l.b16 %v2481
        %v5796 = vunpack.c.h.b16 %v2481
        %v5797 = vunpack.c.l.b16 %v2482
        %v5798 = vunpack.c.h.b16 %v2482
        %v5799 = vunpack.c.l.b16 %v2483
        %v5800 = vunpack.c.h.b16 %v2483
        %v5801 = vunpack.c.l.b16 %v2484
        %v5802 = vunpack.c.h.b16 %v2484
        %v5803 = vunpack.c.l.b16 %v2485
        %v5804 = vunpack.c.h.b16 %v2485
        %v5805 = vunpack.c.l.b16 %v2486
        %v5806 = vunpack.c.h.b16 %v2486
        %v5807 = vunpack.c.l.b16 %v2487
        %v5808 = vunpack.c.h.b16 %v2487
        %v5809 = vunpack.c.l.b16 %v2488
        %v5810 = vunpack.c.h.b16 %v2488
        %v5811 = vunpack.c.l.b16 %v2489
        %v5812 = vunpack.c.h.b16 %v2489
        %v5813 = vunpack.c.l.b16 %v2490
        %v5814 = vunpack.c.h.b16 %v2490
        %v5815 = vunpack.c.l.b16 %v2491
        %v5816 = vunpack.c.h.b16 %v2491
        %v5817 = vunpack.c.l.b16 %v2492
        %v5818 = vunpack.c.h.b16 %v2492
        %v5819 = vunpack.c.l.b16 %v2493
        %v5820 = vunpack.c.h.b16 %v2493
        %v5821 = vunpack.c.l.b16 %v2494
        %v5822 = vunpack.c.h.b16 %v2494
        %v5823 = vunpack.c.l.b16 %v2495
        %v5824 = vunpack.c.h.b16 %v2495
        %v5825 = vunpack.c.l.b16 %v2496
        %v5826 = vunpack.c.h.b16 %v2496
        %v5827 = vunpack.c.l.b16 %v2497
        %v5828 = vunpack.c.h.b16 %v2497
        %v5829 = vunpack.c.l.b16 %v2498
        %v5830 = vunpack.c.h.b16 %v2498
        %v5831 = vunpack.c.l.b16 %v2499
        %v5832 = vunpack.c.h.b16 %v2499
        %v5833 = vunpack.c.l.b16 %v2500
        %v5834 = vunpack.c.h.b16 %v2500
        %v5835 = vunpack.c.l.b16 %v2501
        %v5836 = vunpack.c.h.b16 %v2501
        %v5837 = vunpack.c.l.b16 %v2502
        %v5838 = vunpack.c.h.b16 %v2502
        %v5839 = vunpack.c.l.b16 %v2503
        %v5840 = vunpack.c.h.b16 %v2503
        %v5841 = vunpack.c.l.b16 %v2504
        %v5842 = vunpack.c.h.b16 %v2504
        %v5843 = vunpack.c.l.b16 %v2505
        %v5844 = vunpack.c.h.b16 %v2505
        %v5845 = vunpack.c.l.b16 %v2506
        %v5846 = vunpack.c.h.b16 %v2506
        %v5847 = vunpack.c.l.b16 %v2507
        %v5848 = vunpack.c.h.b16 %v2507
        %v5849 = vunpack.c.l.b16 %v2508
        %v5850 = vunpack.c.h.b16 %v2508
        %v5851 = vunpack.c.l.b16 %v2509
        %v5852 = vunpack.c.h.b16 %v2509
        %v5853 = vunpack.c.l.b16 %v2510
        %v5854 = vunpack.c.h.b16 %v2510
        %v5855 = vunpack.c.l.b16 %v2511
        %v5856 = vunpack.c.h.b16 %v2511
        %v5857 = vunpack.c.l.b16 %v2512
        %v5858 = vunpack.c.h.b16 %v2512
        %v5859 = vunpack.c.l.b16 %v2513
        %v5860 = vunpack.c.h.b16 %v2513
        %v5861 = vunpack.c.l.b16 %v2514
        %v5862 = vunpack.c.h.b16 %v2514
        %v5863 = vunpack.c.l.b16 %v2515
        %v5864 = vunpack.c.h.b16 %v2515
        %v5865 = vunpack.c.l.b16 %v2516
        %v5866 = vunpack.c.h.b16 %v2516
        %v5867 = vunpack.c.l.b16 %v2517
        %v5868 = vunpack.c.h.b16 %v2517
        %v5869 = vunpack.c.l.b16 %v2518
        %v5870 = vunpack.c.h.b16 %v2518
        %v5871 = vunpack.c.l.b16 %v2519
        %v5872 = vunpack.c.h.b16 %v2519
        %v5873 = vunpack.c.l.b16 %v2520
        %v5874 = vunpack.c.h.b16 %v2520
        %v5875 = vunpack.c.l.b16 %v2521
        %v5876 = vunpack.c.h.b16 %v2521
        %v5877 = vunpack.c.l.b16 %v2522
        %v5878 = vunpack.c.h.b16 %v2522
        %v5879 = vunpack.c.l.b16 %v2523
        %v5880 = vunpack.c.h.b16 %v2523
        %v5881 = vunpack.c.l.b16 %v2524
        %v5882 = vunpack.c.h.b16 %v2524
        %v5883 = vunpack.c.l.b16 %v2525
        %v5884 = vunpack.c.h.b16 %v2525
        %v5885 = vunpack.c.l.b16 %v2526
        %v5886 = vunpack.c.h.b16 %v2526
        %v5887 = vunpack.c.l.b16 %v2527
        %v5888 = vunpack.c.h.b16 %v2527
        %v5889 = vunpack.c.l.b16 %v2528
        %v5890 = vunpack.c.h.b16 %v2528
        %v5891 = vunpack.c.l.b16 %v2529
        %v5892 = vunpack.c.h.b16 %v2529
        %v5893 = vunpack.c.l.b16 %v2530
        %v5894 = vunpack.c.h.b16 %v2530
        %v5895 = vunpack.c.l.b16 %v2531
        %v5896 = vunpack.c.h.b16 %v2531
        %v5897 = vunpack.c.l.b16 %v2532
        %v5898 = vunpack.c.h.b16 %v2532
        %v5899 = vunpack.c.l.b16 %v2533
        %v5900 = vunpack.c.h.b16 %v2533
        %v5901 = vunpack.c.l.b16 %v2534
        %v5902 = vunpack.c.h.b16 %v2534
        %v5903 = vunpack.c.l.b16 %v2535
        %v5904 = vunpack.c.h.b16 %v2535
        %v5905 = vunpack.c.l.b16 %v2536
        %v5906 = vunpack.c.h.b16 %v2536
        %v5907 = vunpack.c.l.b16 %v2537
        %v5908 = vunpack.c.h.b16 %v2537
        %v5909 = vunpack.c.l.b16 %v2538
        %v5910 = vunpack.c.h.b16 %v2538
        %v5911 = vunpack.c.l.b16 %v2539
        %v5912 = vunpack.c.h.b16 %v2539
        %v5913 = vunpack.c.l.b16 %v2540
        %v5914 = vunpack.c.h.b16 %v2540
        %v5915 = vunpack.c.l.b16 %v2541
        %v5916 = vunpack.c.h.b16 %v2541
        %v5917 = vunpack.c.l.b16 %v2542
        %v5918 = vunpack.c.h.b16 %v2542
        %v5919 = vunpack.c.l.b16 %v2543
        %v5920 = vunpack.c.h.b16 %v2543
        %v5921 = vunpack.c.l.b16 %v2544
        %v5922 = vunpack.c.h.b16 %v2544
        %v5923 = vunpack.c.l.b16 %v2545
        %v5924 = vunpack.c.h.b16 %v2545
        %v5925 = vunpack.c.l.b16 %v2546
        %v5926 = vunpack.c.h.b16 %v2546
        %v5927 = vunpack.c.l.b16 %v2547
        %v5928 = vunpack.c.h.b16 %v2547
        %v5929 = vunpack.c.l.b16 %v2548
        %v5930 = vunpack.c.h.b16 %v2548
        %v5931 = vunpack.c.l.b16 %v2549
        %v5932 = vunpack.c.h.b16 %v2549
        %v5933 = vunpack.c.l.b16 %v2550
        %v5934 = vunpack.c.h.b16 %v2550
        %v5935 = vunpack.c.l.b16 %v2551
        %v5936 = vunpack.c.h.b16 %v2551
        %v5937 = vunpack.c.l.b16 %v2552
        %v5938 = vunpack.c.h.b16 %v2552
        %v5939 = vunpack.c.l.b16 %v2553
        %v5940 = vunpack.c.h.b16 %v2553
        %v5941 = vunpack.c.l.b16 %v2554
        %v5942 = vunpack.c.h.b16 %v2554
        %v5943 = vunpack.c.l.b16 %v2555
        %v5944 = vunpack.c.h.b16 %v2555
        %v5945 = vunpack.c.l.b16 %v2556
        %v5946 = vunpack.c.h.b16 %v2556
        %v5947 = vunpack.c.l.b16 %v2557
        %v5948 = vunpack.c.h.b16 %v2557
        %v5949 = vunpack.c.l.b16 %v2558
        %v5950 = vunpack.c.h.b16 %v2558
        %v5951 = vunpack.c.l.b16 %v2559
        %v5952 = vunpack.c.h.b16 %v2559
        %v5953 = vunpack.c.l.b16 %v2560
        %v5954 = vunpack.c.h.b16 %v2560
        %v5955 = vunpack.c.l.b16 %v2561
        %v5956 = vunpack.c.h.b16 %v2561
        %v5957 = vunpack.c.l.b16 %v2562
        %v5958 = vunpack.c.h.b16 %v2562
        %v5959 = vunpack.c.l.b16 %v2563
        %v5960 = vunpack.c.h.b16 %v2563
        %v5961 = vunpack.c.l.b16 %v2564
        %v5962 = vunpack.c.h.b16 %v2564
        %v5963 = vunpack.c.l.b16 %v2565
        %v5964 = vunpack.c.h.b16 %v2565
        %v5965 = vunpack.c.l.b16 %v2566
        %v5966 = vunpack.c.h.b16 %v2566
        %v5967 = vunpack.c.l.b16 %v2567
        %v5968 = vunpack.c.h.b16 %v2567
        %v5969 = vunpack.c.l.b16 %v2568
        %v5970 = vunpack.c.h.b16 %v2568
        %v5971 = vunpack.c.l.b16 %v2569
        %v5972 = vunpack.c.h.b16 %v2569
        %v5973 = vunpack.c.l.b16 %v2570
        %v5974 = vunpack.c.h.b16 %v2570
        %v5975 = vunpack.c.l.b16 %v2571
        %v5976 = vunpack.c.h.b16 %v2571
        %v5977 = vunpack.c.l.b16 %v2572
        %v5978 = vunpack.c.h.b16 %v2572
        %v5979 = vunpack.c.l.b16 %v2573
        %v5980 = vunpack.c.h.b16 %v2573
        %v5981 = vunpack.c.l.b16 %v2574
        %v5982 = vunpack.c.h.b16 %v2574
        %v5983 = vunpack.c.l.b16 %v2575
        %v5984 = vunpack.c.h.b16 %v2575
        %v5985 = vunpack.c.l.b16 %v2576
        %v5986 = vunpack.c.h.b16 %v2576
        %v5987 = vunpack.c.l.b16 %v2577
        %v5988 = vunpack.c.h.b16 %v2577
        %v5989 = vunpack.c.l.b16 %v2578
        %v5990 = vunpack.c.h.b16 %v2578
        %v5991 = vunpack.c.l.b16 %v2579
        %v5992 = vunpack.c.h.b16 %v2579
        %v5993 = vunpack.c.l.b16 %v2580
        %v5994 = vunpack.c.h.b16 %v2580
        %v5995 = vunpack.c.l.b16 %v2581
        %v5996 = vunpack.c.h.b16 %v2581
        %v5997 = vunpack.c.l.b16 %v2582
        %v5998 = vunpack.c.h.b16 %v2582
        %v5999 = vunpack.c.l.b16 %v2583
        %v6000 = vunpack.c.h.b16 %v2583
        %v6001 = vunpack.c.l.b16 %v2584
        %v6002 = vunpack.c.h.b16 %v2584
        %v6003 = vunpack.c.l.b16 %v2585
        %v6004 = vunpack.c.h.b16 %v2585
        %v6005 = vunpack.c.l.b16 %v2586
        %v6006 = vunpack.c.h.b16 %v2586
        %v6007 = vunpack.c.l.b16 %v2587
        %v6008 = vunpack.c.h.b16 %v2587
        %v6009 = vunpack.c.l.b16 %v2588
        %v6010 = vunpack.c.h.b16 %v2588
        %v6011 = vunpack.c.l.b16 %v2589
        %v6012 = vunpack.c.h.b16 %v2589
        %v6013 = vunpack.c.l.b16 %v2590
        %v6014 = vunpack.c.h.b16 %v2590
        %v6015 = vunpack.c.l.b16 %v2591
        %v6016 = vunpack.c.h.b16 %v2591
        %v6017 = vunpack.c.l.b16 %v2592
        %v6018 = vunpack.c.h.b16 %v2592
        %v6019 = vunpack.c.l.b16 %v2593
        %v6020 = vunpack.c.h.b16 %v2593
        %v6021 = vunpack.c.l.b16 %v2594
        %v6022 = vunpack.c.h.b16 %v2594
        %v6023 = vunpack.c.l.b16 %v2595
        %v6024 = vunpack.c.h.b16 %v2595
        %v6025 = vunpack.c.l.b16 %v2596
        %v6026 = vunpack.c.h.b16 %v2596
        %v6027 = vunpack.c.l.b16 %v2597
        %v6028 = vunpack.c.h.b16 %v2597
        %v6029 = vunpack.c.l.b16 %v2598
        %v6030 = vunpack.c.h.b16 %v2598
        %v6031 = vunpack.c.l.b16 %v2599
        %v6032 = vunpack.c.h.b16 %v2599
        %v6033 = vunpack.c.l.b16 %v2600
        %v6034 = vunpack.c.h.b16 %v2600
        %v6035 = vunpack.c.l.b16 %v2601
        %v6036 = vunpack.c.h.b16 %v2601
        %v6037 = vunpack.c.l.b16 %v2602
        %v6038 = vunpack.c.h.b16 %v2602
        %v6039 = vunpack.c.l.b16 %v2603
        %v6040 = vunpack.c.h.b16 %v2603
        %v6041 = vunpack.c.l.b16 %v2604
        %v6042 = vunpack.c.h.b16 %v2604
        %v6043 = vunpack.c.l.b16 %v2605
        %v6044 = vunpack.c.h.b16 %v2605
        %v6045 = vunpack.c.l.b16 %v2606
        %v6046 = vunpack.c.h.b16 %v2606
        %v6047 = vunpack.c.l.b16 %v2607
        %v6048 = vunpack.c.h.b16 %v2607
        %v6049 = vunpack.c.l.b16 %v2608
        %v6050 = vunpack.c.h.b16 %v2608
        %v6051 = vunpack.c.l.b16 %v2609
        %v6052 = vunpack.c.h.b16 %v2609
        %v6053 = vunpack.c.l.b16 %v2610
        %v6054 = vunpack.c.h.b16 %v2610
        %v6055 = vunpack.c.l.b16 %v2611
        %v6056 = vunpack.c.h.b16 %v2611
        %v6057 = vunpack.c.l.b16 %v2612
        %v6058 = vunpack.c.h.b16 %v2612
        %v6059 = vunpack.c.l.b16 %v2613
        %v6060 = vunpack.c.h.b16 %v2613
        %v6061 = vunpack.c.l.b16 %v2614
        %v6062 = vunpack.c.h.b16 %v2614
        %v6063 = vunpack.c.l.b16 %v2615
        %v6064 = vunpack.c.h.b16 %v2615
        %v6065 = vunpack.c.l.b16 %v2616
        %v6066 = vunpack.c.h.b16 %v2616
        %v6067 = vunpack.c.l.b16 %v2617
        %v6068 = vunpack.c.h.b16 %v2617
        %v6069 = vunpack.c.l.b16 %v2618
        %v6070 = vunpack.c.h.b16 %v2618
        %v6071 = vunpack.c.l.b16 %v2619
        %v6072 = vunpack.c.h.b16 %v2619
        %v6073 = vunpack.c.l.b16 %v2620
        %v6074 = vunpack.c.h.b16 %v2620
        %v6075 = vunpack.c.l.b16 %v2621
        %v6076 = vunpack.c.h.b16 %v2621
        %v6077 = vunpack.c.l.b16 %v2622
        %v6078 = vunpack.c.h.b16 %v2622
        %v6079 = vunpack.c.l.b16 %v2623
        %v6080 = vunpack.c.h.b16 %v2623
        %v6081 = vunpack.c.l.b16 %v2624
        %v6082 = vunpack.c.h.b16 %v2624
        %v6083 = vunpack.c.l.b16 %v2625
        %v6084 = vunpack.c.h.b16 %v2625
        %v6085 = vunpack.c.l.b16 %v2626
        %v6086 = vunpack.c.h.b16 %v2626
        %v6087 = vunpack.c.l.b16 %v2627
        %v6088 = vunpack.c.h.b16 %v2627
        %v6089 = vunpack.c.l.b16 %v2628
        %v6090 = vunpack.c.h.b16 %v2628
        %v6091 = vunpack.c.l.b16 %v2629
        %v6092 = vunpack.c.h.b16 %v2629
        %v6093 = vunpack.c.l.b16 %v2630
        %v6094 = vunpack.c.h.b16 %v2630
        %v6095 = vunpack.c.l.b16 %v2631
        %v6096 = vunpack.c.h.b16 %v2631
        %v6097 = vunpack.c.l.b16 %v2632
        %v6098 = vunpack.c.h.b16 %v2632
        %v6099 = vunpack.c.l.b16 %v2633
        %v6100 = vunpack.c.h.b16 %v2633
        %v6101 = vunpack.c.l.b16 %v2634
        %v6102 = vunpack.c.h.b16 %v2634
        %v6103 = vunpack.c.l.b16 %v2635
        %v6104 = vunpack.c.h.b16 %v2635
        %v6105 = vunpack.c.l.b16 %v2636
        %v6106 = vunpack.c.h.b16 %v2636
        %v6107 = vunpack.c.l.b16 %v2637
        %v6108 = vunpack.c.h.b16 %v2637
        %v6109 = vunpack.c.l.b16 %v2638
        %v6110 = vunpack.c.h.b16 %v2638
        %v6111 = vunpack.c.l.b16 %v2639
        %v6112 = vunpack.c.h.b16 %v2639
        %v6113 = vunpack.c.l.b16 %v2640
        %v6114 = vunpack.c.h.b16 %v2640
        %v6115 = vunpack.c.l.b16 %v2641
        %v6116 = vunpack.c.h.b16 %v2641
        %v6117 = vunpack.c.l.b16 %v2642
        %v6118 = vunpack.c.h.b16 %v2642
        %v6119 = vunpack.c.l.b16 %v2643
        %v6120 = vunpack.c.h.b16 %v2643
        %v6121 = vunpack.c.l.b16 %v2644
        %v6122 = vunpack.c.h.b16 %v2644
        %v6123 = vunpack.c.l.b16 %v2645
        %v6124 = vunpack.c.h.b16 %v2645
        %v6125 = vunpack.c.l.b16 %v2646
        %v6126 = vunpack.c.h.b16 %v2646
        %v6127 = vunpack.c.l.b16 %v2647
        %v6128 = vunpack.c.h.b16 %v2647
        %v6129 = vunpack.c.l.b16 %v2648
        %v6130 = vunpack.c.h.b16 %v2648
        %v6131 = vunpack.c.l.b16 %v2649
        %v6132 = vunpack.c.h.b16 %v2649
        %v6133 = vunpack.c.l.b16 %v2650
        %v6134 = vunpack.c.h.b16 %v2650
        %v6135 = vunpack.c.l.b16 %v2651
        %v6136 = vunpack.c.h.b16 %v2651
        %v6137 = vunpack.c.l.b16 %v2652
        %v6138 = vunpack.c.h.b16 %v2652
        %v6139 = vunpack.c.l.b16 %v2653
        %v6140 = vunpack.c.h.b16 %v2653
        %v6141 = vunpack.c.l.b16 %v2654
        %v6142 = vunpack.c.h.b16 %v2654
        %v6143 = vunpack.c.l.b16 %v2655
        %v6144 = vunpack.c.h.b16 %v2655
        %v6145 = vunpack.c.l.b16 %v2656
        %v6146 = vunpack.c.h.b16 %v2656
        %v6147 = vunpack.c.l.b16 %v2657
        %v6148 = vunpack.c.h.b16 %v2657
        %v6149 = vunpack.c.l.b16 %v2658
        %v6150 = vunpack.c.h.b16 %v2658
        %v6151 = vunpack.c.l.b16 %v2659
        %v6152 = vunpack.c.h.b16 %v2659
        %v6153 = vunpack.c.l.b16 %v2660
        %v6154 = vunpack.c.h.b16 %v2660
        %v6155 = vunpack.c.l.b16 %v2661
        %v6156 = vunpack.c.h.b16 %v2661
        %v6157 = vunpack.c.l.b16 %v2662
        %v6158 = vunpack.c.h.b16 %v2662
        %v6159 = vunpack.c.l.b16 %v2663
        %v6160 = vunpack.c.h.b16 %v2663
        %v6161 = vunpack.c.l.b16 %v2664
        %v6162 = vunpack.c.h.b16 %v2664
        %v6163 = vunpack.c.l.b16 %v2665
        %v6164 = vunpack.c.h.b16 %v2665
        %v6165 = vunpack.c.l.b16 %v2666
        %v6166 = vunpack.c.h.b16 %v2666
        %v6167 = vunpack.c.l.b16 %v2667
        %v6168 = vunpack.c.h.b16 %v2667
        %v6169 = vunpack.c.l.b16 %v2668
        %v6170 = vunpack.c.h.b16 %v2668
        %v6171 = vunpack.c.l.b16 %v2669
        %v6172 = vunpack.c.h.b16 %v2669
        %v6173 = vunpack.c.l.b16 %v2670
        %v6174 = vunpack.c.h.b16 %v2670
        %v6175 = vunpack.c.l.b16 %v2671
        %v6176 = vunpack.c.h.b16 %v2671
        %v6177 = vunpack.c.l.b16 %v2672
        %v6178 = vunpack.c.h.b16 %v2672
        %v6179 = vunpack.c.l.b16 %v2673
        %v6180 = vunpack.c.h.b16 %v2673
        %v6181 = vunpack.c.l.b16 %v2674
        %v6182 = vunpack.c.h.b16 %v2674
        %v6183 = vunpack.c.l.b16 %v2675
        %v6184 = vunpack.c.h.b16 %v2675
        %v6185 = vunpack.c.l.b16 %v2676
        %v6186 = vunpack.c.h.b16 %v2676
        %v6187 = vunpack.c.l.b16 %v2677
        %v6188 = vunpack.c.h.b16 %v2677
        %v6189 = vunpack.c.l.b16 %v2678
        %v6190 = vunpack.c.h.b16 %v2678
        %v6191 = vunpack.c.l.b16 %v2679
        %v6192 = vunpack.c.h.b16 %v2679
        %v6193 = vunpack.c.l.b16 %v2680
        %v6194 = vunpack.c.h.b16 %v2680
        %v6195 = vunpack.c.l.b16 %v2681
        %v6196 = vunpack.c.h.b16 %v2681
        %v6197 = vunpack.c.l.b16 %v2682
        %v6198 = vunpack.c.h.b16 %v2682
        %v6199 = vunpack.c.l.b16 %v2683
        %v6200 = vunpack.c.h.b16 %v2683
        %v6201 = vunpack.c.l.b16 %v2684
        %v6202 = vunpack.c.h.b16 %v2684
        %v6203 = vunpack.c.l.b16 %v2685
        %v6204 = vunpack.c.h.b16 %v2685
        %v6205 = vunpack.c.l.b16 %v2686
        %v6206 = vunpack.c.h.b16 %v2686
        %v6207 = vunpack.c.l.b16 %v2687
        %v6208 = vunpack.c.h.b16 %v2687
        %v6209 = vunpack.c.l.b16 %v2688
        %v6210 = vunpack.c.h.b16 %v2688
        %v6211 = vunpack.c.l.b16 %v2689
        %v6212 = vunpack.c.h.b16 %v2689
        %v6213 = vunpack.c.l.b16 %v2690
        %v6214 = vunpack.c.h.b16 %v2690
        %v6215 = vunpack.c.l.b16 %v2691
        %v6216 = vunpack.c.h.b16 %v2691
        %v6217 = vunpack.c.l.b16 %v2692
        %v6218 = vunpack.c.h.b16 %v2692
        %v6219 = vunpack.c.l.b16 %v2693
        %v6220 = vunpack.c.h.b16 %v2693
        %v6221 = vunpack.c.l.b16 %v2694
        %v6222 = vunpack.c.h.b16 %v2694
        %v6223 = vunpack.c.l.b16 %v2695
        %v6224 = vunpack.c.h.b16 %v2695
        %v6225 = vunpack.c.l.b16 %v2696
        %v6226 = vunpack.c.h.b16 %v2696
        %v6227 = vunpack.c.l.b16 %v2697
        %v6228 = vunpack.c.h.b16 %v2697
        %v6229 = vunpack.c.l.b16 %v2698
        %v6230 = vunpack.c.h.b16 %v2698
        %v6231 = vunpack.c.l.b16 %v2699
        %v6232 = vunpack.c.h.b16 %v2699
        %v6233 = vunpack.c.l.b16 %v2700
        %v6234 = vunpack.c.h.b16 %v2700
        %v6235 = vunpack.c.l.b16 %v2701
        %v6236 = vunpack.c.h.b16 %v2701
        %v6237 = vunpack.c.l.b16 %v2702
        %v6238 = vunpack.c.h.b16 %v2702
        %v6239 = vunpack.c.l.b16 %v2703
        %v6240 = vunpack.c.h.b16 %v2703
        %v6241 = vunpack.c.l.b16 %v2704
        %v6242 = vunpack.c.h.b16 %v2704
        %v6243 = vunpack.c.l.b16 %v2705
        %v6244 = vunpack.c.h.b16 %v2705
        %v6245 = vunpack.c.l.b16 %v2706
        %v6246 = vunpack.c.h.b16 %v2706
        %v6247 = vunpack.c.l.b16 %v2707
        %v6248 = vunpack.c.h.b16 %v2707
        %v6249 = vunpack.c.l.b16 %v2708
        %v6250 = vunpack.c.h.b16 %v2708
        %v6251 = vunpack.c.l.b16 %v2709
        %v6252 = vunpack.c.h.b16 %v2709
        %v6253 = vunpack.c.l.b16 %v2710
        %v6254 = vunpack.c.h.b16 %v2710
        %v6255 = vunpack.c.l.b16 %v2711
        %v6256 = vunpack.c.h.b16 %v2711
        %v6257 = vunpack.c.l.b16 %v2712
        %v6258 = vunpack.c.h.b16 %v2712
        %v6259 = vunpack.c.l.b16 %v2713
        %v6260 = vunpack.c.h.b16 %v2713
        %v6261 = vunpack.c.l.b16 %v2714
        %v6262 = vunpack.c.h.b16 %v2714
        %v6263 = vunpack.c.l.b16 %v2715
        %v6264 = vunpack.c.h.b16 %v2715
        %v6265 = vunpack.c.l.b16 %v2716
        %v6266 = vunpack.c.h.b16 %v2716
        %v6267 = vunpack.c.l.b16 %v2717
        %v6268 = vunpack.c.h.b16 %v2717
        %v6269 = vunpack.c.l.b16 %v2718
        %v6270 = vunpack.c.h.b16 %v2718
        %v6271 = vunpack.c.l.b16 %v2719
        %v6272 = vunpack.c.h.b16 %v2719
        %v6273 = vunpack.c.l.b16 %v2720
        %v6274 = vunpack.c.h.b16 %v2720
        %v6275 = vunpack.c.l.b16 %v2721
        %v6276 = vunpack.c.h.b16 %v2721
        %v6277 = vunpack.c.l.b16 %v2722
        %v6278 = vunpack.c.h.b16 %v2722
        %v6279 = vunpack.c.l.b16 %v2723
        %v6280 = vunpack.c.h.b16 %v2723
        %v6281 = vunpack.c.l.b16 %v2724
        %v6282 = vunpack.c.h.b16 %v2724
        %v6283 = vunpack.c.l.b16 %v2725
        %v6284 = vunpack.c.h.b16 %v2725
        %v6285 = vunpack.c.l.b16 %v2726
        %v6286 = vunpack.c.h.b16 %v2726
        %v6287 = vunpack.c.l.b16 %v2727
        %v6288 = vunpack.c.h.b16 %v2727
        %v6289 = vunpack.c.l.b16 %v2728
        %v6290 = vunpack.c.h.b16 %v2728
        %v6291 = vunpack.c.l.b16 %v2729
        %v6292 = vunpack.c.h.b16 %v2729
        %v6293 = vunpack.c.l.b16 %v2730
        %v6294 = vunpack.c.h.b16 %v2730
        %v6295 = vunpack.c.l.b16 %v2731
        %v6296 = vunpack.c.h.b16 %v2731
        %v6297 = vunpack.c.l.b16 %v2732
        %v6298 = vunpack.c.h.b16 %v2732
        %v6299 = vunpack.c.l.b16 %v2733
        %v6300 = vunpack.c.h.b16 %v2733
        %v6301 = vunpack.c.l.b16 %v2734
        %v6302 = vunpack.c.h.b16 %v2734
        %v6303 = vunpack.c.l.b16 %v2735
        %v6304 = vunpack.c.h.b16 %v2735
        %v6305 = vunpack.c.l.b16 %v2736
        %v6306 = vunpack.c.h.b16 %v2736
        %v6307 = vunpack.c.l.b16 %v2737
        %v6308 = vunpack.c.h.b16 %v2737
        %v6309 = vunpack.c.l.b16 %v2738
        %v6310 = vunpack.c.h.b16 %v2738
        %v6311 = vunpack.c.l.b16 %v2739
        %v6312 = vunpack.c.h.b16 %v2739
        %v6313 = vunpack.c.l.b16 %v2740
        %v6314 = vunpack.c.h.b16 %v2740
        %v6315 = vunpack.c.l.b16 %v2741
        %v6316 = vunpack.c.h.b16 %v2741
        %v6317 = vunpack.c.l.b16 %v2742
        %v6318 = vunpack.c.h.b16 %v2742
        %v6319 = vunpack.c.l.b16 %v2743
        %v6320 = vunpack.c.h.b16 %v2743
        %v6321 = vunpack.c.l.b16 %v2744
        %v6322 = vunpack.c.h.b16 %v2744
        %v6323 = vunpack.c.l.b16 %v2745
        %v6324 = vunpack.c.h.b16 %v2745
        %v6325 = vunpack.c.l.b16 %v2746
        %v6326 = vunpack.c.h.b16 %v2746
        %v6327 = vunpack.c.l.b16 %v2747
        %v6328 = vunpack.c.h.b16 %v2747
        %v6329 = vunpack.c.l.b16 %v2748
        %v6330 = vunpack.c.h.b16 %v2748
        %v6331 = vunpack.c.l.b16 %v2749
        %v6332 = vunpack.c.h.b16 %v2749
        %v6333 = vunpack.c.l.b16 %v2750
        %v6334 = vunpack.c.h.b16 %v2750
        %v6335 = vunpack.c.l.b16 %v2751
        %v6336 = vunpack.c.h.b16 %v2751
        %v6337 = vunpack.c.l.b16 %v2752
        %v6338 = vunpack.c.h.b16 %v2752
        %v6339 = vunpack.c.l.b16 %v2753
        %v6340 = vunpack.c.h.b16 %v2753
        %v6341 = vunpack.c.l.b16 %v2754
        %v6342 = vunpack.c.h.b16 %v2754
        %v6343 = vunpack.c.l.b16 %v2755
        %v6344 = vunpack.c.h.b16 %v2755
        %v6345 = vunpack.c.l.b16 %v2756
        %v6346 = vunpack.c.h.b16 %v2756
        %v6347 = vunpack.c.l.b16 %v2757
        %v6348 = vunpack.c.h.b16 %v2757
        %v6349 = vunpack.c.l.b16 %v2758
        %v6350 = vunpack.c.h.b16 %v2758
        %v6351 = vunpack.c.l.b16 %v2759
        %v6352 = vunpack.c.h.b16 %v2759
        %v6353 = vunpack.c.l.b16 %v2760
        %v6354 = vunpack.c.h.b16 %v2760
        %v6355 = vunpack.c.l.b16 %v2761
        %v6356 = vunpack.c.h.b16 %v2761
        %v6357 = vunpack.c.l.b16 %v2762
        %v6358 = vunpack.c.h.b16 %v2762
        %v6359 = vunpack.c.l.b16 %v2763
        %v6360 = vunpack.c.h.b16 %v2763
        %v6361 = vunpack.c.l.b16 %v2764
        %v6362 = vunpack.c.h.b16 %v2764
        %v6363 = vunpack.c.l.b16 %v2765
        %v6364 = vunpack.c.h.b16 %v2765
        %v6365 = vunpack.c.l.b16 %v2766
        %v6366 = vunpack.c.h.b16 %v2766
        %v6367 = vunpack.c.l.b16 %v2767
        %v6368 = vunpack.c.h.b16 %v2767
        %v6369 = vunpack.c.l.b16 %v2768
        %v6370 = vunpack.c.h.b16 %v2768
        %v6371 = vunpack.c.l.b16 %v2769
        %v6372 = vunpack.c.h.b16 %v2769
        %v6373 = vunpack.c.l.b16 %v2770
        %v6374 = vunpack.c.h.b16 %v2770
        %v6375 = vunpack.c.l.b16 %v2771
        %v6376 = vunpack.c.h.b16 %v2771
        %v6377 = vunpack.c.l.b16 %v2772
        %v6378 = vunpack.c.h.b16 %v2772
        %v6379 = vunpack.c.l.b16 %v2773
        %v6380 = vunpack.c.h.b16 %v2773
        %v6381 = vunpack.c.l.b16 %v2774
        %v6382 = vunpack.c.h.b16 %v2774
        %v6383 = vunpack.c.l.b16 %v2775
        %v6384 = vunpack.c.h.b16 %v2775
        %v6385 = vunpack.c.l.b16 %v2776
        %v6386 = vunpack.c.h.b16 %v2776
        %v6387 = vunpack.c.l.b16 %v2777
        %v6388 = vunpack.c.h.b16 %v2777
        %v6389 = vunpack.c.l.b16 %v2778
        %v6390 = vunpack.c.h.b16 %v2778
        %v6391 = vunpack.c.l.b16 %v2779
        %v6392 = vunpack.c.h.b16 %v2779
        %v6393 = vunpack.c.l.b16 %v2780
        %v6394 = vunpack.c.h.b16 %v2780
        %v6395 = vunpack.c.l.b16 %v2781
        %v6396 = vunpack.c.h.b16 %v2781
        %v6397 = vunpack.c.l.b16 %v2782
        %v6398 = vunpack.c.h.b16 %v2782
        %v6399 = vunpack.c.l.b16 %v2783
        %v6400 = vunpack.c.h.b16 %v2783
        %v6401 = vunpack.c.l.b16 %v2784
        %v6402 = vunpack.c.h.b16 %v2784
        %v6403 = vunpack.c.l.b16 %v2785
        %v6404 = vunpack.c.h.b16 %v2785
        %v6405 = vunpack.c.l.b16 %v2786
        %v6406 = vunpack.c.h.b16 %v2786
        %v6407 = vunpack.c.l.b16 %v2787
        %v6408 = vunpack.c.h.b16 %v2787
        %v6409 = vunpack.c.l.b16 %v2788
        %v6410 = vunpack.c.h.b16 %v2788
        %v6411 = vunpack.c.l.b16 %v2789
        %v6412 = vunpack.c.h.b16 %v2789
        %v6413 = vunpack.c.l.b16 %v2790
        %v6414 = vunpack.c.h.b16 %v2790
        %v6415 = vunpack.c.l.b16 %v2791
        %v6416 = vunpack.c.h.b16 %v2791
        %v6417 = vunpack.c.l.b16 %v2792
        %v6418 = vunpack.c.h.b16 %v2792
        %v6419 = vunpack.c.l.b16 %v2793
        %v6420 = vunpack.c.h.b16 %v2793
        %v6421 = vunpack.c.l.b16 %v2794
        %v6422 = vunpack.c.h.b16 %v2794
        %v6423 = vunpack.c.l.b16 %v2795
        %v6424 = vunpack.c.h.b16 %v2795
        %v6425 = vunpack.c.l.b16 %v2796
        %v6426 = vunpack.c.h.b16 %v2796
        %v6427 = vunpack.c.l.b16 %v2797
        %v6428 = vunpack.c.h.b16 %v2797
        %v6429 = vunpack.c.l.b16 %v2798
        %v6430 = vunpack.c.h.b16 %v2798
        %v6431 = vunpack.c.l.b16 %v2799
        %v6432 = vunpack.c.h.b16 %v2799
        %v6433 = vunpack.c.l.b16 %v2800
        %v6434 = vunpack.c.h.b16 %v2800
        %v6435 = vunpack.c.l.b16 %v2801
        %v6436 = vunpack.c.h.b16 %v2801
        %v6437 = vunpack.c.l.b16 %v2802
        %v6438 = vunpack.c.h.b16 %v2802
        %v6439 = vunpack.c.l.b16 %v2803
        %v6440 = vunpack.c.h.b16 %v2803
        %v6441 = vunpack.c.l.b16 %v2804
        %v6442 = vunpack.c.h.b16 %v2804
        %v6443 = vunpack.c.l.b16 %v2805
        %v6444 = vunpack.c.h.b16 %v2805
        %v6445 = vunpack.c.l.b16 %v2806
        %v6446 = vunpack.c.h.b16 %v2806
        %v6447 = vunpack.c.l.b16 %v2807
        %v6448 = vunpack.c.h.b16 %v2807
        %v6449 = vunpack.c.l.b16 %v2808
        %v6450 = vunpack.c.h.b16 %v2808
        %v6451 = vunpack.c.l.b16 %v2809
        %v6452 = vunpack.c.h.b16 %v2809
        %v6453 = vunpack.c.l.b16 %v2810
        %v6454 = vunpack.c.h.b16 %v2810
        %v6455 = vunpack.c.l.b16 %v2811
        %v6456 = vunpack.c.h.b16 %v2811
        %v6457 = vunpack.c.l.b16 %v2812
        %v6458 = vunpack.c.h.b16 %v2812
        %v6459 = vunpack.c.l.b16 %v2813
        %v6460 = vunpack.c.h.b16 %v2813
        %v6461 = vunpack.c.l.b16 %v2814
        %v6462 = vunpack.c.h.b16 %v2814
        %v6463 = vunpack.c.l.b16 %v2815
        %v6464 = vunpack.c.h.b16 %v2815
        %v6465 = vunpack.c.l.b16 %v2816
        %v6466 = vunpack.c.h.b16 %v2816
        %v6467 = vunpack.c.l.b16 %v2817
        %v6468 = vunpack.c.h.b16 %v2817
        %v6469 = vunpack.c.l.b16 %v2818
        %v6470 = vunpack.c.h.b16 %v2818
        %v6471 = vunpack.c.l.b16 %v2819
        %v6472 = vunpack.c.h.b16 %v2819
        %v6473 = vunpack.c.l.b16 %v2820
        %v6474 = vunpack.c.h.b16 %v2820
        %v6475 = vunpack.c.l.b16 %v2821
        %v6476 = vunpack.c.h.b16 %v2821
        %v6477 = vunpack.c.l.b16 %v2822
        %v6478 = vunpack.c.h.b16 %v2822
        %v6479 = vunpack.c.l.b16 %v2823
        %v6480 = vunpack.c.h.b16 %v2823
        %v6481 = vunpack.c.l.b16 %v2824
        %v6482 = vunpack.c.h.b16 %v2824
        %v6483 = vunpack.c.l.b16 %v2825
        %v6484 = vunpack.c.h.b16 %v2825
        %v6485 = vunpack.c.l.b16 %v2826
        %v6486 = vunpack.c.h.b16 %v2826
        %v6487 = vunpack.c.l.b16 %v2827
        %v6488 = vunpack.c.h.b16 %v2827
        %v6489 = vunpack.c.l.b16 %v2828
        %v6490 = vunpack.c.h.b16 %v2828
        %v6491 = vunpack.c.l.b16 %v2829
        %v6492 = vunpack.c.h.b16 %v2829
        %v6493 = vunpack.c.l.b16 %v2830
        %v6494 = vunpack.c.h.b16 %v2830
        %v6495 = vunpack.c.l.b16 %v2831
        %v6496 = vunpack.c.h.b16 %v2831
        %v6497 = vunpack.c.l.b16 %v2832
        %v6498 = vunpack.c.h.b16 %v2832
        %v6499 = vunpack.c.l.b16 %v2833
        %v6500 = vunpack.c.h.b16 %v2833
        %v6501 = vunpack.c.l.b16 %v2834
        %v6502 = vunpack.c.h.b16 %v2834
        %v6503 = vunpack.c.l.b16 %v2835
        %v6504 = vunpack.c.h.b16 %v2835
        %v6505 = vunpack.c.l.b16 %v2836
        %v6506 = vunpack.c.h.b16 %v2836
        %v6507 = vunpack.c.l.b16 %v2837
        %v6508 = vunpack.c.h.b16 %v2837
        %v6509 = vunpack.c.l.b16 %v2838
        %v6510 = vunpack.c.h.b16 %v2838
        %v6511 = vunpack.c.l.b16 %v2839
        %v6512 = vunpack.c.h.b16 %v2839
        %v6513 = vunpack.c.l.b16 %v2840
        %v6514 = vunpack.c.h.b16 %v2840
        %v6515 = vunpack.c.l.b16 %v2841
        %v6516 = vunpack.c.h.b16 %v2841
        %v6517 = vunpack.c.l.b16 %v2842
        %v6518 = vunpack.c.h.b16 %v2842
        %v6519 = vunpack.c.l.b16 %v2843
        %v6520 = vunpack.c.h.b16 %v2843
        %v6521 = vunpack.c.l.b16 %v2844
        %v6522 = vunpack.c.h.b16 %v2844
        %v6523 = vunpack.c.l.b16 %v2845
        %v6524 = vunpack.c.h.b16 %v2845
        %v6525 = vunpack.c.l.b16 %v2846
        %v6526 = vunpack.c.h.b16 %v2846
        %v6527 = vunpack.c.l.b16 %v2847
        %v6528 = vunpack.c.h.b16 %v2847
        %v6529 = vunpack.c.l.b16 %v2848
        %v6530 = vunpack.c.h.b16 %v2848
        %v6531 = vunpack.c.l.b16 %v2849
        %v6532 = vunpack.c.h.b16 %v2849
        %v6533 = vunpack.c.l.b16 %v2850
        %v6534 = vunpack.c.h.b16 %v2850
        %v6535 = vunpack.c.l.b16 %v2851
        %v6536 = vunpack.c.h.b16 %v2851
        %v6537 = vunpack.c.l.b16 %v2852
        %v6538 = vunpack.c.h.b16 %v2852
        %v6539 = vunpack.c.l.b16 %v2853
        %v6540 = vunpack.c.h.b16 %v2853
        %v6541 = vunpack.c.l.b16 %v2854
        %v6542 = vunpack.c.h.b16 %v2854
        %v6543 = vunpack.c.l.b16 %v2855
        %v6544 = vunpack.c.h.b16 %v2855
        %v6545 = vunpack.c.l.b16 %v2856
        %v6546 = vunpack.c.h.b16 %v2856
        %v6547 = vunpack.c.l.b16 %v2857
        %v6548 = vunpack.c.h.b16 %v2857
        %v6549 = vunpack.c.l.b16 %v2858
        %v6550 = vunpack.c.h.b16 %v2858
        %v6551 = vunpack.c.l.b16 %v2859
        %v6552 = vunpack.c.h.b16 %v2859
        %v6553 = vunpack.c.l.b16 %v2860
        %v6554 = vunpack.c.h.b16 %v2860
        %v6555 = vunpack.c.l.b16 %v2861
        %v6556 = vunpack.c.h.b16 %v2861
        %v6557 = vunpack.c.l.b16 %v2862
        %v6558 = vunpack.c.h.b16 %v2862
        %v6559 = vunpack.c.l.b16 %v2863
        %v6560 = vunpack.c.h.b16 %v2863
        %v6561 = vunpack.c.l.b16 %v2864
        %v6562 = vunpack.c.h.b16 %v2864
        %v6563 = vunpack.c.l.b16 %v2865
        %v6564 = vunpack.c.h.b16 %v2865
        %v6565 = vunpack.c.l.b16 %v2866
        %v6566 = vunpack.c.h.b16 %v2866
        %v6567 = vunpack.c.l.b16 %v2867
        %v6568 = vunpack.c.h.b16 %v2867
        %v6569 = vunpack.c.l.b16 %v2868
        %v6570 = vunpack.c.h.b16 %v2868
        %v6571 = vunpack.c.l.b16 %v2869
        %v6572 = vunpack.c.h.b16 %v2869
        %v6573 = vunpack.c.l.b16 %v2870
        %v6574 = vunpack.c.h.b16 %v2870
        %v6575 = vunpack.c.l.b16 %v2871
        %v6576 = vunpack.c.h.b16 %v2871
        %v6577 = vunpack.c.l.b16 %v2872
        %v6578 = vunpack.c.h.b16 %v2872
        %v6579 = vunpack.c.l.b16 %v2873
        %v6580 = vunpack.c.h.b16 %v2873
        %v6581 = vunpack.c.l.b16 %v2874
        %v6582 = vunpack.c.h.b16 %v2874
        %v6583 = vunpack.c.l.b16 %v2875
        %v6584 = vunpack.c.h.b16 %v2875
        %v6585 = vunpack.c.l.b16 %v2876
        %v6586 = vunpack.c.h.b16 %v2876
        %v6587 = vunpack.c.l.b16 %v2877
        %v6588 = vunpack.c.h.b16 %v2877
        %v6589 = vunpack.c.l.b16 %v2878
        %v6590 = vunpack.c.h.b16 %v2878
        %v6591 = vunpack.c.l.b16 %v2879
        %v6592 = vunpack.c.h.b16 %v2879
        %v6593 = vunpack.c.l.b16 %v2880
        %v6594 = vunpack.c.h.b16 %v2880
        %v6595 = vunpack.c.l.b16 %v2881
        %v6596 = vunpack.c.h.b16 %v2881
        %v6597 = vunpack.c.l.b16 %v2882
        %v6598 = vunpack.c.h.b16 %v2882
        %v6599 = vunpack.c.l.b16 %v2883
        %v6600 = vunpack.c.h.b16 %v2883
        %v6601 = vunpack.c.l.b16 %v2884
        %v6602 = vunpack.c.h.b16 %v2884
        %v6603 = vunpack.c.l.b16 %v2885
        %v6604 = vunpack.c.h.b16 %v2885
        %v6605 = vunpack.c.l.b16 %v2886
        %v6606 = vunpack.c.h.b16 %v2886
        %v6607 = vunpack.c.l.b16 %v2887
        %v6608 = vunpack.c.h.b16 %v2887
        %v6609 = vunpack.c.l.b16 %v2888
        %v6610 = vunpack.c.h.b16 %v2888
        %v6611 = vunpack.c.l.b16 %v2889
        %v6612 = vunpack.c.h.b16 %v2889
        %v6613 = vunpack.c.l.b16 %v2890
        %v6614 = vunpack.c.h.b16 %v2890
        %v6615 = vunpack.c.l.b16 %v2891
        %v6616 = vunpack.c.h.b16 %v2891
        %v6617 = vunpack.c.l.b16 %v2892
        %v6618 = vunpack.c.h.b16 %v2892
        %v6619 = vunpack.c.l.b16 %v2893
        %v6620 = vunpack.c.h.b16 %v2893
        %v6621 = vunpack.c.l.b16 %v2894
        %v6622 = vunpack.c.h.b16 %v2894
        %v6623 = vunpack.c.l.b16 %v2895
        %v6624 = vunpack.c.h.b16 %v2895
        %v6625 = vunpack.c.l.b16 %v2896
        %v6626 = vunpack.c.h.b16 %v2896
        %v6627 = vunpack.c.l.b16 %v2897
        %v6628 = vunpack.c.h.b16 %v2897
        %v6629 = vunpack.c.l.b16 %v2898
        %v6630 = vunpack.c.h.b16 %v2898
        %v6631 = vunpack.c.l.b16 %v2899
        %v6632 = vunpack.c.h.b16 %v2899
        %v6633 = vunpack.c.l.b16 %v2900
        %v6634 = vunpack.c.h.b16 %v2900
        %v6635 = vunpack.c.l.b16 %v2901
        %v6636 = vunpack.c.h.b16 %v2901
        %v6637 = vunpack.c.l.b16 %v2902
        %v6638 = vunpack.c.h.b16 %v2902
        %v6639 = vunpack.c.l.b16 %v2903
        %v6640 = vunpack.c.h.b16 %v2903
        %v6641 = vunpack.c.l.b16 %v2904
        %v6642 = vunpack.c.h.b16 %v2904
        %v6643 = vunpack.c.l.b16 %v2905
        %v6644 = vunpack.c.h.b16 %v2905
        %v6645 = vunpack.c.l.b16 %v2906
        %v6646 = vunpack.c.h.b16 %v2906
        %v6647 = vunpack.c.l.b16 %v2907
        %v6648 = vunpack.c.h.b16 %v2907
        %v6649 = vunpack.c.l.b16 %v2908
        %v6650 = vunpack.c.h.b16 %v2908
        %v6651 = vunpack.c.l.b16 %v2909
        %v6652 = vunpack.c.h.b16 %v2909
        %v6653 = vunpack.c.l.b16 %v2910
        %v6654 = vunpack.c.h.b16 %v2910
        %v6655 = vunpack.c.l.b16 %v2911
        %v6656 = vunpack.c.h.b16 %v2911
        %v6657 = vunpack.c.l.b16 %v2912
        %v6658 = vunpack.c.h.b16 %v2912
        %v6659 = vunpack.c.l.b16 %v2913
        %v6660 = vunpack.c.h.b16 %v2913
        %v6661 = vunpack.c.l.b16 %v2914
        %v6662 = vunpack.c.h.b16 %v2914
        %v6663 = vunpack.c.l.b16 %v2915
        %v6664 = vunpack.c.h.b16 %v2915
        %v6665 = vunpack.c.l.b16 %v2916
        %v6666 = vunpack.c.h.b16 %v2916
        %v6667 = vunpack.c.l.b16 %v2917
        %v6668 = vunpack.c.h.b16 %v2917
        %v6669 = vunpack.c.l.b16 %v2918
        %v6670 = vunpack.c.h.b16 %v2918
        %v6671 = vunpack.c.l.b16 %v2919
        %v6672 = vunpack.c.h.b16 %v2919
        %v6673 = vunpack.c.l.b16 %v2920
        %v6674 = vunpack.c.h.b16 %v2920
        %v6675 = vunpack.c.l.b16 %v2921
        %v6676 = vunpack.c.h.b16 %v2921
        %v6677 = vunpack.c.l.b16 %v2922
        %v6678 = vunpack.c.h.b16 %v2922
        %v6679 = vunpack.c.l.b16 %v2923
        %v6680 = vunpack.c.h.b16 %v2923
        %v6681 = vunpack.c.l.b16 %v2924
        %v6682 = vunpack.c.h.b16 %v2924
        %v6683 = vunpack.c.l.b16 %v2925
        %v6684 = vunpack.c.h.b16 %v2925
        %v6685 = vunpack.c.l.b16 %v2926
        %v6686 = vunpack.c.h.b16 %v2926
        %v6687 = vunpack.c.l.b16 %v2927
        %v6688 = vunpack.c.h.b16 %v2927
        %v6689 = vunpack.c.l.b16 %v2928
        %v6690 = vunpack.c.h.b16 %v2928
        %v6691 = vunpack.c.l.b16 %v2929
        %v6692 = vunpack.c.h.b16 %v2929
        %v6693 = vunpack.c.l.b16 %v2930
        %v6694 = vunpack.c.h.b16 %v2930
        %v6695 = vunpack.c.l.b16 %v2931
        %v6696 = vunpack.c.h.b16 %v2931
        %v6697 = vunpack.c.l.b16 %v2932
        %v6698 = vunpack.c.h.b16 %v2932
        %v6699 = vunpack.c.l.b16 %v2933
        %v6700 = vunpack.c.h.b16 %v2933
        %v6701 = vunpack.c.l.b16 %v2934
        %v6702 = vunpack.c.h.b16 %v2934
        %v6703 = vunpack.c.l.b16 %v2935
        %v6704 = vunpack.c.h.b16 %v2935
        %v6705 = vunpack.c.l.b16 %v2936
        %v6706 = vunpack.c.h.b16 %v2936
        %v6707 = vunpack.c.l.b16 %v2937
        %v6708 = vunpack.c.h.b16 %v2937
        %v6709 = vunpack.c.l.b16 %v2938
        %v6710 = vunpack.c.h.b16 %v2938
        %v6711 = vunpack.c.l.b16 %v2939
        %v6712 = vunpack.c.h.b16 %v2939
        %v6713 = vunpack.c.l.b16 %v2940
        %v6714 = vunpack.c.h.b16 %v2940
        %v6715 = vunpack.c.l.b16 %v2941
        %v6716 = vunpack.c.h.b16 %v2941
        %v6717 = vunpack.c.l.b16 %v2942
        %v6718 = vunpack.c.h.b16 %v2942
        %v6719 = vunpack.c.l.b16 %v2943
        %v6720 = vunpack.c.h.b16 %v2943
        %v6721 = vunpack.c.l.b16 %v2944
        %v6722 = vunpack.c.h.b16 %v2944
        %v6723 = vunpack.c.l.b16 %v2945
        %v6724 = vunpack.c.h.b16 %v2945
        %v6725 = vunpack.c.l.b16 %v2946
        %v6726 = vunpack.c.h.b16 %v2946
        %v6727 = vunpack.c.l.b16 %v2947
        %v6728 = vunpack.c.h.b16 %v2947
        %v6729 = vunpack.c.l.b16 %v2948
        %v6730 = vunpack.c.h.b16 %v2948
        %v6731 = vunpack.c.l.b16 %v2949
        %v6732 = vunpack.c.h.b16 %v2949
        %v6733 = vunpack.c.l.b16 %v2950
        %v6734 = vunpack.c.h.b16 %v2950
        %v6735 = vunpack.c.l.b16 %v2951
        %v6736 = vunpack.c.h.b16 %v2951
        %v6737 = vunpack.c.l.b16 %v2952
        %v6738 = vunpack.c.h.b16 %v2952
        %v6739 = vunpack.c.l.b16 %v2953
        %v6740 = vunpack.c.h.b16 %v2953
        %v6741 = vunpack.c.l.b16 %v2954
        %v6742 = vunpack.c.h.b16 %v2954
        %v6743 = vunpack.c.l.b16 %v2955
        %v6744 = vunpack.c.h.b16 %v2955
        %v6745 = vunpack.c.l.b16 %v2956
        %v6746 = vunpack.c.h.b16 %v2956
        %v6747 = vunpack.c.l.b16 %v2957
        %v6748 = vunpack.c.h.b16 %v2957
        %v6749 = vunpack.c.l.b16 %v2958
        %v6750 = vunpack.c.h.b16 %v2958
        %v6751 = vunpack.c.l.b16 %v2959
        %v6752 = vunpack.c.h.b16 %v2959
        %v6753 = vunpack.c.l.b16 %v2960
        %v6754 = vunpack.c.h.b16 %v2960
        %v6755 = vunpack.c.l.b16 %v2961
        %v6756 = vunpack.c.h.b16 %v2961
        %v6757 = vunpack.c.l.b16 %v2962
        %v6758 = vunpack.c.h.b16 %v2962
        %v6759 = vunpack.c.l.b16 %v2963
        %v6760 = vunpack.c.h.b16 %v2963
        %v6761 = vunpack.c.l.b16 %v2964
        %v6762 = vunpack.c.h.b16 %v2964
        %v6763 = vunpack.c.l.b16 %v2965
        %v6764 = vunpack.c.h.b16 %v2965
        %v6765 = vunpack.c.l.b16 %v2966
        %v6766 = vunpack.c.h.b16 %v2966
        %v6767 = vunpack.c.l.b16 %v2967
        %v6768 = vunpack.c.h.b16 %v2967
        %v6769 = vunpack.c.l.b16 %v2968
        %v6770 = vunpack.c.h.b16 %v2968
        %v6771 = vunpack.c.l.b16 %v2969
        %v6772 = vunpack.c.h.b16 %v2969
        %v6773 = vunpack.c.l.b16 %v2970
        %v6774 = vunpack.c.h.b16 %v2970
        %v6775 = vunpack.c.l.b16 %v2971
        %v6776 = vunpack.c.h.b16 %v2971
        %v6777 = vunpack.c.l.b16 %v2972
        %v6778 = vunpack.c.h.b16 %v2972
        %v6779 = vunpack.c.l.b16 %v2973
        %v6780 = vunpack.c.h.b16 %v2973
        %v6781 = vunpack.c.l.b16 %v2974
        %v6782 = vunpack.c.h.b16 %v2974
        %v6783 = vunpack.c.l.b16 %v2975
        %v6784 = vunpack.c.h.b16 %v2975
        %v6785 = vunpack.c.l.b16 %v2976
        %v6786 = vunpack.c.h.b16 %v2976
        %v6787 = vunpack.c.l.b16 %v2977
        %v6788 = vunpack.c.h.b16 %v2977
        %v6789 = vunpack.c.l.b16 %v2978
        %v6790 = vunpack.c.h.b16 %v2978
        %v6791 = vunpack.c.l.b16 %v2979
        %v6792 = vunpack.c.h.b16 %v2979
        %v6793 = vunpack.c.l.b16 %v2980
        %v6794 = vunpack.c.h.b16 %v2980
        %v6795 = vunpack.c.l.b16 %v2981
        %v6796 = vunpack.c.h.b16 %v2981
        %v6797 = vunpack.c.l.b16 %v2982
        %v6798 = vunpack.c.h.b16 %v2982
        %v6799 = vunpack.c.l.b16 %v2983
        %v6800 = vunpack.c.h.b16 %v2983
        %v6801 = vunpack.c.l.b16 %v2984
        %v6802 = vunpack.c.h.b16 %v2984
        %v6803 = vunpack.c.l.b16 %v2985
        %v6804 = vunpack.c.h.b16 %v2985
        %v6805 = vunpack.c.l.b16 %v2986
        %v6806 = vunpack.c.h.b16 %v2986
        %v6807 = vunpack.c.l.b16 %v2987
        %v6808 = vunpack.c.h.b16 %v2987
        %v6809 = vunpack.c.l.b16 %v2988
        %v6810 = vunpack.c.h.b16 %v2988
        %v6811 = vunpack.c.l.b16 %v2989
        %v6812 = vunpack.c.h.b16 %v2989
        %v6813 = vunpack.c.l.b16 %v2990
        %v6814 = vunpack.c.h.b16 %v2990
        %v6815 = vunpack.c.l.b16 %v2991
        %v6816 = vunpack.c.h.b16 %v2991
        %v6817 = vunpack.c.l.b16 %v2992
        %v6818 = vunpack.c.h.b16 %v2992
        %v6819 = vunpack.c.l.b16 %v2993
        %v6820 = vunpack.c.h.b16 %v2993
        %v6821 = vunpack.c.l.b16 %v2994
        %v6822 = vunpack.c.h.b16 %v2994
        %v6823 = vunpack.c.l.b16 %v2995
        %v6824 = vunpack.c.h.b16 %v2995
        %v6825 = vunpack.c.l.b16 %v2996
        %v6826 = vunpack.c.h.b16 %v2996
        %v6827 = vunpack.c.l.b16 %v2997
        %v6828 = vunpack.c.h.b16 %v2997
        %v6829 = vunpack.c.l.b16 %v2998
        %v6830 = vunpack.c.h.b16 %v2998
        %v6831 = vunpack.c.l.b16 %v2999
        %v6832 = vunpack.c.h.b16 %v2999
        %v6833 = vunpack.c.l.b16 %v3000
        %v6834 = vunpack.c.h.b16 %v3000
        %v6835 = vunpack.c.l.b16 %v3001
        %v6836 = vunpack.c.h.b16 %v3001
        %v6837 = vunpack.c.l.b16 %v3002
        %v6838 = vunpack.c.h.b16 %v3002
        %v6839 = vunpack.c.l.b16 %v3003
        %v6840 = vunpack.c.h.b16 %v3003
        %v6841 = vunpack.c.l.b16 %v3004
        %v6842 = vunpack.c.h.b16 %v3004
        %v6843 = vunpack.c.l.b16 %v3005
        %v6844 = vunpack.c.h.b16 %v3005
        %v6845 = vunpack.c.l.b16 %v3006
        %v6846 = vunpack.c.h.b16 %v3006
        %v6847 = vunpack.c.l.b16 %v3007
        %v6848 = vunpack.c.h.b16 %v3007
        %v6849 = vunpack.c.l.b16 %v3008
        %v6850 = vunpack.c.h.b16 %v3008
        %v6851 = vunpack.c.l.b16 %v3009
        %v6852 = vunpack.c.h.b16 %v3009
        %v6853 = vunpack.c.l.b16 %v3010
        %v6854 = vunpack.c.h.b16 %v3010
        %v6855 = vunpack.c.l.b16 %v3011
        %v6856 = vunpack.c.h.b16 %v3011
        %v6857 = vunpack.c.l.b16 %v3012
        %v6858 = vunpack.c.h.b16 %v3012
        %v6859 = vunpack.c.l.b16 %v3013
        %v6860 = vunpack.c.h.b16 %v3013
        %v6861 = vunpack.c.l.b16 %v3014
        %v6862 = vunpack.c.h.b16 %v3014
        %v6863 = vunpack.c.l.b16 %v3015
        %v6864 = vunpack.c.h.b16 %v3015
        %v6865 = vunpack.c.l.b16 %v3016
        %v6866 = vunpack.c.h.b16 %v3016
        %v6867 = vunpack.c.l.b16 %v3017
        %v6868 = vunpack.c.h.b16 %v3017
        %v6869 = vunpack.c.l.b16 %v3018
        %v6870 = vunpack.c.h.b16 %v3018
        %v6871 = vunpack.c.l.b16 %v3019
        %v6872 = vunpack.c.h.b16 %v3019
        %v6873 = vunpack.c.l.b16 %v3020
        %v6874 = vunpack.c.h.b16 %v3020
        %v6875 = vunpack.c.l.b16 %v3021
        %v6876 = vunpack.c.h.b16 %v3021
        %v6877 = vunpack.c.l.b16 %v3022
        %v6878 = vunpack.c.h.b16 %v3022
        %v6879 = vunpack.c.l.b16 %v3023
        %v6880 = vunpack.c.h.b16 %v3023
        %v6881 = vunpack.c.l.b16 %v3024
        %v6882 = vunpack.c.h.b16 %v3024
        %v6883 = vunpack.c.l.b16 %v3025
        %v6884 = vunpack.c.h.b16 %v3025
        %v6885 = vunpack.c.l.b16 %v3026
        %v6886 = vunpack.c.h.b16 %v3026
        %v6887 = vunpack.c.l.b16 %v3027
        %v6888 = vunpack.c.h.b16 %v3027
        %v6889 = vunpack.c.l.b16 %v3028
        %v6890 = vunpack.c.h.b16 %v3028
        %v6891 = vunpack.c.l.b16 %v3029
        %v6892 = vunpack.c.h.b16 %v3029
        %v6893 = vunpack.c.l.b16 %v3030
        %v6894 = vunpack.c.h.b16 %v3030
        %v6895 = vunpack.c.l.b16 %v3031
        %v6896 = vunpack.c.h.b16 %v3031
        %v6897 = vunpack.c.l.b16 %v3032
        %v6898 = vunpack.c.h.b16 %v3032
        %v6899 = vunpack.c.l.b16 %v3033
        %v6900 = vunpack.c.h.b16 %v3033
        %v6901 = vunpack.c.l.b16 %v3034
        %v6902 = vunpack.c.h.b16 %v3034
        %v6903 = vunpack.c.l.b16 %v3035
        %v6904 = vunpack.c.h.b16 %v3035
        %v6905 = vunpack.c.l.b16 %v3036
        %v6906 = vunpack.c.h.b16 %v3036
        %v6907 = vunpack.c.l.b16 %v3037
        %v6908 = vunpack.c.h.b16 %v3037
        %v6909 = vunpack.c.l.b16 %v3038
        %v6910 = vunpack.c.h.b16 %v3038
        %v6911 = vunpack.c.l.b16 %v3039
        %v6912 = vunpack.c.h.b16 %v3039
        %v6913 = vunpack.c.l.b16 %v3040
        %v6914 = vunpack.c.h.b16 %v3040
        %v6915 = vunpack.c.l.b16 %v3041
        %v6916 = vunpack.c.h.b16 %v3041
        %v6917 = vunpack.c.l.b16 %v3042
        %v6918 = vunpack.c.h.b16 %v3042
        %v6919 = vunpack.c.l.b16 %v3043
        %v6920 = vunpack.c.h.b16 %v3043
        %v6921 = vunpack.c.l.b16 %v3044
        %v6922 = vunpack.c.h.b16 %v3044
        %v6923 = vunpack.c.l.b16 %v3045
        %v6924 = vunpack.c.h.b16 %v3045
        %v6925 = vunpack.c.l.b16 %v3046
        %v6926 = vunpack.c.h.b16 %v3046
        %v6927 = vunpack.c.l.b16 %v3047
        %v6928 = vunpack.c.h.b16 %v3047
        %v6929 = vunpack.c.l.b16 %v3048
        %v6930 = vunpack.c.h.b16 %v3048
        %v6931 = vunpack.c.l.b16 %v3049
        %v6932 = vunpack.c.h.b16 %v3049
        %v6933 = vunpack.c.l.b16 %v3050
        %v6934 = vunpack.c.h.b16 %v3050
        %v6935 = vunpack.c.l.b16 %v3051
        %v6936 = vunpack.c.h.b16 %v3051
        %v6937 = vunpack.c.l.b16 %v3052
        %v6938 = vunpack.c.h.b16 %v3052
        %v6939 = vunpack.c.l.b16 %v3053
        %v6940 = vunpack.c.h.b16 %v3053
        %v6941 = vunpack.c.l.b16 %v3054
        %v6942 = vunpack.c.h.b16 %v3054
        %v6943 = vunpack.c.l.b16 %v3055
        %v6944 = vunpack.c.h.b16 %v3055
        %v6945 = vunpack.c.l.b16 %v3056
        %v6946 = vunpack.c.h.b16 %v3056
        %v6947 = vunpack.c.l.b16 %v3057
        %v6948 = vunpack.c.h.b16 %v3057
        %v6949 = vunpack.c.l.b16 %v3058
        %v6950 = vunpack.c.h.b16 %v3058
        %v6951 = vunpack.c.l.b16 %v3059
        %v6952 = vunpack.c.h.b16 %v3059
        %v6953 = vunpack.c.l.b16 %v3060
        %v6954 = vunpack.c.h.b16 %v3060
        %v6955 = vunpack.c.l.b16 %v3061
        %v6956 = vunpack.c.h.b16 %v3061
        %v6957 = vunpack.c.l.b16 %v3062
        %v6958 = vunpack.c.h.b16 %v3062
        %v6959 = vunpack.c.l.b16 %v3063
        %v6960 = vunpack.c.h.b16 %v3063
        %v6961 = vunpack.c.l.b16 %v3064
        %v6962 = vunpack.c.h.b16 %v3064
        %v6963 = vunpack.c.l.b16 %v3065
        %v6964 = vunpack.c.h.b16 %v3065
        %v6965 = vunpack.c.l.b16 %v3066
        %v6966 = vunpack.c.h.b16 %v3066
        %v6967 = vunpack.c.l.b16 %v3067
        %v6968 = vunpack.c.h.b16 %v3067
        %v6969 = vunpack.c.l.b16 %v3068
        %v6970 = vunpack.c.h.b16 %v3068
        %v6971 = vunpack.c.l.b16 %v3069
        %v6972 = vunpack.c.h.b16 %v3069
        %v6973 = vunpack.c.l.b16 %v3070
        %v6974 = vunpack.c.h.b16 %v3070
        %v6975 = vunpack.c.l.b16 %v3071
        %v6976 = vunpack.c.h.b16 %v3071
        %v6977 = vunpack.c.l.b16 %v3072
        %v6978 = vunpack.c.h.b16 %v3072
        %v6979 = vunpack.c.l.b16 %v3073
        %v6980 = vunpack.c.h.b16 %v3073
        %v6981 = vunpack.c.l.b16 %v3074
        %v6982 = vunpack.c.h.b16 %v3074
        %v6983 = vunpack.c.l.b16 %v3075
        %v6984 = vunpack.c.h.b16 %v3075
        %v6985 = vunpack.c.l.b16 %v3076
        %v6986 = vunpack.c.h.b16 %v3076
        %v6987 = vunpack.c.l.b16 %v3077
        %v6988 = vunpack.c.h.b16 %v3077
        %v6989 = vunpack.c.l.b16 %v3078
        %v6990 = vunpack.c.h.b16 %v3078
        %v6991 = vunpack.c.l.b16 %v3079
        %v6992 = vunpack.c.h.b16 %v3079
        %v6993 = vunpack.c.l.b16 %v3080
        %v6994 = vunpack.c.h.b16 %v3080
        %v6995 = vunpack.c.l.b16 %v3081
        %v6996 = vunpack.c.h.b16 %v3081
        %v6997 = vunpack.c.l.b16 %v3082
        %v6998 = vunpack.c.h.b16 %v3082
        %v6999 = vunpack.c.l.b16 %v3083
        %v7000 = vunpack.c.h.b16 %v3083
        %v7001 = vunpack.c.l.b16 %v3084
        %v7002 = vunpack.c.h.b16 %v3084
        %v7003 = vunpack.c.l.b16 %v3085
        %v7004 = vunpack.c.h.b16 %v3085
        %v7005 = vunpack.c.l.b16 %v3086
        %v7006 = vunpack.c.h.b16 %v3086
        %v7007 = vunpack.c.l.b16 %v3087
        %v7008 = vunpack.c.h.b16 %v3087
        %v7009 = vunpack.c.l.b16 %v3088
        %v7010 = vunpack.c.h.b16 %v3088
        %v7011 = vunpack.c.l.b16 %v3089
        %v7012 = vunpack.c.h.b16 %v3089
        %v7013 = vunpack.c.l.b16 %v3090
        %v7014 = vunpack.c.h.b16 %v3090
        %v7015 = vunpack.c.l.b16 %v3091
        %v7016 = vunpack.c.h.b16 %v3091
        %v7017 = vunpack.c.l.b16 %v3092
        %v7018 = vunpack.c.h.b16 %v3092
        %v7019 = vunpack.c.l.b16 %v3093
        %v7020 = vunpack.c.h.b16 %v3093
        %v7021 = vunpack.c.l.b16 %v3094
        %v7022 = vunpack.c.h.b16 %v3094
        %v7023 = vunpack.c.l.b16 %v3095
        %v7024 = vunpack.c.h.b16 %v3095
        %v7025 = vunpack.c.l.b16 %v3096
        %v7026 = vunpack.c.h.b16 %v3096
        %v7027 = vunpack.c.l.b16 %v3097
        %v7028 = vunpack.c.h.b16 %v3097
        %v7029 = vunpack.c.l.b16 %v3098
        %v7030 = vunpack.c.h.b16 %v3098
        %v7031 = vunpack.c.l.b16 %v3099
        %v7032 = vunpack.c.h.b16 %v3099
        %v7033 = vunpack.c.l.b16 %v3100
        %v7034 = vunpack.c.h.b16 %v3100
        %v7035 = vunpack.c.l.b16 %v3101
        %v7036 = vunpack.c.h.b16 %v3101
        %v7037 = vunpack.c.l.b16 %v3102
        %v7038 = vunpack.c.h.b16 %v3102
        %v7039 = vunpack.c.l.b16 %v3103
        %v7040 = vunpack.c.h.b16 %v3103
        %v7041 = vunpack.c.l.b16 %v3104
        %v7042 = vunpack.c.h.b16 %v3104
        %v7043 = vunpack.c.l.b16 %v3105
        %v7044 = vunpack.c.h.b16 %v3105
        %v7045 = vunpack.c.l.b16 %v3106
        %v7046 = vunpack.c.h.b16 %v3106
        %v7047 = vunpack.c.l.b16 %v3107
        %v7048 = vunpack.c.h.b16 %v3107
        %v7049 = vunpack.c.l.b16 %v3108
        %v7050 = vunpack.c.h.b16 %v3108
        %v7051 = vunpack.c.l.b16 %v3109
        %v7052 = vunpack.c.h.b16 %v3109
        %v7053 = vunpack.c.l.b16 %v3110
        %v7054 = vunpack.c.h.b16 %v3110
        %v7055 = vunpack.c.l.b16 %v3111
        %v7056 = vunpack.c.h.b16 %v3111
        %v7057 = vunpack.c.l.b16 %v3112
        %v7058 = vunpack.c.h.b16 %v3112
        %v7059 = vunpack.c.l.b16 %v3113
        %v7060 = vunpack.c.h.b16 %v3113
        %v7061 = vunpack.c.l.b16 %v3114
        %v7062 = vunpack.c.h.b16 %v3114
        %v7063 = vunpack.c.l.b16 %v3115
        %v7064 = vunpack.c.h.b16 %v3115
        %v7065 = vunpack.c.l.b16 %v3116
        %v7066 = vunpack.c.h.b16 %v3116
        %v7067 = vunpack.c.l.b16 %v3117
        %v7068 = vunpack.c.h.b16 %v3117
        %v7069 = vunpack.c.l.b16 %v3118
        %v7070 = vunpack.c.h.b16 %v3118
        %v7071 = vunpack.c.l.b16 %v3119
        %v7072 = vunpack.c.h.b16 %v3119
        %v7073 = vunpack.c.l.b16 %v3120
        %v7074 = vunpack.c.h.b16 %v3120
        %v7075 = vunpack.c.l.b16 %v3121
        %v7076 = vunpack.c.h.b16 %v3121
        %v7077 = vunpack.c.l.b16 %v3122
        %v7078 = vunpack.c.h.b16 %v3122
        %v7079 = vunpack.c.l.b16 %v3123
        %v7080 = vunpack.c.h.b16 %v3123
        %v7081 = vunpack.c.l.b16 %v3124
        %v7082 = vunpack.c.h.b16 %v3124
        %v7083 = vunpack.c.l.b16 %v3125
        %v7084 = vunpack.c.h.b16 %v3125
        %v7085 = vunpack.c.l.b16 %v3126
        %v7086 = vunpack.c.h.b16 %v3126
        %v7087 = vunpack.c.l.b16 %v3127
        %v7088 = vunpack.c.h.b16 %v3127
        %v7089 = vunpack.c.l.b16 %v3128
        %v7090 = vunpack.c.h.b16 %v3128
        %v7091 = vunpack.c.l.b16 %v3129
        %v7092 = vunpack.c.h.b16 %v3129
        %v7093 = vunpack.c.l.b16 %v3130
        %v7094 = vunpack.c.h.b16 %v3130
        %v7095 = vunpack.c.l.b16 %v3131
        %v7096 = vunpack.c.h.b16 %v3131
        %v7097 = vunpack.c.l.b16 %v3132
        %v7098 = vunpack.c.h.b16 %v3132
        %v7099 = vunpack.c.l.b16 %v3133
        %v7100 = vunpack.c.h.b16 %v3133
        %v7101 = vunpack.c.l.b16 %v3134
        %v7102 = vunpack.c.h.b16 %v3134
        %v7103 = vunpack.c.l.b16 %v3135
        %v7104 = vunpack.c.h.b16 %v3135
        %v7105 = vunpack.c.l.b16 %v3136
        %v7106 = vunpack.c.h.b16 %v3136
        %v7107 = vunpack.c.l.b16 %v3137
        %v7108 = vunpack.c.h.b16 %v3137
        %v7109 = vunpack.c.l.b16 %v3138
        %v7110 = vunpack.c.h.b16 %v3138
        %v7111 = vunpack.c.l.b16 %v3139
        %v7112 = vunpack.c.h.b16 %v3139
        %v7113 = vunpack.c.l.b16 %v3140
        %v7114 = vunpack.c.h.b16 %v3140
        %v7115 = vunpack.c.l.b16 %v3141
        %v7116 = vunpack.c.h.b16 %v3141
        %v7117 = vunpack.c.l.b16 %v3142
        %v7118 = vunpack.c.h.b16 %v3142
        %v7119 = vunpack.c.l.b16 %v3143
        %v7120 = vunpack.c.h.b16 %v3143
        %v7121 = vunpack.c.l.b16 %v3144
        %v7122 = vunpack.c.h.b16 %v3144
        %v7123 = vunpack.c.l.b16 %v3145
        %v7124 = vunpack.c.h.b16 %v3145
        %v7125 = vunpack.c.l.b16 %v3146
        %v7126 = vunpack.c.h.b16 %v3146
        %v7127 = vunpack.c.l.b16 %v3147
        %v7128 = vunpack.c.h.b16 %v3147
        %v7129 = vunpack.c.l.b16 %v3148
        %v7130 = vunpack.c.h.b16 %v3148
        %v7131 = vunpack.c.l.b16 %v3149
        %v7132 = vunpack.c.h.b16 %v3149
        %v7133 = vunpack.c.l.b16 %v3150
        %v7134 = vunpack.c.h.b16 %v3150
        %v7135 = vunpack.c.l.b16 %v3151
        %v7136 = vunpack.c.h.b16 %v3151
        %v7137 = vunpack.c.l.b16 %v3152
        %v7138 = vunpack.c.h.b16 %v3152
        %v7139 = vunpack.c.l.b16 %v3153
        %v7140 = vunpack.c.h.b16 %v3153
        %v7141 = vunpack.c.l.b16 %v3154
        %v7142 = vunpack.c.h.b16 %v3154
        %v7143 = vunpack.c.l.b16 %v3155
        %v7144 = vunpack.c.h.b16 %v3155
        %v7145 = vunpack.c.l.b16 %v3156
        %v7146 = vunpack.c.h.b16 %v3156
        %v7147 = vunpack.c.l.b16 %v3157
        %v7148 = vunpack.c.h.b16 %v3157
        %v7149 = vunpack.c.l.b16 %v3158
        %v7150 = vunpack.c.h.b16 %v3158
        %v7151 = vunpack.c.l.b16 %v3159
        %v7152 = vunpack.c.h.b16 %v3159
        %v7153 = vunpack.c.l.b16 %v3160
        %v7154 = vunpack.c.h.b16 %v3160
        %v7155 = vunpack.c.l.b16 %v3161
        %v7156 = vunpack.c.h.b16 %v3161
        %v7157 = vunpack.c.l.b16 %v3162
        %v7158 = vunpack.c.h.b16 %v3162
        %v7159 = vunpack.c.l.b16 %v3163
        %v7160 = vunpack.c.h.b16 %v3163
        %v7161 = vunpack.c.l.b16 %v3164
        %v7162 = vunpack.c.h.b16 %v3164
        %v7163 = vunpack.c.l.b16 %v3165
        %v7164 = vunpack.c.h.b16 %v3165
        %v7165 = vunpack.c.l.b16 %v3166
        %v7166 = vunpack.c.h.b16 %v3166
        %v7167 = vunpack.c.l.b16 %v3167
        %v7168 = vunpack.c.h.b16 %v3167
        %v7169 = vunpack.c.l.b16 %v3168
        %v7170 = vunpack.c.h.b16 %v3168
        %v7171 = vunpack.c.l.b16 %v3169
        %v7172 = vunpack.c.h.b16 %v3169
        %v7173 = vunpack.c.l.b16 %v3170
        %v7174 = vunpack.c.h.b16 %v3170
        %v7175 = vunpack.c.l.b16 %v3171
        %v7176 = vunpack.c.h.b16 %v3171
        %v7177 = vunpack.c.l.b16 %v3172
        %v7178 = vunpack.c.h.b16 %v3172
        %v7179 = vunpack.c.l.b16 %v3173
        %v7180 = vunpack.c.h.b16 %v3173
        %v7181 = vunpack.c.l.b16 %v3174
        %v7182 = vunpack.c.h.b16 %v3174
        %v7183 = vunpack.c.l.b16 %v3175
        %v7184 = vunpack.c.h.b16 %v3175
        %v7185 = vunpack.c.l.b16 %v3176
        %v7186 = vunpack.c.h.b16 %v3176
        %v7187 = vunpack.c.l.b16 %v3177
        %v7188 = vunpack.c.h.b16 %v3177
        %v7189 = vunpack.c.l.b16 %v3178
        %v7190 = vunpack.c.h.b16 %v3178
        %v7191 = vunpack.c.l.b16 %v3179
        %v7192 = vunpack.c.h.b16 %v3179
        %v7193 = vunpack.c.l.b16 %v3180
        %v7194 = vunpack.c.h.b16 %v3180
        %v7195 = vunpack.c.l.b16 %v3181
        %v7196 = vunpack.c.h.b16 %v3181
        %v7197 = vunpack.c.l.b16 %v3182
        %v7198 = vunpack.c.h.b16 %v3182
        %v7199 = vunpack.c.l.b16 %v3183
        %v7200 = vunpack.c.h.b16 %v3183
        %v7201 = vunpack.c.l.b16 %v3184
        %v7202 = vunpack.c.h.b16 %v3184
        %v7203 = vunpack.c.l.b16 %v3185
        %v7204 = vunpack.c.h.b16 %v3185
        %v7205 = vunpack.c.l.b16 %v3186
        %v7206 = vunpack.c.h.b16 %v3186
        %v7207 = vunpack.c.l.b16 %v3187
        %v7208 = vunpack.c.h.b16 %v3187
        %v7209 = vunpack.c.l.b16 %v3188
        %v7210 = vunpack.c.h.b16 %v3188
        %v7211 = vunpack.c.l.b16 %v3189
        %v7212 = vunpack.c.h.b16 %v3189
        %v7213 = vunpack.c.l.b16 %v3190
        %v7214 = vunpack.c.h.b16 %v3190
        %v7215 = vunpack.c.l.b16 %v3191
        %v7216 = vunpack.c.h.b16 %v3191
        %v7217 = vunpack.c.l.b16 %v3192
        %v7218 = vunpack.c.h.b16 %v3192
        %v7219 = vunpack.c.l.b16 %v3193
        %v7220 = vunpack.c.h.b16 %v3193
        %v7221 = vunpack.c.l.b16 %v3194
        %v7222 = vunpack.c.h.b16 %v3194
        %v7223 = vunpack.c.l.b16 %v3195
        %v7224 = vunpack.c.h.b16 %v3195
        %v7225 = vunpack.c.l.b16 %v3196
        %v7226 = vunpack.c.h.b16 %v3196
        %v7227 = vunpack.c.l.b16 %v3197
        %v7228 = vunpack.c.h.b16 %v3197
        %v7229 = vunpack.c.l.b16 %v3198
        %v7230 = vunpack.c.h.b16 %v3198
        %v7231 = vunpack.c.l.b16 %v3199
        %v7232 = vunpack.c.h.b16 %v3199
        %v7233 = vunpack.c.l.b16 %v3200
        %v7234 = vunpack.c.h.b16 %v3200
        %v7235 = vunpack.c.l.b16 %v3201
        %v7236 = vunpack.c.h.b16 %v3201
        %v7237 = vunpack.c.l.b16 %v3202
        %v7238 = vunpack.c.h.b16 %v3202
        %v7239 = vunpack.c.l.b16 %v3203
        %v7240 = vunpack.c.h.b16 %v3203
        %v7241 = vunpack.c.l.b16 %v3204
        %v7242 = vunpack.c.h.b16 %v3204
        %v7243 = vunpack.c.l.b16 %v3205
        %v7244 = vunpack.c.h.b16 %v3205
        %v7245 = vunpack.c.l.b16 %v3206
        %v7246 = vunpack.c.h.b16 %v3206
        %v7247 = vunpack.c.l.b16 %v3207
        %v7248 = vunpack.c.h.b16 %v3207
        %v7249 = vunpack.c.l.b16 %v3208
        %v7250 = vunpack.c.h.b16 %v3208
        %v7251 = vunpack.c.l.b16 %v3209
        %v7252 = vunpack.c.h.b16 %v3209
        %v7253 = vunpack.c.l.b16 %v3210
        %v7254 = vunpack.c.h.b16 %v3210
        %v7255 = vunpack.c.l.b16 %v3211
        %v7256 = vunpack.c.h.b16 %v3211
        %v7257 = vunpack.c.l.b16 %v3212
        %v7258 = vunpack.c.h.b16 %v3212
        %v7259 = vunpack.c.l.b16 %v3213
        %v7260 = vunpack.c.h.b16 %v3213
        %v7261 = vunpack.c.l.b16 %v3214
        %v7262 = vunpack.c.h.b16 %v3214
        %v7263 = vunpack.c.l.b16 %v3215
        %v7264 = vunpack.c.h.b16 %v3215
        %v7265 = vunpack.c.l.b16 %v3216
        %v7266 = vunpack.c.h.b16 %v3216
        %v7267 = vunpack.c.l.b16 %v3217
        %v7268 = vunpack.c.h.b16 %v3217
        %v7269 = vunpack.c.l.b16 %v3218
        %v7270 = vunpack.c.h.b16 %v3218
        %v7271 = vunpack.c.l.b16 %v3219
        %v7272 = vunpack.c.h.b16 %v3219
        %v7273 = vunpack.c.l.b16 %v3220
        %v7274 = vunpack.c.h.b16 %v3220
        %v7275 = vunpack.c.l.b16 %v3221
        %v7276 = vunpack.c.h.b16 %v3221
        %v7277 = vunpack.c.l.b16 %v3222
        %v7278 = vunpack.c.h.b16 %v3222
        %v7279 = vunpack.c.l.b16 %v3223
        %v7280 = vunpack.c.h.b16 %v3223
        %v7281 = vunpack.c.l.b16 %v3224
        %v7282 = vunpack.c.h.b16 %v3224
        %v7283 = vunpack.c.l.b16 %v3225
        %v7284 = vunpack.c.h.b16 %v3225
        %v7285 = vunpack.c.l.b16 %v3226
        %v7286 = vunpack.c.h.b16 %v3226
        %v7287 = vunpack.c.l.b16 %v3227
        %v7288 = vunpack.c.h.b16 %v3227
        %v7289 = vunpack.c.l.b16 %v3228
        %v7290 = vunpack.c.h.b16 %v3228
        %v7291 = vunpack.c.l.b16 %v3229
        %v7292 = vunpack.c.h.b16 %v3229
        %v7293 = vunpack.c.l.b16 %v3230
        %v7294 = vunpack.c.h.b16 %v3230
        %v7295 = vunpack.c.l.b16 %v3231
        %v7296 = vunpack.c.h.b16 %v3231
        %v7297 = vunpack.c.l.b16 %v3232
        %v7298 = vunpack.c.h.b16 %v3232
        %v7299 = vunpack.c.l.b16 %v3233
        %v7300 = vunpack.c.h.b16 %v3233
        %v7301 = vunpack.c.l.b16 %v3234
        %v7302 = vunpack.c.h.b16 %v3234
        %v7303 = vunpack.c.l.b16 %v3235
        %v7304 = vunpack.c.h.b16 %v3235
        %v7305 = vunpack.c.l.b16 %v3236
        %v7306 = vunpack.c.h.b16 %v3236
        %v7307 = vunpack.c.l.b16 %v3237
        %v7308 = vunpack.c.h.b16 %v3237
        %v7309 = vunpack.c.l.b16 %v3238
        %v7310 = vunpack.c.h.b16 %v3238
        %v7311 = vunpack.c.l.b16 %v3239
        %v7312 = vunpack.c.h.b16 %v3239
        %v7313 = vunpack.c.l.b16 %v3240
        %v7314 = vunpack.c.h.b16 %v3240
        %v7315 = vunpack.c.l.b16 %v3241
        %v7316 = vunpack.c.h.b16 %v3241
        %v7317 = vunpack.c.l.b16 %v3242
        %v7318 = vunpack.c.h.b16 %v3242
        %v7319 = vunpack.c.l.b16 %v3243
        %v7320 = vunpack.c.h.b16 %v3243
        %v7321 = vunpack.c.l.b16 %v3244
        %v7322 = vunpack.c.h.b16 %v3244
        %v7323 = vunpack.c.l.b16 %v3245
        %v7324 = vunpack.c.h.b16 %v3245
        %v7325 = vunpack.c.l.b16 %v3246
        %v7326 = vunpack.c.h.b16 %v3246
        %v7327 = vunpack.c.l.b16 %v3247
        %v7328 = vunpack.c.h.b16 %v3247
        %v7329 = vunpack.c.l.b16 %v3248
        %v7330 = vunpack.c.h.b16 %v3248
        %v7331 = vunpack.c.l.b16 %v3249
        %v7332 = vunpack.c.h.b16 %v3249
        %v7333 = vunpack.c.l.b16 %v3250
        %v7334 = vunpack.c.h.b16 %v3250
        %v7335 = vunpack.c.l.b16 %v3251
        %v7336 = vunpack.c.h.b16 %v3251
        %v7337 = vunpack.c.l.b16 %v3252
        %v7338 = vunpack.c.h.b16 %v3252
        %v7339 = vunpack.c.l.b16 %v3253
        %v7340 = vunpack.c.h.b16 %v3253
        %v7341 = vunpack.c.l.b16 %v3254
        %v7342 = vunpack.c.h.b16 %v3254
        %v7343 = vunpack.c.l.b16 %v3255
        %v7344 = vunpack.c.h.b16 %v3255
        %v7345 = vunpack.c.l.b16 %v3256
        %v7346 = vunpack.c.h.b16 %v3256
        %v7347 = vunpack.c.l.b16 %v3257
        %v7348 = vunpack.c.h.b16 %v3257
        %v7349 = vunpack.c.l.b16 %v3258
        %v7350 = vunpack.c.h.b16 %v3258
        %v7351 = vunpack.c.l.b16 %v3259
        %v7352 = vunpack.c.h.b16 %v3259
        %v7353 = vunpack.c.l.b16 %v3260
        %v7354 = vunpack.c.h.b16 %v3260
        %v7355 = vunpack.c.l.b16 %v3261
        %v7356 = vunpack.c.h.b16 %v3261
        %v7357 = vunpack.c.l.b16 %v3262
        %v7358 = vunpack.c.h.b16 %v3262
        %v7359 = vunpack.c.l.b16 %v3263
        %v7360 = vunpack.c.h.b16 %v3263
        %v7361 = vunpack.c.l.b16 %v3264
        %v7362 = vunpack.c.h.b16 %v3264
        %v7363 = vunpack.c.l.b16 %v3265
        %v7364 = vunpack.c.h.b16 %v3265
        %v7365 = vunpack.c.l.b16 %v3266
        %v7366 = vunpack.c.h.b16 %v3266
        %v7367 = vunpack.c.l.b16 %v3267
        %v7368 = vunpack.c.h.b16 %v3267
        %v7369 = vunpack.c.l.b16 %v3268
        %v7370 = vunpack.c.h.b16 %v3268
        %v7371 = vunpack.c.l.b16 %v3269
        %v7372 = vunpack.c.h.b16 %v3269
        %v7373 = vunpack.c.l.b16 %v3270
        %v7374 = vunpack.c.h.b16 %v3270
        %v7375 = vunpack.c.l.b16 %v3271
        %v7376 = vunpack.c.h.b16 %v3271
        %v7377 = vunpack.c.l.b16 %v3272
        %v7378 = vunpack.c.h.b16 %v3272
        %v7379 = vunpack.c.l.b16 %v3273
        %v7380 = vunpack.c.h.b16 %v3273
        %v7381 = vunpack.c.l.b16 %v3274
        %v7382 = vunpack.c.h.b16 %v3274
        %v7383 = vunpack.c.l.b16 %v3275
        %v7384 = vunpack.c.h.b16 %v3275
        %v7385 = vunpack.c.l.b16 %v3276
        %v7386 = vunpack.c.h.b16 %v3276
        %v7387 = vunpack.c.l.b16 %v3277
        %v7388 = vunpack.c.h.b16 %v3277
        %v7389 = vunpack.c.l.b16 %v3278
        %v7390 = vunpack.c.h.b16 %v3278
        %v7391 = vunpack.c.l.b16 %v3279
        %v7392 = vunpack.c.h.b16 %v3279
        %v7393 = vunpack.c.l.b16 %v3280
        %v7394 = vunpack.c.h.b16 %v3280
        %v7395 = vunpack.c.l.b16 %v3281
        %v7396 = vunpack.c.h.b16 %v3281
        %v7397 = vunpack.c.l.b16 %v3282
        %v7398 = vunpack.c.h.b16 %v3282
        %v7399 = vunpack.c.l.b16 %v3283
        %v7400 = vunpack.c.h.b16 %v3283
        %v7401 = vunpack.c.l.b16 %v3284
        %v7402 = vunpack.c.h.b16 %v3284
        %v7403 = vunpack.c.l.b16 %v3285
        %v7404 = vunpack.c.h.b16 %v3285
        %v7405 = vunpack.c.l.b16 %v3286
        %v7406 = vunpack.c.h.b16 %v3286
        %v7407 = vunpack.c.l.b16 %v3287
        %v7408 = vunpack.c.h.b16 %v3287
        %v7409 = vunpack.c.l.b16 %v3288
        %v7410 = vunpack.c.h.b16 %v3288
        %v7411 = vunpack.c.l.b16 %v3289
        %v7412 = vunpack.c.h.b16 %v3289
        %v7413 = vunpack.c.l.b16 %v3290
        %v7414 = vunpack.c.h.b16 %v3290
        %v7415 = vunpack.c.l.b16 %v3291
        %v7416 = vunpack.c.h.b16 %v3291
        %v7417 = vunpack.c.l.b16 %v3292
        %v7418 = vunpack.c.h.b16 %v3292
        %v7419 = vunpack.c.l.b16 %v3293
        %v7420 = vunpack.c.h.b16 %v3293
        %v7421 = vunpack.c.l.b16 %v3294
        %v7422 = vunpack.c.h.b16 %v3294
        %v7423 = vunpack.c.l.b16 %v3295
        %v7424 = vunpack.c.h.b16 %v3295
        %v7425 = vunpack.c.l.b16 %v3296
        %v7426 = vunpack.c.h.b16 %v3296
        %v7427 = vunpack.c.l.b16 %v3297
        %v7428 = vunpack.c.h.b16 %v3297
        %v7429 = vunpack.c.l.b16 %v3298
        %v7430 = vunpack.c.h.b16 %v3298
        %v7431 = vunpack.c.l.b16 %v3299
        %v7432 = vunpack.c.h.b16 %v3299
        %v7433 = vunpack.c.l.b16 %v3300
        %v7434 = vunpack.c.h.b16 %v3300
        %v7435 = vunpack.c.l.b16 %v3301
        %v7436 = vunpack.c.h.b16 %v3301
        %v7437 = vunpack.c.l.b16 %v3302
        %v7438 = vunpack.c.h.b16 %v3302
        %v7439 = vunpack.c.l.b16 %v3303
        %v7440 = vunpack.c.h.b16 %v3303
        %v7441 = vunpack.c.l.b16 %v3304
        %v7442 = vunpack.c.h.b16 %v3304
        %v7443 = vunpack.c.l.b16 %v3305
        %v7444 = vunpack.c.h.b16 %v3305
        %v7445 = vunpack.c.l.b16 %v3306
        %v7446 = vunpack.c.h.b16 %v3306
        %v7447 = vunpack.c.l.b16 %v3307
        %v7448 = vunpack.c.h.b16 %v3307
        %v7449 = vunpack.c.l.b16 %v3308
        %v7450 = vunpack.c.h.b16 %v3308
        %v7451 = vunpack.c.l.b16 %v3309
        %v7452 = vunpack.c.h.b16 %v3309
        %v7453 = vunpack.c.l.b16 %v3310
        %v7454 = vunpack.c.h.b16 %v3310
        %v7455 = vunpack.c.l.b16 %v3311
        %v7456 = vunpack.c.h.b16 %v3311
        %v7457 = vunpack.c.l.b16 %v3312
        %v7458 = vunpack.c.h.b16 %v3312
        %v7459 = vunpack.c.l.b16 %v3313
        %v7460 = vunpack.c.h.b16 %v3313
        %v7461 = vunpack.c.l.b16 %v3314
        %v7462 = vunpack.c.h.b16 %v3314
        %v7463 = vunpack.c.l.b16 %v3315
        %v7464 = vunpack.c.h.b16 %v3315
        %v7465 = vunpack.c.l.b16 %v3316
        %v7466 = vunpack.c.h.b16 %v3316
        %v7467 = vunpack.c.l.b16 %v3317
        %v7468 = vunpack.c.h.b16 %v3317
        %v7469 = vunpack.c.l.b16 %v3318
        %v7470 = vunpack.c.h.b16 %v3318
        %v7471 = vunpack.c.l.b16 %v3319
        %v7472 = vunpack.c.h.b16 %v3319
        %v7473 = vunpack.c.l.b16 %v3320
        %v7474 = vunpack.c.h.b16 %v3320
        %v7475 = vunpack.c.l.b16 %v3321
        %v7476 = vunpack.c.h.b16 %v3321
        %v7477 = vunpack.c.l.b16 %v3322
        %v7478 = vunpack.c.h.b16 %v3322
        %v7479 = vunpack.c.l.b16 %v3323
        %v7480 = vunpack.c.h.b16 %v3323
        %v7481 = vunpack.c.l.b16 %v3324
        %v7482 = vunpack.c.h.b16 %v3324
        %v7483 = vunpack.c.l.b16 %v3325
        %v7484 = vunpack.c.h.b16 %v3325
        %v7485 = vunpack.c.l.b16 %v3326
        %v7486 = vunpack.c.h.b16 %v3326
        %v7487 = vunpack.c.l.b16 %v3327
        %v7488 = vunpack.c.h.b16 %v3327
        %v7489 = vunpack.c.l.b16 %v3328
        %v7490 = vunpack.c.h.b16 %v3328
        %v7491 = vunpack.c.l.b16 %v3329
        %v7492 = vunpack.c.h.b16 %v3329
        %v7493 = vunpack.c.l.b16 %v3330
        %v7494 = vunpack.c.h.b16 %v3330
        %v7495 = vunpack.c.l.b16 %v3331
        %v7496 = vunpack.c.h.b16 %v3331
        %v7497 = vunpack.c.l.b16 %v3332
        %v7498 = vunpack.c.h.b16 %v3332
        %v7499 = vunpack.c.l.b16 %v3333
        %v7500 = vunpack.c.h.b16 %v3333
        %v7501 = vunpack.c.l.b16 %v3334
        %v7502 = vunpack.c.h.b16 %v3334
        %v7503 = vunpack.c.l.b16 %v3335
        %v7504 = vunpack.c.h.b16 %v3335
        %v7505 = vunpack.c.l.b16 %v3336
        %v7506 = vunpack.c.h.b16 %v3336
        %v7507 = vunpack.c.l.b16 %v3337
        %v7508 = vunpack.c.h.b16 %v3337
        %v7509 = vunpack.c.l.b16 %v3338
        %v7510 = vunpack.c.h.b16 %v3338
        %v7511 = vunpack.c.l.b16 %v3339
        %v7512 = vunpack.c.h.b16 %v3339
        %v7513 = vunpack.c.l.b16 %v3340
        %v7514 = vunpack.c.h.b16 %v3340
        %v7515 = vunpack.c.l.b16 %v3341
        %v7516 = vunpack.c.h.b16 %v3341
        %v7517 = vunpack.c.l.b16 %v3342
        %v7518 = vunpack.c.h.b16 %v3342
        %v7519 = vunpack.c.l.b16 %v3343
        %v7520 = vunpack.c.h.b16 %v3343
        %v7521 = vunpack.c.l.b16 %v3344
        %v7522 = vunpack.c.h.b16 %v3344
        %v7523 = vunpack.c.l.b16 %v3345
        %v7524 = vunpack.c.h.b16 %v3345
        %v7525 = vunpack.c.l.b16 %v3346
        %v7526 = vunpack.c.h.b16 %v3346
        %v7527 = vunpack.c.l.b16 %v3347
        %v7528 = vunpack.c.h.b16 %v3347
        %v7529 = vunpack.c.l.b16 %v3348
        %v7530 = vunpack.c.h.b16 %v3348
        %v7531 = vunpack.c.l.b16 %v3349
        %v7532 = vunpack.c.h.b16 %v3349
        %v7533 = vunpack.c.l.b16 %v3350
        %v7534 = vunpack.c.h.b16 %v3350
        %v7535 = vunpack.c.l.b16 %v3351
        %v7536 = vunpack.c.h.b16 %v3351
        %v7537 = vunpack.c.l.b16 %v3352
        %v7538 = vunpack.c.h.b16 %v3352
        %v7539 = vunpack.c.l.b16 %v3353
        %v7540 = vunpack.c.h.b16 %v3353
        %v7541 = vunpack.c.l.b16 %v3354
        %v7542 = vunpack.c.h.b16 %v3354
        %v7543 = vunpack.c.l.b16 %v3355
        %v7544 = vunpack.c.h.b16 %v3355
        %v7545 = vunpack.c.l.b16 %v3356
        %v7546 = vunpack.c.h.b16 %v3356
        %v7547 = vunpack.c.l.b16 %v3357
        %v7548 = vunpack.c.h.b16 %v3357
        %v7549 = vunpack.c.l.b16 %v3358
        %v7550 = vunpack.c.h.b16 %v3358
        %v7551 = vunpack.c.l.b16 %v3359
        %v7552 = vunpack.c.h.b16 %v3359
        %v7553 = vunpack.c.l.b16 %v3360
        %v7554 = vunpack.c.h.b16 %v3360
        %v7555 = vunpack.c.l.b16 %v3361
        %v7556 = vunpack.c.h.b16 %v3361
        %v7557 = vunpack.c.l.b16 %v3362
        %v7558 = vunpack.c.h.b16 %v3362
        %v7559 = vunpack.c.l.b16 %v3363
        %v7560 = vunpack.c.h.b16 %v3363
        %v7561 = vunpack.c.l.b16 %v3364
        %v7562 = vunpack.c.h.b16 %v3364
        %v7563 = vunpack.c.l.b16 %v3365
        %v7564 = vunpack.c.h.b16 %v3365
        %v7565 = vunpack.c.l.b16 %v3366
        %v7566 = vunpack.c.h.b16 %v3366
        %v7567 = vunpack.c.l.b16 %v3367
        %v7568 = vunpack.c.h.b16 %v3367
        %v7569 = vunpack.c.l.b16 %v3368
        %v7570 = vunpack.c.h.b16 %v3368
        %v7571 = vunpack.c.l.b16 %v3369
        %v7572 = vunpack.c.h.b16 %v3369
        %v7573 = vunpack.c.l.b16 %v3370
        %v7574 = vunpack.c.h.b16 %v3370
        %v7575 = vunpack.c.l.b16 %v3371
        %v7576 = vunpack.c.h.b16 %v3371
        %v7577 = vunpack.c.l.b16 %v3372
        %v7578 = vunpack.c.h.b16 %v3372
        %v7579 = vunpack.c.l.b16 %v3373
        %v7580 = vunpack.c.h.b16 %v3373
        %v7581 = vunpack.c.l.b16 %v3374
        %v7582 = vunpack.c.h.b16 %v3374
        %v7583 = vunpack.c.l.b16 %v3375
        %v7584 = vunpack.c.h.b16 %v3375
        %v7585 = vunpack.c.l.b16 %v3376
        %v7586 = vunpack.c.h.b16 %v3376
        %v7587 = vunpack.c.l.b16 %v3377
        %v7588 = vunpack.c.h.b16 %v3377
        %v7589 = vunpack.c.l.b16 %v3378
        %v7590 = vunpack.c.h.b16 %v3378
        %v7591 = vunpack.c.l.b16 %v3379
        %v7592 = vunpack.c.h.b16 %v3379
        %v7593 = vunpack.c.l.b16 %v3380
        %v7594 = vunpack.c.h.b16 %v3380
        %v7595 = vunpack.c.l.b16 %v3381
        %v7596 = vunpack.c.h.b16 %v3381
        %v7597 = vunpack.c.l.b16 %v3382
        %v7598 = vunpack.c.h.b16 %v3382
        %v7599 = vunpack.c.l.b16 %v3383
        %v7600 = vunpack.c.h.b16 %v3383
        %v7601 = vunpack.c.l.b16 %v3384
        %v7602 = vunpack.c.h.b16 %v3384
        %v7603 = vunpack.c.l.b16 %v3385
        %v7604 = vunpack.c.h.b16 %v3385
        %v7605 = vunpack.c.l.b16 %v3386
        %v7606 = vunpack.c.h.b16 %v3386
        %v7607 = vunpack.c.l.b16 %v3387
        %v7608 = vunpack.c.h.b16 %v3387
        %v7609 = vunpack.c.l.b16 %v3388
        %v7610 = vunpack.c.h.b16 %v3388
        %v7611 = vunpack.c.l.b16 %v3389
        %v7612 = vunpack.c.h.b16 %v3389
        %v7613 = vunpack.c.l.b16 %v3390
        %v7614 = vunpack.c.h.b16 %v3390
        %v7615 = vunpack.c.l.b16 %v3391
        %v7616 = vunpack.c.h.b16 %v3391
        %v7617 = vunpack.c.l.b16 %v3392
        %v7618 = vunpack.c.h.b16 %v3392
        %v7619 = vunpack.c.l.b16 %v3393
        %v7620 = vunpack.c.h.b16 %v3393
        %v7621 = vunpack.c.l.b16 %v3394
        %v7622 = vunpack.c.h.b16 %v3394
        %v7623 = vunpack.c.l.b16 %v3395
        %v7624 = vunpack.c.h.b16 %v3395
        %v7625 = vunpack.c.l.b16 %v3396
        %v7626 = vunpack.c.h.b16 %v3396
        %v7627 = vunpack.c.l.b16 %v3397
        %v7628 = vunpack.c.h.b16 %v3397
        %v7629 = vunpack.c.l.b16 %v3398
        %v7630 = vunpack.c.h.b16 %v3398
        %v7631 = vunpack.c.l.b16 %v3399
        %v7632 = vunpack.c.h.b16 %v3399
        %v7633 = vunpack.c.l.b16 %v3400
        %v7634 = vunpack.c.h.b16 %v3400
        %v7635 = vunpack.c.l.b16 %v3401
        %v7636 = vunpack.c.h.b16 %v3401
        %v7637 = vunpack.c.l.b16 %v3402
        %v7638 = vunpack.c.h.b16 %v3402
        %v7639 = vunpack.c.l.b16 %v3403
        %v7640 = vunpack.c.h.b16 %v3403
        %v7641 = vunpack.c.l.b16 %v3404
        %v7642 = vunpack.c.h.b16 %v3404
        %v7643 = vunpack.c.l.b16 %v3405
        %v7644 = vunpack.c.h.b16 %v3405
        %v7645 = vunpack.c.l.b16 %v3406
        %v7646 = vunpack.c.h.b16 %v3406
        %v7647 = vunpack.c.l.b16 %v3407
        %v7648 = vunpack.c.h.b16 %v3407
        %v7649 = vunpack.c.l.b16 %v3408
        %v7650 = vunpack.c.h.b16 %v3408
        %v7651 = vunpack.c.l.b16 %v3409
        %v7652 = vunpack.c.h.b16 %v3409
        %v7653 = vunpack.c.l.b16 %v3410
        %v7654 = vunpack.c.h.b16 %v3410
        %v7655 = vunpack.c.l.b16 %v3411
        %v7656 = vunpack.c.h.b16 %v3411
        %v7657 = vunpack.c.l.b16 %v3412
        %v7658 = vunpack.c.h.b16 %v3412
        %v7659 = vunpack.c.l.b16 %v3413
        %v7660 = vunpack.c.h.b16 %v3413
        %v7661 = vunpack.c.l.b16 %v3414
        %v7662 = vunpack.c.h.b16 %v3414
        %v7663 = vunpack.c.l.b16 %v3415
        %v7664 = vunpack.c.h.b16 %v3415
        %v7665 = vunpack.c.l.b16 %v3416
        %v7666 = vunpack.c.h.b16 %v3416
        %v7667 = vunpack.c.l.b16 %v3417
        %v7668 = vunpack.c.h.b16 %v3417
        %v7669 = vunpack.c.l.b16 %v3418
        %v7670 = vunpack.c.h.b16 %v3418
        %v7671 = vunpack.c.l.b16 %v3419
        %v7672 = vunpack.c.h.b16 %v3419
        %v7673 = vunpack.c.l.b16 %v3420
        %v7674 = vunpack.c.h.b16 %v3420
        %v7675 = vunpack.c.l.b16 %v3421
        %v7676 = vunpack.c.h.b16 %v3421
        %v7677 = vunpack.c.l.b16 %v3422
        %v7678 = vunpack.c.h.b16 %v3422
        %v7679 = vunpack.c.l.b16 %v3423
        %v7680 = vunpack.c.h.b16 %v3423
        %v7681 = vunpack.c.l.b16 %v3424
        %v7682 = vunpack.c.h.b16 %v3424
        %v7683 = vunpack.c.l.b16 %v3425
        %v7684 = vunpack.c.h.b16 %v3425
        %v7685 = vunpack.c.l.b16 %v3426
        %v7686 = vunpack.c.h.b16 %v3426
        %v7687 = vunpack.c.l.b16 %v3427
        %v7688 = vunpack.c.h.b16 %v3427
        %v7689 = vunpack.c.l.b16 %v3428
        %v7690 = vunpack.c.h.b16 %v3428
        %v7691 = vunpack.c.l.b16 %v3429
        %v7692 = vunpack.c.h.b16 %v3429
        %v7693 = vunpack.c.l.b16 %v3430
        %v7694 = vunpack.c.h.b16 %v3430
        %v7695 = vunpack.c.l.b16 %v3431
        %v7696 = vunpack.c.h.b16 %v3431
        %v7697 = vunpack.c.l.b16 %v3432
        %v7698 = vunpack.c.h.b16 %v3432
        %v7699 = vunpack.c.l.b16 %v3433
        %v7700 = vunpack.c.h.b16 %v3433
        %v7701 = vunpack.c.l.b16 %v3434
        %v7702 = vunpack.c.h.b16 %v3434
        %v7703 = vunpack.c.l.b16 %v3435
        %v7704 = vunpack.c.h.b16 %v3435
        %v7705 = vunpack.c.l.b16 %v3436
        %v7706 = vunpack.c.h.b16 %v3436
        %v7707 = vunpack.c.l.b16 %v3437
        %v7708 = vunpack.c.h.b16 %v3437
        %v7709 = vunpack.c.l.b16 %v3438
        %v7710 = vunpack.c.h.b16 %v3438
        %v7711 = vunpack.c.l.b16 %v3439
        %v7712 = vunpack.c.h.b16 %v3439
        %v7713 = vunpack.c.l.b16 %v3440
        %v7714 = vunpack.c.h.b16 %v3440
        %v7715 = vunpack.c.l.b16 %v3441
        %v7716 = vunpack.c.h.b16 %v3441
        %v7717 = vunpack.c.l.b16 %v3442
        %v7718 = vunpack.c.h.b16 %v3442
        %v7719 = vunpack.c.l.b16 %v3443
        %v7720 = vunpack.c.h.b16 %v3443
        %v7721 = vunpack.c.l.b16 %v3444
        %v7722 = vunpack.c.h.b16 %v3444
        %v7723 = vunpack.c.l.b16 %v3445
        %v7724 = vunpack.c.h.b16 %v3445
        %v7725 = vunpack.c.l.b16 %v3446
        %v7726 = vunpack.c.h.b16 %v3446
        %v7727 = vunpack.c.l.b16 %v3447
        %v7728 = vunpack.c.h.b16 %v3447
        %v7729 = vunpack.c.l.b16 %v3448
        %v7730 = vunpack.c.h.b16 %v3448
        %v7731 = vunpack.c.l.b16 %v3449
        %v7732 = vunpack.c.h.b16 %v3449
        %v7733 = vunpack.c.l.b16 %v3450
        %v7734 = vunpack.c.h.b16 %v3450
        %v7735 = vunpack.c.l.b16 %v3451
        %v7736 = vunpack.c.h.b16 %v3451
        %v7737 = vunpack.c.l.b16 %v3452
        %v7738 = vunpack.c.h.b16 %v3452
        %v7739 = vunpack.c.l.b16 %v3453
        %v7740 = vunpack.c.h.b16 %v3453
        %v7741 = vunpack.c.l.b16 %v3454
        %v7742 = vunpack.c.h.b16 %v3454
        %v7743 = vunpack.c.l.b16 %v3455
        %v7744 = vunpack.c.h.b16 %v3455
        %v7745 = vunpack.c.l.b16 %v3456
        %v7746 = vunpack.c.h.b16 %v3456
        %v7747 = vunpack.c.l.b16 %v3457
        %v7748 = vunpack.c.h.b16 %v3457
        %v7749 = vunpack.c.l.b16 %v3458
        %v7750 = vunpack.c.h.b16 %v3458
        %v7751 = vunpack.c.l.b16 %v3459
        %v7752 = vunpack.c.h.b16 %v3459
        %v7753 = vunpack.c.l.b16 %v3460
        %v7754 = vunpack.c.h.b16 %v3460
        %v7755 = vunpack.c.l.b16 %v3461
        %v7756 = vunpack.c.h.b16 %v3461
        %v7757 = vunpack.c.l.b16 %v3462
        %v7758 = vunpack.c.h.b16 %v3462
        %v7759 = vunpack.c.l.b16 %v3463
        %v7760 = vunpack.c.h.b16 %v3463
        %v7761 = vunpack.c.l.b16 %v3464
        %v7762 = vunpack.c.h.b16 %v3464
        %v7763 = vunpack.c.l.b16 %v3465
        %v7764 = vunpack.c.h.b16 %v3465
        %v7765 = vunpack.c.l.b16 %v3466
        %v7766 = vunpack.c.h.b16 %v3466
        %v7767 = vunpack.c.l.b16 %v3467
        %v7768 = vunpack.c.h.b16 %v3467
        %v7769 = vunpack.c.l.b16 %v3468
        %v7770 = vunpack.c.h.b16 %v3468
        %v7771 = vunpack.c.l.b16 %v3469
        %v7772 = vunpack.c.h.b16 %v3469
        %v7773 = vunpack.c.l.b16 %v3470
        %v7774 = vunpack.c.h.b16 %v3470
        %v7775 = vunpack.c.l.b16 %v3471
        %v7776 = vunpack.c.h.b16 %v3471
        %v7777 = vunpack.c.l.b16 %v3472
        %v7778 = vunpack.c.h.b16 %v3472
        %v7779 = vunpack.c.l.b16 %v3473
        %v7780 = vunpack.c.h.b16 %v3473
        %v7781 = vunpack.c.l.b16 %v3474
        %v7782 = vunpack.c.h.b16 %v3474
        %v7783 = vunpack.c.l.b16 %v3475
        %v7784 = vunpack.c.h.b16 %v3475
        %v7785 = vunpack.c.l.b16 %v3476
        %v7786 = vunpack.c.h.b16 %v3476
        %v7787 = vunpack.c.l.b16 %v3477
        %v7788 = vunpack.c.h.b16 %v3477
        %v7789 = vunpack.c.l.b16 %v3478
        %v7790 = vunpack.c.h.b16 %v3478
        %v7791 = vunpack.c.l.b16 %v3479
        %v7792 = vunpack.c.h.b16 %v3479
        %v7793 = vunpack.c.l.b16 %v3480
        %v7794 = vunpack.c.h.b16 %v3480
        %v7795 = vunpack.c.l.b16 %v3481
        %v7796 = vunpack.c.h.b16 %v3481
        %v7797 = vunpack.c.l.b16 %v3482
        %v7798 = vunpack.c.h.b16 %v3482
        %v7799 = vunpack.c.l.b16 %v3483
        %v7800 = vunpack.c.h.b16 %v3483
        %v7801 = vunpack.c.l.b16 %v3484
        %v7802 = vunpack.c.h.b16 %v3484
        %v7803 = vunpack.c.l.b16 %v3485
        %v7804 = vunpack.c.h.b16 %v3485
        %v7805 = vunpack.c.l.b16 %v3486
        %v7806 = vunpack.c.h.b16 %v3486
        %v7807 = vunpack.c.l.b16 %v3487
        %v7808 = vunpack.c.h.b16 %v3487
        %v7809 = vunpack.c.l.b16 %v3488
        %v7810 = vunpack.c.h.b16 %v3488
        %v7811 = vunpack.c.l.b16 %v3489
        %v7812 = vunpack.c.h.b16 %v3489
        %v7813 = vunpack.c.l.b16 %v3490
        %v7814 = vunpack.c.h.b16 %v3490
        %v7815 = vunpack.c.l.b16 %v3491
        %v7816 = vunpack.c.h.b16 %v3491
        %v7817 = vunpack.c.l.b16 %v3492
        %v7818 = vunpack.c.h.b16 %v3492
        %v7819 = vunpack.c.l.b16 %v3493
        %v7820 = vunpack.c.h.b16 %v3493
        %v7821 = vunpack.c.l.b16 %v3494
        %v7822 = vunpack.c.h.b16 %v3494
        %v7823 = vunpack.c.l.b16 %v3495
        %v7824 = vunpack.c.h.b16 %v3495
        %v7825 = vunpack.c.l.b16 %v3496
        %v7826 = vunpack.c.h.b16 %v3496
        %v7827 = vunpack.c.l.b16 %v3497
        %v7828 = vunpack.c.h.b16 %v3497
        %v7829 = vunpack.c.l.b16 %v3498
        %v7830 = vunpack.c.h.b16 %v3498
        %v7831 = vunpack.c.l.b16 %v3499
        %v7832 = vunpack.c.h.b16 %v3499
        %v7833 = vunpack.c.l.b16 %v3500
        %v7834 = vunpack.c.h.b16 %v3500
        %v7835 = vunpack.c.l.b16 %v3501
        %v7836 = vunpack.c.h.b16 %v3501
        %v7837 = vunpack.c.l.b16 %v3502
        %v7838 = vunpack.c.h.b16 %v3502
        %v7839 = vunpack.c.l.b16 %v3503
        %v7840 = vunpack.c.h.b16 %v3503
        %v7841 = vunpack.c.l.b16 %v3504
        %v7842 = vunpack.c.h.b16 %v3504
        %v7843 = vunpack.c.l.b16 %v3505
        %v7844 = vunpack.c.h.b16 %v3505
        %v7845 = vunpack.c.l.b16 %v3506
        %v7846 = vunpack.c.h.b16 %v3506
        %v7847 = vunpack.c.l.b16 %v3507
        %v7848 = vunpack.c.h.b16 %v3507
        %v7849 = vunpack.c.l.b16 %v3508
        %v7850 = vunpack.c.h.b16 %v3508
        %v7851 = vunpack.c.l.b16 %v3509
        %v7852 = vunpack.c.h.b16 %v3509
        %v7853 = vunpack.c.l.b16 %v3510
        %v7854 = vunpack.c.h.b16 %v3510
        %v7855 = vunpack.c.l.b16 %v3511
        %v7856 = vunpack.c.h.b16 %v3511
        %v7857 = vunpack.c.l.b16 %v3512
        %v7858 = vunpack.c.h.b16 %v3512
        %v7859 = vunpack.c.l.b16 %v3513
        %v7860 = vunpack.c.h.b16 %v3513
        %v7861 = vunpack.c.l.b16 %v3514
        %v7862 = vunpack.c.h.b16 %v3514
        %v7863 = vunpack.c.l.b16 %v3515
        %v7864 = vunpack.c.h.b16 %v3515
        %v7865 = vunpack.c.l.b16 %v3516
        %v7866 = vunpack.c.h.b16 %v3516
        %v7867 = vunpack.c.l.b16 %v3517
        %v7868 = vunpack.c.h.b16 %v3517
        %v7869 = vunpack.c.l.b16 %v3518
        %v7870 = vunpack.c.h.b16 %v3518
        %v7871 = vunpack.c.l.b16 %v3519
        %v7872 = vunpack.c.h.b16 %v3519
        %v7873 = vunpack.c.l.b16 %v3520
        %v7874 = vunpack.c.h.b16 %v3520
        %v7875 = vunpack.c.l.b16 %v3521
        %v7876 = vunpack.c.h.b16 %v3521
        %v7877 = vunpack.c.l.b16 %v3522
        %v7878 = vunpack.c.h.b16 %v3522
        %v7879 = vunpack.c.l.b16 %v3523
        %v7880 = vunpack.c.h.b16 %v3523
        %v7881 = vunpack.c.l.b16 %v3524
        %v7882 = vunpack.c.h.b16 %v3524
        %v7883 = vunpack.c.l.b16 %v3525
        %v7884 = vunpack.c.h.b16 %v3525
        %v7885 = vunpack.c.l.b16 %v3526
        %v7886 = vunpack.c.h.b16 %v3526
        %v7887 = vunpack.c.l.b16 %v3527
        %v7888 = vunpack.c.h.b16 %v3527
        %v7889 = vunpack.c.l.b16 %v3528
        %v7890 = vunpack.c.h.b16 %v3528
        %v7891 = vunpack.c.l.b16 %v3529
        %v7892 = vunpack.c.h.b16 %v3529
        %v7893 = vunpack.c.l.b16 %v3530
        %v7894 = vunpack.c.h.b16 %v3530
        %v7895 = vunpack.c.l.b16 %v3531
        %v7896 = vunpack.c.h.b16 %v3531
        %v7897 = vunpack.c.l.b16 %v3532
        %v7898 = vunpack.c.h.b16 %v3532
        %v7899 = vunpack.c.l.b16 %v3533
        %v7900 = vunpack.c.h.b16 %v3533
        %v7901 = vunpack.c.l.b16 %v3534
        %v7902 = vunpack.c.h.b16 %v3534
        %v7903 = vunpack.c.l.b16 %v3535
        %v7904 = vunpack.c.h.b16 %v3535
        %v7905 = vunpack.c.l.b16 %v3536
        %v7906 = vunpack.c.h.b16 %v3536
        %v7907 = vunpack.c.l.b16 %v3537
        %v7908 = vunpack.c.h.b16 %v3537
        %v7909 = vunpack.c.l.b16 %v3538
        %v7910 = vunpack.c.h.b16 %v3538
        %v7911 = vunpack.c.l.b16 %v3539
        %v7912 = vunpack.c.h.b16 %v3539
        %v7913 = vunpack.c.l.b16 %v3540
        %v7914 = vunpack.c.h.b16 %v3540
        %v7915 = vunpack.c.l.b16 %v3541
        %v7916 = vunpack.c.h.b16 %v3541
        %v7917 = vunpack.c.l.b16 %v3542
        %v7918 = vunpack.c.h.b16 %v3542
        %v7919 = vunpack.c.l.b16 %v3543
        %v7920 = vunpack.c.h.b16 %v3543
        %v7921 = vunpack.c.l.b16 %v3544
        %v7922 = vunpack.c.h.b16 %v3544
        %v7923 = vunpack.c.l.b16 %v3545
        %v7924 = vunpack.c.h.b16 %v3545
        %v7925 = vunpack.c.l.b16 %v3546
        %v7926 = vunpack.c.h.b16 %v3546
        %v7927 = vunpack.c.l.b16 %v3547
        %v7928 = vunpack.c.h.b16 %v3547
        %v7929 = vunpack.c.l.b16 %v3548
        %v7930 = vunpack.c.h.b16 %v3548
        %v7931 = vunpack.c.l.b16 %v3549
        %v7932 = vunpack.c.h.b16 %v3549
        %v7933 = vunpack.c.l.b16 %v3550
        %v7934 = vunpack.c.h.b16 %v3550
        %v7935 = vunpack.c.l.b16 %v3551
        %v7936 = vunpack.c.h.b16 %v3551
        %v7937 = vunpack.c.l.b16 %v3552
        %v7938 = vunpack.c.h.b16 %v3552
        %v7939 = vunpack.c.l.b16 %v3553
        %v7940 = vunpack.c.h.b16 %v3553
        %v7941 = vunpack.c.l.b16 %v3554
        %v7942 = vunpack.c.h.b16 %v3554
        %v7943 = vunpack.c.l.b16 %v3555
        %v7944 = vunpack.c.h.b16 %v3555
        %v7945 = vunpack.c.l.b16 %v3556
        %v7946 = vunpack.c.h.b16 %v3556
        %v7947 = vunpack.c.l.b16 %v3557
        %v7948 = vunpack.c.h.b16 %v3557
        %v7949 = vunpack.c.l.b16 %v3558
        %v7950 = vunpack.c.h.b16 %v3558
        %v7951 = vunpack.c.l.b16 %v3559
        %v7952 = vunpack.c.h.b16 %v3559
        %v7953 = vunpack.c.l.b16 %v3560
        %v7954 = vunpack.c.h.b16 %v3560
        %v7955 = vunpack.c.l.b16 %v3561
        %v7956 = vunpack.c.h.b16 %v3561
        %v7957 = vunpack.c.l.b16 %v3562
        %v7958 = vunpack.c.h.b16 %v3562
        %v7959 = vunpack.c.l.b16 %v3563
        %v7960 = vunpack.c.h.b16 %v3563
        %v7961 = vunpack.c.l.b16 %v3564
        %v7962 = vunpack.c.h.b16 %v3564
        %v7963 = vunpack.c.l.b16 %v3565
        %v7964 = vunpack.c.h.b16 %v3565
        %v7965 = vunpack.c.l.b16 %v3566
        %v7966 = vunpack.c.h.b16 %v3566
        %v7967 = vunpack.c.l.b16 %v3567
        %v7968 = vunpack.c.h.b16 %v3567
        %v7969 = vunpack.c.l.b16 %v3568
        %v7970 = vunpack.c.h.b16 %v3568
        %v7971 = vunpack.c.l.b16 %v3569
        %v7972 = vunpack.c.h.b16 %v3569
        %v7973 = vunpack.c.l.b16 %v3570
        %v7974 = vunpack.c.h.b16 %v3570
        %v7975 = vunpack.c.l.b16 %v3571
        %v7976 = vunpack.c.h.b16 %v3571
        %v7977 = vunpack.c.l.b16 %v3572
        %v7978 = vunpack.c.h.b16 %v3572
        %v7979 = vunpack.c.l.b16 %v3573
        %v7980 = vunpack.c.h.b16 %v3573
        %v7981 = vunpack.c.l.b16 %v3574
        %v7982 = vunpack.c.h.b16 %v3574
        %v7983 = vunpack.c.l.b16 %v3575
        %v7984 = vunpack.c.h.b16 %v3575
        %v7985 = vunpack.c.l.b16 %v3576
        %v7986 = vunpack.c.h.b16 %v3576
        %v7987 = vunpack.c.l.b16 %v3577
        %v7988 = vunpack.c.h.b16 %v3577
        %v7989 = vunpack.c.l.b16 %v3578
        %v7990 = vunpack.c.h.b16 %v3578
        %v7991 = vunpack.c.l.b16 %v3579
        %v7992 = vunpack.c.h.b16 %v3579
        %v7993 = vunpack.c.l.b16 %v3580
        %v7994 = vunpack.c.h.b16 %v3580
        %v7995 = vunpack.c.l.b16 %v3581
        %v7996 = vunpack.c.h.b16 %v3581
        %v7997 = vunpack.c.l.b16 %v3582
        %v7998 = vunpack.c.h.b16 %v3582
        %v7999 = vunpack.c.l.b16 %v3583
        %v8000 = vunpack.c.h.b16 %v3583
        %v8001 = vunpack.c.l.b16 %v3584
        %v8002 = vunpack.c.h.b16 %v3584
        %v8003 = vunpack.c.l.b16 %v3585
        %v8004 = vunpack.c.h.b16 %v3585
        %v8005 = vunpack.c.l.b16 %v3586
        %v8006 = vunpack.c.h.b16 %v3586
        %v8007 = vunpack.c.l.b16 %v3587
        %v8008 = vunpack.c.h.b16 %v3587
        %v8009 = vunpack.c.l.b16 %v3588
        %v8010 = vunpack.c.h.b16 %v3588
        %v8011 = vunpack.c.l.b16 %v3589
        %v8012 = vunpack.c.h.b16 %v3589
        %v8013 = vunpack.c.l.b16 %v3590
        %v8014 = vunpack.c.h.b16 %v3590
        %v8015 = vunpack.c.l.b16 %v3591
        %v8016 = vunpack.c.h.b16 %v3591
        %v8017 = vunpack.c.l.b16 %v3592
        %v8018 = vunpack.c.h.b16 %v3592
        %v8019 = vunpack.c.l.b16 %v3593
        %v8020 = vunpack.c.h.b16 %v3593
        %v8021 = vunpack.c.l.b16 %v3594
        %v8022 = vunpack.c.h.b16 %v3594
        %v8023 = vunpack.c.l.b16 %v3595
        %v8024 = vunpack.c.h.b16 %v3595
        %v8025 = vunpack.c.l.b16 %v3596
        %v8026 = vunpack.c.h.b16 %v3596
        %v8027 = vunpack.c.l.b16 %v3597
        %v8028 = vunpack.c.h.b16 %v3597
        %v8029 = vunpack.c.l.b16 %v3598
        %v8030 = vunpack.c.h.b16 %v3598
        %v8031 = vunpack.c.l.b16 %v3599
        %v8032 = vunpack.c.h.b16 %v3599
        %v8033 = vunpack.c.l.b16 %v3600
        %v8034 = vunpack.c.h.b16 %v3600
        %v8035 = vunpack.c.l.b16 %v3601
        %v8036 = vunpack.c.h.b16 %v3601
        %v8037 = vunpack.c.l.b16 %v3602
        %v8038 = vunpack.c.h.b16 %v3602
        %v8039 = vunpack.c.l.b16 %v3603
        %v8040 = vunpack.c.h.b16 %v3603
        %v8041 = vunpack.c.l.b16 %v3604
        %v8042 = vunpack.c.h.b16 %v3604
        %v8043 = vunpack.c.l.b16 %v3605
        %v8044 = vunpack.c.h.b16 %v3605
        %v8045 = vunpack.c.l.b16 %v3606
        %v8046 = vunpack.c.h.b16 %v3606
        %v8047 = vunpack.c.l.b16 %v3607
        %v8048 = vunpack.c.h.b16 %v3607
        %v8049 = vunpack.c.l.b16 %v3608
        %v8050 = vunpack.c.h.b16 %v3608
        %v8051 = vunpack.c.l.b16 %v3609
        %v8052 = vunpack.c.h.b16 %v3609
        %v8053 = vunpack.c.l.b16 %v3610
        %v8054 = vunpack.c.h.b16 %v3610
        %v8055 = vunpack.c.l.b16 %v3611
        %v8056 = vunpack.c.h.b16 %v3611
        %v8057 = vunpack.c.l.b16 %v3612
        %v8058 = vunpack.c.h.b16 %v3612
        %v8059 = vunpack.c.l.b16 %v3613
        %v8060 = vunpack.c.h.b16 %v3613
        %v8061 = vunpack.c.l.b16 %v3614
        %v8062 = vunpack.c.h.b16 %v3614
        %v8063 = vunpack.c.l.b16 %v3615
        %v8064 = vunpack.c.h.b16 %v3615
        %v8065 = vunpack.c.l.b16 %v3616
        %v8066 = vunpack.c.h.b16 %v3616
        %v8067 = vunpack.c.l.b16 %v3617
        %v8068 = vunpack.c.h.b16 %v3617
        %v8069 = vunpack.c.l.b16 %v3618
        %v8070 = vunpack.c.h.b16 %v3618
        %v8071 = vunpack.c.l.b16 %v3619
        %v8072 = vunpack.c.h.b16 %v3619
        %v8073 = vunpack.c.l.b16 %v3620
        %v8074 = vunpack.c.h.b16 %v3620
        %v8075 = vunpack.c.l.b16 %v3621
        %v8076 = vunpack.c.h.b16 %v3621
        %v8077 = vunpack.c.l.b16 %v3622
        %v8078 = vunpack.c.h.b16 %v3622
        %v8079 = vunpack.c.l.b16 %v3623
        %v8080 = vunpack.c.h.b16 %v3623
        %v8081 = vunpack.c.l.b16 %v3624
        %v8082 = vunpack.c.h.b16 %v3624
        %v8083 = vunpack.c.l.b16 %v3625
        %v8084 = vunpack.c.h.b16 %v3625
        %v8085 = vunpack.c.l.b16 %v3626
        %v8086 = vunpack.c.h.b16 %v3626
        %v8087 = vunpack.c.l.b16 %v3627
        %v8088 = vunpack.c.h.b16 %v3627
        %v8089 = vunpack.c.l.b16 %v3628
        %v8090 = vunpack.c.h.b16 %v3628
        %v8091 = vunpack.c.l.b16 %v3629
        %v8092 = vunpack.c.h.b16 %v3629
        %v8093 = vunpack.c.l.b16 %v3630
        %v8094 = vunpack.c.h.b16 %v3630
        %v8095 = vunpack.c.l.b16 %v3631
        %v8096 = vunpack.c.h.b16 %v3631
        %v8097 = vunpack.c.l.b16 %v3632
        %v8098 = vunpack.c.h.b16 %v3632
        %v8099 = vunpack.c.l.b16 %v3633
        %v8100 = vunpack.c.h.b16 %v3633
        %v8101 = vunpack.c.l.b16 %v3634
        %v8102 = vunpack.c.h.b16 %v3634
        %v8103 = vunpack.c.l.b16 %v3635
        %v8104 = vunpack.c.h.b16 %v3635
        %v8105 = vunpack.c.l.b16 %v3636
        %v8106 = vunpack.c.h.b16 %v3636
        %v8107 = vunpack.c.l.b16 %v3637
        %v8108 = vunpack.c.h.b16 %v3637
        %v8109 = vunpack.c.l.b16 %v3638
        %v8110 = vunpack.c.h.b16 %v3638
        %v8111 = vunpack.c.l.b16 %v3639
        %v8112 = vunpack.c.h.b16 %v3639
        %v8113 = vunpack.c.l.b16 %v3640
        %v8114 = vunpack.c.h.b16 %v3640
        %v8115 = vunpack.c.l.b16 %v3641
        %v8116 = vunpack.c.h.b16 %v3641
        %v8117 = vunpack.c.l.b16 %v3642
        %v8118 = vunpack.c.h.b16 %v3642
        %v8119 = vunpack.c.l.b16 %v3643
        %v8120 = vunpack.c.h.b16 %v3643
        %v8121 = vunpack.c.l.b16 %v3644
        %v8122 = vunpack.c.h.b16 %v3644
        %v8123 = vunpack.c.l.b16 %v3645
        %v8124 = vunpack.c.h.b16 %v3645
        %v8125 = vunpack.c.l.b16 %v3646
        %v8126 = vunpack.c.h.b16 %v3646
        %v8127 = vunpack.c.l.b16 %v3647
        %v8128 = vunpack.c.h.b16 %v3647
        %v8129 = vunpack.c.l.b16 %v3648
        %v8130 = vunpack.c.h.b16 %v3648
        %v8131 = vunpack.c.l.b16 %v3649
        %v8132 = vunpack.c.h.b16 %v3649
        %v8133 = vunpack.c.l.b16 %v3650
        %v8134 = vunpack.c.h.b16 %v3650
        %v8135 = vunpack.c.l.b16 %v3651
        %v8136 = vunpack.c.h.b16 %v3651
        %v8137 = vunpack.c.l.b16 %v3652
        %v8138 = vunpack.c.h.b16 %v3652
        %v8139 = vunpack.c.l.b16 %v3653
        %v8140 = vunpack.c.h.b16 %v3653
        %v8141 = vunpack.c.l.b16 %v3654
        %v8142 = vunpack.c.h.b16 %v3654
        %v8143 = vunpack.c.l.b16 %v3655
        %v8144 = vunpack.c.h.b16 %v3655
        %v8145 = vunpack.c.l.b16 %v3656
        %v8146 = vunpack.c.h.b16 %v3656
        %v8147 = vunpack.c.l.b16 %v3657
        %v8148 = vunpack.c.h.b16 %v3657
        %v8149 = vunpack.c.l.b16 %v3658
        %v8150 = vunpack.c.h.b16 %v3658
        %v8151 = vunpack.c.l.b16 %v3659
        %v8152 = vunpack.c.h.b16 %v3659
        %v8153 = vunpack.c.l.b16 %v3660
        %v8154 = vunpack.c.h.b16 %v3660
        %v8155 = vunpack.c.l.b16 %v3661
        %v8156 = vunpack.c.h.b16 %v3661
        %v8157 = vunpack.c.l.b16 %v3662
        %v8158 = vunpack.c.h.b16 %v3662
        %v8159 = vunpack.c.l.b16 %v3663
        %v8160 = vunpack.c.h.b16 %v3663
        %v8161 = vunpack.c.l.b16 %v3664
        %v8162 = vunpack.c.h.b16 %v3664
        %v8163 = vunpack.c.l.b16 %v3665
        %v8164 = vunpack.c.h.b16 %v3665
        %v8165 = vunpack.c.l.b16 %v3666
        %v8166 = vunpack.c.h.b16 %v3666
        %v8167 = vunpack.c.l.b16 %v3667
        %v8168 = vunpack.c.h.b16 %v3667
        %v8169 = vunpack.c.l.b16 %v3668
        %v8170 = vunpack.c.h.b16 %v3668
        %v8171 = vunpack.c.l.b16 %v3669
        %v8172 = vunpack.c.h.b16 %v3669
        %v8173 = vunpack.c.l.b16 %v3670
        %v8174 = vunpack.c.h.b16 %v3670
        %v8175 = vunpack.c.l.b16 %v3671
        %v8176 = vunpack.c.h.b16 %v3671
        %v8177 = vunpack.c.l.b16 %v3672
        %v8178 = vunpack.c.h.b16 %v3672
        %v8179 = vunpack.c.l.b16 %v3673
        %v8180 = vunpack.c.h.b16 %v3673
        %v8181 = vunpack.c.l.b16 %v3674
        %v8182 = vunpack.c.h.b16 %v3674
        %v8183 = vunpack.c.l.b16 %v3675
        %v8184 = vunpack.c.h.b16 %v3675
        %v8185 = vunpack.c.l.b16 %v3676
        %v8186 = vunpack.c.h.b16 %v3676
        %v8187 = vunpack.c.l.b16 %v3677
        %v8188 = vunpack.c.h.b16 %v3677
        %v8189 = vunpack.c.l.b16 %v3678
        %v8190 = vunpack.c.h.b16 %v3678
        %v8191 = vunpack.c.l.b16 %v3679
        %v8192 = vunpack.c.h.b16 %v3679
        %v8193 = vunpack.c.l.b16 %v3680
        %v8194 = vunpack.c.h.b16 %v3680
        %v8195 = vunpack.c.l.b16 %v3681
        %v8196 = vunpack.c.h.b16 %v3681
        %v8197 = vunpack.c.l.b16 %v3682
        %v8198 = vunpack.c.h.b16 %v3682
        %v8199 = vunpack.c.l.b16 %v3683
        %v8200 = vunpack.c.h.b16 %v3683
        %v8201 = vunpack.c.l.b16 %v3684
        %v8202 = vunpack.c.h.b16 %v3684
        %v8203 = vunpack.c.l.b16 %v3685
        %v8204 = vunpack.c.h.b16 %v3685
        %v8205 = vunpack.c.l.b16 %v3686
        %v8206 = vunpack.c.h.b16 %v3686
        %v8207 = vunpack.c.l.b16 %v3687
        %v8208 = vunpack.c.h.b16 %v3687
        %v8209 = vunpack.c.l.b16 %v3688
        %v8210 = vunpack.c.h.b16 %v3688
        %v8211 = vunpack.c.l.b16 %v3689
        %v8212 = vunpack.c.h.b16 %v3689
        %v8213 = vunpack.c.l.b16 %v3690
        %v8214 = vunpack.c.h.b16 %v3690
        %v8215 = vunpack.c.l.b16 %v3691
        %v8216 = vunpack.c.h.b16 %v3691
        %v8217 = vunpack.c.l.b16 %v3692
        %v8218 = vunpack.c.h.b16 %v3692
        %v8219 = vunpack.c.l.b16 %v3693
        %v8220 = vunpack.c.h.b16 %v3693
        %v8221 = vunpack.c.l.b16 %v3694
        %v8222 = vunpack.c.h.b16 %v3694
        %v8223 = vunpack.c.l.b16 %v3695
        %v8224 = vunpack.c.h.b16 %v3695
        %v8225 = vunpack.c.l.b16 %v3696
        %v8226 = vunpack.c.h.b16 %v3696
        %v8227 = vunpack.c.l.b16 %v3697
        %v8228 = vunpack.c.h.b16 %v3697
        %v8229 = vunpack.c.l.b16 %v3698
        %v8230 = vunpack.c.h.b16 %v3698
        %v8231 = vunpack.c.l.b16 %v3699
        %v8232 = vunpack.c.h.b16 %v3699
        %v8233 = vunpack.c.l.b16 %v3700
        %v8234 = vunpack.c.h.b16 %v3700
        %v8235 = vunpack.c.l.b16 %v3701
        %v8236 = vunpack.c.h.b16 %v3701
        %v8237 = vunpack.c.l.b16 %v3702
        %v8238 = vunpack.c.h.b16 %v3702
        %v8239 = vunpack.c.l.b16 %v3703
        %v8240 = vunpack.c.h.b16 %v3703
        %v8241 = vunpack.c.l.b16 %v3704
        %v8242 = vunpack.c.h.b16 %v3704
        %v8243 = vunpack.c.l.b16 %v3705
        %v8244 = vunpack.c.h.b16 %v3705
        %v8245 = vunpack.c.l.b16 %v3706
        %v8246 = vunpack.c.h.b16 %v3706
        %v8247 = vunpack.c.l.b16 %v3707
        %v8248 = vunpack.c.h.b16 %v3707
        %v8249 = vunpack.c.l.b16 %v3708
        %v8250 = vunpack.c.h.b16 %v3708
        %v8251 = vunpack.c.l.b16 %v3709
        %v8252 = vunpack.c.h.b16 %v3709
        %v8253 = vunpack.c.l.b16 %v3710
        %v8254 = vunpack.c.h.b16 %v3710
        %v8255 = vunpack.c.l.b16 %v3711
        %v8256 = vunpack.c.h.b16 %v3711
        %v8257 = vunpack.c.l.b16 %v3712
        %v8258 = vunpack.c.h.b16 %v3712
        %v8259 = vunpack.c.l.b16 %v3713
        %v8260 = vunpack.c.h.b16 %v3713
        %v8261 = vunpack.c.l.b16 %v3714
        %v8262 = vunpack.c.h.b16 %v3714
        %v8263 = vunpack.c.l.b16 %v3715
        %v8264 = vunpack.c.h.b16 %v3715
        %v8265 = vunpack.c.l.b16 %v3716
        %v8266 = vunpack.c.h.b16 %v3716
        %v8267 = vunpack.c.l.b16 %v3717
        %v8268 = vunpack.c.h.b16 %v3717
        %v8269 = vunpack.c.l.b16 %v3718
        %v8270 = vunpack.c.h.b16 %v3718
        %v8271 = vunpack.c.l.b16 %v3719
        %v8272 = vunpack.c.h.b16 %v3719
        %v8273 = vunpack.c.l.b16 %v3720
        %v8274 = vunpack.c.h.b16 %v3720
        %v8275 = vunpack.c.l.b16 %v3721
        %v8276 = vunpack.c.h.b16 %v3721
        %v8277 = vunpack.c.l.b16 %v3722
        %v8278 = vunpack.c.h.b16 %v3722
        %v8279 = vunpack.c.l.b16 %v3723
        %v8280 = vunpack.c.h.b16 %v3723
        %v8281 = vunpack.c.l.b16 %v3724
        %v8282 = vunpack.c.h.b16 %v3724
        %v8283 = vunpack.c.l.b16 %v3725
        %v8284 = vunpack.c.h.b16 %v3725
        %v8285 = vunpack.c.l.b16 %v3726
        %v8286 = vunpack.c.h.b16 %v3726
        %v8287 = vunpack.c.l.b16 %v3727
        %v8288 = vunpack.c.h.b16 %v3727
        %v8289 = vunpack.c.l.b16 %v3728
        %v8290 = vunpack.c.h.b16 %v3728
        %v8291 = vunpack.c.l.b16 %v3729
        %v8292 = vunpack.c.h.b16 %v3729
        %v8293 = vunpack.c.l.b16 %v3730
        %v8294 = vunpack.c.h.b16 %v3730
        %v8295 = vunpack.c.l.b16 %v3731
        %v8296 = vunpack.c.h.b16 %v3731
        %v8297 = vunpack.c.l.b16 %v3732
        %v8298 = vunpack.c.h.b16 %v3732
        %v8299 = vunpack.c.l.b16 %v3733
        %v8300 = vunpack.c.h.b16 %v3733
        %v8301 = vunpack.c.l.b16 %v3734
        %v8302 = vunpack.c.h.b16 %v3734
        %v8303 = vunpack.c.l.b16 %v3735
        %v8304 = vunpack.c.h.b16 %v3735
        %v8305 = vunpack.c.l.b16 %v3736
        %v8306 = vunpack.c.h.b16 %v3736
        %v8307 = vunpack.c.l.b16 %v3737
        %v8308 = vunpack.c.h.b16 %v3737
        %v8309 = vunpack.c.l.b16 %v3738
        %v8310 = vunpack.c.h.b16 %v3738
        %v8311 = vunpack.c.l.b16 %v3739
        %v8312 = vunpack.c.h.b16 %v3739
        %v8313 = vunpack.c.l.b16 %v3740
        %v8314 = vunpack.c.h.b16 %v3740
        %v8315 = vunpack.c.l.b16 %v3741
        %v8316 = vunpack.c.h.b16 %v3741
        %v8317 = vunpack.c.l.b16 %v3742
        %v8318 = vunpack.c.h.b16 %v3742
        %v8319 = vunpack.c.l.b16 %v3743
        %v8320 = vunpack.c.h.b16 %v3743
        %v8321 = vunpack.c.l.b16 %v3744
        %v8322 = vunpack.c.h.b16 %v3744
        %v8323 = vunpack.c.l.b16 %v3745
        %v8324 = vunpack.c.h.b16 %v3745
        %v8325 = vunpack.c.l.b16 %v3746
        %v8326 = vunpack.c.h.b16 %v3746
        %v8327 = vunpack.c.l.b16 %v3747
        %v8328 = vunpack.c.h.b16 %v3747
        %v8329 = vunpack.c.l.b16 %v3748
        %v8330 = vunpack.c.h.b16 %v3748
        %v8331 = vunpack.c.l.b16 %v3749
        %v8332 = vunpack.c.h.b16 %v3749
        %v8333 = vunpack.c.l.b16 %v3750
        %v8334 = vunpack.c.h.b16 %v3750
        %v8335 = vunpack.c.l.b16 %v3751
        %v8336 = vunpack.c.h.b16 %v3751
        %v8337 = vunpack.c.l.b16 %v3752
        %v8338 = vunpack.c.h.b16 %v3752
        %v8339 = vunpack.c.l.b16 %v3753
        %v8340 = vunpack.c.h.b16 %v3753
        %v8341 = vunpack.c.l.b16 %v3754
        %v8342 = vunpack.c.h.b16 %v3754
        %v8343 = vunpack.c.l.b16 %v3755
        %v8344 = vunpack.c.h.b16 %v3755
        %v8345 = vunpack.c.l.b16 %v3756
        %v8346 = vunpack.c.h.b16 %v3756
        %v8347 = vunpack.c.l.b16 %v3757
        %v8348 = vunpack.c.h.b16 %v3757
        %v8349 = vunpack.c.l.b16 %v3758
        %v8350 = vunpack.c.h.b16 %v3758
        %v8351 = vunpack.c.l.b16 %v3759
        %v8352 = vunpack.c.h.b16 %v3759
        %v8353 = vunpack.c.l.b16 %v3760
        %v8354 = vunpack.c.h.b16 %v3760
        %v8355 = vunpack.c.l.b16 %v3761
        %v8356 = vunpack.c.h.b16 %v3761
        %v8357 = vunpack.c.l.b16 %v3762
        %v8358 = vunpack.c.h.b16 %v3762
        %v8359 = vunpack.c.l.b16 %v3763
        %v8360 = vunpack.c.h.b16 %v3763
        %v8361 = vunpack.c.l.b16 %v3764
        %v8362 = vunpack.c.h.b16 %v3764
        %v8363 = vunpack.c.l.b16 %v3765
        %v8364 = vunpack.c.h.b16 %v3765
        %v8365 = vunpack.c.l.b16 %v3766
        %v8366 = vunpack.c.h.b16 %v3766
        %v8367 = vunpack.c.l.b16 %v3767
        %v8368 = vunpack.c.h.b16 %v3767
        %v8369 = vunpack.c.l.b16 %v3768
        %v8370 = vunpack.c.h.b16 %v3768
        %v8371 = vunpack.c.l.b16 %v3769
        %v8372 = vunpack.c.h.b16 %v3769
        %v8373 = vunpack.c.l.b16 %v3770
        %v8374 = vunpack.c.h.b16 %v3770
        %v8375 = vunpack.c.l.b16 %v3771
        %v8376 = vunpack.c.h.b16 %v3771
        %v8377 = vunpack.c.l.b16 %v3772
        %v8378 = vunpack.c.h.b16 %v3772
        %v8379 = vunpack.c.l.b16 %v3773
        %v8380 = vunpack.c.h.b16 %v3773
        %v8381 = vunpack.c.l.b16 %v3774
        %v8382 = vunpack.c.h.b16 %v3774
        %v8383 = vunpack.c.l.b16 %v3775
        %v8384 = vunpack.c.h.b16 %v3775
        %v8385 = vunpack.c.l.b16 %v3776
        %v8386 = vunpack.c.h.b16 %v3776
        %v8387 = vunpack.c.l.b16 %v3777
        %v8388 = vunpack.c.h.b16 %v3777
        %v8389 = vunpack.c.l.b16 %v3778
        %v8390 = vunpack.c.h.b16 %v3778
        %v8391 = vunpack.c.l.b16 %v3779
        %v8392 = vunpack.c.h.b16 %v3779
        %v8393 = vunpack.c.l.b16 %v3780
        %v8394 = vunpack.c.h.b16 %v3780
        %v8395 = vunpack.c.l.b16 %v3781
        %v8396 = vunpack.c.h.b16 %v3781
        %v8397 = vunpack.c.l.b16 %v3782
        %v8398 = vunpack.c.h.b16 %v3782
        %v8399 = vunpack.c.l.b16 %v3783
        %v8400 = vunpack.c.h.b16 %v3783
        %v8401 = vunpack.c.l.b16 %v3784
        %v8402 = vunpack.c.h.b16 %v3784
        %v8403 = vunpack.c.l.b16 %v3785
        %v8404 = vunpack.c.h.b16 %v3785
        %v8405 = vunpack.c.l.b16 %v3786
        %v8406 = vunpack.c.h.b16 %v3786
        %v8407 = vunpack.c.l.b16 %v3787
        %v8408 = vunpack.c.h.b16 %v3787
        %v8409 = vunpack.c.l.b16 %v3788
        %v8410 = vunpack.c.h.b16 %v3788
        %v8411 = vunpack.c.l.b16 %v3789
        %v8412 = vunpack.c.h.b16 %v3789
        %v8413 = vunpack.c.l.b16 %v3790
        %v8414 = vunpack.c.h.b16 %v3790
        %v8415 = vunpack.c.l.b16 %v3791
        %v8416 = vunpack.c.h.b16 %v3791
        %v8417 = vunpack.c.l.b16 %v3792
        %v8418 = vunpack.c.h.b16 %v3792
        %v8419 = vunpack.c.l.b16 %v3793
        %v8420 = vunpack.c.h.b16 %v3793
        %v8421 = vunpack.c.l.b16 %v3794
        %v8422 = vunpack.c.h.b16 %v3794
        %v8423 = vunpack.c.l.b16 %v3795
        %v8424 = vunpack.c.h.b16 %v3795
        %v8425 = vunpack.c.l.b16 %v3796
        %v8426 = vunpack.c.h.b16 %v3796
        %v8427 = vunpack.c.l.b16 %v3797
        %v8428 = vunpack.c.h.b16 %v3797
        %v8429 = vunpack.c.l.b16 %v3798
        %v8430 = vunpack.c.h.b16 %v3798
        %v8431 = vunpack.c.l.b16 %v3799
        %v8432 = vunpack.c.h.b16 %v3799
        %v8433 = vunpack.c.l.b16 %v3800
        %v8434 = vunpack.c.h.b16 %v3800
        %v8435 = vunpack.c.l.b16 %v3801
        %v8436 = vunpack.c.h.b16 %v3801
        %v8437 = vunpack.c.l.b16 %v3802
        %v8438 = vunpack.c.h.b16 %v3802
        %v8439 = vunpack.c.l.b16 %v3803
        %v8440 = vunpack.c.h.b16 %v3803
        %v8441 = vunpack.c.l.b16 %v3804
        %v8442 = vunpack.c.h.b16 %v3804
        %v8443 = vunpack.c.l.b16 %v3805
        %v8444 = vunpack.c.h.b16 %v3805
        %v8445 = vunpack.c.l.b16 %v3806
        %v8446 = vunpack.c.h.b16 %v3806
        %v8447 = vunpack.c.l.b16 %v3807
        %v8448 = vunpack.c.h.b16 %v3807
        %v8449 = vunpack.c.l.b16 %v3808
        %v8450 = vunpack.c.h.b16 %v3808
        %v8451 = vunpack.c.l.b16 %v3809
        %v8452 = vunpack.c.h.b16 %v3809
        %v8453 = vunpack.c.l.b16 %v3810
        %v8454 = vunpack.c.h.b16 %v3810
        %v8455 = vunpack.c.l.b16 %v3811
        %v8456 = vunpack.c.h.b16 %v3811
        %v8457 = vunpack.c.l.b16 %v3812
        %v8458 = vunpack.c.h.b16 %v3812
        %v8459 = vunpack.c.l.b16 %v3813
        %v8460 = vunpack.c.h.b16 %v3813
        %v8461 = vunpack.c.l.b16 %v3814
        %v8462 = vunpack.c.h.b16 %v3814
        %v8463 = vunpack.c.l.b16 %v3815
        %v8464 = vunpack.c.h.b16 %v3815
        %v8465 = vunpack.c.l.b16 %v3816
        %v8466 = vunpack.c.h.b16 %v3816
        %v8467 = vunpack.c.l.b16 %v3817
        %v8468 = vunpack.c.h.b16 %v3817
        %v8469 = vunpack.c.l.b16 %v3818
        %v8470 = vunpack.c.h.b16 %v3818
        %v8471 = vunpack.c.l.b16 %v3819
        %v8472 = vunpack.c.h.b16 %v3819
        %v8473 = vunpack.c.l.b16 %v3820
        %v8474 = vunpack.c.h.b16 %v3820
        %v8475 = vunpack.c.l.b16 %v3821
        %v8476 = vunpack.c.h.b16 %v3821
        %v8477 = vunpack.c.l.b16 %v3822
        %v8478 = vunpack.c.h.b16 %v3822
        %v8479 = vunpack.c.l.b16 %v3823
        %v8480 = vunpack.c.h.b16 %v3823
        %v8481 = vunpack.c.l.b16 %v3824
        %v8482 = vunpack.c.h.b16 %v3824
        %v8483 = vunpack.c.l.b16 %v3825
        %v8484 = vunpack.c.h.b16 %v3825
        %v8485 = vunpack.c.l.b16 %v3826
        %v8486 = vunpack.c.h.b16 %v3826
        %v8487 = vunpack.c.l.b16 %v3827
        %v8488 = vunpack.c.h.b16 %v3827
        %v8489 = vunpack.c.l.b16 %v3828
        %v8490 = vunpack.c.h.b16 %v3828
        %v8491 = vunpack.c.l.b16 %v3829
        %v8492 = vunpack.c.h.b16 %v3829
        %v8493 = vunpack.c.l.b16 %v3830
        %v8494 = vunpack.c.h.b16 %v3830
        %v8495 = vunpack.c.l.b16 %v3831
        %v8496 = vunpack.c.h.b16 %v3831
        %v8497 = vunpack.c.l.b16 %v3832
        %v8498 = vunpack.c.h.b16 %v3832
        %v8499 = vunpack.c.l.b16 %v3833
        %v8500 = vunpack.c.h.b16 %v3833
        %v8501 = vunpack.c.l.b16 %v3834
        %v8502 = vunpack.c.h.b16 %v3834
        %v8503 = vunpack.c.l.b16 %v3835
        %v8504 = vunpack.c.h.b16 %v3835
        %v8505 = vunpack.c.l.b16 %v3836
        %v8506 = vunpack.c.h.b16 %v3836
        %v8507 = vunpack.c.l.b16 %v3837
        %v8508 = vunpack.c.h.b16 %v3837
        %v8509 = vunpack.c.l.b16 %v3838
        %v8510 = vunpack.c.h.b16 %v3838
        %v8511 = vunpack.c.l.b16 %v3839
        %v8512 = vunpack.c.h.b16 %v3839
        %v8513 = vunpack.c.l.b16 %v3840
        %v8514 = vunpack.c.h.b16 %v3840
        %v8515 = vunpack.c.l.b16 %v3841
        %v8516 = vunpack.c.h.b16 %v3841
        %v8517 = vunpack.c.l.b16 %v3842
        %v8518 = vunpack.c.h.b16 %v3842
        %v8519 = vunpack.c.l.b16 %v3843
        %v8520 = vunpack.c.h.b16 %v3843
        %v8521 = vunpack.c.l.b16 %v3844
        %v8522 = vunpack.c.h.b16 %v3844
        %v8523 = vunpack.c.l.b16 %v3845
        %v8524 = vunpack.c.h.b16 %v3845
        %v8525 = vunpack.c.l.b16 %v3846
        %v8526 = vunpack.c.h.b16 %v3846
        %v8527 = vunpack.c.l.b16 %v3847
        %v8528 = vunpack.c.h.b16 %v3847
        %v8529 = vunpack.c.l.b16 %v3848
        %v8530 = vunpack.c.h.b16 %v3848
        %v8531 = vunpack.c.l.b16 %v3849
        %v8532 = vunpack.c.h.b16 %v3849
        %v8533 = vunpack.c.l.b16 %v3850
        %v8534 = vunpack.c.h.b16 %v3850
        %v8535 = vunpack.c.l.b16 %v3851
        %v8536 = vunpack.c.h.b16 %v3851
        %v8537 = vunpack.c.l.b16 %v3852
        %v8538 = vunpack.c.h.b16 %v3852
        %v8539 = vunpack.c.l.b16 %v3853
        %v8540 = vunpack.c.h.b16 %v3853
        %v8541 = vunpack.c.l.b16 %v3854
        %v8542 = vunpack.c.h.b16 %v3854
        %v8543 = vunpack.c.l.b16 %v3855
        %v8544 = vunpack.c.h.b16 %v3855
        %v8545 = vunpack.c.l.b16 %v3856
        %v8546 = vunpack.c.h.b16 %v3856
        %v8547 = vunpack.c.l.b16 %v3857
        %v8548 = vunpack.c.h.b16 %v3857
        %v8549 = vunpack.c.l.b16 %v3858
        %v8550 = vunpack.c.h.b16 %v3858
        %v8551 = vunpack.c.l.b16 %v3859
        %v8552 = vunpack.c.h.b16 %v3859
        %v8553 = vunpack.c.l.b16 %v3860
        %v8554 = vunpack.c.h.b16 %v3860
        %v8555 = vunpack.c.l.b16 %v3861
        %v8556 = vunpack.c.h.b16 %v3861
        %v8557 = vunpack.c.l.b16 %v3862
        %v8558 = vunpack.c.h.b16 %v3862
        %v8559 = vunpack.c.l.b16 %v3863
        %v8560 = vunpack.c.h.b16 %v3863
        %v8561 = vunpack.c.l.b16 %v3864
        %v8562 = vunpack.c.h.b16 %v3864
        %v8563 = vunpack.c.l.b16 %v3865
        %v8564 = vunpack.c.h.b16 %v3865
        %v8565 = vunpack.c.l.b16 %v3866
        %v8566 = vunpack.c.h.b16 %v3866
        %v8567 = vunpack.c.l.b16 %v3867
        %v8568 = vunpack.c.h.b16 %v3867
        %v8569 = vunpack.c.l.b16 %v3868
        %v8570 = vunpack.c.h.b16 %v3868
        %v8571 = vunpack.c.l.b16 %v3869
        %v8572 = vunpack.c.h.b16 %v3869
        %v8573 = vunpack.c.l.b16 %v3870
        %v8574 = vunpack.c.h.b16 %v3870
        %v8575 = vunpack.c.l.b16 %v3871
        %v8576 = vunpack.c.h.b16 %v3871
        %v8577 = vunpack.c.l.b16 %v3872
        %v8578 = vunpack.c.h.b16 %v3872
        %v8579 = vunpack.c.l.b16 %v3873
        %v8580 = vunpack.c.h.b16 %v3873
        %v8581 = vunpack.c.l.b16 %v3874
        %v8582 = vunpack.c.h.b16 %v3874
        %v8583 = vunpack.c.l.b16 %v3875
        %v8584 = vunpack.c.h.b16 %v3875
        %v8585 = vunpack.c.l.b16 %v3876
        %v8586 = vunpack.c.h.b16 %v3876
        %v8587 = vunpack.c.l.b16 %v3877
        %v8588 = vunpack.c.h.b16 %v3877
        %v8589 = vunpack.c.l.b16 %v3878
        %v8590 = vunpack.c.h.b16 %v3878
        %v8591 = vunpack.c.l.b16 %v3879
        %v8592 = vunpack.c.h.b16 %v3879
        %v8593 = vunpack.c.l.b16 %v3880
        %v8594 = vunpack.c.h.b16 %v3880
        %v8595 = vunpack.c.l.b16 %v3881
        %v8596 = vunpack.c.h.b16 %v3881
        %v8597 = vunpack.c.l.b16 %v3882
        %v8598 = vunpack.c.h.b16 %v3882
        %v8599 = vunpack.c.l.b16 %v3883
        %v8600 = vunpack.c.h.b16 %v3883
        %v8601 = vunpack.c.l.b16 %v3884
        %v8602 = vunpack.c.h.b16 %v3884
        %v8603 = vunpack.c.l.b16 %v3885
        %v8604 = vunpack.c.h.b16 %v3885
        %v8605 = vunpack.c.l.b16 %v3886
        %v8606 = vunpack.c.h.b16 %v3886
        %v8607 = vunpack.c.l.b16 %v3887
        %v8608 = vunpack.c.h.b16 %v3887
        %v8609 = vunpack.c.l.b16 %v3888
        %v8610 = vunpack.c.h.b16 %v3888
        %v8611 = vunpack.c.l.b16 %v3889
        %v8612 = vunpack.c.h.b16 %v3889
        %v8613 = vunpack.c.l.b16 %v3890
        %v8614 = vunpack.c.h.b16 %v3890
        %v8615 = vunpack.c.l.b16 %v3891
        %v8616 = vunpack.c.h.b16 %v3891
        %v8617 = vunpack.c.l.b16 %v3892
        %v8618 = vunpack.c.h.b16 %v3892
        %v8619 = vunpack.c.l.b16 %v3893
        %v8620 = vunpack.c.h.b16 %v3893
        %v8621 = vunpack.c.l.b16 %v3894
        %v8622 = vunpack.c.h.b16 %v3894
        %v8623 = vunpack.c.l.b16 %v3895
        %v8624 = vunpack.c.h.b16 %v3895
        %v8625 = vunpack.c.l.b16 %v3896
        %v8626 = vunpack.c.h.b16 %v3896
        %v8627 = vunpack.c.l.b16 %v3897
        %v8628 = vunpack.c.h.b16 %v3897
        %v8629 = vunpack.c.l.b16 %v3898
        %v8630 = vunpack.c.h.b16 %v3898
        %v8631 = vunpack.c.l.b16 %v3899
        %v8632 = vunpack.c.h.b16 %v3899
        %v8633 = vunpack.c.l.b16 %v3900
        %v8634 = vunpack.c.h.b16 %v3900
        %v8635 = vunpack.c.l.b16 %v3901
        %v8636 = vunpack.c.h.b16 %v3901
        %v8637 = vunpack.c.l.b16 %v3902
        %v8638 = vunpack.c.h.b16 %v3902
        %v8639 = vunpack.c.l.b16 %v3903
        %v8640 = vunpack.c.h.b16 %v3903
        %v8641 = vunpack.c.l.b16 %v3904
        %v8642 = vunpack.c.h.b16 %v3904
        %v8643 = vunpack.c.l.b16 %v3905
        %v8644 = vunpack.c.h.b16 %v3905
        %v8645 = vunpack.c.l.b16 %v3906
        %v8646 = vunpack.c.h.b16 %v3906
        %v8647 = vunpack.c.l.b16 %v3907
        %v8648 = vunpack.c.h.b16 %v3907
        %v8649 = vunpack.c.l.b16 %v3908
        %v8650 = vunpack.c.h.b16 %v3908
        %v8651 = vunpack.c.l.b16 %v3909
        %v8652 = vunpack.c.h.b16 %v3909
        %v8653 = vunpack.c.l.b16 %v3910
        %v8654 = vunpack.c.h.b16 %v3910
        %v8655 = vunpack.c.l.b16 %v3911
        %v8656 = vunpack.c.h.b16 %v3911
        %v8657 = vunpack.c.l.b16 %v3912
        %v8658 = vunpack.c.h.b16 %v3912
        %v8659 = vunpack.c.l.b16 %v3913
        %v8660 = vunpack.c.h.b16 %v3913
        %v8661 = vunpack.c.l.b16 %v3914
        %v8662 = vunpack.c.h.b16 %v3914
        %v8663 = vunpack.c.l.b16 %v3915
        %v8664 = vunpack.c.h.b16 %v3915
        %v8665 = vunpack.c.l.b16 %v3916
        %v8666 = vunpack.c.h.b16 %v3916
        %v8667 = vunpack.c.l.b16 %v3917
        %v8668 = vunpack.c.h.b16 %v3917
        %v8669 = vunpack.c.l.b16 %v3918
        %v8670 = vunpack.c.h.b16 %v3918
        %v8671 = vunpack.c.l.b16 %v3919
        %v8672 = vunpack.c.h.b16 %v3919
        %v8673 = vunpack.c.l.b16 %v3920
        %v8674 = vunpack.c.h.b16 %v3920
        %v8675 = vunpack.c.l.b16 %v3921
        %v8676 = vunpack.c.h.b16 %v3921
        %v8677 = vunpack.c.l.b16 %v3922
        %v8678 = vunpack.c.h.b16 %v3922
        %v8679 = vunpack.c.l.b16 %v3923
        %v8680 = vunpack.c.h.b16 %v3923
        %v8681 = vunpack.c.l.b16 %v3924
        %v8682 = vunpack.c.h.b16 %v3924
        %v8683 = vunpack.c.l.b16 %v3925
        %v8684 = vunpack.c.h.b16 %v3925
        %v8685 = vunpack.c.l.b16 %v3926
        %v8686 = vunpack.c.h.b16 %v3926
        %v8687 = vunpack.c.l.b16 %v3927
        %v8688 = vunpack.c.h.b16 %v3927
        %v8689 = vunpack.c.l.b16 %v3928
        %v8690 = vunpack.c.h.b16 %v3928
        %v8691 = vunpack.c.l.b16 %v3929
        %v8692 = vunpack.c.h.b16 %v3929
        %v8693 = vunpack.c.l.b16 %v3930
        %v8694 = vunpack.c.h.b16 %v3930
        %v8695 = vunpack.c.l.b16 %v3931
        %v8696 = vunpack.c.h.b16 %v3931
        %v8697 = vunpack.c.l.b16 %v3932
        %v8698 = vunpack.c.h.b16 %v3932
        %v8699 = vunpack.c.l.b16 %v3933
        %v8700 = vunpack.c.h.b16 %v3933
        %v8701 = vunpack.c.l.b16 %v3934
        %v8702 = vunpack.c.h.b16 %v3934
        %v8703 = vunpack.c.l.b16 %v3935
        %v8704 = vunpack.c.h.b16 %v3935
        %v8705 = vunpack.c.l.b16 %v3936
        %v8706 = vunpack.c.h.b16 %v3936
        %v8707 = vunpack.c.l.b16 %v3937
        %v8708 = vunpack.c.h.b16 %v3937
        %v8709 = vunpack.c.l.b16 %v3938
        %v8710 = vunpack.c.h.b16 %v3938
        %v8711 = vunpack.c.l.b16 %v3939
        %v8712 = vunpack.c.h.b16 %v3939
        %v8713 = vunpack.c.l.b16 %v3940
        %v8714 = vunpack.c.h.b16 %v3940
        %v8715 = vunpack.c.l.b16 %v3941
        %v8716 = vunpack.c.h.b16 %v3941
        %v8717 = vunpack.c.l.b16 %v3942
        %v8718 = vunpack.c.h.b16 %v3942
        %v8719 = vunpack.c.l.b16 %v3943
        %v8720 = vunpack.c.h.b16 %v3943
        %v8721 = vunpack.c.l.b16 %v3944
        %v8722 = vunpack.c.h.b16 %v3944
        %v8723 = vunpack.c.l.b16 %v3945
        %v8724 = vunpack.c.h.b16 %v3945
        %v8725 = vunpack.c.l.b16 %v3946
        %v8726 = vunpack.c.h.b16 %v3946
        %v8727 = vunpack.c.l.b16 %v3947
        %v8728 = vunpack.c.h.b16 %v3947
        %v8729 = vunpack.c.l.b16 %v3948
        %v8730 = vunpack.c.h.b16 %v3948
        %v8731 = vpack.c.b16 %v5667, %v5659
        %v8732 = vpack.c.b16 %v5668, %v5660
        %v8733 = vpack.c.b16 %v5669, %v5661
        %v8734 = vpack.c.b16 %v5670, %v5662
        %v8735 = vpack.c.b16 %v5671, %v5663
        %v8736 = vpack.c.b16 %v5672, %v5664
        %v8737 = vpack.c.b16 %v5673, %v5665
        %v8738 = vpack.c.b16 %v5674, %v5666
        %v8739 = vpack.c.b16 %v5683, %v5675
        %v8740 = vpack.c.b16 %v5684, %v5676
        %v8741 = vpack.c.b16 %v5685, %v5677
        %v8742 = vpack.c.b16 %v5686, %v5678
        %v8743 = vpack.c.b16 %v5687, %v5679
        %v8744 = vpack.c.b16 %v5688, %v5680
        %v8745 = vpack.c.b16 %v5689, %v5681
        %v8746 = vpack.c.b16 %v5690, %v5682
        %v8747 = vpack.c.b16 %v5699, %v5691
        %v8748 = vpack.c.b16 %v5700, %v5692
        %v8749 = vpack.c.b16 %v5701, %v5693
        %v8750 = vpack.c.b16 %v5702, %v5694
        %v8751 = vpack.c.b16 %v5703, %v5695
        %v8752 = vpack.c.b16 %v5704, %v5696
        %v8753 = vpack.c.b16 %v5705, %v5697
        %v8754 = vpack.c.b16 %v5706, %v5698
        %v8755 = vpack.c.b16 %v5715, %v5707
        %v8756 = vpack.c.b16 %v5716, %v5708
        %v8757 = vpack.c.b16 %v5717, %v5709
        %v8758 = vpack.c.b16 %v5718, %v5710
        %v8759 = vpack.c.b16 %v5719, %v5711
        %v8760 = vpack.c.b16 %v5720, %v5712
        %v8761 = vpack.c.b16 %v5721, %v5713
        %v8762 = vpack.c.b16 %v5722, %v5714
        %v8763 = vpack.c.b16 %v5731, %v5723
        %v8764 = vpack.c.b16 %v5732, %v5724
        %v8765 = vpack.c.b16 %v5733, %v5725
        %v8766 = vpack.c.b16 %v5734, %v5726
        %v8767 = vpack.c.b16 %v5735, %v5727
        %v8768 = vpack.c.b16 %v5736, %v5728
        %v8769 = vpack.c.b16 %v5737, %v5729
        %v8770 = vpack.c.b16 %v5738, %v5730
        %v8771 = vpack.c.b16 %v5747, %v5739
        %v8772 = vpack.c.b16 %v5748, %v5740
        %v8773 = vpack.c.b16 %v5749, %v5741
        %v8774 = vpack.c.b16 %v5750, %v5742
        %v8775 = vpack.c.b16 %v5751, %v5743
        %v8776 = vpack.c.b16 %v5752, %v5744
        %v8777 = vpack.c.b16 %v5753, %v5745
        %v8778 = vpack.c.b16 %v5754, %v5746
        %v8779 = vpack.c.b16 %v5763, %v5755
        %v8780 = vpack.c.b16 %v5764, %v5756
        %v8781 = vpack.c.b16 %v5765, %v5757
        %v8782 = vpack.c.b16 %v5766, %v5758
        %v8783 = vpack.c.b16 %v5767, %v5759
        %v8784 = vpack.c.b16 %v5768, %v5760
        %v8785 = vpack.c.b16 %v5769, %v5761
        %v8786 = vpack.c.b16 %v5770, %v5762
        %v8787 = vpack.c.b16 %v5779, %v5771
        %v8788 = vpack.c.b16 %v5780, %v5772
        %v8789 = vpack.c.b16 %v5781, %v5773
        %v8790 = vpack.c.b16 %v5782, %v5774
        %v8791 = vpack.c.b16 %v5783, %v5775
        %v8792 = vpack.c.b16 %v5784, %v5776
        %v8793 = vpack.c.b16 %v5785, %v5777
        %v8794 = vpack.c.b16 %v5786, %v5778
        %v8795 = vpack.c.b16 %v5795, %v5787
        %v8796 = vpack.c.b16 %v5796, %v5788
        %v8797 = vpack.c.b16 %v5797, %v5789
        %v8798 = vpack.c.b16 %v5798, %v5790
        %v8799 = vpack.c.b16 %v5799, %v5791
        %v8800 = vpack.c.b16 %v5800, %v5792
        %v8801 = vpack.c.b16 %v5801, %v5793
        %v8802 = vpack.c.b16 %v5802, %v5794
        %v8803 = vpack.c.b16 %v5811, %v5803
        %v8804 = vpack.c.b16 %v5812, %v5804
        %v8805 = vpack.c.b16 %v5813, %v5805
        %v8806 = vpack.c.b16 %v5814, %v5806
        %v8807 = vpack.c.b16 %v5815, %v5807
        %v8808 = vpack.c.b16 %v5816, %v5808
        %v8809 = vpack.c.b16 %v5817, %v5809
        %v8810 = vpack.c.b16 %v5818, %v5810
        %v8811 = vpack.c.b16 %v5827, %v5819
        %v8812 = vpack.c.b16 %v5828, %v5820
        %v8813 = vpack.c.b16 %v5829, %v5821
        %v8814 = vpack.c.b16 %v5830, %v5822
        %v8815 = vpack.c.b16 %v5831, %v5823
        %v8816 = vpack.c.b16 %v5832, %v5824
        %v8817 = vpack.c.b16 %v5833, %v5825
        %v8818 = vpack.c.b16 %v5834, %v5826
        %v8819 = vpack.c.b16 %v5843, %v5835
        %v8820 = vpack.c.b16 %v5844, %v5836
        %v8821 = vpack.c.b16 %v5845, %v5837
        %v8822 = vpack.c.b16 %v5846, %v5838
        %v8823 = vpack.c.b16 %v5847, %v5839
        %v8824 = vpack.c.b16 %v5848, %v5840
        %v8825 = vpack.c.b16 %v5849, %v5841
        %v8826 = vpack.c.b16 %v5850, %v5842
        %v8827 = vpack.c.b16 %v5859, %v5851
        %v8828 = vpack.c.b16 %v5860, %v5852
        %v8829 = vpack.c.b16 %v5861, %v5853
        %v8830 = vpack.c.b16 %v5862, %v5854
        %v8831 = vpack.c.b16 %v5863, %v5855
        %v8832 = vpack.c.b16 %v5864, %v5856
        %v8833 = vpack.c.b16 %v5865, %v5857
        %v8834 = vpack.c.b16 %v5866, %v5858
        %v8835 = vpack.c.b16 %v5875, %v5867
        %v8836 = vpack.c.b16 %v5876, %v5868
        %v8837 = vpack.c.b16 %v5877, %v5869
        %v8838 = vpack.c.b16 %v5878, %v5870
        %v8839 = vpack.c.b16 %v5879, %v5871
        %v8840 = vpack.c.b16 %v5880, %v5872
        %v8841 = vpack.c.b16 %v5881, %v5873
        %v8842 = vpack.c.b16 %v5882, %v5874
        %v8843 = vpack.c.b16 %v5891, %v5883
        %v8844 = vpack.c.b16 %v5892, %v5884
        %v8845 = vpack.c.b16 %v5893, %v5885
        %v8846 = vpack.c.b16 %v5894, %v5886
        %v8847 = vpack.c.b16 %v5895, %v5887
        %v8848 = vpack.c.b16 %v5896, %v5888
        %v8849 = vpack.c.b16 %v5897, %v5889
        %v8850 = vpack.c.b16 %v5898, %v5890
        %v8851 = vpack.c.b16 %v5907, %v5899
        %v8852 = vpack.c.b16 %v5908, %v5900
        %v8853 = vpack.c.b16 %v5909, %v5901
        %v8854 = vpack.c.b16 %v5910, %v5902
        %v8855 = vpack.c.b16 %v5911, %v5903
        %v8856 = vpack.c.b16 %v5912, %v5904
        %v8857 = vpack.c.b16 %v5913, %v5905
        %v8858 = vpack.c.b16 %v5914, %v5906
        %v8859 = vpack.c.b16 %v5923, %v5915
        %v8860 = vpack.c.b16 %v5924, %v5916
        %v8861 = vpack.c.b16 %v5925, %v5917
        %v8862 = vpack.c.b16 %v5926, %v5918
        %v8863 = vpack.c.b16 %v5927, %v5919
        %v8864 = vpack.c.b16 %v5928, %v5920
        %v8865 = vpack.c.b16 %v5929, %v5921
        %v8866 = vpack.c.b16 %v5930, %v5922
        %v8867 = vpack.c.b16 %v5939, %v5931
        %v8868 = vpack.c.b16 %v5940, %v5932
        %v8869 = vpack.c.b16 %v5941, %v5933
        %v8870 = vpack.c.b16 %v5942, %v5934
        %v8871 = vpack.c.b16 %v5943, %v5935
        %v8872 = vpack.c.b16 %v5944, %v5936
        %v8873 = vpack.c.b16 %v5945, %v5937
        %v8874 = vpack.c.b16 %v5946, %v5938
        %v8875 = vpack.c.b16 %v5955, %v5947
        %v8876 = vpack.c.b16 %v5956, %v5948
        %v8877 = vpack.c.b16 %v5957, %v5949
        %v8878 = vpack.c.b16 %v5958, %v5950
        %v8879 = vpack.c.b16 %v5959, %v5951
        %v8880 = vpack.c.b16 %v5960, %v5952
        %v8881 = vpack.c.b16 %v5961, %v5953
        %v8882 = vpack.c.b16 %v5962, %v5954
        %v8883 = vpack.c.b16 %v5971, %v5963
        %v8884 = vpack.c.b16 %v5972, %v5964
        %v8885 = vpack.c.b16 %v5973, %v5965
        %v8886 = vpack.c.b16 %v5974, %v5966
        %v8887 = vpack.c.b16 %v5975, %v5967
        %v8888 = vpack.c.b16 %v5976, %v5968
        %v8889 = vpack.c.b16 %v5977, %v5969
        %v8890 = vpack.c.b16 %v5978, %v5970
        %v8891 = vpack.c.b16 %v5987, %v5979
        %v8892 = vpack.c.b16 %v5988, %v5980
        %v8893 = vpack.c.b16 %v5989, %v5981
        %v8894 = vpack.c.b16 %v5990, %v5982
        %v8895 = vpack.c.b16 %v5991, %v5983
        %v8896 = vpack.c.b16 %v5992, %v5984
        %v8897 = vpack.c.b16 %v5993, %v5985
        %v8898 = vpack.c.b16 %v5994, %v5986
        %v8899 = vpack.c.b16 %v6003, %v5995
        %v8900 = vpack.c.b16 %v6004, %v5996
        %v8901 = vpack.c.b16 %v6005, %v5997
        %v8902 = vpack.c.b16 %v6006, %v5998
        %v8903 = vpack.c.b16 %v6007, %v5999
        %v8904 = vpack.c.b16 %v6008, %v6000
        %v8905 = vpack.c.b16 %v6009, %v6001
        %v8906 = vpack.c.b16 %v6010, %v6002
        %v8907 = vpack.c.b16 %v6019, %v6011
        %v8908 = vpack.c.b16 %v6020, %v6012
        %v8909 = vpack.c.b16 %v6021, %v6013
        %v8910 = vpack.c.b16 %v6022, %v6014
        %v8911 = vpack.c.b16 %v6023, %v6015
        %v8912 = vpack.c.b16 %v6024, %v6016
        %v8913 = vpack.c.b16 %v6025, %v6017
        %v8914 = vpack.c.b16 %v6026, %v6018
        %v8915 = vpack.c.b16 %v6035, %v6027
        %v8916 = vpack.c.b16 %v6036, %v6028
        %v8917 = vpack.c.b16 %v6037, %v6029
        %v8918 = vpack.c.b16 %v6038, %v6030
        %v8919 = vpack.c.b16 %v6039, %v6031
        %v8920 = vpack.c.b16 %v6040, %v6032
        %v8921 = vpack.c.b16 %v6041, %v6033
        %v8922 = vpack.c.b16 %v6042, %v6034
        %v8923 = vpack.c.b16 %v6051, %v6043
        %v8924 = vpack.c.b16 %v6052, %v6044
        %v8925 = vpack.c.b16 %v6053, %v6045
        %v8926 = vpack.c.b16 %v6054, %v6046
        %v8927 = vpack.c.b16 %v6055, %v6047
        %v8928 = vpack.c.b16 %v6056, %v6048
        %v8929 = vpack.c.b16 %v6057, %v6049
        %v8930 = vpack.c.b16 %v6058, %v6050
        %v8931 = vpack.c.b16 %v6067, %v6059
        %v8932 = vpack.c.b16 %v6068, %v6060
        %v8933 = vpack.c.b16 %v6069, %v6061
        %v8934 = vpack.c.b16 %v6070, %v6062
        %v8935 = vpack.c.b16 %v6071, %v6063
        %v8936 = vpack.c.b16 %v6072, %v6064
        %v8937 = vpack.c.b16 %v6073, %v6065
        %v8938 = vpack.c.b16 %v6074, %v6066
        %v8939 = vpack.c.b16 %v6083, %v6075
        %v8940 = vpack.c.b16 %v6084, %v6076
        %v8941 = vpack.c.b16 %v6085, %v6077
        %v8942 = vpack.c.b16 %v6086, %v6078
        %v8943 = vpack.c.b16 %v6087, %v6079
        %v8944 = vpack.c.b16 %v6088, %v6080
        %v8945 = vpack.c.b16 %v6089, %v6081
        %v8946 = vpack.c.b16 %v6090, %v6082
        %v8947 = vpack.c.b16 %v6099, %v6091
        %v8948 = vpack.c.b16 %v6100, %v6092
        %v8949 = vpack.c.b16 %v6101, %v6093
        %v8950 = vpack.c.b16 %v6102, %v6094
        %v8951 = vpack.c.b16 %v6103, %v6095
        %v8952 = vpack.c.b16 %v6104, %v6096
        %v8953 = vpack.c.b16 %v6105, %v6097
        %v8954 = vpack.c.b16 %v6106, %v6098
        %v8955 = vpack.c.b16 %v6115, %v6107
        %v8956 = vpack.c.b16 %v6116, %v6108
        %v8957 = vpack.c.b16 %v6117, %v6109
        %v8958 = vpack.c.b16 %v6118, %v6110
        %v8959 = vpack.c.b16 %v6119, %v6111
        %v8960 = vpack.c.b16 %v6120, %v6112
        %v8961 = vpack.c.b16 %v6121, %v6113
        %v8962 = vpack.c.b16 %v6122, %v6114
        %v8963 = vpack.c.b16 %v6131, %v6123
        %v8964 = vpack.c.b16 %v6132, %v6124
        %v8965 = vpack.c.b16 %v6133, %v6125
        %v8966 = vpack.c.b16 %v6134, %v6126
        %v8967 = vpack.c.b16 %v6135, %v6127
        %v8968 = vpack.c.b16 %v6136, %v6128
        %v8969 = vpack.c.b16 %v6137, %v6129
        %v8970 = vpack.c.b16 %v6138, %v6130
        %v8971 = vpack.c.b16 %v6147, %v6139
        %v8972 = vpack.c.b16 %v6148, %v6140
        %v8973 = vpack.c.b16 %v6149, %v6141
        %v8974 = vpack.c.b16 %v6150, %v6142
        %v8975 = vpack.c.b16 %v6151, %v6143
        %v8976 = vpack.c.b16 %v6152, %v6144
        %v8977 = vpack.c.b16 %v6153, %v6145
        %v8978 = vpack.c.b16 %v6154, %v6146
        %v8979 = vpack.c.b16 %v6163, %v6155
        %v8980 = vpack.c.b16 %v6164, %v6156
        %v8981 = vpack.c.b16 %v6165, %v6157
        %v8982 = vpack.c.b16 %v6166, %v6158
        %v8983 = vpack.c.b16 %v6167, %v6159
        %v8984 = vpack.c.b16 %v6168, %v6160
        %v8985 = vpack.c.b16 %v6169, %v6161
        %v8986 = vpack.c.b16 %v6170, %v6162
        %v8987 = vpack.c.b16 %v6179, %v6171
        %v8988 = vpack.c.b16 %v6180, %v6172
        %v8989 = vpack.c.b16 %v6181, %v6173
        %v8990 = vpack.c.b16 %v6182, %v6174
        %v8991 = vpack.c.b16 %v6183, %v6175
        %v8992 = vpack.c.b16 %v6184, %v6176
        %v8993 = vpack.c.b16 %v6185, %v6177
        %v8994 = vpack.c.b16 %v6186, %v6178
        %v8995 = vpack.c.b16 %v6195, %v6187
        %v8996 = vpack.c.b16 %v6196, %v6188
        %v8997 = vpack.c.b16 %v6197, %v6189
        %v8998 = vpack.c.b16 %v6198, %v6190
        %v8999 = vpack.c.b16 %v6199, %v6191
        %v9000 = vpack.c.b16 %v6200, %v6192
        %v9001 = vpack.c.b16 %v6201, %v6193
        %v9002 = vpack.c.b16 %v6202, %v6194
        %v9003 = vpack.c.b16 %v6211, %v6203
        %v9004 = vpack.c.b16 %v6212, %v6204
        %v9005 = vpack.c.b16 %v6213, %v6205
        %v9006 = vpack.c.b16 %v6214, %v6206
        %v9007 = vpack.c.b16 %v6215, %v6207
        %v9008 = vpack.c.b16 %v6216, %v6208
        %v9009 = vpack.c.b16 %v6217, %v6209
        %v9010 = vpack.c.b16 %v6218, %v6210
        %v9011 = vpack.c.b16 %v6227, %v6219
        %v9012 = vpack.c.b16 %v6228, %v6220
        %v9013 = vpack.c.b16 %v6229, %v6221
        %v9014 = vpack.c.b16 %v6230, %v6222
        %v9015 = vpack.c.b16 %v6231, %v6223
        %v9016 = vpack.c.b16 %v6232, %v6224
        %v9017 = vpack.c.b16 %v6233, %v6225
        %v9018 = vpack.c.b16 %v6234, %v6226
        %v9019 = vpack.c.b16 %v6243, %v6235
        %v9020 = vpack.c.b16 %v6244, %v6236
        %v9021 = vpack.c.b16 %v6245, %v6237
        %v9022 = vpack.c.b16 %v6246, %v6238
        %v9023 = vpack.c.b16 %v6247, %v6239
        %v9024 = vpack.c.b16 %v6248, %v6240
        %v9025 = vpack.c.b16 %v6249, %v6241
        %v9026 = vpack.c.b16 %v6250, %v6242
        %v9027 = vpack.c.b16 %v6259, %v6251
        %v9028 = vpack.c.b16 %v6260, %v6252
        %v9029 = vpack.c.b16 %v6261, %v6253
        %v9030 = vpack.c.b16 %v6262, %v6254
        %v9031 = vpack.c.b16 %v6263, %v6255
        %v9032 = vpack.c.b16 %v6264, %v6256
        %v9033 = vpack.c.b16 %v6265, %v6257
        %v9034 = vpack.c.b16 %v6266, %v6258
        %v9035 = vpack.c.b16 %v6275, %v6267
        %v9036 = vpack.c.b16 %v6276, %v6268
        %v9037 = vpack.c.b16 %v6277, %v6269
        %v9038 = vpack.c.b16 %v6278, %v6270
        %v9039 = vpack.c.b16 %v6279, %v6271
        %v9040 = vpack.c.b16 %v6280, %v6272
        %v9041 = vpack.c.b16 %v6281, %v6273
        %v9042 = vpack.c.b16 %v6282, %v6274
        %v9043 = vpack.c.b16 %v6291, %v6283
        %v9044 = vpack.c.b16 %v6292, %v6284
        %v9045 = vpack.c.b16 %v6293, %v6285
        %v9046 = vpack.c.b16 %v6294, %v6286
        %v9047 = vpack.c.b16 %v6295, %v6287
        %v9048 = vpack.c.b16 %v6296, %v6288
        %v9049 = vpack.c.b16 %v6297, %v6289
        %v9050 = vpack.c.b16 %v6298, %v6290
        %v9051 = vpack.c.b16 %v6307, %v6299
        %v9052 = vpack.c.b16 %v6308, %v6300
        %v9053 = vpack.c.b16 %v6309, %v6301
        %v9054 = vpack.c.b16 %v6310, %v6302
        %v9055 = vpack.c.b16 %v6311, %v6303
        %v9056 = vpack.c.b16 %v6312, %v6304
        %v9057 = vpack.c.b16 %v6313, %v6305
        %v9058 = vpack.c.b16 %v6314, %v6306
        %v9059 = vpack.c.b16 %v6323, %v6315
        %v9060 = vpack.c.b16 %v6324, %v6316
        %v9061 = vpack.c.b16 %v6325, %v6317
        %v9062 = vpack.c.b16 %v6326, %v6318
        %v9063 = vpack.c.b16 %v6327, %v6319
        %v9064 = vpack.c.b16 %v6328, %v6320
        %v9065 = vpack.c.b16 %v6329, %v6321
        %v9066 = vpack.c.b16 %v6330, %v6322
        %v9067 = vpack.c.b16 %v6339, %v6331
        %v9068 = vpack.c.b16 %v6340, %v6332
        %v9069 = vpack.c.b16 %v6341, %v6333
        %v9070 = vpack.c.b16 %v6342, %v6334
        %v9071 = vpack.c.b16 %v6343, %v6335
        %v9072 = vpack.c.b16 %v6344, %v6336
        %v9073 = vpack.c.b16 %v6345, %v6337
        %v9074 = vpack.c.b16 %v6346, %v6338
        %v9075 = vpack.c.b16 %v6355, %v6347
        %v9076 = vpack.c.b16 %v6356, %v6348
        %v9077 = vpack.c.b16 %v6357, %v6349
        %v9078 = vpack.c.b16 %v6358, %v6350
        %v9079 = vpack.c.b16 %v6359, %v6351
        %v9080 = vpack.c.b16 %v6360, %v6352
        %v9081 = vpack.c.b16 %v6361, %v6353
        %v9082 = vpack.c.b16 %v6362, %v6354
        %v9083 = vpack.c.b16 %v6371, %v6363
        %v9084 = vpack.c.b16 %v6372, %v6364
        %v9085 = vpack.c.b16 %v6373, %v6365
        %v9086 = vpack.c.b16 %v6374, %v6366
        %v9087 = vpack.c.b16 %v6375, %v6367
        %v9088 = vpack.c.b16 %v6376, %v6368
        %v9089 = vpack.c.b16 %v6377, %v6369
        %v9090 = vpack.c.b16 %v6378, %v6370
        %v9091 = vpack.c.b16 %v6387, %v6379
        %v9092 = vpack.c.b16 %v6388, %v6380
        %v9093 = vpack.c.b16 %v6389, %v6381
        %v9094 = vpack.c.b16 %v6390, %v6382
        %v9095 = vpack.c.b16 %v6391, %v6383
        %v9096 = vpack.c.b16 %v6392, %v6384
        %v9097 = vpack.c.b16 %v6393, %v6385
        %v9098 = vpack.c.b16 %v6394, %v6386
        %v9099 = vpack.c.b16 %v6403, %v6395
        %v9100 = vpack.c.b16 %v6404, %v6396
        %v9101 = vpack.c.b16 %v6405, %v6397
        %v9102 = vpack.c.b16 %v6406, %v6398
        %v9103 = vpack.c.b16 %v6407, %v6399
        %v9104 = vpack.c.b16 %v6408, %v6400
        %v9105 = vpack.c.b16 %v6409, %v6401
        %v9106 = vpack.c.b16 %v6410, %v6402
        %v9107 = vpack.c.b16 %v6419, %v6411
        %v9108 = vpack.c.b16 %v6420, %v6412
        %v9109 = vpack.c.b16 %v6421, %v6413
        %v9110 = vpack.c.b16 %v6422, %v6414
        %v9111 = vpack.c.b16 %v6423, %v6415
        %v9112 = vpack.c.b16 %v6424, %v6416
        %v9113 = vpack.c.b16 %v6425, %v6417
        %v9114 = vpack.c.b16 %v6426, %v6418
        %v9115 = vpack.c.b16 %v6435, %v6427
        %v9116 = vpack.c.b16 %v6436, %v6428
        %v9117 = vpack.c.b16 %v6437, %v6429
        %v9118 = vpack.c.b16 %v6438, %v6430
        %v9119 = vpack.c.b16 %v6439, %v6431
        %v9120 = vpack.c.b16 %v6440, %v6432
        %v9121 = vpack.c.b16 %v6441, %v6433
        %v9122 = vpack.c.b16 %v6442, %v6434
        %v9123 = vpack.c.b16 %v6451, %v6443
        %v9124 = vpack.c.b16 %v6452, %v6444
        %v9125 = vpack.c.b16 %v6453, %v6445
        %v9126 = vpack.c.b16 %v6454, %v6446
        %v9127 = vpack.c.b16 %v6455, %v6447
        %v9128 = vpack.c.b16 %v6456, %v6448
        %v9129 = vpack.c.b16 %v6457, %v6449
        %v9130 = vpack.c.b16 %v6458, %v6450
        %v9131 = vpack.c.b16 %v6467, %v6459
        %v9132 = vpack.c.b16 %v6468, %v6460
        %v9133 = vpack.c.b16 %v6469, %v6461
        %v9134 = vpack.c.b16 %v6470, %v6462
        %v9135 = vpack.c.b16 %v6471, %v6463
        %v9136 = vpack.c.b16 %v6472, %v6464
        %v9137 = vpack.c.b16 %v6473, %v6465
        %v9138 = vpack.c.b16 %v6474, %v6466
        %v9139 = vpack.c.b16 %v6483, %v6475
        %v9140 = vpack.c.b16 %v6484, %v6476
        %v9141 = vpack.c.b16 %v6485, %v6477
        %v9142 = vpack.c.b16 %v6486, %v6478
        %v9143 = vpack.c.b16 %v6487, %v6479
        %v9144 = vpack.c.b16 %v6488, %v6480
        %v9145 = vpack.c.b16 %v6489, %v6481
        %v9146 = vpack.c.b16 %v6490, %v6482
        %v9147 = vpack.c.b16 %v6499, %v6491
        %v9148 = vpack.c.b16 %v6500, %v6492
        %v9149 = vpack.c.b16 %v6501, %v6493
        %v9150 = vpack.c.b16 %v6502, %v6494
        %v9151 = vpack.c.b16 %v6503, %v6495
        %v9152 = vpack.c.b16 %v6504, %v6496
        %v9153 = vpack.c.b16 %v6505, %v6497
        %v9154 = vpack.c.b16 %v6506, %v6498
        %v9155 = vpack.c.b16 %v6515, %v6507
        %v9156 = vpack.c.b16 %v6516, %v6508
        %v9157 = vpack.c.b16 %v6517, %v6509
        %v9158 = vpack.c.b16 %v6518, %v6510
        %v9159 = vpack.c.b16 %v6519, %v6511
        %v9160 = vpack.c.b16 %v6520, %v6512
        %v9161 = vpack.c.b16 %v6521, %v6513
        %v9162 = vpack.c.b16 %v6522, %v6514
        %v9163 = vpack.c.b16 %v6531, %v6523
        %v9164 = vpack.c.b16 %v6532, %v6524
        %v9165 = vpack.c.b16 %v6533, %v6525
        %v9166 = vpack.c.b16 %v6534, %v6526
        %v9167 = vpack.c.b16 %v6535, %v6527
        %v9168 = vpack.c.b16 %v6536, %v6528
        %v9169 = vpack.c.b16 %v6537, %v6529
        %v9170 = vpack.c.b16 %v6538, %v6530
        %v9171 = vpack.c.b16 %v6547, %v6539
        %v9172 = vpack.c.b16 %v6548, %v6540
        %v9173 = vpack.c.b16 %v6549, %v6541
        %v9174 = vpack.c.b16 %v6550, %v6542
        %v9175 = vpack.c.b16 %v6551, %v6543
        %v9176 = vpack.c.b16 %v6552, %v6544
        %v9177 = vpack.c.b16 %v6553, %v6545
        %v9178 = vpack.c.b16 %v6554, %v6546
        %v9179 = vpack.c.b16 %v6563, %v6555
        %v9180 = vpack.c.b16 %v6564, %v6556
        %v9181 = vpack.c.b16 %v6565, %v6557
        %v9182 = vpack.c.b16 %v6566, %v6558
        %v9183 = vpack.c.b16 %v6567, %v6559
        %v9184 = vpack.c.b16 %v6568, %v6560
        %v9185 = vpack.c.b16 %v6569, %v6561
        %v9186 = vpack.c.b16 %v6570, %v6562
        %v9187 = vpack.c.b16 %v6579, %v6571
        %v9188 = vpack.c.b16 %v6580, %v6572
        %v9189 = vpack.c.b16 %v6581, %v6573
        %v9190 = vpack.c.b16 %v6582, %v6574
        %v9191 = vpack.c.b16 %v6583, %v6575
        %v9192 = vpack.c.b16 %v6584, %v6576
        %v9193 = vpack.c.b16 %v6585, %v6577
        %v9194 = vpack.c.b16 %v6586, %v6578
        %v9195 = vpack.c.b16 %v6595, %v6587
        %v9196 = vpack.c.b16 %v6596, %v6588
        %v9197 = vpack.c.b16 %v6597, %v6589
        %v9198 = vpack.c.b16 %v6598, %v6590
        %v9199 = vpack.c.b16 %v6599, %v6591
        %v9200 = vpack.c.b16 %v6600, %v6592
        %v9201 = vpack.c.b16 %v6601, %v6593
        %v9202 = vpack.c.b16 %v6602, %v6594
        %v9203 = vpack.c.b16 %v6611, %v6603
        %v9204 = vpack.c.b16 %v6612, %v6604
        %v9205 = vpack.c.b16 %v6613, %v6605
        %v9206 = vpack.c.b16 %v6614, %v6606
        %v9207 = vpack.c.b16 %v6615, %v6607
        %v9208 = vpack.c.b16 %v6616, %v6608
        %v9209 = vpack.c.b16 %v6617, %v6609
        %v9210 = vpack.c.b16 %v6618, %v6610
        %v9211 = vpack.c.b16 %v6627, %v6619
        %v9212 = vpack.c.b16 %v6628, %v6620
        %v9213 = vpack.c.b16 %v6629, %v6621
        %v9214 = vpack.c.b16 %v6630, %v6622
        %v9215 = vpack.c.b16 %v6631, %v6623
        %v9216 = vpack.c.b16 %v6632, %v6624
        %v9217 = vpack.c.b16 %v6633, %v6625
        %v9218 = vpack.c.b16 %v6634, %v6626
        %v9219 = vpack.c.b16 %v6643, %v6635
        %v9220 = vpack.c.b16 %v6644, %v6636
        %v9221 = vpack.c.b16 %v6645, %v6637
        %v9222 = vpack.c.b16 %v6646, %v6638
        %v9223 = vpack.c.b16 %v6647, %v6639
        %v9224 = vpack.c.b16 %v6648, %v6640
        %v9225 = vpack.c.b16 %v6649, %v6641
        %v9226 = vpack.c.b16 %v6650, %v6642
        %v9227 = vpack.c.b16 %v6659, %v6651
        %v9228 = vpack.c.b16 %v6660, %v6652
        %v9229 = vpack.c.b16 %v6661, %v6653
        %v9230 = vpack.c.b16 %v6662, %v6654
        %v9231 = vpack.c.b16 %v6663, %v6655
        %v9232 = vpack.c.b16 %v6664, %v6656
        %v9233 = vpack.c.b16 %v6665, %v6657
        %v9234 = vpack.c.b16 %v6666, %v6658
        %v9235 = vpack.c.b16 %v6675, %v6667
        %v9236 = vpack.c.b16 %v6676, %v6668
        %v9237 = vpack.c.b16 %v6677, %v6669
        %v9238 = vpack.c.b16 %v6678, %v6670
        %v9239 = vpack.c.b16 %v6679, %v6671
        %v9240 = vpack.c.b16 %v6680, %v6672
        %v9241 = vpack.c.b16 %v6681, %v6673
        %v9242 = vpack.c.b16 %v6682, %v6674
        %v9243 = vpack.c.b16 %v6691, %v6683
        %v9244 = vpack.c.b16 %v6692, %v6684
        %v9245 = vpack.c.b16 %v6693, %v6685
        %v9246 = vpack.c.b16 %v6694, %v6686
        %v9247 = vpack.c.b16 %v6695, %v6687
        %v9248 = vpack.c.b16 %v6696, %v6688
        %v9249 = vpack.c.b16 %v6697, %v6689
        %v9250 = vpack.c.b16 %v6698, %v6690
        %v9251 = vpack.c.b16 %v6707, %v6699
        %v9252 = vpack.c.b16 %v6708, %v6700
        %v9253 = vpack.c.b16 %v6709, %v6701
        %v9254 = vpack.c.b16 %v6710, %v6702
        %v9255 = vpack.c.b16 %v6711, %v6703
        %v9256 = vpack.c.b16 %v6712, %v6704
        %v9257 = vpack.c.b16 %v6713, %v6705
        %v9258 = vpack.c.b16 %v6714, %v6706
        %v9259 = vpack.c.b16 %v6723, %v6715
        %v9260 = vpack.c.b16 %v6724, %v6716
        %v9261 = vpack.c.b16 %v6725, %v6717
        %v9262 = vpack.c.b16 %v6726, %v6718
        %v9263 = vpack.c.b16 %v6727, %v6719
        %v9264 = vpack.c.b16 %v6728, %v6720
        %v9265 = vpack.c.b16 %v6729, %v6721
        %v9266 = vpack.c.b16 %v6730, %v6722
        %v9267 = vpack.c.b16 %v6739, %v6731
        %v9268 = vpack.c.b16 %v6740, %v6732
        %v9269 = vpack.c.b16 %v6741, %v6733
        %v9270 = vpack.c.b16 %v6742, %v6734
        %v9271 = vpack.c.b16 %v6743, %v6735
        %v9272 = vpack.c.b16 %v6744, %v6736
        %v9273 = vpack.c.b16 %v6745, %v6737
        %v9274 = vpack.c.b16 %v6746, %v6738
        %v9275 = vpack.c.b16 %v6755, %v6747
        %v9276 = vpack.c.b16 %v6756, %v6748
        %v9277 = vpack.c.b16 %v6757, %v6749
        %v9278 = vpack.c.b16 %v6758, %v6750
        %v9279 = vpack.c.b16 %v6759, %v6751
        %v9280 = vpack.c.b16 %v6760, %v6752
        %v9281 = vpack.c.b16 %v6761, %v6753
        %v9282 = vpack.c.b16 %v6762, %v6754
        %v9283 = vpack.c.b16 %v6771, %v6763
        %v9284 = vpack.c.b16 %v6772, %v6764
        %v9285 = vpack.c.b16 %v6773, %v6765
        %v9286 = vpack.c.b16 %v6774, %v6766
        %v9287 = vpack.c.b16 %v6775, %v6767
        %v9288 = vpack.c.b16 %v6776, %v6768
        %v9289 = vpack.c.b16 %v6777, %v6769
        %v9290 = vpack.c.b16 %v6778, %v6770
        %v9291 = vpack.c.b16 %v6787, %v6779
        %v9292 = vpack.c.b16 %v6788, %v6780
        %v9293 = vpack.c.b16 %v6789, %v6781
        %v9294 = vpack.c.b16 %v6790, %v6782
        %v9295 = vpack.c.b16 %v6791, %v6783
        %v9296 = vpack.c.b16 %v6792, %v6784
        %v9297 = vpack.c.b16 %v6793, %v6785
        %v9298 = vpack.c.b16 %v6794, %v6786
        %v9299 = vpack.c.b16 %v6803, %v6795
        %v9300 = vpack.c.b16 %v6804, %v6796
        %v9301 = vpack.c.b16 %v6805, %v6797
        %v9302 = vpack.c.b16 %v6806, %v6798
        %v9303 = vpack.c.b16 %v6807, %v6799
        %v9304 = vpack.c.b16 %v6808, %v6800
        %v9305 = vpack.c.b16 %v6809, %v6801
        %v9306 = vpack.c.b16 %v6810, %v6802
        %v9307 = vpack.c.b16 %v6819, %v6811
        %v9308 = vpack.c.b16 %v6820, %v6812
        %v9309 = vpack.c.b16 %v6821, %v6813
        %v9310 = vpack.c.b16 %v6822, %v6814
        %v9311 = vpack.c.b16 %v6823, %v6815
        %v9312 = vpack.c.b16 %v6824, %v6816
        %v9313 = vpack.c.b16 %v6825, %v6817
        %v9314 = vpack.c.b16 %v6826, %v6818
        %v9315 = vpack.c.b16 %v6835, %v6827
        %v9316 = vpack.c.b16 %v6836, %v6828
        %v9317 = vpack.c.b16 %v6837, %v6829
        %v9318 = vpack.c.b16 %v6838, %v6830
        %v9319 = vpack.c.b16 %v6839, %v6831
        %v9320 = vpack.c.b16 %v6840, %v6832
        %v9321 = vpack.c.b16 %v6841, %v6833
        %v9322 = vpack.c.b16 %v6842, %v6834
        %v9323 = vpack.c.b16 %v6851, %v6843
        %v9324 = vpack.c.b16 %v6852, %v6844
        %v9325 = vpack.c.b16 %v6853, %v6845
        %v9326 = vpack.c.b16 %v6854, %v6846
        %v9327 = vpack.c.b16 %v6855, %v6847
        %v9328 = vpack.c.b16 %v6856, %v6848
        %v9329 = vpack.c.b16 %v6857, %v6849
        %v9330 = vpack.c.b16 %v6858, %v6850
        %v9331 = vpack.c.b16 %v6867, %v6859
        %v9332 = vpack.c.b16 %v6868, %v6860
        %v9333 = vpack.c.b16 %v6869, %v6861
        %v9334 = vpack.c.b16 %v6870, %v6862
        %v9335 = vpack.c.b16 %v6871, %v6863
        %v9336 = vpack.c.b16 %v6872, %v6864
        %v9337 = vpack.c.b16 %v6873, %v6865
        %v9338 = vpack.c.b16 %v6874, %v6866
        %v9339 = vpack.c.b16 %v6883, %v6875
        %v9340 = vpack.c.b16 %v6884, %v6876
        %v9341 = vpack.c.b16 %v6885, %v6877
        %v9342 = vpack.c.b16 %v6886, %v6878
        %v9343 = vpack.c.b16 %v6887, %v6879
        %v9344 = vpack.c.b16 %v6888, %v6880
        %v9345 = vpack.c.b16 %v6889, %v6881
        %v9346 = vpack.c.b16 %v6890, %v6882
        %v9347 = vpack.c.b16 %v6899, %v6891
        %v9348 = vpack.c.b16 %v6900, %v6892
        %v9349 = vpack.c.b16 %v6901, %v6893
        %v9350 = vpack.c.b16 %v6902, %v6894
        %v9351 = vpack.c.b16 %v6903, %v6895
        %v9352 = vpack.c.b16 %v6904, %v6896
        %v9353 = vpack.c.b16 %v6905, %v6897
        %v9354 = vpack.c.b16 %v6906, %v6898
        %v9355 = vpack.c.b16 %v6915, %v6907
        %v9356 = vpack.c.b16 %v6916, %v6908
        %v9357 = vpack.c.b16 %v6917, %v6909
        %v9358 = vpack.c.b16 %v6918, %v6910
        %v9359 = vpack.c.b16 %v6919, %v6911
        %v9360 = vpack.c.b16 %v6920, %v6912
        %v9361 = vpack.c.b16 %v6921, %v6913
        %v9362 = vpack.c.b16 %v6922, %v6914
        %v9363 = vpack.c.b16 %v6931, %v6923
        %v9364 = vpack.c.b16 %v6932, %v6924
        %v9365 = vpack.c.b16 %v6933, %v6925
        %v9366 = vpack.c.b16 %v6934, %v6926
        %v9367 = vpack.c.b16 %v6935, %v6927
        %v9368 = vpack.c.b16 %v6936, %v6928
        %v9369 = vpack.c.b16 %v6937, %v6929
        %v9370 = vpack.c.b16 %v6938, %v6930
        %v9371 = vpack.c.b16 %v6947, %v6939
        %v9372 = vpack.c.b16 %v6948, %v6940
        %v9373 = vpack.c.b16 %v6949, %v6941
        %v9374 = vpack.c.b16 %v6950, %v6942
        %v9375 = vpack.c.b16 %v6951, %v6943
        %v9376 = vpack.c.b16 %v6952, %v6944
        %v9377 = vpack.c.b16 %v6953, %v6945
        %v9378 = vpack.c.b16 %v6954, %v6946
        %v9379 = vpack.c.b16 %v6963, %v6955
        %v9380 = vpack.c.b16 %v6964, %v6956
        %v9381 = vpack.c.b16 %v6965, %v6957
        %v9382 = vpack.c.b16 %v6966, %v6958
        %v9383 = vpack.c.b16 %v6967, %v6959
        %v9384 = vpack.c.b16 %v6968, %v6960
        %v9385 = vpack.c.b16 %v6969, %v6961
        %v9386 = vpack.c.b16 %v6970, %v6962
        %v9387 = vpack.c.b16 %v6979, %v6971
        %v9388 = vpack.c.b16 %v6980, %v6972
        %v9389 = vpack.c.b16 %v6981, %v6973
        %v9390 = vpack.c.b16 %v6982, %v6974
        %v9391 = vpack.c.b16 %v6983, %v6975
        %v9392 = vpack.c.b16 %v6984, %v6976
        %v9393 = vpack.c.b16 %v6985, %v6977
        %v9394 = vpack.c.b16 %v6986, %v6978
        %v9395 = vpack.c.b16 %v6995, %v6987
        %v9396 = vpack.c.b16 %v6996, %v6988
        %v9397 = vpack.c.b16 %v6997, %v6989
        %v9398 = vpack.c.b16 %v6998, %v6990
        %v9399 = vpack.c.b16 %v6999, %v6991
        %v9400 = vpack.c.b16 %v7000, %v6992
        %v9401 = vpack.c.b16 %v7001, %v6993
        %v9402 = vpack.c.b16 %v7002, %v6994
        %v9403 = vpack.c.b16 %v7011, %v7003
        %v9404 = vpack.c.b16 %v7012, %v7004
        %v9405 = vpack.c.b16 %v7013, %v7005
        %v9406 = vpack.c.b16 %v7014, %v7006
        %v9407 = vpack.c.b16 %v7015, %v7007
        %v9408 = vpack.c.b16 %v7016, %v7008
        %v9409 = vpack.c.b16 %v7017, %v7009
        %v9410 = vpack.c.b16 %v7018, %v7010
        %v9411 = vpack.c.b16 %v7027, %v7019
        %v9412 = vpack.c.b16 %v7028, %v7020
        %v9413 = vpack.c.b16 %v7029, %v7021
        %v9414 = vpack.c.b16 %v7030, %v7022
        %v9415 = vpack.c.b16 %v7031, %v7023
        %v9416 = vpack.c.b16 %v7032, %v7024
        %v9417 = vpack.c.b16 %v7033, %v7025
        %v9418 = vpack.c.b16 %v7034, %v7026
        %v9419 = vpack.c.b16 %v7043, %v7035
        %v9420 = vpack.c.b16 %v7044, %v7036
        %v9421 = vpack.c.b16 %v7045, %v7037
        %v9422 = vpack.c.b16 %v7046, %v7038
        %v9423 = vpack.c.b16 %v7047, %v7039
        %v9424 = vpack.c.b16 %v7048, %v7040
        %v9425 = vpack.c.b16 %v7049, %v7041
        %v9426 = vpack.c.b16 %v7050, %v7042
        %v9427 = vpack.c.b16 %v7059, %v7051
        %v9428 = vpack.c.b16 %v7060, %v7052
        %v9429 = vpack.c.b16 %v7061, %v7053
        %v9430 = vpack.c.b16 %v7062, %v7054
        %v9431 = vpack.c.b16 %v7063, %v7055
        %v9432 = vpack.c.b16 %v7064, %v7056
        %v9433 = vpack.c.b16 %v7065, %v7057
        %v9434 = vpack.c.b16 %v7066, %v7058
        %v9435 = vpack.c.b16 %v7075, %v7067
        %v9436 = vpack.c.b16 %v7076, %v7068
        %v9437 = vpack.c.b16 %v7077, %v7069
        %v9438 = vpack.c.b16 %v7078, %v7070
        %v9439 = vpack.c.b16 %v7079, %v7071
        %v9440 = vpack.c.b16 %v7080, %v7072
        %v9441 = vpack.c.b16 %v7081, %v7073
        %v9442 = vpack.c.b16 %v7082, %v7074
        %v9443 = vpack.c.b16 %v7091, %v7083
        %v9444 = vpack.c.b16 %v7092, %v7084
        %v9445 = vpack.c.b16 %v7093, %v7085
        %v9446 = vpack.c.b16 %v7094, %v7086
        %v9447 = vpack.c.b16 %v7095, %v7087
        %v9448 = vpack.c.b16 %v7096, %v7088
        %v9449 = vpack.c.b16 %v7097, %v7089
        %v9450 = vpack.c.b16 %v7098, %v7090
        %v9451 = vpack.c.b16 %v7107, %v7099
        %v9452 = vpack.c.b16 %v7108, %v7100
        %v9453 = vpack.c.b16 %v7109, %v7101
        %v9454 = vpack.c.b16 %v7110, %v7102
        %v9455 = vpack.c.b16 %v7111, %v7103
        %v9456 = vpack.c.b16 %v7112, %v7104
        %v9457 = vpack.c.b16 %v7113, %v7105
        %v9458 = vpack.c.b16 %v7114, %v7106
        %v9459 = vpack.c.b16 %v7123, %v7115
        %v9460 = vpack.c.b16 %v7124, %v7116
        %v9461 = vpack.c.b16 %v7125, %v7117
        %v9462 = vpack.c.b16 %v7126, %v7118
        %v9463 = vpack.c.b16 %v7127, %v7119
        %v9464 = vpack.c.b16 %v7128, %v7120
        %v9465 = vpack.c.b16 %v7129, %v7121
        %v9466 = vpack.c.b16 %v7130, %v7122
        %v9467 = vpack.c.b16 %v7139, %v7131
        %v9468 = vpack.c.b16 %v7140, %v7132
        %v9469 = vpack.c.b16 %v7141, %v7133
        %v9470 = vpack.c.b16 %v7142, %v7134
        %v9471 = vpack.c.b16 %v7143, %v7135
        %v9472 = vpack.c.b16 %v7144, %v7136
        %v9473 = vpack.c.b16 %v7145, %v7137
        %v9474 = vpack.c.b16 %v7146, %v7138
        %v9475 = vpack.c.b16 %v7155, %v7147
        %v9476 = vpack.c.b16 %v7156, %v7148
        %v9477 = vpack.c.b16 %v7157, %v7149
        %v9478 = vpack.c.b16 %v7158, %v7150
        %v9479 = vpack.c.b16 %v7159, %v7151
        %v9480 = vpack.c.b16 %v7160, %v7152
        %v9481 = vpack.c.b16 %v7161, %v7153
        %v9482 = vpack.c.b16 %v7162, %v7154
        %v9483 = vpack.c.b16 %v7171, %v7163
        %v9484 = vpack.c.b16 %v7172, %v7164
        %v9485 = vpack.c.b16 %v7173, %v7165
        %v9486 = vpack.c.b16 %v7174, %v7166
        %v9487 = vpack.c.b16 %v7175, %v7167
        %v9488 = vpack.c.b16 %v7176, %v7168
        %v9489 = vpack.c.b16 %v7177, %v7169
        %v9490 = vpack.c.b16 %v7178, %v7170
        %v9491 = vpack.c.b16 %v7187, %v7179
        %v9492 = vpack.c.b16 %v7188, %v7180
        %v9493 = vpack.c.b16 %v7189, %v7181
        %v9494 = vpack.c.b16 %v7190, %v7182
        %v9495 = vpack.c.b16 %v7191, %v7183
        %v9496 = vpack.c.b16 %v7192, %v7184
        %v9497 = vpack.c.b16 %v7193, %v7185
        %v9498 = vpack.c.b16 %v7194, %v7186
        %v9499 = vpack.c.b16 %v7203, %v7195
        %v9500 = vpack.c.b16 %v7204, %v7196
        %v9501 = vpack.c.b16 %v7205, %v7197
        %v9502 = vpack.c.b16 %v7206, %v7198
        %v9503 = vpack.c.b16 %v7207, %v7199
        %v9504 = vpack.c.b16 %v7208, %v7200
        %v9505 = vpack.c.b16 %v7209, %v7201
        %v9506 = vpack.c.b16 %v7210, %v7202
        %v9507 = vpack.c.b16 %v7219, %v7211
        %v9508 = vpack.c.b16 %v7220, %v7212
        %v9509 = vpack.c.b16 %v7221, %v7213
        %v9510 = vpack.c.b16 %v7222, %v7214
        %v9511 = vpack.c.b16 %v7223, %v7215
        %v9512 = vpack.c.b16 %v7224, %v7216
        %v9513 = vpack.c.b16 %v7225, %v7217
        %v9514 = vpack.c.b16 %v7226, %v7218
        %v9515 = vpack.c.b16 %v7235, %v7227
        %v9516 = vpack.c.b16 %v7236, %v7228
        %v9517 = vpack.c.b16 %v7237, %v7229
        %v9518 = vpack.c.b16 %v7238, %v7230
        %v9519 = vpack.c.b16 %v7239, %v7231
        %v9520 = vpack.c.b16 %v7240, %v7232
        %v9521 = vpack.c.b16 %v7241, %v7233
        %v9522 = vpack.c.b16 %v7242, %v7234
        %v9523 = vpack.c.b16 %v7251, %v7243
        %v9524 = vpack.c.b16 %v7252, %v7244
        %v9525 = vpack.c.b16 %v7253, %v7245
        %v9526 = vpack.c.b16 %v7254, %v7246
        %v9527 = vpack.c.b16 %v7255, %v7247
        %v9528 = vpack.c.b16 %v7256, %v7248
        %v9529 = vpack.c.b16 %v7257, %v7249
        %v9530 = vpack.c.b16 %v7258, %v7250
        %v9531 = vpack.c.b16 %v7267, %v7259
        %v9532 = vpack.c.b16 %v7268, %v7260
        %v9533 = vpack.c.b16 %v7269, %v7261
        %v9534 = vpack.c.b16 %v7270, %v7262
        %v9535 = vpack.c.b16 %v7271, %v7263
        %v9536 = vpack.c.b16 %v7272, %v7264
        %v9537 = vpack.c.b16 %v7273, %v7265
        %v9538 = vpack.c.b16 %v7274, %v7266
        %v9539 = vpack.c.b16 %v7283, %v7275
        %v9540 = vpack.c.b16 %v7284, %v7276
        %v9541 = vpack.c.b16 %v7285, %v7277
        %v9542 = vpack.c.b16 %v7286, %v7278
        %v9543 = vpack.c.b16 %v7287, %v7279
        %v9544 = vpack.c.b16 %v7288, %v7280
        %v9545 = vpack.c.b16 %v7289, %v7281
        %v9546 = vpack.c.b16 %v7290, %v7282
        %v9547 = vpack.c.b16 %v7299, %v7291
        %v9548 = vpack.c.b16 %v7300, %v7292
        %v9549 = vpack.c.b16 %v7301, %v7293
        %v9550 = vpack.c.b16 %v7302, %v7294
        %v9551 = vpack.c.b16 %v7303, %v7295
        %v9552 = vpack.c.b16 %v7304, %v7296
        %v9553 = vpack.c.b16 %v7305, %v7297
        %v9554 = vpack.c.b16 %v7306, %v7298
        %v9555 = vpack.c.b16 %v7315, %v7307
        %v9556 = vpack.c.b16 %v7316, %v7308
        %v9557 = vpack.c.b16 %v7317, %v7309
        %v9558 = vpack.c.b16 %v7318, %v7310
        %v9559 = vpack.c.b16 %v7319, %v7311
        %v9560 = vpack.c.b16 %v7320, %v7312
        %v9561 = vpack.c.b16 %v7321, %v7313
        %v9562 = vpack.c.b16 %v7322, %v7314
        %v9563 = vpack.c.b16 %v7331, %v7323
        %v9564 = vpack.c.b16 %v7332, %v7324
        %v9565 = vpack.c.b16 %v7333, %v7325
        %v9566 = vpack.c.b16 %v7334, %v7326
        %v9567 = vpack.c.b16 %v7335, %v7327
        %v9568 = vpack.c.b16 %v7336, %v7328
        %v9569 = vpack.c.b16 %v7337, %v7329
        %v9570 = vpack.c.b16 %v7338, %v7330
        %v9571 = vpack.c.b16 %v7347, %v7339
        %v9572 = vpack.c.b16 %v7348, %v7340
        %v9573 = vpack.c.b16 %v7349, %v7341
        %v9574 = vpack.c.b16 %v7350, %v7342
        %v9575 = vpack.c.b16 %v7351, %v7343
        %v9576 = vpack.c.b16 %v7352, %v7344
        %v9577 = vpack.c.b16 %v7353, %v7345
        %v9578 = vpack.c.b16 %v7354, %v7346
        %v9579 = vpack.c.b16 %v7363, %v7355
        %v9580 = vpack.c.b16 %v7364, %v7356
        %v9581 = vpack.c.b16 %v7365, %v7357
        %v9582 = vpack.c.b16 %v7366, %v7358
        %v9583 = vpack.c.b16 %v7367, %v7359
        %v9584 = vpack.c.b16 %v7368, %v7360
        %v9585 = vpack.c.b16 %v7369, %v7361
        %v9586 = vpack.c.b16 %v7370, %v7362
        %v9587 = vpack.c.b16 %v7379, %v7371
        %v9588 = vpack.c.b16 %v7380, %v7372
        %v9589 = vpack.c.b16 %v7381, %v7373
        %v9590 = vpack.c.b16 %v7382, %v7374
        %v9591 = vpack.c.b16 %v7383, %v7375
        %v9592 = vpack.c.b16 %v7384, %v7376
        %v9593 = vpack.c.b16 %v7385, %v7377
        %v9594 = vpack.c.b16 %v7386, %v7378
        %v9595 = vpack.c.b16 %v7395, %v7387
        %v9596 = vpack.c.b16 %v7396, %v7388
        %v9597 = vpack.c.b16 %v7397, %v7389
        %v9598 = vpack.c.b16 %v7398, %v7390
        %v9599 = vpack.c.b16 %v7399, %v7391
        %v9600 = vpack.c.b16 %v7400, %v7392
        %v9601 = vpack.c.b16 %v7401, %v7393
        %v9602 = vpack.c.b16 %v7402, %v7394
        %v9603 = vpack.c.b16 %v7411, %v7403
        %v9604 = vpack.c.b16 %v7412, %v7404
        %v9605 = vpack.c.b16 %v7413, %v7405
        %v9606 = vpack.c.b16 %v7414, %v7406
        %v9607 = vpack.c.b16 %v7415, %v7407
        %v9608 = vpack.c.b16 %v7416, %v7408
        %v9609 = vpack.c.b16 %v7417, %v7409
        %v9610 = vpack.c.b16 %v7418, %v7410
        %v9611 = vpack.c.b16 %v7427, %v7419
        %v9612 = vpack.c.b16 %v7428, %v7420
        %v9613 = vpack.c.b16 %v7429, %v7421
        %v9614 = vpack.c.b16 %v7430, %v7422
        %v9615 = vpack.c.b16 %v7431, %v7423
        %v9616 = vpack.c.b16 %v7432, %v7424
        %v9617 = vpack.c.b16 %v7433, %v7425
        %v9618 = vpack.c.b16 %v7434, %v7426
        %v9619 = vpack.c.b16 %v7443, %v7435
        %v9620 = vpack.c.b16 %v7444, %v7436
        %v9621 = vpack.c.b16 %v7445, %v7437
        %v9622 = vpack.c.b16 %v7446, %v7438
        %v9623 = vpack.c.b16 %v7447, %v7439
        %v9624 = vpack.c.b16 %v7448, %v7440
        %v9625 = vpack.c.b16 %v7449, %v7441
        %v9626 = vpack.c.b16 %v7450, %v7442
        %v9627 = vpack.c.b16 %v7459, %v7451
        %v9628 = vpack.c.b16 %v7460, %v7452
        %v9629 = vpack.c.b16 %v7461, %v7453
        %v9630 = vpack.c.b16 %v7462, %v7454
        %v9631 = vpack.c.b16 %v7463, %v7455
        %v9632 = vpack.c.b16 %v7464, %v7456
        %v9633 = vpack.c.b16 %v7465, %v7457
        %v9634 = vpack.c.b16 %v7466, %v7458
        %v9635 = vpack.c.b16 %v7475, %v7467
        %v9636 = vpack.c.b16 %v7476, %v7468
        %v9637 = vpack.c.b16 %v7477, %v7469
        %v9638 = vpack.c.b16 %v7478, %v7470
        %v9639 = vpack.c.b16 %v7479, %v7471
        %v9640 = vpack.c.b16 %v7480, %v7472
        %v9641 = vpack.c.b16 %v7481, %v7473
        %v9642 = vpack.c.b16 %v7482, %v7474
        %v9643 = vpack.c.b16 %v7491, %v7483
        %v9644 = vpack.c.b16 %v7492, %v7484
        %v9645 = vpack.c.b16 %v7493, %v7485
        %v9646 = vpack.c.b16 %v7494, %v7486
        %v9647 = vpack.c.b16 %v7495, %v7487
        %v9648 = vpack.c.b16 %v7496, %v7488
        %v9649 = vpack.c.b16 %v7497, %v7489
        %v9650 = vpack.c.b16 %v7498, %v7490
        %v9651 = vpack.c.b16 %v7507, %v7499
        %v9652 = vpack.c.b16 %v7508, %v7500
        %v9653 = vpack.c.b16 %v7509, %v7501
        %v9654 = vpack.c.b16 %v7510, %v7502
        %v9655 = vpack.c.b16 %v7511, %v7503
        %v9656 = vpack.c.b16 %v7512, %v7504
        %v9657 = vpack.c.b16 %v7513, %v7505
        %v9658 = vpack.c.b16 %v7514, %v7506
        %v9659 = vpack.c.b16 %v7523, %v7515
        %v9660 = vpack.c.b16 %v7524, %v7516
        %v9661 = vpack.c.b16 %v7525, %v7517
        %v9662 = vpack.c.b16 %v7526, %v7518
        %v9663 = vpack.c.b16 %v7527, %v7519
        %v9664 = vpack.c.b16 %v7528, %v7520
        %v9665 = vpack.c.b16 %v7529, %v7521
        %v9666 = vpack.c.b16 %v7530, %v7522
        %v9667 = vpack.c.b16 %v7539, %v7531
        %v9668 = vpack.c.b16 %v7540, %v7532
        %v9669 = vpack.c.b16 %v7541, %v7533
        %v9670 = vpack.c.b16 %v7542, %v7534
        %v9671 = vpack.c.b16 %v7543, %v7535
        %v9672 = vpack.c.b16 %v7544, %v7536
        %v9673 = vpack.c.b16 %v7545, %v7537
        %v9674 = vpack.c.b16 %v7546, %v7538
        %v9675 = vpack.c.b16 %v7555, %v7547
        %v9676 = vpack.c.b16 %v7556, %v7548
        %v9677 = vpack.c.b16 %v7557, %v7549
        %v9678 = vpack.c.b16 %v7558, %v7550
        %v9679 = vpack.c.b16 %v7559, %v7551
        %v9680 = vpack.c.b16 %v7560, %v7552
        %v9681 = vpack.c.b16 %v7561, %v7553
        %v9682 = vpack.c.b16 %v7562, %v7554
        %v9683 = vpack.c.b16 %v7571, %v7563
        %v9684 = vpack.c.b16 %v7572, %v7564
        %v9685 = vpack.c.b16 %v7573, %v7565
        %v9686 = vpack.c.b16 %v7574, %v7566
        %v9687 = vpack.c.b16 %v7575, %v7567
        %v9688 = vpack.c.b16 %v7576, %v7568
        %v9689 = vpack.c.b16 %v7577, %v7569
        %v9690 = vpack.c.b16 %v7578, %v7570
        %v9691 = vpack.c.b16 %v7587, %v7579
        %v9692 = vpack.c.b16 %v7588, %v7580
        %v9693 = vpack.c.b16 %v7589, %v7581
        %v9694 = vpack.c.b16 %v7590, %v7582
        %v9695 = vpack.c.b16 %v7591, %v7583
        %v9696 = vpack.c.b16 %v7592, %v7584
        %v9697 = vpack.c.b16 %v7593, %v7585
        %v9698 = vpack.c.b16 %v7594, %v7586
        %v9699 = vpack.c.b16 %v7603, %v7595
        %v9700 = vpack.c.b16 %v7604, %v7596
        %v9701 = vpack.c.b16 %v7605, %v7597
        %v9702 = vpack.c.b16 %v7606, %v7598
        %v9703 = vpack.c.b16 %v7607, %v7599
        %v9704 = vpack.c.b16 %v7608, %v7600
        %v9705 = vpack.c.b16 %v7609, %v7601
        %v9706 = vpack.c.b16 %v7610, %v7602
        %v9707 = vpack.c.b16 %v7619, %v7611
        %v9708 = vpack.c.b16 %v7620, %v7612
        %v9709 = vpack.c.b16 %v7621, %v7613
        %v9710 = vpack.c.b16 %v7622, %v7614
        %v9711 = vpack.c.b16 %v7623, %v7615
        %v9712 = vpack.c.b16 %v7624, %v7616
        %v9713 = vpack.c.b16 %v7625, %v7617
        %v9714 = vpack.c.b16 %v7626, %v7618
        %v9715 = vpack.c.b16 %v7635, %v7627
        %v9716 = vpack.c.b16 %v7636, %v7628
        %v9717 = vpack.c.b16 %v7637, %v7629
        %v9718 = vpack.c.b16 %v7638, %v7630
        %v9719 = vpack.c.b16 %v7639, %v7631
        %v9720 = vpack.c.b16 %v7640, %v7632
        %v9721 = vpack.c.b16 %v7641, %v7633
        %v9722 = vpack.c.b16 %v7642, %v7634
        %v9723 = vpack.c.b16 %v7651, %v7643
        %v9724 = vpack.c.b16 %v7652, %v7644
        %v9725 = vpack.c.b16 %v7653, %v7645
        %v9726 = vpack.c.b16 %v7654, %v7646
        %v9727 = vpack.c.b16 %v7655, %v7647
        %v9728 = vpack.c.b16 %v7656, %v7648
        %v9729 = vpack.c.b16 %v7657, %v7649
        %v9730 = vpack.c.b16 %v7658, %v7650
        %v9731 = vpack.c.b16 %v7667, %v7659
        %v9732 = vpack.c.b16 %v7668, %v7660
        %v9733 = vpack.c.b16 %v7669, %v7661
        %v9734 = vpack.c.b16 %v7670, %v7662
        %v9735 = vpack.c.b16 %v7671, %v7663
        %v9736 = vpack.c.b16 %v7672, %v7664
        %v9737 = vpack.c.b16 %v7673, %v7665
        %v9738 = vpack.c.b16 %v7674, %v7666
        %v9739 = vpack.c.b16 %v7683, %v7675
        %v9740 = vpack.c.b16 %v7684, %v7676
        %v9741 = vpack.c.b16 %v7685, %v7677
        %v9742 = vpack.c.b16 %v7686, %v7678
        %v9743 = vpack.c.b16 %v7687, %v7679
        %v9744 = vpack.c.b16 %v7688, %v7680
        %v9745 = vpack.c.b16 %v7689, %v7681
        %v9746 = vpack.c.b16 %v7690, %v7682
        %v9747 = vpack.c.b16 %v7699, %v7691
        %v9748 = vpack.c.b16 %v7700, %v7692
        %v9749 = vpack.c.b16 %v7701, %v7693
        %v9750 = vpack.c.b16 %v7702, %v7694
        %v9751 = vpack.c.b16 %v7703, %v7695
        %v9752 = vpack.c.b16 %v7704, %v7696
        %v9753 = vpack.c.b16 %v7705, %v7697
        %v9754 = vpack.c.b16 %v7706, %v7698
        %v9755 = vpack.c.b16 %v7715, %v7707
        %v9756 = vpack.c.b16 %v7716, %v7708
        %v9757 = vpack.c.b16 %v7717, %v7709
        %v9758 = vpack.c.b16 %v7718, %v7710
        %v9759 = vpack.c.b16 %v7719, %v7711
        %v9760 = vpack.c.b16 %v7720, %v7712
        %v9761 = vpack.c.b16 %v7721, %v7713
        %v9762 = vpack.c.b16 %v7722, %v7714
        %v9763 = vpack.c.b16 %v7731, %v7723
        %v9764 = vpack.c.b16 %v7732, %v7724
        %v9765 = vpack.c.b16 %v7733, %v7725
        %v9766 = vpack.c.b16 %v7734, %v7726
        %v9767 = vpack.c.b16 %v7735, %v7727
        %v9768 = vpack.c.b16 %v7736, %v7728
        %v9769 = vpack.c.b16 %v7737, %v7729
        %v9770 = vpack.c.b16 %v7738, %v7730
        %v9771 = vpack.c.b16 %v7747, %v7739
        %v9772 = vpack.c.b16 %v7748, %v7740
        %v9773 = vpack.c.b16 %v7749, %v7741
        %v9774 = vpack.c.b16 %v7750, %v7742
        %v9775 = vpack.c.b16 %v7751, %v7743
        %v9776 = vpack.c.b16 %v7752, %v7744
        %v9777 = vpack.c.b16 %v7753, %v7745
        %v9778 = vpack.c.b16 %v7754, %v7746
        %v9779 = vpack.c.b16 %v7763, %v7755
        %v9780 = vpack.c.b16 %v7764, %v7756
        %v9781 = vpack.c.b16 %v7765, %v7757
        %v9782 = vpack.c.b16 %v7766, %v7758
        %v9783 = vpack.c.b16 %v7767, %v7759
        %v9784 = vpack.c.b16 %v7768, %v7760
        %v9785 = vpack.c.b16 %v7769, %v7761
        %v9786 = vpack.c.b16 %v7770, %v7762
        %v9787 = vpack.c.b16 %v7779, %v7771
        %v9788 = vpack.c.b16 %v7780, %v7772
        %v9789 = vpack.c.b16 %v7781, %v7773
        %v9790 = vpack.c.b16 %v7782, %v7774
        %v9791 = vpack.c.b16 %v7783, %v7775
        %v9792 = vpack.c.b16 %v7784, %v7776
        %v9793 = vpack.c.b16 %v7785, %v7777
        %v9794 = vpack.c.b16 %v7786, %v7778
        %v9795 = vpack.c.b16 %v7795, %v7787
        %v9796 = vpack.c.b16 %v7796, %v7788
        %v9797 = vpack.c.b16 %v7797, %v7789
        %v9798 = vpack.c.b16 %v7798, %v7790
        %v9799 = vpack.c.b16 %v7799, %v7791
        %v9800 = vpack.c.b16 %v7800, %v7792
        %v9801 = vpack.c.b16 %v7801, %v7793
        %v9802 = vpack.c.b16 %v7802, %v7794
        %v9803 = vpack.c.b16 %v7811, %v7803
        %v9804 = vpack.c.b16 %v7812, %v7804
        %v9805 = vpack.c.b16 %v7813, %v7805
        %v9806 = vpack.c.b16 %v7814, %v7806
        %v9807 = vpack.c.b16 %v7815, %v7807
        %v9808 = vpack.c.b16 %v7816, %v7808
        %v9809 = vpack.c.b16 %v7817, %v7809
        %v9810 = vpack.c.b16 %v7818, %v7810
        %v9811 = vpack.c.b16 %v7827, %v7819
        %v9812 = vpack.c.b16 %v7828, %v7820
        %v9813 = vpack.c.b16 %v7829, %v7821
        %v9814 = vpack.c.b16 %v7830, %v7822
        %v9815 = vpack.c.b16 %v7831, %v7823
        %v9816 = vpack.c.b16 %v7832, %v7824
        %v9817 = vpack.c.b16 %v7833, %v7825
        %v9818 = vpack.c.b16 %v7834, %v7826
        %v9819 = vpack.c.b16 %v7843, %v7835
        %v9820 = vpack.c.b16 %v7844, %v7836
        %v9821 = vpack.c.b16 %v7845, %v7837
        %v9822 = vpack.c.b16 %v7846, %v7838
        %v9823 = vpack.c.b16 %v7847, %v7839
        %v9824 = vpack.c.b16 %v7848, %v7840
        %v9825 = vpack.c.b16 %v7849, %v7841
        %v9826 = vpack.c.b16 %v7850, %v7842
        %v9827 = vpack.c.b16 %v7859, %v7851
        %v9828 = vpack.c.b16 %v7860, %v7852
        %v9829 = vpack.c.b16 %v7861, %v7853
        %v9830 = vpack.c.b16 %v7862, %v7854
        %v9831 = vpack.c.b16 %v7863, %v7855
        %v9832 = vpack.c.b16 %v7864, %v7856
        %v9833 = vpack.c.b16 %v7865, %v7857
        %v9834 = vpack.c.b16 %v7866, %v7858
        %v9835 = vpack.c.b16 %v7875, %v7867
        %v9836 = vpack.c.b16 %v7876, %v7868
        %v9837 = vpack.c.b16 %v7877, %v7869
        %v9838 = vpack.c.b16 %v7878, %v7870
        %v9839 = vpack.c.b16 %v7879, %v7871
        %v9840 = vpack.c.b16 %v7880, %v7872
        %v9841 = vpack.c.b16 %v7881, %v7873
        %v9842 = vpack.c.b16 %v7882, %v7874
        %v9843 = vpack.c.b16 %v7891, %v7883
        %v9844 = vpack.c.b16 %v7892, %v7884
        %v9845 = vpack.c.b16 %v7893, %v7885
        %v9846 = vpack.c.b16 %v7894, %v7886
        %v9847 = vpack.c.b16 %v7895, %v7887
        %v9848 = vpack.c.b16 %v7896, %v7888
        %v9849 = vpack.c.b16 %v7897, %v7889
        %v9850 = vpack.c.b16 %v7898, %v7890
        %v9851 = vpack.c.b16 %v7907, %v7899
        %v9852 = vpack.c.b16 %v7908, %v7900
        %v9853 = vpack.c.b16 %v7909, %v7901
        %v9854 = vpack.c.b16 %v7910, %v7902
        %v9855 = vpack.c.b16 %v7911, %v7903
        %v9856 = vpack.c.b16 %v7912, %v7904
        %v9857 = vpack.c.b16 %v7913, %v7905
        %v9858 = vpack.c.b16 %v7914, %v7906
        %v9859 = vpack.c.b16 %v7923, %v7915
        %v9860 = vpack.c.b16 %v7924, %v7916
        %v9861 = vpack.c.b16 %v7925, %v7917
        %v9862 = vpack.c.b16 %v7926, %v7918
        %v9863 = vpack.c.b16 %v7927, %v7919
        %v9864 = vpack.c.b16 %v7928, %v7920
        %v9865 = vpack.c.b16 %v7929, %v7921
        %v9866 = vpack.c.b16 %v7930, %v7922
        %v9867 = vpack.c.b16 %v7939, %v7931
        %v9868 = vpack.c.b16 %v7940, %v7932
        %v9869 = vpack.c.b16 %v7941, %v7933
        %v9870 = vpack.c.b16 %v7942, %v7934
        %v9871 = vpack.c.b16 %v7943, %v7935
        %v9872 = vpack.c.b16 %v7944, %v7936
        %v9873 = vpack.c.b16 %v7945, %v7937
        %v9874 = vpack.c.b16 %v7946, %v7938
        %v9875 = vpack.c.b16 %v7955, %v7947
        %v9876 = vpack.c.b16 %v7956, %v7948
        %v9877 = vpack.c.b16 %v7957, %v7949
        %v9878 = vpack.c.b16 %v7958, %v7950
        %v9879 = vpack.c.b16 %v7959, %v7951
        %v9880 = vpack.c.b16 %v7960, %v7952
        %v9881 = vpack.c.b16 %v7961, %v7953
        %v9882 = vpack.c.b16 %v7962, %v7954
        %v9883 = vpack.c.b16 %v7971, %v7963
        %v9884 = vpack.c.b16 %v7972, %v7964
        %v9885 = vpack.c.b16 %v7973, %v7965
        %v9886 = vpack.c.b16 %v7974, %v7966
        %v9887 = vpack.c.b16 %v7975, %v7967
        %v9888 = vpack.c.b16 %v7976, %v7968
        %v9889 = vpack.c.b16 %v7977, %v7969
        %v9890 = vpack.c.b16 %v7978, %v7970
        %v9891 = vpack.c.b16 %v7987, %v7979
        %v9892 = vpack.c.b16 %v7988, %v7980
        %v9893 = vpack.c.b16 %v7989, %v7981
        %v9894 = vpack.c.b16 %v7990, %v7982
        %v9895 = vpack.c.b16 %v7991, %v7983
        %v9896 = vpack.c.b16 %v7992, %v7984
        %v9897 = vpack.c.b16 %v7993, %v7985
        %v9898 = vpack.c.b16 %v7994, %v7986
        %v9899 = vpack.c.b16 %v8003, %v7995
        %v9900 = vpack.c.b16 %v8004, %v7996
        %v9901 = vpack.c.b16 %v8005, %v7997
        %v9902 = vpack.c.b16 %v8006, %v7998
        %v9903 = vpack.c.b16 %v8007, %v7999
        %v9904 = vpack.c.b16 %v8008, %v8000
        %v9905 = vpack.c.b16 %v8009, %v8001
        %v9906 = vpack.c.b16 %v8010, %v8002
        %v9907 = vpack.c.b16 %v8019, %v8011
        %v9908 = vpack.c.b16 %v8020, %v8012
        %v9909 = vpack.c.b16 %v8021, %v8013
        %v9910 = vpack.c.b16 %v8022, %v8014
        %v9911 = vpack.c.b16 %v8023, %v8015
        %v9912 = vpack.c.b16 %v8024, %v8016
        %v9913 = vpack.c.b16 %v8025, %v8017
        %v9914 = vpack.c.b16 %v8026, %v8018
        %v9915 = vpack.c.b16 %v8035, %v8027
        %v9916 = vpack.c.b16 %v8036, %v8028
        %v9917 = vpack.c.b16 %v8037, %v8029
        %v9918 = vpack.c.b16 %v8038, %v8030
        %v9919 = vpack.c.b16 %v8039, %v8031
        %v9920 = vpack.c.b16 %v8040, %v8032
        %v9921 = vpack.c.b16 %v8041, %v8033
        %v9922 = vpack.c.b16 %v8042, %v8034
        %v9923 = vpack.c.b16 %v8051, %v8043
        %v9924 = vpack.c.b16 %v8052, %v8044
        %v9925 = vpack.c.b16 %v8053, %v8045
        %v9926 = vpack.c.b16 %v8054, %v8046
        %v9927 = vpack.c.b16 %v8055, %v8047
        %v9928 = vpack.c.b16 %v8056, %v8048
        %v9929 = vpack.c.b16 %v8057, %v8049
        %v9930 = vpack.c.b16 %v8058, %v8050
        %v9931 = vpack.c.b16 %v8067, %v8059
        %v9932 = vpack.c.b16 %v8068, %v8060
        %v9933 = vpack.c.b16 %v8069, %v8061
        %v9934 = vpack.c.b16 %v8070, %v8062
        %v9935 = vpack.c.b16 %v8071, %v8063
        %v9936 = vpack.c.b16 %v8072, %v8064
        %v9937 = vpack.c.b16 %v8073, %v8065
        %v9938 = vpack.c.b16 %v8074, %v8066
        %v9939 = vpack.c.b16 %v8083, %v8075
        %v9940 = vpack.c.b16 %v8084, %v8076
        %v9941 = vpack.c.b16 %v8085, %v8077
        %v9942 = vpack.c.b16 %v8086, %v8078
        %v9943 = vpack.c.b16 %v8087, %v8079
        %v9944 = vpack.c.b16 %v8088, %v8080
        %v9945 = vpack.c.b16 %v8089, %v8081
        %v9946 = vpack.c.b16 %v8090, %v8082
        %v9947 = vpack.c.b16 %v8099, %v8091
        %v9948 = vpack.c.b16 %v8100, %v8092
        %v9949 = vpack.c.b16 %v8101, %v8093
        %v9950 = vpack.c.b16 %v8102, %v8094
        %v9951 = vpack.c.b16 %v8103, %v8095
        %v9952 = vpack.c.b16 %v8104, %v8096
        %v9953 = vpack.c.b16 %v8105, %v8097
        %v9954 = vpack.c.b16 %v8106, %v8098
        %v9955 = vpack.c.b16 %v8115, %v8107
        %v9956 = vpack.c.b16 %v8116, %v8108
        %v9957 = vpack.c.b16 %v8117, %v8109
        %v9958 = vpack.c.b16 %v8118, %v8110
        %v9959 = vpack.c.b16 %v8119, %v8111
        %v9960 = vpack.c.b16 %v8120, %v8112
        %v9961 = vpack.c.b16 %v8121, %v8113
        %v9962 = vpack.c.b16 %v8122, %v8114
        %v9963 = vpack.c.b16 %v8131, %v8123
        %v9964 = vpack.c.b16 %v8132, %v8124
        %v9965 = vpack.c.b16 %v8133, %v8125
        %v9966 = vpack.c.b16 %v8134, %v8126
        %v9967 = vpack.c.b16 %v8135, %v8127
        %v9968 = vpack.c.b16 %v8136, %v8128
        %v9969 = vpack.c.b16 %v8137, %v8129
        %v9970 = vpack.c.b16 %v8138, %v8130
        %v9971 = vpack.c.b16 %v8147, %v8139
        %v9972 = vpack.c.b16 %v8148, %v8140
        %v9973 = vpack.c.b16 %v8149, %v8141
        %v9974 = vpack.c.b16 %v8150, %v8142
        %v9975 = vpack.c.b16 %v8151, %v8143
        %v9976 = vpack.c.b16 %v8152, %v8144
        %v9977 = vpack.c.b16 %v8153, %v8145
        %v9978 = vpack.c.b16 %v8154, %v8146
        %v9979 = vpack.c.b16 %v8163, %v8155
        %v9980 = vpack.c.b16 %v8164, %v8156
        %v9981 = vpack.c.b16 %v8165, %v8157
        %v9982 = vpack.c.b16 %v8166, %v8158
        %v9983 = vpack.c.b16 %v8167, %v8159
        %v9984 = vpack.c.b16 %v8168, %v8160
        %v9985 = vpack.c.b16 %v8169, %v8161
        %v9986 = vpack.c.b16 %v8170, %v8162
        %v9987 = vpack.c.b16 %v8179, %v8171
        %v9988 = vpack.c.b16 %v8180, %v8172
        %v9989 = vpack.c.b16 %v8181, %v8173
        %v9990 = vpack.c.b16 %v8182, %v8174
        %v9991 = vpack.c.b16 %v8183, %v8175
        %v9992 = vpack.c.b16 %v8184, %v8176
        %v9993 = vpack.c.b16 %v8185, %v8177
        %v9994 = vpack.c.b16 %v8186, %v8178
        %v9995 = vpack.c.b16 %v8195, %v8187
        %v9996 = vpack.c.b16 %v8196, %v8188
        %v9997 = vpack.c.b16 %v8197, %v8189
        %v9998 = vpack.c.b16 %v8198, %v8190
        %v9999 = vpack.c.b16 %v8199, %v8191
        %v10000 = vpack.c.b16 %v8200, %v8192
        %v10001 = vpack.c.b16 %v8201, %v8193
        %v10002 = vpack.c.b16 %v8202, %v8194
        %v10003 = vpack.c.b16 %v8211, %v8203
        %v10004 = vpack.c.b16 %v8212, %v8204
        %v10005 = vpack.c.b16 %v8213, %v8205
        %v10006 = vpack.c.b16 %v8214, %v8206
        %v10007 = vpack.c.b16 %v8215, %v8207
        %v10008 = vpack.c.b16 %v8216, %v8208
        %v10009 = vpack.c.b16 %v8217, %v8209
        %v10010 = vpack.c.b16 %v8218, %v8210
        %v10011 = vpack.c.b16 %v8227, %v8219
        %v10012 = vpack.c.b16 %v8228, %v8220
        %v10013 = vpack.c.b16 %v8229, %v8221
        %v10014 = vpack.c.b16 %v8230, %v8222
        %v10015 = vpack.c.b16 %v8231, %v8223
        %v10016 = vpack.c.b16 %v8232, %v8224
        %v10017 = vpack.c.b16 %v8233, %v8225
        %v10018 = vpack.c.b16 %v8234, %v8226
        %v10019 = vpack.c.b16 %v8243, %v8235
        %v10020 = vpack.c.b16 %v8244, %v8236
        %v10021 = vpack.c.b16 %v8245, %v8237
        %v10022 = vpack.c.b16 %v8246, %v8238
        %v10023 = vpack.c.b16 %v8247, %v8239
        %v10024 = vpack.c.b16 %v8248, %v8240
        %v10025 = vpack.c.b16 %v8249, %v8241
        %v10026 = vpack.c.b16 %v8250, %v8242
        %v10027 = vpack.c.b16 %v8259, %v8251
        %v10028 = vpack.c.b16 %v8260, %v8252
        %v10029 = vpack.c.b16 %v8261, %v8253
        %v10030 = vpack.c.b16 %v8262, %v8254
        %v10031 = vpack.c.b16 %v8263, %v8255
        %v10032 = vpack.c.b16 %v8264, %v8256
        %v10033 = vpack.c.b16 %v8265, %v8257
        %v10034 = vpack.c.b16 %v8266, %v8258
        %v10035 = vpack.c.b16 %v8275, %v8267
        %v10036 = vpack.c.b16 %v8276, %v8268
        %v10037 = vpack.c.b16 %v8277, %v8269
        %v10038 = vpack.c.b16 %v8278, %v8270
        %v10039 = vpack.c.b16 %v8279, %v8271
        %v10040 = vpack.c.b16 %v8280, %v8272
        %v10041 = vpack.c.b16 %v8281, %v8273
        %v10042 = vpack.c.b16 %v8282, %v8274
        %v10043 = vpack.c.b16 %v8291, %v8283
        %v10044 = vpack.c.b16 %v8292, %v8284
        %v10045 = vpack.c.b16 %v8293, %v8285
        %v10046 = vpack.c.b16 %v8294, %v8286
        %v10047 = vpack.c.b16 %v8295, %v8287
        %v10048 = vpack.c.b16 %v8296, %v8288
        %v10049 = vpack.c.b16 %v8297, %v8289
        %v10050 = vpack.c.b16 %v8298, %v8290
        %v10051 = vpack.c.b16 %v8307, %v8299
        %v10052 = vpack.c.b16 %v8308, %v8300
        %v10053 = vpack.c.b16 %v8309, %v8301
        %v10054 = vpack.c.b16 %v8310, %v8302
        %v10055 = vpack.c.b16 %v8311, %v8303
        %v10056 = vpack.c.b16 %v8312, %v8304
        %v10057 = vpack.c.b16 %v8313, %v8305
        %v10058 = vpack.c.b16 %v8314, %v8306
        %v10059 = vpack.c.b16 %v8323, %v8315
        %v10060 = vpack.c.b16 %v8324, %v8316
        %v10061 = vpack.c.b16 %v8325, %v8317
        %v10062 = vpack.c.b16 %v8326, %v8318
        %v10063 = vpack.c.b16 %v8327, %v8319
        %v10064 = vpack.c.b16 %v8328, %v8320
        %v10065 = vpack.c.b16 %v8329, %v8321
        %v10066 = vpack.c.b16 %v8330, %v8322
        %v10067 = vpack.c.b16 %v8339, %v8331
        %v10068 = vpack.c.b16 %v8340, %v8332
        %v10069 = vpack.c.b16 %v8341, %v8333
        %v10070 = vpack.c.b16 %v8342, %v8334
        %v10071 = vpack.c.b16 %v8343, %v8335
        %v10072 = vpack.c.b16 %v8344, %v8336
        %v10073 = vpack.c.b16 %v8345, %v8337
        %v10074 = vpack.c.b16 %v8346, %v8338
        %v10075 = vpack.c.b16 %v8355, %v8347
        %v10076 = vpack.c.b16 %v8356, %v8348
        %v10077 = vpack.c.b16 %v8357, %v8349
        %v10078 = vpack.c.b16 %v8358, %v8350
        %v10079 = vpack.c.b16 %v8359, %v8351
        %v10080 = vpack.c.b16 %v8360, %v8352
        %v10081 = vpack.c.b16 %v8361, %v8353
        %v10082 = vpack.c.b16 %v8362, %v8354
        %v10083 = vpack.c.b16 %v8371, %v8363
        %v10084 = vpack.c.b16 %v8372, %v8364
        %v10085 = vpack.c.b16 %v8373, %v8365
        %v10086 = vpack.c.b16 %v8374, %v8366
        %v10087 = vpack.c.b16 %v8375, %v8367
        %v10088 = vpack.c.b16 %v8376, %v8368
        %v10089 = vpack.c.b16 %v8377, %v8369
        %v10090 = vpack.c.b16 %v8378, %v8370
        %v10091 = vpack.c.b16 %v8387, %v8379
        %v10092 = vpack.c.b16 %v8388, %v8380
        %v10093 = vpack.c.b16 %v8389, %v8381
        %v10094 = vpack.c.b16 %v8390, %v8382
        %v10095 = vpack.c.b16 %v8391, %v8383
        %v10096 = vpack.c.b16 %v8392, %v8384
        %v10097 = vpack.c.b16 %v8393, %v8385
        %v10098 = vpack.c.b16 %v8394, %v8386
        %v10099 = vpack.c.b16 %v8403, %v8395
        %v10100 = vpack.c.b16 %v8404, %v8396
        %v10101 = vpack.c.b16 %v8405, %v8397
        %v10102 = vpack.c.b16 %v8406, %v8398
        %v10103 = vpack.c.b16 %v8407, %v8399
        %v10104 = vpack.c.b16 %v8408, %v8400
        %v10105 = vpack.c.b16 %v8409, %v8401
        %v10106 = vpack.c.b16 %v8410, %v8402
        %v10107 = vpack.c.b16 %v8419, %v8411
        %v10108 = vpack.c.b16 %v8420, %v8412
        %v10109 = vpack.c.b16 %v8421, %v8413
        %v10110 = vpack.c.b16 %v8422, %v8414
        %v10111 = vpack.c.b16 %v8423, %v8415
        %v10112 = vpack.c.b16 %v8424, %v8416
        %v10113 = vpack.c.b16 %v8425, %v8417
        %v10114 = vpack.c.b16 %v8426, %v8418
        %v10115 = vpack.c.b16 %v8435, %v8427
        %v10116 = vpack.c.b16 %v8436, %v8428
        %v10117 = vpack.c.b16 %v8437, %v8429
        %v10118 = vpack.c.b16 %v8438, %v8430
        %v10119 = vpack.c.b16 %v8439, %v8431
        %v10120 = vpack.c.b16 %v8440, %v8432
        %v10121 = vpack.c.b16 %v8441, %v8433
        %v10122 = vpack.c.b16 %v8442, %v8434
        %v10123 = vpack.c.b16 %v8451, %v8443
        %v10124 = vpack.c.b16 %v8452, %v8444
        %v10125 = vpack.c.b16 %v8453, %v8445
        %v10126 = vpack.c.b16 %v8454, %v8446
        %v10127 = vpack.c.b16 %v8455, %v8447
        %v10128 = vpack.c.b16 %v8456, %v8448
        %v10129 = vpack.c.b16 %v8457, %v8449
        %v10130 = vpack.c.b16 %v8458, %v8450
        %v10131 = vpack.c.b16 %v8467, %v8459
        %v10132 = vpack.c.b16 %v8468, %v8460
        %v10133 = vpack.c.b16 %v8469, %v8461
        %v10134 = vpack.c.b16 %v8470, %v8462
        %v10135 = vpack.c.b16 %v8471, %v8463
        %v10136 = vpack.c.b16 %v8472, %v8464
        %v10137 = vpack.c.b16 %v8473, %v8465
        %v10138 = vpack.c.b16 %v8474, %v8466
        %v10139 = vpack.c.b16 %v8483, %v8475
        %v10140 = vpack.c.b16 %v8484, %v8476
        %v10141 = vpack.c.b16 %v8485, %v8477
        %v10142 = vpack.c.b16 %v8486, %v8478
        %v10143 = vpack.c.b16 %v8487, %v8479
        %v10144 = vpack.c.b16 %v8488, %v8480
        %v10145 = vpack.c.b16 %v8489, %v8481
        %v10146 = vpack.c.b16 %v8490, %v8482
        %v10147 = vpack.c.b16 %v8499, %v8491
        %v10148 = vpack.c.b16 %v8500, %v8492
        %v10149 = vpack.c.b16 %v8501, %v8493
        %v10150 = vpack.c.b16 %v8502, %v8494
        %v10151 = vpack.c.b16 %v8503, %v8495
        %v10152 = vpack.c.b16 %v8504, %v8496
        %v10153 = vpack.c.b16 %v8505, %v8497
        %v10154 = vpack.c.b16 %v8506, %v8498
        %v10155 = vpack.c.b16 %v8515, %v8507
        %v10156 = vpack.c.b16 %v8516, %v8508
        %v10157 = vpack.c.b16 %v8517, %v8509
        %v10158 = vpack.c.b16 %v8518, %v8510
        %v10159 = vpack.c.b16 %v8519, %v8511
        %v10160 = vpack.c.b16 %v8520, %v8512
        %v10161 = vpack.c.b16 %v8521, %v8513
        %v10162 = vpack.c.b16 %v8522, %v8514
        %v10163 = vpack.c.b16 %v8531, %v8523
        %v10164 = vpack.c.b16 %v8532, %v8524
        %v10165 = vpack.c.b16 %v8533, %v8525
        %v10166 = vpack.c.b16 %v8534, %v8526
        %v10167 = vpack.c.b16 %v8535, %v8527
        %v10168 = vpack.c.b16 %v8536, %v8528
        %v10169 = vpack.c.b16 %v8537, %v8529
        %v10170 = vpack.c.b16 %v8538, %v8530
        %v10171 = vpack.c.b16 %v8547, %v8539
        %v10172 = vpack.c.b16 %v8548, %v8540
        %v10173 = vpack.c.b16 %v8549, %v8541
        %v10174 = vpack.c.b16 %v8550, %v8542
        %v10175 = vpack.c.b16 %v8551, %v8543
        %v10176 = vpack.c.b16 %v8552, %v8544
        %v10177 = vpack.c.b16 %v8553, %v8545
        %v10178 = vpack.c.b16 %v8554, %v8546
        %v10179 = vpack.c.b16 %v8563, %v8555
        %v10180 = vpack.c.b16 %v8564, %v8556
        %v10181 = vpack.c.b16 %v8565, %v8557
        %v10182 = vpack.c.b16 %v8566, %v8558
        %v10183 = vpack.c.b16 %v8567, %v8559
        %v10184 = vpack.c.b16 %v8568, %v8560
        %v10185 = vpack.c.b16 %v8569, %v8561
        %v10186 = vpack.c.b16 %v8570, %v8562
        %v10187 = vpack.c.b16 %v8579, %v8571
        %v10188 = vpack.c.b16 %v8580, %v8572
        %v10189 = vpack.c.b16 %v8581, %v8573
        %v10190 = vpack.c.b16 %v8582, %v8574
        %v10191 = vpack.c.b16 %v8583, %v8575
        %v10192 = vpack.c.b16 %v8584, %v8576
        %v10193 = vpack.c.b16 %v8585, %v8577
        %v10194 = vpack.c.b16 %v8586, %v8578
        %v10195 = vpack.c.b16 %v8595, %v8587
        %v10196 = vpack.c.b16 %v8596, %v8588
        %v10197 = vpack.c.b16 %v8597, %v8589
        %v10198 = vpack.c.b16 %v8598, %v8590
        %v10199 = vpack.c.b16 %v8599, %v8591
        %v10200 = vpack.c.b16 %v8600, %v8592
        %v10201 = vpack.c.b16 %v8601, %v8593
        %v10202 = vpack.c.b16 %v8602, %v8594
        %v10203 = vpack.c.b16 %v8611, %v8603
        %v10204 = vpack.c.b16 %v8612, %v8604
        %v10205 = vpack.c.b16 %v8613, %v8605
        %v10206 = vpack.c.b16 %v8614, %v8606
        %v10207 = vpack.c.b16 %v8615, %v8607
        %v10208 = vpack.c.b16 %v8616, %v8608
        %v10209 = vpack.c.b16 %v8617, %v8609
        %v10210 = vpack.c.b16 %v8618, %v8610
        %v10211 = vpack.c.b16 %v8627, %v8619
        %v10212 = vpack.c.b16 %v8628, %v8620
        %v10213 = vpack.c.b16 %v8629, %v8621
        %v10214 = vpack.c.b16 %v8630, %v8622
        %v10215 = vpack.c.b16 %v8631, %v8623
        %v10216 = vpack.c.b16 %v8632, %v8624
        %v10217 = vpack.c.b16 %v8633, %v8625
        %v10218 = vpack.c.b16 %v8634, %v8626
        %v10219 = vpack.c.b16 %v8643, %v8635
        %v10220 = vpack.c.b16 %v8644, %v8636
        %v10221 = vpack.c.b16 %v8645, %v8637
        %v10222 = vpack.c.b16 %v8646, %v8638
        %v10223 = vpack.c.b16 %v8647, %v8639
        %v10224 = vpack.c.b16 %v8648, %v8640
        %v10225 = vpack.c.b16 %v8649, %v8641
        %v10226 = vpack.c.b16 %v8650, %v8642
        %v10227 = vpack.c.b16 %v8659, %v8651
        %v10228 = vpack.c.b16 %v8660, %v8652
        %v10229 = vpack.c.b16 %v8661, %v8653
        %v10230 = vpack.c.b16 %v8662, %v8654
        %v10231 = vpack.c.b16 %v8663, %v8655
        %v10232 = vpack.c.b16 %v8664, %v8656
        %v10233 = vpack.c.b16 %v8665, %v8657
        %v10234 = vpack.c.b16 %v8666, %v8658
        %v10235 = vpack.c.b16 %v8675, %v8667
        %v10236 = vpack.c.b16 %v8676, %v8668
        %v10237 = vpack.c.b16 %v8677, %v8669
        %v10238 = vpack.c.b16 %v8678, %v8670
        %v10239 = vpack.c.b16 %v8679, %v8671
        %v10240 = vpack.c.b16 %v8680, %v8672
        %v10241 = vpack.c.b16 %v8681, %v8673
        %v10242 = vpack.c.b16 %v8682, %v8674
        %v10243 = vpack.c.b16 %v8691, %v8683
        %v10244 = vpack.c.b16 %v8692, %v8684
        %v10245 = vpack.c.b16 %v8693, %v8685
        %v10246 = vpack.c.b16 %v8694, %v8686
        %v10247 = vpack.c.b16 %v8695, %v8687
        %v10248 = vpack.c.b16 %v8696, %v8688
        %v10249 = vpack.c.b16 %v8697, %v8689
        %v10250 = vpack.c.b16 %v8698, %v8690
        %v10251 = vpack.c.b16 %v8707, %v8699
        %v10252 = vpack.c.b16 %v8708, %v8700
        %v10253 = vpack.c.b16 %v8709, %v8701
        %v10254 = vpack.c.b16 %v8710, %v8702
        %v10255 = vpack.c.b16 %v8711, %v8703
        %v10256 = vpack.c.b16 %v8712, %v8704
        %v10257 = vpack.c.b16 %v8713, %v8705
        %v10258 = vpack.c.b16 %v8714, %v8706
        %v10259 = vpack.c.b16 %v8723, %v8715
        %v10260 = vpack.c.b16 %v8724, %v8716
        %v10261 = vpack.c.b16 %v8725, %v8717
        %v10262 = vpack.c.b16 %v8726, %v8718
        %v10263 = vpack.c.b16 %v8727, %v8719
        %v10264 = vpack.c.b16 %v8728, %v8720
        %v10265 = vpack.c.b16 %v8729, %v8721
        %v10266 = vpack.c.b16 %v8730, %v8722
        %11803 = vmatprep.subr.bf16.mxu0 %v8788
        %11804 = vmatpush1.bf16.msra.mxu0 %v8787
        %11805 = vmatprep.subr.bf16.mxu0 %v8780
        %11806 = vmatpush1.bf16.msra.mxu0 %v8779
        %11807 = vmatprep.subr.bf16.mxu0 %v8772
        %11808 = vmatpush1.bf16.msra.mxu0 %v8771
        %11809 = vmatprep.subr.bf16.mxu0 %v8764
        %11810 = vmatpush1.bf16.msra.mxu0 %v8763
        %11811 = vmatprep.subr.bf16.mxu0 %v8756
        %11812 = vmatpush1.bf16.msra.mxu0 %v8755
        %11813 = vmatprep.subr.bf16.mxu0 %v8748
        %11814 = vmatpush1.bf16.msra.mxu0 %v8747
        %11815 = vmatprep.subr.bf16.mxu0 %v8740
        %11816 = vmatpush1.bf16.msra.mxu0 %v8739
        %11817 = vmatprep.subr.bf16.mxu0 %v8732
        %11818 = vmatpush1.bf16.msra.mxu0 %v8731
        %11819 = vmatprep.subr.bf16.mxu0 %v8852
        %11820 = vmatpush2.bf16.msra.mxu0 %v8851
        %11821 = vmatprep.subr.bf16.mxu0 %v8844
        %11822 = vmatpush2.bf16.msra.mxu0 %v8843
        %11823 = vmatprep.subr.bf16.mxu0 %v8836
        %11824 = vmatpush2.bf16.msra.mxu0 %v8835
        %11825 = vmatprep.subr.bf16.mxu0 %v8828
        %11826 = vmatpush2.bf16.msra.mxu0 %v8827
        %11827 = vmatprep.subr.bf16.mxu0 %v8820
        %11828 = vmatpush2.bf16.msra.mxu0 %v8819
        %11829 = vmatprep.subr.bf16.mxu0 %v8812
        %11830 = vmatpush2.bf16.msra.mxu0 %v8811
        %11831 = vmatprep.subr.bf16.mxu0 %v8804
        %11832 = vmatpush2.bf16.msra.mxu0 %v8803
        %11833 = vmatprep.subr.bf16.mxu0 %v8796
        %11834 = vmatpush2.bf16.msra.mxu0 %v8795
        %11835 = vmatprep.mubr.bf16.mxu0 %v4012
        %11836 = vmatmul.mubr.bf16.gmra.mxu0 %v4004
        %v11837 = vpop.f32.mrf.mxu0
        %v11838 = vadd.f32 %v3954, %v11837
        %v11839 = vpop.f32.mrf.mxu0
        %v11840 = vadd.f32 %v3958, %v11839
        %v11841 = vpop.f32.mrf.mxu0
        %v11842 = vpop.f32.mrf.mxu0
        %11843 = vdwg.mxu0
        %11844 = vmatprep.subr.bf16.mxu0 %v8916
        %11845 = vmatpush1.bf16.msra.mxu0 %v8915
        %11846 = vmatprep.subr.bf16.mxu0 %v8908
        %11847 = vmatpush1.bf16.msra.mxu0 %v8907
        %11848 = vmatprep.subr.bf16.mxu0 %v8900
        %11849 = vmatpush1.bf16.msra.mxu0 %v8899
        %11850 = vmatprep.subr.bf16.mxu0 %v8892
        %11851 = vmatpush1.bf16.msra.mxu0 %v8891
        %11852 = vmatprep.subr.bf16.mxu0 %v8884
        %11853 = vmatpush1.bf16.msra.mxu0 %v8883
        %11854 = vmatprep.subr.bf16.mxu0 %v8876
        %11855 = vmatpush1.bf16.msra.mxu0 %v8875
        %11856 = vmatprep.subr.bf16.mxu0 %v8868
        %11857 = vmatpush1.bf16.msra.mxu0 %v8867
        %11858 = vmatprep.subr.bf16.mxu0 %v8860
        %11859 = vmatpush1.bf16.msra.mxu0 %v8859
        %11860 = vmatprep.subr.bf16.mxu0 %v8980
        %11861 = vmatpush2.bf16.msra.mxu0 %v8979
        %11862 = vmatprep.subr.bf16.mxu0 %v8972
        %11863 = vmatpush2.bf16.msra.mxu0 %v8971
        %11864 = vmatprep.subr.bf16.mxu0 %v8964
        %11865 = vmatpush2.bf16.msra.mxu0 %v8963
        %11866 = vmatprep.subr.bf16.mxu0 %v8956
        %11867 = vmatpush2.bf16.msra.mxu0 %v8955
        %11868 = vmatprep.subr.bf16.mxu0 %v8948
        %11869 = vmatpush2.bf16.msra.mxu0 %v8947
        %11870 = vmatprep.subr.bf16.mxu0 %v8940
        %11871 = vmatpush2.bf16.msra.mxu0 %v8939
        %11872 = vmatprep.subr.bf16.mxu0 %v8932
        %11873 = vmatpush2.bf16.msra.mxu0 %v8931
        %11874 = vmatprep.subr.bf16.mxu0 %v8924
        %11875 = vmatpush2.bf16.msra.mxu0 %v8923
        %11876 = vmatprep.mubr.bf16.mxu0 %v4013
        %11877 = vmatmul.mubr.bf16.gmra.mxu0 %v4011
        %v11878 = vpop.f32.mrf.mxu0
        %v11879 = vadd.f32 %v11838, %v11878
        %v11880 = vpop.f32.mrf.mxu0
        %v11881 = vadd.f32 %v11840, %v11880
        %v11882 = vpop.f32.mrf.mxu0
        %v11883 = vpop.f32.mrf.mxu0
        %11884 = vdwg.mxu0
        %11885 = vmatprep.subr.bf16.mxu0 %v9044
        %11886 = vmatpush1.bf16.msra.mxu0 %v9043
        %11887 = vmatprep.subr.bf16.mxu0 %v9036
        %11888 = vmatpush1.bf16.msra.mxu0 %v9035
        %11889 = vmatprep.subr.bf16.mxu0 %v9028
        %11890 = vmatpush1.bf16.msra.mxu0 %v9027
        %11891 = vmatprep.subr.bf16.mxu0 %v9020
        %11892 = vmatpush1.bf16.msra.mxu0 %v9019
        %11893 = vmatprep.subr.bf16.mxu0 %v9012
        %11894 = vmatpush1.bf16.msra.mxu0 %v9011
        %11895 = vmatprep.subr.bf16.mxu0 %v9004
        %11896 = vmatpush1.bf16.msra.mxu0 %v9003
        %11897 = vmatprep.subr.bf16.mxu0 %v8996
        %11898 = vmatpush1.bf16.msra.mxu0 %v8995
        %11899 = vmatprep.subr.bf16.mxu0 %v8988
        %11900 = vmatpush1.bf16.msra.mxu0 %v8987
        %11901 = vmatprep.subr.bf16.mxu0 %v9108
        %11902 = vmatpush2.bf16.msra.mxu0 %v9107
        %11903 = vmatprep.subr.bf16.mxu0 %v9100
        %11904 = vmatpush2.bf16.msra.mxu0 %v9099
        %11905 = vmatprep.subr.bf16.mxu0 %v9092
        %11906 = vmatpush2.bf16.msra.mxu0 %v9091
        %11907 = vmatprep.subr.bf16.mxu0 %v9084
        %11908 = vmatpush2.bf16.msra.mxu0 %v9083
        %11909 = vmatprep.subr.bf16.mxu0 %v9076
        %11910 = vmatpush2.bf16.msra.mxu0 %v9075
        %11911 = vmatprep.subr.bf16.mxu0 %v9068
        %11912 = vmatpush2.bf16.msra.mxu0 %v9067
        %11913 = vmatprep.subr.bf16.mxu0 %v9060
        %11914 = vmatpush2.bf16.msra.mxu0 %v9059
        %11915 = vmatprep.subr.bf16.mxu0 %v9052
        %11916 = vmatpush2.bf16.msra.mxu0 %v9051
        %11917 = vmatprep.mubr.bf16.mxu0 %v4029
        %11918 = vmatmul.mubr.bf16.gmra.mxu0 %v4021
        %v11919 = vpop.f32.mrf.mxu0
        %v11920 = vadd.f32 %v11879, %v11919
        %v11921 = vpop.f32.mrf.mxu0
        %v11922 = vadd.f32 %v11881, %v11921
        %v11923 = vpop.f32.mrf.mxu0
        %v11924 = vpop.f32.mrf.mxu0
        %11925 = vdwg.mxu0
        %11926 = vmatprep.subr.bf16.mxu0 %v9172
        %11927 = vmatpush1.bf16.msra.mxu0 %v9171
        %11928 = vmatprep.subr.bf16.mxu0 %v9164
        %11929 = vmatpush1.bf16.msra.mxu0 %v9163
        %11930 = vmatprep.subr.bf16.mxu0 %v9156
        %11931 = vmatpush1.bf16.msra.mxu0 %v9155
        %11932 = vmatprep.subr.bf16.mxu0 %v9148
        %11933 = vmatpush1.bf16.msra.mxu0 %v9147
        %11934 = vmatprep.subr.bf16.mxu0 %v9140
        %11935 = vmatpush1.bf16.msra.mxu0 %v9139
        %11936 = vmatprep.subr.bf16.mxu0 %v9132
        %11937 = vmatpush1.bf16.msra.mxu0 %v9131
        %11938 = vmatprep.subr.bf16.mxu0 %v9124
        %11939 = vmatpush1.bf16.msra.mxu0 %v9123
        %11940 = vmatprep.subr.bf16.mxu0 %v9116
        %11941 = vmatpush1.bf16.msra.mxu0 %v9115
        %11942 = vmatprep.subr.bf16.mxu0 %v9236
        %11943 = vmatpush2.bf16.msra.mxu0 %v9235
        %11944 = vmatprep.subr.bf16.mxu0 %v9228
        %11945 = vmatpush2.bf16.msra.mxu0 %v9227
        %11946 = vmatprep.subr.bf16.mxu0 %v9220
        %11947 = vmatpush2.bf16.msra.mxu0 %v9219
        %11948 = vmatprep.subr.bf16.mxu0 %v9212
        %11949 = vmatpush2.bf16.msra.mxu0 %v9211
        %11950 = vmatprep.subr.bf16.mxu0 %v9204
        %11951 = vmatpush2.bf16.msra.mxu0 %v9203
        %11952 = vmatprep.subr.bf16.mxu0 %v9196
        %11953 = vmatpush2.bf16.msra.mxu0 %v9195
        %11954 = vmatprep.subr.bf16.mxu0 %v9188
        %11955 = vmatpush2.bf16.msra.mxu0 %v9187
        %11956 = vmatprep.subr.bf16.mxu0 %v9180
        %11957 = vmatpush2.bf16.msra.mxu0 %v9179
        %11958 = vmatprep.mubr.bf16.mxu0 %v4030
        %11959 = vmatmul.mubr.bf16.gmra.mxu0 %v4028
        %v11960 = vpop.f32.mrf.mxu0
        %v11961 = vadd.f32 %v11920, %v11960
        %v11962 = vpop.f32.mrf.mxu0
        %v11963 = vadd.f32 %v11922, %v11962
        %v11964 = vpop.f32.mrf.mxu0
        %v11965 = vpop.f32.mrf.mxu0
        %11966 = vdwg.mxu0
        %11967 = vmatprep.subr.bf16.mxu0 %v9300
        %11968 = vmatpush1.bf16.msra.mxu0 %v9299
        %11969 = vmatprep.subr.bf16.mxu0 %v9292
        %11970 = vmatpush1.bf16.msra.mxu0 %v9291
        %11971 = vmatprep.subr.bf16.mxu0 %v9284
        %11972 = vmatpush1.bf16.msra.mxu0 %v9283
        %11973 = vmatprep.subr.bf16.mxu0 %v9276
        %11974 = vmatpush1.bf16.msra.mxu0 %v9275
        %11975 = vmatprep.subr.bf16.mxu0 %v9268
        %11976 = vmatpush1.bf16.msra.mxu0 %v9267
        %11977 = vmatprep.subr.bf16.mxu0 %v9260
        %11978 = vmatpush1.bf16.msra.mxu0 %v9259
        %11979 = vmatprep.subr.bf16.mxu0 %v9252
        %11980 = vmatpush1.bf16.msra.mxu0 %v9251
        %11981 = vmatprep.subr.bf16.mxu0 %v9244
        %11982 = vmatpush1.bf16.msra.mxu0 %v9243
        %11983 = vmatprep.subr.bf16.mxu0 %v9364
        %11984 = vmatpush2.bf16.msra.mxu0 %v9363
        %11985 = vmatprep.subr.bf16.mxu0 %v9356
        %11986 = vmatpush2.bf16.msra.mxu0 %v9355
        %11987 = vmatprep.subr.bf16.mxu0 %v9348
        %11988 = vmatpush2.bf16.msra.mxu0 %v9347
        %11989 = vmatprep.subr.bf16.mxu0 %v9340
        %11990 = vmatpush2.bf16.msra.mxu0 %v9339
        %11991 = vmatprep.subr.bf16.mxu0 %v9332
        %11992 = vmatpush2.bf16.msra.mxu0 %v9331
        %11993 = vmatprep.subr.bf16.mxu0 %v9324
        %11994 = vmatpush2.bf16.msra.mxu0 %v9323
        %11995 = vmatprep.subr.bf16.mxu0 %v9316
        %11996 = vmatpush2.bf16.msra.mxu0 %v9315
        %11997 = vmatprep.subr.bf16.mxu0 %v9308
        %11998 = vmatpush2.bf16.msra.mxu0 %v9307
        %11999 = vmatprep.mubr.bf16.mxu0 %v4046
        %12000 = vmatmul.mubr.bf16.gmra.mxu0 %v4038
        %v12001 = vpop.f32.mrf.mxu0
        %v12002 = vadd.f32 %v11961, %v12001
        %v12003 = vpop.f32.mrf.mxu0
        %v12004 = vadd.f32 %v11963, %v12003
        %v12005 = vpop.f32.mrf.mxu0
        %v12006 = vpop.f32.mrf.mxu0
        %12007 = vdwg.mxu0
        %12008 = vmatprep.subr.bf16.mxu0 %v9428
        %12009 = vmatpush1.bf16.msra.mxu0 %v9427
        %12010 = vmatprep.subr.bf16.mxu0 %v9420
        %12011 = vmatpush1.bf16.msra.mxu0 %v9419
        %12012 = vmatprep.subr.bf16.mxu0 %v9412
        %12013 = vmatpush1.bf16.msra.mxu0 %v9411
        %12014 = vmatprep.subr.bf16.mxu0 %v9404
        %12015 = vmatpush1.bf16.msra.mxu0 %v9403
        %12016 = vmatprep.subr.bf16.mxu0 %v9396
        %12017 = vmatpush1.bf16.msra.mxu0 %v9395
        %12018 = vmatprep.subr.bf16.mxu0 %v9388
        %12019 = vmatpush1.bf16.msra.mxu0 %v9387
        %12020 = vmatprep.subr.bf16.mxu0 %v9380
        %12021 = vmatpush1.bf16.msra.mxu0 %v9379
        %12022 = vmatprep.subr.bf16.mxu0 %v9372
        %12023 = vmatpush1.bf16.msra.mxu0 %v9371
        %12024 = vmatprep.subr.bf16.mxu0 %v9492
        %12025 = vmatpush2.bf16.msra.mxu0 %v9491
        %12026 = vmatprep.subr.bf16.mxu0 %v9484
        %12027 = vmatpush2.bf16.msra.mxu0 %v9483
        %12028 = vmatprep.subr.bf16.mxu0 %v9476
        %12029 = vmatpush2.bf16.msra.mxu0 %v9475
        %12030 = vmatprep.subr.bf16.mxu0 %v9468
        %12031 = vmatpush2.bf16.msra.mxu0 %v9467
        %12032 = vmatprep.subr.bf16.mxu0 %v9460
        %12033 = vmatpush2.bf16.msra.mxu0 %v9459
        %12034 = vmatprep.subr.bf16.mxu0 %v9452
        %12035 = vmatpush2.bf16.msra.mxu0 %v9451
        %12036 = vmatprep.subr.bf16.mxu0 %v9444
        %12037 = vmatpush2.bf16.msra.mxu0 %v9443
        %12038 = vmatprep.subr.bf16.mxu0 %v9436
        %12039 = vmatpush2.bf16.msra.mxu0 %v9435
        %12040 = vmatprep.mubr.bf16.mxu0 %v4047
        %12041 = vmatmul.mubr.bf16.gmra.mxu0 %v4045
        %v12042 = vpop.f32.mrf.mxu0
        %v12043 = vadd.f32 %v12002, %v12042
        %v12044 = vpop.f32.mrf.mxu0
        %v12045 = vadd.f32 %v12004, %v12044
        %v12046 = vpop.f32.mrf.mxu0
        %v12047 = vpop.f32.mrf.mxu0
        %12048 = vdwg.mxu0
        %12049 = vmatprep.subr.bf16.mxu0 %v9556
        %12050 = vmatpush1.bf16.msra.mxu0 %v9555
        %12051 = vmatprep.subr.bf16.mxu0 %v9548
        %12052 = vmatpush1.bf16.msra.mxu0 %v9547
        %12053 = vmatprep.subr.bf16.mxu0 %v9540
        %12054 = vmatpush1.bf16.msra.mxu0 %v9539
        %12055 = vmatprep.subr.bf16.mxu0 %v9532
        %12056 = vmatpush1.bf16.msra.mxu0 %v9531
        %12057 = vmatprep.subr.bf16.mxu0 %v9524
        %12058 = vmatpush1.bf16.msra.mxu0 %v9523
        %12059 = vmatprep.subr.bf16.mxu0 %v9516
        %12060 = vmatpush1.bf16.msra.mxu0 %v9515
        %12061 = vmatprep.subr.bf16.mxu0 %v9508
        %12062 = vmatpush1.bf16.msra.mxu0 %v9507
        %12063 = vmatprep.subr.bf16.mxu0 %v9500
        %12064 = vmatpush1.bf16.msra.mxu0 %v9499
        %12065 = vmatprep.subr.bf16.mxu0 %v9620
        %12066 = vmatpush2.bf16.msra.mxu0 %v9619
        %12067 = vmatprep.subr.bf16.mxu0 %v9612
        %12068 = vmatpush2.bf16.msra.mxu0 %v9611
        %12069 = vmatprep.subr.bf16.mxu0 %v9604
        %12070 = vmatpush2.bf16.msra.mxu0 %v9603
        %12071 = vmatprep.subr.bf16.mxu0 %v9596
        %12072 = vmatpush2.bf16.msra.mxu0 %v9595
        %12073 = vmatprep.subr.bf16.mxu0 %v9588
        %12074 = vmatpush2.bf16.msra.mxu0 %v9587
        %12075 = vmatprep.subr.bf16.mxu0 %v9580
        %12076 = vmatpush2.bf16.msra.mxu0 %v9579
        %12077 = vmatprep.subr.bf16.mxu0 %v9572
        %12078 = vmatpush2.bf16.msra.mxu0 %v9571
        %12079 = vmatprep.subr.bf16.mxu0 %v9564
        %12080 = vmatpush2.bf16.msra.mxu0 %v9563
        %12081 = vmatprep.mubr.bf16.mxu0 %v4063
        %12082 = vmatmul.mubr.bf16.gmra.mxu0 %v4055
        %v12083 = vpop.f32.mrf.mxu0
        %v12084 = vadd.f32 %v12043, %v12083
        %v12085 = vpop.f32.mrf.mxu0
        %v12086 = vadd.f32 %v12045, %v12085
        %v12087 = vpop.f32.mrf.mxu0
        %v12088 = vpop.f32.mrf.mxu0
        %12089 = vdwg.mxu0
        %12090 = vmatprep.subr.bf16.mxu0 %v9684
        %12091 = vmatpush1.bf16.msra.mxu0 %v9683
        %12092 = vmatprep.subr.bf16.mxu0 %v9676
        %12093 = vmatpush1.bf16.msra.mxu0 %v9675
        %12094 = vmatprep.subr.bf16.mxu0 %v9668
        %12095 = vmatpush1.bf16.msra.mxu0 %v9667
        %12096 = vmatprep.subr.bf16.mxu0 %v9660
        %12097 = vmatpush1.bf16.msra.mxu0 %v9659
        %12098 = vmatprep.subr.bf16.mxu0 %v9652
        %12099 = vmatpush1.bf16.msra.mxu0 %v9651
        %12100 = vmatprep.subr.bf16.mxu0 %v9644
        %12101 = vmatpush1.bf16.msra.mxu0 %v9643
        %12102 = vmatprep.subr.bf16.mxu0 %v9636
        %12103 = vmatpush1.bf16.msra.mxu0 %v9635
        %12104 = vmatprep.subr.bf16.mxu0 %v9628
        %12105 = vmatpush1.bf16.msra.mxu0 %v9627
        %12106 = vmatprep.subr.bf16.mxu0 %v9748
        %12107 = vmatpush2.bf16.msra.mxu0 %v9747
        %12108 = vmatprep.subr.bf16.mxu0 %v9740
        %12109 = vmatpush2.bf16.msra.mxu0 %v9739
        %12110 = vmatprep.subr.bf16.mxu0 %v9732
        %12111 = vmatpush2.bf16.msra.mxu0 %v9731
        %12112 = vmatprep.subr.bf16.mxu0 %v9724
        %12113 = vmatpush2.bf16.msra.mxu0 %v9723
        %12114 = vmatprep.subr.bf16.mxu0 %v9716
        %12115 = vmatpush2.bf16.msra.mxu0 %v9715
        %12116 = vmatprep.subr.bf16.mxu0 %v9708
        %12117 = vmatpush2.bf16.msra.mxu0 %v9707
        %12118 = vmatprep.subr.bf16.mxu0 %v9700
        %12119 = vmatpush2.bf16.msra.mxu0 %v9699
        %12120 = vmatprep.subr.bf16.mxu0 %v9692
        %12121 = vmatpush2.bf16.msra.mxu0 %v9691
        %12122 = vmatprep.mubr.bf16.mxu0 %v4064
        %12123 = vmatmul.mubr.bf16.gmra.mxu0 %v4062
        %v12124 = vpop.f32.mrf.mxu0
        %v12125 = vadd.f32 %v12084, %v12124
        %v12126 = vpop.f32.mrf.mxu0
        %v12127 = vadd.f32 %v12086, %v12126
        %v12128 = vpop.f32.mrf.mxu0
        %v12129 = vpop.f32.mrf.mxu0
        %12130 = vdwg.mxu0
        %12131 = vmatprep.subr.bf16.mxu0 %v9812
        %12132 = vmatpush1.bf16.msra.mxu0 %v9811
        %12133 = vmatprep.subr.bf16.mxu0 %v9804
        %12134 = vmatpush1.bf16.msra.mxu0 %v9803
        %12135 = vmatprep.subr.bf16.mxu0 %v9796
        %12136 = vmatpush1.bf16.msra.mxu0 %v9795
        %12137 = vmatprep.subr.bf16.mxu0 %v9788
        %12138 = vmatpush1.bf16.msra.mxu0 %v9787
        %12139 = vmatprep.subr.bf16.mxu0 %v9780
        %12140 = vmatpush1.bf16.msra.mxu0 %v9779
        %12141 = vmatprep.subr.bf16.mxu0 %v9772
        %12142 = vmatpush1.bf16.msra.mxu0 %v9771
        %12143 = vmatprep.subr.bf16.mxu0 %v9764
        %12144 = vmatpush1.bf16.msra.mxu0 %v9763
        %12145 = vmatprep.subr.bf16.mxu0 %v9756
        %12146 = vmatpush1.bf16.msra.mxu0 %v9755
        %12147 = vmatprep.subr.bf16.mxu0 %v9876
        %12148 = vmatpush2.bf16.msra.mxu0 %v9875
        %12149 = vmatprep.subr.bf16.mxu0 %v9868
        %12150 = vmatpush2.bf16.msra.mxu0 %v9867
        %12151 = vmatprep.subr.bf16.mxu0 %v9860
        %12152 = vmatpush2.bf16.msra.mxu0 %v9859
        %12153 = vmatprep.subr.bf16.mxu0 %v9852
        %12154 = vmatpush2.bf16.msra.mxu0 %v9851
        %12155 = vmatprep.subr.bf16.mxu0 %v9844
        %12156 = vmatpush2.bf16.msra.mxu0 %v9843
        %12157 = vmatprep.subr.bf16.mxu0 %v9836
        %12158 = vmatpush2.bf16.msra.mxu0 %v9835
        %12159 = vmatprep.subr.bf16.mxu0 %v9828
        %12160 = vmatpush2.bf16.msra.mxu0 %v9827
        %12161 = vmatprep.subr.bf16.mxu0 %v9820
        %12162 = vmatpush2.bf16.msra.mxu0 %v9819
        %12163 = vmatprep.mubr.bf16.mxu0 %v4080
        %12164 = vmatmul.mubr.bf16.gmra.mxu0 %v4072
        %v12165 = vpop.f32.mrf.mxu0
        %v12166 = vadd.f32 %v12125, %v12165
        %v12167 = vpop.f32.mrf.mxu0
        %v12168 = vadd.f32 %v12127, %v12167
        %v12169 = vpop.f32.mrf.mxu0
        %v12170 = vpop.f32.mrf.mxu0
        %12171 = vdwg.mxu0
        %12172 = vmatprep.subr.bf16.mxu0 %v9940
        %12173 = vmatpush1.bf16.msra.mxu0 %v9939
        %12174 = vmatprep.subr.bf16.mxu0 %v9932
        %12175 = vmatpush1.bf16.msra.mxu0 %v9931
        %12176 = vmatprep.subr.bf16.mxu0 %v9924
        %12177 = vmatpush1.bf16.msra.mxu0 %v9923
        %12178 = vmatprep.subr.bf16.mxu0 %v9916
        %12179 = vmatpush1.bf16.msra.mxu0 %v9915
        %12180 = vmatprep.subr.bf16.mxu0 %v9908
        %12181 = vmatpush1.bf16.msra.mxu0 %v9907
        %12182 = vmatprep.subr.bf16.mxu0 %v9900
        %12183 = vmatpush1.bf16.msra.mxu0 %v9899
        %12184 = vmatprep.subr.bf16.mxu0 %v9892
        %12185 = vmatpush1.bf16.msra.mxu0 %v9891
        %12186 = vmatprep.subr.bf16.mxu0 %v9884
        %12187 = vmatpush1.bf16.msra.mxu0 %v9883
        %12188 = vmatprep.subr.bf16.mxu0 %v10004
        %12189 = vmatpush2.bf16.msra.mxu0 %v10003
        %12190 = vmatprep.subr.bf16.mxu0 %v9996
        %12191 = vmatpush2.bf16.msra.mxu0 %v9995
        %12192 = vmatprep.subr.bf16.mxu0 %v9988
        %12193 = vmatpush2.bf16.msra.mxu0 %v9987
        %12194 = vmatprep.subr.bf16.mxu0 %v9980
        %12195 = vmatpush2.bf16.msra.mxu0 %v9979
        %12196 = vmatprep.subr.bf16.mxu0 %v9972
        %12197 = vmatpush2.bf16.msra.mxu0 %v9971
        %12198 = vmatprep.subr.bf16.mxu0 %v9964
        %12199 = vmatpush2.bf16.msra.mxu0 %v9963
        %12200 = vmatprep.subr.bf16.mxu0 %v9956
        %12201 = vmatpush2.bf16.msra.mxu0 %v9955
        %12202 = vmatprep.subr.bf16.mxu0 %v9948
        %12203 = vmatpush2.bf16.msra.mxu0 %v9947
        %12204 = vmatprep.mubr.bf16.mxu0 %v4081
        %12205 = vmatmul.mubr.bf16.gmra.mxu0 %v4079
        %v12206 = vpop.f32.mrf.mxu0
        %v12207 = vadd.f32 %v12166, %v12206
        %v12208 = vpop.f32.mrf.mxu0
        %v12209 = vadd.f32 %v12168, %v12208
        %v12210 = vpop.f32.mrf.mxu0
        %v12211 = vpop.f32.mrf.mxu0
        %12212 = vdwg.mxu0
        %12213 = vmatprep.subr.bf16.mxu0 %v10068
        %12214 = vmatpush1.bf16.msra.mxu0 %v10067
        %12215 = vmatprep.subr.bf16.mxu0 %v10060
        %12216 = vmatpush1.bf16.msra.mxu0 %v10059
        %12217 = vmatprep.subr.bf16.mxu0 %v10052
        %12218 = vmatpush1.bf16.msra.mxu0 %v10051
        %12219 = vmatprep.subr.bf16.mxu0 %v10044
        %12220 = vmatpush1.bf16.msra.mxu0 %v10043
        %12221 = vmatprep.subr.bf16.mxu0 %v10036
        %12222 = vmatpush1.bf16.msra.mxu0 %v10035
        %12223 = vmatprep.subr.bf16.mxu0 %v10028
        %12224 = vmatpush1.bf16.msra.mxu0 %v10027
        %12225 = vmatprep.subr.bf16.mxu0 %v10020
        %12226 = vmatpush1.bf16.msra.mxu0 %v10019
        %12227 = vmatprep.subr.bf16.mxu0 %v10012
        %12228 = vmatpush1.bf16.msra.mxu0 %v10011
        %12229 = vmatprep.subr.bf16.mxu0 %v10132
        %12230 = vmatpush2.bf16.msra.mxu0 %v10131
        %12231 = vmatprep.subr.bf16.mxu0 %v10124
        %12232 = vmatpush2.bf16.msra.mxu0 %v10123
        %12233 = vmatprep.subr.bf16.mxu0 %v10116
        %12234 = vmatpush2.bf16.msra.mxu0 %v10115
        %12235 = vmatprep.subr.bf16.mxu0 %v10108
        %12236 = vmatpush2.bf16.msra.mxu0 %v10107
        %12237 = vmatprep.subr.bf16.mxu0 %v10100
        %12238 = vmatpush2.bf16.msra.mxu0 %v10099
        %12239 = vmatprep.subr.bf16.mxu0 %v10092
        %12240 = vmatpush2.bf16.msra.mxu0 %v10091
        %12241 = vmatprep.subr.bf16.mxu0 %v10084
        %12242 = vmatpush2.bf16.msra.mxu0 %v10083
        %12243 = vmatprep.subr.bf16.mxu0 %v10076
        %12244 = vmatpush2.bf16.msra.mxu0 %v10075
        %12245 = vmatprep.mubr.bf16.mxu0 %v4097
        %12246 = vmatmul.mubr.bf16.gmra.mxu0 %v4089
        %v12247 = vpop.f32.mrf.mxu0
        %v12248 = vadd.f32 %v12207, %v12247
        %v12249 = vpop.f32.mrf.mxu0
        %v12250 = vadd.f32 %v12209, %v12249
        %v12251 = vpop.f32.mrf.mxu0
        %v12252 = vpop.f32.mrf.mxu0
        %12253 = vdwg.mxu0
        %12254 = vmatprep.subr.bf16.mxu0 %v10196
        %12255 = vmatpush1.bf16.msra.mxu0 %v10195
        %12256 = vmatprep.subr.bf16.mxu0 %v10188
        %12257 = vmatpush1.bf16.msra.mxu0 %v10187
        %12258 = vmatprep.subr.bf16.mxu0 %v10180
        %12259 = vmatpush1.bf16.msra.mxu0 %v10179
        %12260 = vmatprep.subr.bf16.mxu0 %v10172
        %12261 = vmatpush1.bf16.msra.mxu0 %v10171
        %12262 = vmatprep.subr.bf16.mxu0 %v10164
        %12263 = vmatpush1.bf16.msra.mxu0 %v10163
        %12264 = vmatprep.subr.bf16.mxu0 %v10156
        %12265 = vmatpush1.bf16.msra.mxu0 %v10155
        %12266 = vmatprep.subr.bf16.mxu0 %v10148
        %12267 = vmatpush1.bf16.msra.mxu0 %v10147
        %12268 = vmatprep.subr.bf16.mxu0 %v10140
        %12269 = vmatpush1.bf16.msra.mxu0 %v10139
        %12270 = vmatprep.subr.bf16.mxu0 %v10260
        %12271 = vmatpush2.bf16.msra.mxu0 %v10259
        %12272 = vmatprep.subr.bf16.mxu0 %v10252
        %12273 = vmatpush2.bf16.msra.mxu0 %v10251
        %12274 = vmatprep.subr.bf16.mxu0 %v10244
        %12275 = vmatpush2.bf16.msra.mxu0 %v10243
        %12276 = vmatprep.subr.bf16.mxu0 %v10236
        %12277 = vmatpush2.bf16.msra.mxu0 %v10235
        %12278 = vmatprep.subr.bf16.mxu0 %v10228
        %12279 = vmatpush2.bf16.msra.mxu0 %v10227
        %12280 = vmatprep.subr.bf16.mxu0 %v10220
        %12281 = vmatpush2.bf16.msra.mxu0 %v10219
        %12282 = vmatprep.subr.bf16.mxu0 %v10212
        %12283 = vmatpush2.bf16.msra.mxu0 %v10211
        %12284 = vmatprep.subr.bf16.mxu0 %v10204
        %12285 = vmatpush2.bf16.msra.mxu0 %v10203
        %12286 = vmatprep.mubr.bf16.mxu0 %v4098
        %12287 = vmatmul.mubr.bf16.gmra.mxu0 %v4096
        %v12288 = vpop.f32.mrf.mxu0
        %v12289 = vadd.f32 %v12248, %v12288
        %v12290 = vpop.f32.mrf.mxu0
        %v12291 = vadd.f32 %v12250, %v12290
        %v12292 = vpop.f32.mrf.mxu0
        %v12293 = vpop.f32.mrf.mxu0
        %12294 = vdwg.mxu0
        %12295 = vmatprep.subr.bf16.mxu0 %v8790
        %12296 = vmatpush1.bf16.msra.mxu0 %v8789
        %12297 = vmatprep.subr.bf16.mxu0 %v8782
        %12298 = vmatpush1.bf16.msra.mxu0 %v8781
        %12299 = vmatprep.subr.bf16.mxu0 %v8774
        %12300 = vmatpush1.bf16.msra.mxu0 %v8773
        %12301 = vmatprep.subr.bf16.mxu0 %v8766
        %12302 = vmatpush1.bf16.msra.mxu0 %v8765
        %12303 = vmatprep.subr.bf16.mxu0 %v8758
        %12304 = vmatpush1.bf16.msra.mxu0 %v8757
        %12305 = vmatprep.subr.bf16.mxu0 %v8750
        %12306 = vmatpush1.bf16.msra.mxu0 %v8749
        %12307 = vmatprep.subr.bf16.mxu0 %v8742
        %12308 = vmatpush1.bf16.msra.mxu0 %v8741
        %12309 = vmatprep.subr.bf16.mxu0 %v8734
        %12310 = vmatpush1.bf16.msra.mxu0 %v8733
        %12311 = vmatprep.subr.bf16.mxu0 %v8854
        %12312 = vmatpush2.bf16.msra.mxu0 %v8853
        %12313 = vmatprep.subr.bf16.mxu0 %v8846
        %12314 = vmatpush2.bf16.msra.mxu0 %v8845
        %12315 = vmatprep.subr.bf16.mxu0 %v8838
        %12316 = vmatpush2.bf16.msra.mxu0 %v8837
        %12317 = vmatprep.subr.bf16.mxu0 %v8830
        %12318 = vmatpush2.bf16.msra.mxu0 %v8829
        %12319 = vmatprep.subr.bf16.mxu0 %v8822
        %12320 = vmatpush2.bf16.msra.mxu0 %v8821
        %12321 = vmatprep.subr.bf16.mxu0 %v8814
        %12322 = vmatpush2.bf16.msra.mxu0 %v8813
        %12323 = vmatprep.subr.bf16.mxu0 %v8806
        %12324 = vmatpush2.bf16.msra.mxu0 %v8805
        %12325 = vmatprep.subr.bf16.mxu0 %v8798
        %12326 = vmatpush2.bf16.msra.mxu0 %v8797
        %12327 = vmatprep.mubr.bf16.mxu0 %v4012
        %12328 = vmatmul.mubr.bf16.gmra.mxu0 %v4004
        %v12329 = vpop.f32.mrf.mxu0
        %v12330 = vadd.f32 %v3962, %v12329
        %v12331 = vpop.f32.mrf.mxu0
        %v12332 = vadd.f32 %v3966, %v12331
        %v12333 = vpop.f32.mrf.mxu0
        %v12334 = vpop.f32.mrf.mxu0
        %12335 = vdwg.mxu0
        %12336 = vmatprep.subr.bf16.mxu0 %v8918
        %12337 = vmatpush1.bf16.msra.mxu0 %v8917
        %12338 = vmatprep.subr.bf16.mxu0 %v8910
        %12339 = vmatpush1.bf16.msra.mxu0 %v8909
        %12340 = vmatprep.subr.bf16.mxu0 %v8902
        %12341 = vmatpush1.bf16.msra.mxu0 %v8901
        %12342 = vmatprep.subr.bf16.mxu0 %v8894
        %12343 = vmatpush1.bf16.msra.mxu0 %v8893
        %12344 = vmatprep.subr.bf16.mxu0 %v8886
        %12345 = vmatpush1.bf16.msra.mxu0 %v8885
        %12346 = vmatprep.subr.bf16.mxu0 %v8878
        %12347 = vmatpush1.bf16.msra.mxu0 %v8877
        %12348 = vmatprep.subr.bf16.mxu0 %v8870
        %12349 = vmatpush1.bf16.msra.mxu0 %v8869
        %12350 = vmatprep.subr.bf16.mxu0 %v8862
        %12351 = vmatpush1.bf16.msra.mxu0 %v8861
        %12352 = vmatprep.subr.bf16.mxu0 %v8982
        %12353 = vmatpush2.bf16.msra.mxu0 %v8981
        %12354 = vmatprep.subr.bf16.mxu0 %v8974
        %12355 = vmatpush2.bf16.msra.mxu0 %v8973
        %12356 = vmatprep.subr.bf16.mxu0 %v8966
        %12357 = vmatpush2.bf16.msra.mxu0 %v8965
        %12358 = vmatprep.subr.bf16.mxu0 %v8958
        %12359 = vmatpush2.bf16.msra.mxu0 %v8957
        %12360 = vmatprep.subr.bf16.mxu0 %v8950
        %12361 = vmatpush2.bf16.msra.mxu0 %v8949
        %12362 = vmatprep.subr.bf16.mxu0 %v8942
        %12363 = vmatpush2.bf16.msra.mxu0 %v8941
        %12364 = vmatprep.subr.bf16.mxu0 %v8934
        %12365 = vmatpush2.bf16.msra.mxu0 %v8933
        %12366 = vmatprep.subr.bf16.mxu0 %v8926
        %12367 = vmatpush2.bf16.msra.mxu0 %v8925
        %12368 = vmatprep.mubr.bf16.mxu0 %v4013
        %12369 = vmatmul.mubr.bf16.gmra.mxu0 %v4011
        %v12370 = vpop.f32.mrf.mxu0
        %v12371 = vadd.f32 %v12330, %v12370
        %v12372 = vpop.f32.mrf.mxu0
        %v12373 = vadd.f32 %v12332, %v12372
        %v12374 = vpop.f32.mrf.mxu0
        %v12375 = vpop.f32.mrf.mxu0
        %12376 = vdwg.mxu0
        %12377 = vmatprep.subr.bf16.mxu0 %v9046
        %12378 = vmatpush1.bf16.msra.mxu0 %v9045
        %12379 = vmatprep.subr.bf16.mxu0 %v9038
        %12380 = vmatpush1.bf16.msra.mxu0 %v9037
        %12381 = vmatprep.subr.bf16.mxu0 %v9030
        %12382 = vmatpush1.bf16.msra.mxu0 %v9029
        %12383 = vmatprep.subr.bf16.mxu0 %v9022
        %12384 = vmatpush1.bf16.msra.mxu0 %v9021
        %12385 = vmatprep.subr.bf16.mxu0 %v9014
        %12386 = vmatpush1.bf16.msra.mxu0 %v9013
        %12387 = vmatprep.subr.bf16.mxu0 %v9006
        %12388 = vmatpush1.bf16.msra.mxu0 %v9005
        %12389 = vmatprep.subr.bf16.mxu0 %v8998
        %12390 = vmatpush1.bf16.msra.mxu0 %v8997
        %12391 = vmatprep.subr.bf16.mxu0 %v8990
        %12392 = vmatpush1.bf16.msra.mxu0 %v8989
        %12393 = vmatprep.subr.bf16.mxu0 %v9110
        %12394 = vmatpush2.bf16.msra.mxu0 %v9109
        %12395 = vmatprep.subr.bf16.mxu0 %v9102
        %12396 = vmatpush2.bf16.msra.mxu0 %v9101
        %12397 = vmatprep.subr.bf16.mxu0 %v9094
        %12398 = vmatpush2.bf16.msra.mxu0 %v9093
        %12399 = vmatprep.subr.bf16.mxu0 %v9086
        %12400 = vmatpush2.bf16.msra.mxu0 %v9085
        %12401 = vmatprep.subr.bf16.mxu0 %v9078
        %12402 = vmatpush2.bf16.msra.mxu0 %v9077
        %12403 = vmatprep.subr.bf16.mxu0 %v9070
        %12404 = vmatpush2.bf16.msra.mxu0 %v9069
        %12405 = vmatprep.subr.bf16.mxu0 %v9062
        %12406 = vmatpush2.bf16.msra.mxu0 %v9061
        %12407 = vmatprep.subr.bf16.mxu0 %v9054
        %12408 = vmatpush2.bf16.msra.mxu0 %v9053
        %12409 = vmatprep.mubr.bf16.mxu0 %v4029
        %12410 = vmatmul.mubr.bf16.gmra.mxu0 %v4021
        %v12411 = vpop.f32.mrf.mxu0
        %v12412 = vadd.f32 %v12371, %v12411
        %v12413 = vpop.f32.mrf.mxu0
        %v12414 = vadd.f32 %v12373, %v12413
        %v12415 = vpop.f32.mrf.mxu0
        %v12416 = vpop.f32.mrf.mxu0
        %12417 = vdwg.mxu0
        %12418 = vmatprep.subr.bf16.mxu0 %v9174
        %12419 = vmatpush1.bf16.msra.mxu0 %v9173
        %12420 = vmatprep.subr.bf16.mxu0 %v9166
        %12421 = vmatpush1.bf16.msra.mxu0 %v9165
        %12422 = vmatprep.subr.bf16.mxu0 %v9158
        %12423 = vmatpush1.bf16.msra.mxu0 %v9157
        %12424 = vmatprep.subr.bf16.mxu0 %v9150
        %12425 = vmatpush1.bf16.msra.mxu0 %v9149
        %12426 = vmatprep.subr.bf16.mxu0 %v9142
        %12427 = vmatpush1.bf16.msra.mxu0 %v9141
        %12428 = vmatprep.subr.bf16.mxu0 %v9134
        %12429 = vmatpush1.bf16.msra.mxu0 %v9133
        %12430 = vmatprep.subr.bf16.mxu0 %v9126
        %12431 = vmatpush1.bf16.msra.mxu0 %v9125
        %12432 = vmatprep.subr.bf16.mxu0 %v9118
        %12433 = vmatpush1.bf16.msra.mxu0 %v9117
        %12434 = vmatprep.subr.bf16.mxu0 %v9238
        %12435 = vmatpush2.bf16.msra.mxu0 %v9237
        %12436 = vmatprep.subr.bf16.mxu0 %v9230
        %12437 = vmatpush2.bf16.msra.mxu0 %v9229
        %12438 = vmatprep.subr.bf16.mxu0 %v9222
        %12439 = vmatpush2.bf16.msra.mxu0 %v9221
        %12440 = vmatprep.subr.bf16.mxu0 %v9214
        %12441 = vmatpush2.bf16.msra.mxu0 %v9213
        %12442 = vmatprep.subr.bf16.mxu0 %v9206
        %12443 = vmatpush2.bf16.msra.mxu0 %v9205
        %12444 = vmatprep.subr.bf16.mxu0 %v9198
        %12445 = vmatpush2.bf16.msra.mxu0 %v9197
        %12446 = vmatprep.subr.bf16.mxu0 %v9190
        %12447 = vmatpush2.bf16.msra.mxu0 %v9189
        %12448 = vmatprep.subr.bf16.mxu0 %v9182
        %12449 = vmatpush2.bf16.msra.mxu0 %v9181
        %12450 = vmatprep.mubr.bf16.mxu0 %v4030
        %12451 = vmatmul.mubr.bf16.gmra.mxu0 %v4028
        %v12452 = vpop.f32.mrf.mxu0
        %v12453 = vadd.f32 %v12412, %v12452
        %v12454 = vpop.f32.mrf.mxu0
        %v12455 = vadd.f32 %v12414, %v12454
        %v12456 = vpop.f32.mrf.mxu0
        %v12457 = vpop.f32.mrf.mxu0
        %12458 = vdwg.mxu0
        %12459 = vmatprep.subr.bf16.mxu0 %v9302
        %12460 = vmatpush1.bf16.msra.mxu0 %v9301
        %12461 = vmatprep.subr.bf16.mxu0 %v9294
        %12462 = vmatpush1.bf16.msra.mxu0 %v9293
        %12463 = vmatprep.subr.bf16.mxu0 %v9286
        %12464 = vmatpush1.bf16.msra.mxu0 %v9285
        %12465 = vmatprep.subr.bf16.mxu0 %v9278
        %12466 = vmatpush1.bf16.msra.mxu0 %v9277
        %12467 = vmatprep.subr.bf16.mxu0 %v9270
        %12468 = vmatpush1.bf16.msra.mxu0 %v9269
        %12469 = vmatprep.subr.bf16.mxu0 %v9262
        %12470 = vmatpush1.bf16.msra.mxu0 %v9261
        %12471 = vmatprep.subr.bf16.mxu0 %v9254
        %12472 = vmatpush1.bf16.msra.mxu0 %v9253
        %12473 = vmatprep.subr.bf16.mxu0 %v9246
        %12474 = vmatpush1.bf16.msra.mxu0 %v9245
        %12475 = vmatprep.subr.bf16.mxu0 %v9366
        %12476 = vmatpush2.bf16.msra.mxu0 %v9365
        %12477 = vmatprep.subr.bf16.mxu0 %v9358
        %12478 = vmatpush2.bf16.msra.mxu0 %v9357
        %12479 = vmatprep.subr.bf16.mxu0 %v9350
        %12480 = vmatpush2.bf16.msra.mxu0 %v9349
        %12481 = vmatprep.subr.bf16.mxu0 %v9342
        %12482 = vmatpush2.bf16.msra.mxu0 %v9341
        %12483 = vmatprep.subr.bf16.mxu0 %v9334
        %12484 = vmatpush2.bf16.msra.mxu0 %v9333
        %12485 = vmatprep.subr.bf16.mxu0 %v9326
        %12486 = vmatpush2.bf16.msra.mxu0 %v9325
        %12487 = vmatprep.subr.bf16.mxu0 %v9318
        %12488 = vmatpush2.bf16.msra.mxu0 %v9317
        %12489 = vmatprep.subr.bf16.mxu0 %v9310
        %12490 = vmatpush2.bf16.msra.mxu0 %v9309
        %12491 = vmatprep.mubr.bf16.mxu0 %v4046
        %12492 = vmatmul.mubr.bf16.gmra.mxu0 %v4038
        %v12493 = vpop.f32.mrf.mxu0
        %v12494 = vadd.f32 %v12453, %v12493
        %v12495 = vpop.f32.mrf.mxu0
        %v12496 = vadd.f32 %v12455, %v12495
        %v12497 = vpop.f32.mrf.mxu0
        %v12498 = vpop.f32.mrf.mxu0
        %12499 = vdwg.mxu0
        %12500 = vmatprep.subr.bf16.mxu0 %v9430
        %12501 = vmatpush1.bf16.msra.mxu0 %v9429
        %12502 = vmatprep.subr.bf16.mxu0 %v9422
        %12503 = vmatpush1.bf16.msra.mxu0 %v9421
        %12504 = vmatprep.subr.bf16.mxu0 %v9414
        %12505 = vmatpush1.bf16.msra.mxu0 %v9413
        %12506 = vmatprep.subr.bf16.mxu0 %v9406
        %12507 = vmatpush1.bf16.msra.mxu0 %v9405
        %12508 = vmatprep.subr.bf16.mxu0 %v9398
        %12509 = vmatpush1.bf16.msra.mxu0 %v9397
        %12510 = vmatprep.subr.bf16.mxu0 %v9390
        %12511 = vmatpush1.bf16.msra.mxu0 %v9389
        %12512 = vmatprep.subr.bf16.mxu0 %v9382
        %12513 = vmatpush1.bf16.msra.mxu0 %v9381
        %12514 = vmatprep.subr.bf16.mxu0 %v9374
        %12515 = vmatpush1.bf16.msra.mxu0 %v9373
        %12516 = vmatprep.subr.bf16.mxu0 %v9494
        %12517 = vmatpush2.bf16.msra.mxu0 %v9493
        %12518 = vmatprep.subr.bf16.mxu0 %v9486
        %12519 = vmatpush2.bf16.msra.mxu0 %v9485
        %12520 = vmatprep.subr.bf16.mxu0 %v9478
        %12521 = vmatpush2.bf16.msra.mxu0 %v9477
        %12522 = vmatprep.subr.bf16.mxu0 %v9470
        %12523 = vmatpush2.bf16.msra.mxu0 %v9469
        %12524 = vmatprep.subr.bf16.mxu0 %v9462
        %12525 = vmatpush2.bf16.msra.mxu0 %v9461
        %12526 = vmatprep.subr.bf16.mxu0 %v9454
        %12527 = vmatpush2.bf16.msra.mxu0 %v9453
        %12528 = vmatprep.subr.bf16.mxu0 %v9446
        %12529 = vmatpush2.bf16.msra.mxu0 %v9445
        %12530 = vmatprep.subr.bf16.mxu0 %v9438
        %12531 = vmatpush2.bf16.msra.mxu0 %v9437
        %12532 = vmatprep.mubr.bf16.mxu0 %v4047
        %12533 = vmatmul.mubr.bf16.gmra.mxu0 %v4045
        %v12534 = vpop.f32.mrf.mxu0
        %v12535 = vadd.f32 %v12494, %v12534
        %v12536 = vpop.f32.mrf.mxu0
        %v12537 = vadd.f32 %v12496, %v12536
        %v12538 = vpop.f32.mrf.mxu0
        %v12539 = vpop.f32.mrf.mxu0
        %12540 = vdwg.mxu0
        %12541 = vmatprep.subr.bf16.mxu0 %v9558
        %12542 = vmatpush1.bf16.msra.mxu0 %v9557
        %12543 = vmatprep.subr.bf16.mxu0 %v9550
        %12544 = vmatpush1.bf16.msra.mxu0 %v9549
        %12545 = vmatprep.subr.bf16.mxu0 %v9542
        %12546 = vmatpush1.bf16.msra.mxu0 %v9541
        %12547 = vmatprep.subr.bf16.mxu0 %v9534
        %12548 = vmatpush1.bf16.msra.mxu0 %v9533
        %12549 = vmatprep.subr.bf16.mxu0 %v9526
        %12550 = vmatpush1.bf16.msra.mxu0 %v9525
        %12551 = vmatprep.subr.bf16.mxu0 %v9518
        %12552 = vmatpush1.bf16.msra.mxu0 %v9517
        %12553 = vmatprep.subr.bf16.mxu0 %v9510
        %12554 = vmatpush1.bf16.msra.mxu0 %v9509
        %12555 = vmatprep.subr.bf16.mxu0 %v9502
        %12556 = vmatpush1.bf16.msra.mxu0 %v9501
        %12557 = vmatprep.subr.bf16.mxu0 %v9622
        %12558 = vmatpush2.bf16.msra.mxu0 %v9621
        %12559 = vmatprep.subr.bf16.mxu0 %v9614
        %12560 = vmatpush2.bf16.msra.mxu0 %v9613
        %12561 = vmatprep.subr.bf16.mxu0 %v9606
        %12562 = vmatpush2.bf16.msra.mxu0 %v9605
        %12563 = vmatprep.subr.bf16.mxu0 %v9598
        %12564 = vmatpush2.bf16.msra.mxu0 %v9597
        %12565 = vmatprep.subr.bf16.mxu0 %v9590
        %12566 = vmatpush2.bf16.msra.mxu0 %v9589
        %12567 = vmatprep.subr.bf16.mxu0 %v9582
        %12568 = vmatpush2.bf16.msra.mxu0 %v9581
        %12569 = vmatprep.subr.bf16.mxu0 %v9574
        %12570 = vmatpush2.bf16.msra.mxu0 %v9573
        %12571 = vmatprep.subr.bf16.mxu0 %v9566
        %12572 = vmatpush2.bf16.msra.mxu0 %v9565
        %12573 = vmatprep.mubr.bf16.mxu0 %v4063
        %12574 = vmatmul.mubr.bf16.gmra.mxu0 %v4055
        %v12575 = vpop.f32.mrf.mxu0
        %v12576 = vadd.f32 %v12535, %v12575
        %v12577 = vpop.f32.mrf.mxu0
        %v12578 = vadd.f32 %v12537, %v12577
        %v12579 = vpop.f32.mrf.mxu0
        %v12580 = vpop.f32.mrf.mxu0
        %12581 = vdwg.mxu0
        %12582 = vmatprep.subr.bf16.mxu0 %v9686
        %12583 = vmatpush1.bf16.msra.mxu0 %v9685
        %12584 = vmatprep.subr.bf16.mxu0 %v9678
        %12585 = vmatpush1.bf16.msra.mxu0 %v9677
        %12586 = vmatprep.subr.bf16.mxu0 %v9670
        %12587 = vmatpush1.bf16.msra.mxu0 %v9669
        %12588 = vmatprep.subr.bf16.mxu0 %v9662
        %12589 = vmatpush1.bf16.msra.mxu0 %v9661
        %12590 = vmatprep.subr.bf16.mxu0 %v9654
        %12591 = vmatpush1.bf16.msra.mxu0 %v9653
        %12592 = vmatprep.subr.bf16.mxu0 %v9646
        %12593 = vmatpush1.bf16.msra.mxu0 %v9645
        %12594 = vmatprep.subr.bf16.mxu0 %v9638
        %12595 = vmatpush1.bf16.msra.mxu0 %v9637
        %12596 = vmatprep.subr.bf16.mxu0 %v9630
        %12597 = vmatpush1.bf16.msra.mxu0 %v9629
        %12598 = vmatprep.subr.bf16.mxu0 %v9750
        %12599 = vmatpush2.bf16.msra.mxu0 %v9749
        %12600 = vmatprep.subr.bf16.mxu0 %v9742
        %12601 = vmatpush2.bf16.msra.mxu0 %v9741
        %12602 = vmatprep.subr.bf16.mxu0 %v9734
        %12603 = vmatpush2.bf16.msra.mxu0 %v9733
        %12604 = vmatprep.subr.bf16.mxu0 %v9726
        %12605 = vmatpush2.bf16.msra.mxu0 %v9725
        %12606 = vmatprep.subr.bf16.mxu0 %v9718
        %12607 = vmatpush2.bf16.msra.mxu0 %v9717
        %12608 = vmatprep.subr.bf16.mxu0 %v9710
        %12609 = vmatpush2.bf16.msra.mxu0 %v9709
        %12610 = vmatprep.subr.bf16.mxu0 %v9702
        %12611 = vmatpush2.bf16.msra.mxu0 %v9701
        %12612 = vmatprep.subr.bf16.mxu0 %v9694
        %12613 = vmatpush2.bf16.msra.mxu0 %v9693
        %12614 = vmatprep.mubr.bf16.mxu0 %v4064
        %12615 = vmatmul.mubr.bf16.gmra.mxu0 %v4062
        %v12616 = vpop.f32.mrf.mxu0
        %v12617 = vadd.f32 %v12576, %v12616
        %v12618 = vpop.f32.mrf.mxu0
        %v12619 = vadd.f32 %v12578, %v12618
        %v12620 = vpop.f32.mrf.mxu0
        %v12621 = vpop.f32.mrf.mxu0
        %12622 = vdwg.mxu0
        %12623 = vmatprep.subr.bf16.mxu0 %v9814
        %12624 = vmatpush1.bf16.msra.mxu0 %v9813
        %12625 = vmatprep.subr.bf16.mxu0 %v9806
        %12626 = vmatpush1.bf16.msra.mxu0 %v9805
        %12627 = vmatprep.subr.bf16.mxu0 %v9798
        %12628 = vmatpush1.bf16.msra.mxu0 %v9797
        %12629 = vmatprep.subr.bf16.mxu0 %v9790
        %12630 = vmatpush1.bf16.msra.mxu0 %v9789
        %12631 = vmatprep.subr.bf16.mxu0 %v9782
        %12632 = vmatpush1.bf16.msra.mxu0 %v9781
        %12633 = vmatprep.subr.bf16.mxu0 %v9774
        %12634 = vmatpush1.bf16.msra.mxu0 %v9773
        %12635 = vmatprep.subr.bf16.mxu0 %v9766
        %12636 = vmatpush1.bf16.msra.mxu0 %v9765
        %12637 = vmatprep.subr.bf16.mxu0 %v9758
        %12638 = vmatpush1.bf16.msra.mxu0 %v9757
        %12639 = vmatprep.subr.bf16.mxu0 %v9878
        %12640 = vmatpush2.bf16.msra.mxu0 %v9877
        %12641 = vmatprep.subr.bf16.mxu0 %v9870
        %12642 = vmatpush2.bf16.msra.mxu0 %v9869
        %12643 = vmatprep.subr.bf16.mxu0 %v9862
        %12644 = vmatpush2.bf16.msra.mxu0 %v9861
        %12645 = vmatprep.subr.bf16.mxu0 %v9854
        %12646 = vmatpush2.bf16.msra.mxu0 %v9853
        %12647 = vmatprep.subr.bf16.mxu0 %v9846
        %12648 = vmatpush2.bf16.msra.mxu0 %v9845
        %12649 = vmatprep.subr.bf16.mxu0 %v9838
        %12650 = vmatpush2.bf16.msra.mxu0 %v9837
        %12651 = vmatprep.subr.bf16.mxu0 %v9830
        %12652 = vmatpush2.bf16.msra.mxu0 %v9829
        %12653 = vmatprep.subr.bf16.mxu0 %v9822
        %12654 = vmatpush2.bf16.msra.mxu0 %v9821
        %12655 = vmatprep.mubr.bf16.mxu0 %v4080
        %12656 = vmatmul.mubr.bf16.gmra.mxu0 %v4072
        %v12657 = vpop.f32.mrf.mxu0
        %v12658 = vadd.f32 %v12617, %v12657
        %v12659 = vpop.f32.mrf.mxu0
        %v12660 = vadd.f32 %v12619, %v12659
        %v12661 = vpop.f32.mrf.mxu0
        %v12662 = vpop.f32.mrf.mxu0
        %12663 = vdwg.mxu0
        %12664 = vmatprep.subr.bf16.mxu0 %v9942
        %12665 = vmatpush1.bf16.msra.mxu0 %v9941
        %12666 = vmatprep.subr.bf16.mxu0 %v9934
        %12667 = vmatpush1.bf16.msra.mxu0 %v9933
        %12668 = vmatprep.subr.bf16.mxu0 %v9926
        %12669 = vmatpush1.bf16.msra.mxu0 %v9925
        %12670 = vmatprep.subr.bf16.mxu0 %v9918
        %12671 = vmatpush1.bf16.msra.mxu0 %v9917
        %12672 = vmatprep.subr.bf16.mxu0 %v9910
        %12673 = vmatpush1.bf16.msra.mxu0 %v9909
        %12674 = vmatprep.subr.bf16.mxu0 %v9902
        %12675 = vmatpush1.bf16.msra.mxu0 %v9901
        %12676 = vmatprep.subr.bf16.mxu0 %v9894
        %12677 = vmatpush1.bf16.msra.mxu0 %v9893
        %12678 = vmatprep.subr.bf16.mxu0 %v9886
        %12679 = vmatpush1.bf16.msra.mxu0 %v9885
        %12680 = vmatprep.subr.bf16.mxu0 %v10006
        %12681 = vmatpush2.bf16.msra.mxu0 %v10005
        %12682 = vmatprep.subr.bf16.mxu0 %v9998
        %12683 = vmatpush2.bf16.msra.mxu0 %v9997
        %12684 = vmatprep.subr.bf16.mxu0 %v9990
        %12685 = vmatpush2.bf16.msra.mxu0 %v9989
        %12686 = vmatprep.subr.bf16.mxu0 %v9982
        %12687 = vmatpush2.bf16.msra.mxu0 %v9981
        %12688 = vmatprep.subr.bf16.mxu0 %v9974
        %12689 = vmatpush2.bf16.msra.mxu0 %v9973
        %12690 = vmatprep.subr.bf16.mxu0 %v9966
        %12691 = vmatpush2.bf16.msra.mxu0 %v9965
        %12692 = vmatprep.subr.bf16.mxu0 %v9958
        %12693 = vmatpush2.bf16.msra.mxu0 %v9957
        %12694 = vmatprep.subr.bf16.mxu0 %v9950
        %12695 = vmatpush2.bf16.msra.mxu0 %v9949
        %12696 = vmatprep.mubr.bf16.mxu0 %v4081
        %12697 = vmatmul.mubr.bf16.gmra.mxu0 %v4079
        %v12698 = vpop.f32.mrf.mxu0
        %v12699 = vadd.f32 %v12658, %v12698
        %v12700 = vpop.f32.mrf.mxu0
        %v12701 = vadd.f32 %v12660, %v12700
        %v12702 = vpop.f32.mrf.mxu0
        %v12703 = vpop.f32.mrf.mxu0
        %12704 = vdwg.mxu0
        %12705 = vmatprep.subr.bf16.mxu0 %v10070
        %12706 = vmatpush1.bf16.msra.mxu0 %v10069
        %12707 = vmatprep.subr.bf16.mxu0 %v10062
        %12708 = vmatpush1.bf16.msra.mxu0 %v10061
        %12709 = vmatprep.subr.bf16.mxu0 %v10054
        %12710 = vmatpush1.bf16.msra.mxu0 %v10053
        %12711 = vmatprep.subr.bf16.mxu0 %v10046
        %12712 = vmatpush1.bf16.msra.mxu0 %v10045
        %12713 = vmatprep.subr.bf16.mxu0 %v10038
        %12714 = vmatpush1.bf16.msra.mxu0 %v10037
        %12715 = vmatprep.subr.bf16.mxu0 %v10030
        %12716 = vmatpush1.bf16.msra.mxu0 %v10029
        %12717 = vmatprep.subr.bf16.mxu0 %v10022
        %12718 = vmatpush1.bf16.msra.mxu0 %v10021
        %12719 = vmatprep.subr.bf16.mxu0 %v10014
        %12720 = vmatpush1.bf16.msra.mxu0 %v10013
        %12721 = vmatprep.subr.bf16.mxu0 %v10134
        %12722 = vmatpush2.bf16.msra.mxu0 %v10133
        %12723 = vmatprep.subr.bf16.mxu0 %v10126
        %12724 = vmatpush2.bf16.msra.mxu0 %v10125
        %12725 = vmatprep.subr.bf16.mxu0 %v10118
        %12726 = vmatpush2.bf16.msra.mxu0 %v10117
        %12727 = vmatprep.subr.bf16.mxu0 %v10110
        %12728 = vmatpush2.bf16.msra.mxu0 %v10109
        %12729 = vmatprep.subr.bf16.mxu0 %v10102
        %12730 = vmatpush2.bf16.msra.mxu0 %v10101
        %12731 = vmatprep.subr.bf16.mxu0 %v10094
        %12732 = vmatpush2.bf16.msra.mxu0 %v10093
        %12733 = vmatprep.subr.bf16.mxu0 %v10086
        %12734 = vmatpush2.bf16.msra.mxu0 %v10085
        %12735 = vmatprep.subr.bf16.mxu0 %v10078
        %12736 = vmatpush2.bf16.msra.mxu0 %v10077
        %12737 = vmatprep.mubr.bf16.mxu0 %v4097
        %12738 = vmatmul.mubr.bf16.gmra.mxu0 %v4089
        %v12739 = vpop.f32.mrf.mxu0
        %v12740 = vadd.f32 %v12699, %v12739
        %v12741 = vpop.f32.mrf.mxu0
        %v12742 = vadd.f32 %v12701, %v12741
        %v12743 = vpop.f32.mrf.mxu0
        %v12744 = vpop.f32.mrf.mxu0
        %12745 = vdwg.mxu0
        %12746 = vmatprep.subr.bf16.mxu0 %v10198
        %12747 = vmatpush1.bf16.msra.mxu0 %v10197
        %12748 = vmatprep.subr.bf16.mxu0 %v10190
        %12749 = vmatpush1.bf16.msra.mxu0 %v10189
        %12750 = vmatprep.subr.bf16.mxu0 %v10182
        %12751 = vmatpush1.bf16.msra.mxu0 %v10181
        %12752 = vmatprep.subr.bf16.mxu0 %v10174
        %12753 = vmatpush1.bf16.msra.mxu0 %v10173
        %12754 = vmatprep.subr.bf16.mxu0 %v10166
        %12755 = vmatpush1.bf16.msra.mxu0 %v10165
        %12756 = vmatprep.subr.bf16.mxu0 %v10158
        %12757 = vmatpush1.bf16.msra.mxu0 %v10157
        %12758 = vmatprep.subr.bf16.mxu0 %v10150
        %12759 = vmatpush1.bf16.msra.mxu0 %v10149
        %12760 = vmatprep.subr.bf16.mxu0 %v10142
        %12761 = vmatpush1.bf16.msra.mxu0 %v10141
        %12762 = vmatprep.subr.bf16.mxu0 %v10262
        %12763 = vmatpush2.bf16.msra.mxu0 %v10261
        %12764 = vmatprep.subr.bf16.mxu0 %v10254
        %12765 = vmatpush2.bf16.msra.mxu0 %v10253
        %12766 = vmatprep.subr.bf16.mxu0 %v10246
        %12767 = vmatpush2.bf16.msra.mxu0 %v10245
        %12768 = vmatprep.subr.bf16.mxu0 %v10238
        %12769 = vmatpush2.bf16.msra.mxu0 %v10237
        %12770 = vmatprep.subr.bf16.mxu0 %v10230
        %12771 = vmatpush2.bf16.msra.mxu0 %v10229
        %12772 = vmatprep.subr.bf16.mxu0 %v10222
        %12773 = vmatpush2.bf16.msra.mxu0 %v10221
        %12774 = vmatprep.subr.bf16.mxu0 %v10214
        %12775 = vmatpush2.bf16.msra.mxu0 %v10213
        %12776 = vmatprep.subr.bf16.mxu0 %v10206
        %12777 = vmatpush2.bf16.msra.mxu0 %v10205
        %12778 = vmatprep.mubr.bf16.mxu0 %v4098
        %12779 = vmatmul.mubr.bf16.gmra.mxu0 %v4096
        %v12780 = vpop.f32.mrf.mxu0
        %v12781 = vadd.f32 %v12740, %v12780
        %v12782 = vpop.f32.mrf.mxu0
        %v12783 = vadd.f32 %v12742, %v12782
        %v12784 = vpop.f32.mrf.mxu0
        %v12785 = vpop.f32.mrf.mxu0
        %12786 = vdwg.mxu0
        %12787 = vmatprep.subr.bf16.mxu0 %v8792
        %12788 = vmatpush1.bf16.msra.mxu0 %v8791
        %12789 = vmatprep.subr.bf16.mxu0 %v8784
        %12790 = vmatpush1.bf16.msra.mxu0 %v8783
        %12791 = vmatprep.subr.bf16.mxu0 %v8776
        %12792 = vmatpush1.bf16.msra.mxu0 %v8775
        %12793 = vmatprep.subr.bf16.mxu0 %v8768
        %12794 = vmatpush1.bf16.msra.mxu0 %v8767
        %12795 = vmatprep.subr.bf16.mxu0 %v8760
        %12796 = vmatpush1.bf16.msra.mxu0 %v8759
        %12797 = vmatprep.subr.bf16.mxu0 %v8752
        %12798 = vmatpush1.bf16.msra.mxu0 %v8751
        %12799 = vmatprep.subr.bf16.mxu0 %v8744
        %12800 = vmatpush1.bf16.msra.mxu0 %v8743
        %12801 = vmatprep.subr.bf16.mxu0 %v8736
        %12802 = vmatpush1.bf16.msra.mxu0 %v8735
        %12803 = vmatprep.subr.bf16.mxu0 %v8856
        %12804 = vmatpush2.bf16.msra.mxu0 %v8855
        %12805 = vmatprep.subr.bf16.mxu0 %v8848
        %12806 = vmatpush2.bf16.msra.mxu0 %v8847
        %12807 = vmatprep.subr.bf16.mxu0 %v8840
        %12808 = vmatpush2.bf16.msra.mxu0 %v8839
        %12809 = vmatprep.subr.bf16.mxu0 %v8832
        %12810 = vmatpush2.bf16.msra.mxu0 %v8831
        %12811 = vmatprep.subr.bf16.mxu0 %v8824
        %12812 = vmatpush2.bf16.msra.mxu0 %v8823
        %12813 = vmatprep.subr.bf16.mxu0 %v8816
        %12814 = vmatpush2.bf16.msra.mxu0 %v8815
        %12815 = vmatprep.subr.bf16.mxu0 %v8808
        %12816 = vmatpush2.bf16.msra.mxu0 %v8807
        %12817 = vmatprep.subr.bf16.mxu0 %v8800
        %12818 = vmatpush2.bf16.msra.mxu0 %v8799
        %12819 = vmatprep.mubr.bf16.mxu0 %v4012
        %12820 = vmatmul.mubr.bf16.gmra.mxu0 %v4004
        %v12821 = vpop.f32.mrf.mxu0
        %v12822 = vadd.f32 %v3970, %v12821
        %v12823 = vpop.f32.mrf.mxu0
        %v12824 = vadd.f32 %v3974, %v12823
        %v12825 = vpop.f32.mrf.mxu0
        %v12826 = vpop.f32.mrf.mxu0
        %12827 = vdwg.mxu0
        %12828 = vmatprep.subr.bf16.mxu0 %v8920
        %12829 = vmatpush1.bf16.msra.mxu0 %v8919
        %12830 = vmatprep.subr.bf16.mxu0 %v8912
        %12831 = vmatpush1.bf16.msra.mxu0 %v8911
        %12832 = vmatprep.subr.bf16.mxu0 %v8904
        %12833 = vmatpush1.bf16.msra.mxu0 %v8903
        %12834 = vmatprep.subr.bf16.mxu0 %v8896
        %12835 = vmatpush1.bf16.msra.mxu0 %v8895
        %12836 = vmatprep.subr.bf16.mxu0 %v8888
        %12837 = vmatpush1.bf16.msra.mxu0 %v8887
        %12838 = vmatprep.subr.bf16.mxu0 %v8880
        %12839 = vmatpush1.bf16.msra.mxu0 %v8879
        %12840 = vmatprep.subr.bf16.mxu0 %v8872
        %12841 = vmatpush1.bf16.msra.mxu0 %v8871
        %12842 = vmatprep.subr.bf16.mxu0 %v8864
        %12843 = vmatpush1.bf16.msra.mxu0 %v8863
        %12844 = vmatprep.subr.bf16.mxu0 %v8984
        %12845 = vmatpush2.bf16.msra.mxu0 %v8983
        %12846 = vmatprep.subr.bf16.mxu0 %v8976
        %12847 = vmatpush2.bf16.msra.mxu0 %v8975
        %12848 = vmatprep.subr.bf16.mxu0 %v8968
        %12849 = vmatpush2.bf16.msra.mxu0 %v8967
        %12850 = vmatprep.subr.bf16.mxu0 %v8960
        %12851 = vmatpush2.bf16.msra.mxu0 %v8959
        %12852 = vmatprep.subr.bf16.mxu0 %v8952
        %12853 = vmatpush2.bf16.msra.mxu0 %v8951
        %12854 = vmatprep.subr.bf16.mxu0 %v8944
        %12855 = vmatpush2.bf16.msra.mxu0 %v8943
        %12856 = vmatprep.subr.bf16.mxu0 %v8936
        %12857 = vmatpush2.bf16.msra.mxu0 %v8935
        %12858 = vmatprep.subr.bf16.mxu0 %v8928
        %12859 = vmatpush2.bf16.msra.mxu0 %v8927
        %12860 = vmatprep.mubr.bf16.mxu0 %v4013
        %12861 = vmatmul.mubr.bf16.gmra.mxu0 %v4011
        %v12862 = vpop.f32.mrf.mxu0
        %v12863 = vadd.f32 %v12822, %v12862
        %v12864 = vpop.f32.mrf.mxu0
        %v12865 = vadd.f32 %v12824, %v12864
        %v12866 = vpop.f32.mrf.mxu0
        %v12867 = vpop.f32.mrf.mxu0
        %12868 = vdwg.mxu0
        %12869 = vmatprep.subr.bf16.mxu0 %v9048
        %12870 = vmatpush1.bf16.msra.mxu0 %v9047
        %12871 = vmatprep.subr.bf16.mxu0 %v9040
        %12872 = vmatpush1.bf16.msra.mxu0 %v9039
        %12873 = vmatprep.subr.bf16.mxu0 %v9032
        %12874 = vmatpush1.bf16.msra.mxu0 %v9031
        %12875 = vmatprep.subr.bf16.mxu0 %v9024
        %12876 = vmatpush1.bf16.msra.mxu0 %v9023
        %12877 = vmatprep.subr.bf16.mxu0 %v9016
        %12878 = vmatpush1.bf16.msra.mxu0 %v9015
        %12879 = vmatprep.subr.bf16.mxu0 %v9008
        %12880 = vmatpush1.bf16.msra.mxu0 %v9007
        %12881 = vmatprep.subr.bf16.mxu0 %v9000
        %12882 = vmatpush1.bf16.msra.mxu0 %v8999
        %12883 = vmatprep.subr.bf16.mxu0 %v8992
        %12884 = vmatpush1.bf16.msra.mxu0 %v8991
        %12885 = vmatprep.subr.bf16.mxu0 %v9112
        %12886 = vmatpush2.bf16.msra.mxu0 %v9111
        %12887 = vmatprep.subr.bf16.mxu0 %v9104
        %12888 = vmatpush2.bf16.msra.mxu0 %v9103
        %12889 = vmatprep.subr.bf16.mxu0 %v9096
        %12890 = vmatpush2.bf16.msra.mxu0 %v9095
        %12891 = vmatprep.subr.bf16.mxu0 %v9088
        %12892 = vmatpush2.bf16.msra.mxu0 %v9087
        %12893 = vmatprep.subr.bf16.mxu0 %v9080
        %12894 = vmatpush2.bf16.msra.mxu0 %v9079
        %12895 = vmatprep.subr.bf16.mxu0 %v9072
        %12896 = vmatpush2.bf16.msra.mxu0 %v9071
        %12897 = vmatprep.subr.bf16.mxu0 %v9064
        %12898 = vmatpush2.bf16.msra.mxu0 %v9063
        %12899 = vmatprep.subr.bf16.mxu0 %v9056
        %12900 = vmatpush2.bf16.msra.mxu0 %v9055
        %12901 = vmatprep.mubr.bf16.mxu0 %v4029
        %12902 = vmatmul.mubr.bf16.gmra.mxu0 %v4021
        %v12903 = vpop.f32.mrf.mxu0
        %v12904 = vadd.f32 %v12863, %v12903
        %v12905 = vpop.f32.mrf.mxu0
        %v12906 = vadd.f32 %v12865, %v12905
        %v12907 = vpop.f32.mrf.mxu0
        %v12908 = vpop.f32.mrf.mxu0
        %12909 = vdwg.mxu0
        %12910 = vmatprep.subr.bf16.mxu0 %v9176
        %12911 = vmatpush1.bf16.msra.mxu0 %v9175
        %12912 = vmatprep.subr.bf16.mxu0 %v9168
        %12913 = vmatpush1.bf16.msra.mxu0 %v9167
        %12914 = vmatprep.subr.bf16.mxu0 %v9160
        %12915 = vmatpush1.bf16.msra.mxu0 %v9159
        %12916 = vmatprep.subr.bf16.mxu0 %v9152
        %12917 = vmatpush1.bf16.msra.mxu0 %v9151
        %12918 = vmatprep.subr.bf16.mxu0 %v9144
        %12919 = vmatpush1.bf16.msra.mxu0 %v9143
        %12920 = vmatprep.subr.bf16.mxu0 %v9136
        %12921 = vmatpush1.bf16.msra.mxu0 %v9135
        %12922 = vmatprep.subr.bf16.mxu0 %v9128
        %12923 = vmatpush1.bf16.msra.mxu0 %v9127
        %12924 = vmatprep.subr.bf16.mxu0 %v9120
        %12925 = vmatpush1.bf16.msra.mxu0 %v9119
        %12926 = vmatprep.subr.bf16.mxu0 %v9240
        %12927 = vmatpush2.bf16.msra.mxu0 %v9239
        %12928 = vmatprep.subr.bf16.mxu0 %v9232
        %12929 = vmatpush2.bf16.msra.mxu0 %v9231
        %12930 = vmatprep.subr.bf16.mxu0 %v9224
        %12931 = vmatpush2.bf16.msra.mxu0 %v9223
        %12932 = vmatprep.subr.bf16.mxu0 %v9216
        %12933 = vmatpush2.bf16.msra.mxu0 %v9215
        %12934 = vmatprep.subr.bf16.mxu0 %v9208
        %12935 = vmatpush2.bf16.msra.mxu0 %v9207
        %12936 = vmatprep.subr.bf16.mxu0 %v9200
        %12937 = vmatpush2.bf16.msra.mxu0 %v9199
        %12938 = vmatprep.subr.bf16.mxu0 %v9192
        %12939 = vmatpush2.bf16.msra.mxu0 %v9191
        %12940 = vmatprep.subr.bf16.mxu0 %v9184
        %12941 = vmatpush2.bf16.msra.mxu0 %v9183
        %12942 = vmatprep.mubr.bf16.mxu0 %v4030
        %12943 = vmatmul.mubr.bf16.gmra.mxu0 %v4028
        %v12944 = vpop.f32.mrf.mxu0
        %v12945 = vadd.f32 %v12904, %v12944
        %v12946 = vpop.f32.mrf.mxu0
        %v12947 = vadd.f32 %v12906, %v12946
        %v12948 = vpop.f32.mrf.mxu0
        %v12949 = vpop.f32.mrf.mxu0
        %12950 = vdwg.mxu0
        %12951 = vmatprep.subr.bf16.mxu0 %v9304
        %12952 = vmatpush1.bf16.msra.mxu0 %v9303
        %12953 = vmatprep.subr.bf16.mxu0 %v9296
        %12954 = vmatpush1.bf16.msra.mxu0 %v9295
        %12955 = vmatprep.subr.bf16.mxu0 %v9288
        %12956 = vmatpush1.bf16.msra.mxu0 %v9287
        %12957 = vmatprep.subr.bf16.mxu0 %v9280
        %12958 = vmatpush1.bf16.msra.mxu0 %v9279
        %12959 = vmatprep.subr.bf16.mxu0 %v9272
        %12960 = vmatpush1.bf16.msra.mxu0 %v9271
        %12961 = vmatprep.subr.bf16.mxu0 %v9264
        %12962 = vmatpush1.bf16.msra.mxu0 %v9263
        %12963 = vmatprep.subr.bf16.mxu0 %v9256
        %12964 = vmatpush1.bf16.msra.mxu0 %v9255
        %12965 = vmatprep.subr.bf16.mxu0 %v9248
        %12966 = vmatpush1.bf16.msra.mxu0 %v9247
        %12967 = vmatprep.subr.bf16.mxu0 %v9368
        %12968 = vmatpush2.bf16.msra.mxu0 %v9367
        %12969 = vmatprep.subr.bf16.mxu0 %v9360
        %12970 = vmatpush2.bf16.msra.mxu0 %v9359
        %12971 = vmatprep.subr.bf16.mxu0 %v9352
        %12972 = vmatpush2.bf16.msra.mxu0 %v9351
        %12973 = vmatprep.subr.bf16.mxu0 %v9344
        %12974 = vmatpush2.bf16.msra.mxu0 %v9343
        %12975 = vmatprep.subr.bf16.mxu0 %v9336
        %12976 = vmatpush2.bf16.msra.mxu0 %v9335
        %12977 = vmatprep.subr.bf16.mxu0 %v9328
        %12978 = vmatpush2.bf16.msra.mxu0 %v9327
        %12979 = vmatprep.subr.bf16.mxu0 %v9320
        %12980 = vmatpush2.bf16.msra.mxu0 %v9319
        %12981 = vmatprep.subr.bf16.mxu0 %v9312
        %12982 = vmatpush2.bf16.msra.mxu0 %v9311
        %12983 = vmatprep.mubr.bf16.mxu0 %v4046
        %12984 = vmatmul.mubr.bf16.gmra.mxu0 %v4038
        %v12985 = vpop.f32.mrf.mxu0
        %v12986 = vadd.f32 %v12945, %v12985
        %v12987 = vpop.f32.mrf.mxu0
        %v12988 = vadd.f32 %v12947, %v12987
        %v12989 = vpop.f32.mrf.mxu0
        %v12990 = vpop.f32.mrf.mxu0
        %12991 = vdwg.mxu0
        %12992 = vmatprep.subr.bf16.mxu0 %v9432
        %12993 = vmatpush1.bf16.msra.mxu0 %v9431
        %12994 = vmatprep.subr.bf16.mxu0 %v9424
        %12995 = vmatpush1.bf16.msra.mxu0 %v9423
        %12996 = vmatprep.subr.bf16.mxu0 %v9416
        %12997 = vmatpush1.bf16.msra.mxu0 %v9415
        %12998 = vmatprep.subr.bf16.mxu0 %v9408
        %12999 = vmatpush1.bf16.msra.mxu0 %v9407
        %13000 = vmatprep.subr.bf16.mxu0 %v9400
        %13001 = vmatpush1.bf16.msra.mxu0 %v9399
        %13002 = vmatprep.subr.bf16.mxu0 %v9392
        %13003 = vmatpush1.bf16.msra.mxu0 %v9391
        %13004 = vmatprep.subr.bf16.mxu0 %v9384
        %13005 = vmatpush1.bf16.msra.mxu0 %v9383
        %13006 = vmatprep.subr.bf16.mxu0 %v9376
        %13007 = vmatpush1.bf16.msra.mxu0 %v9375
        %13008 = vmatprep.subr.bf16.mxu0 %v9496
        %13009 = vmatpush2.bf16.msra.mxu0 %v9495
        %13010 = vmatprep.subr.bf16.mxu0 %v9488
        %13011 = vmatpush2.bf16.msra.mxu0 %v9487
        %13012 = vmatprep.subr.bf16.mxu0 %v9480
        %13013 = vmatpush2.bf16.msra.mxu0 %v9479
        %13014 = vmatprep.subr.bf16.mxu0 %v9472
        %13015 = vmatpush2.bf16.msra.mxu0 %v9471
        %13016 = vmatprep.subr.bf16.mxu0 %v9464
        %13017 = vmatpush2.bf16.msra.mxu0 %v9463
        %13018 = vmatprep.subr.bf16.mxu0 %v9456
        %13019 = vmatpush2.bf16.msra.mxu0 %v9455
        %13020 = vmatprep.subr.bf16.mxu0 %v9448
        %13021 = vmatpush2.bf16.msra.mxu0 %v9447
        %13022 = vmatprep.subr.bf16.mxu0 %v9440
        %13023 = vmatpush2.bf16.msra.mxu0 %v9439
        %13024 = vmatprep.mubr.bf16.mxu0 %v4047
        %13025 = vmatmul.mubr.bf16.gmra.mxu0 %v4045
        %v13026 = vpop.f32.mrf.mxu0
        %v13027 = vadd.f32 %v12986, %v13026
        %v13028 = vpop.f32.mrf.mxu0
        %v13029 = vadd.f32 %v12988, %v13028
        %v13030 = vpop.f32.mrf.mxu0
        %v13031 = vpop.f32.mrf.mxu0
        %13032 = vdwg.mxu0
        %13033 = vmatprep.subr.bf16.mxu0 %v9560
        %13034 = vmatpush1.bf16.msra.mxu0 %v9559
        %13035 = vmatprep.subr.bf16.mxu0 %v9552
        %13036 = vmatpush1.bf16.msra.mxu0 %v9551
        %13037 = vmatprep.subr.bf16.mxu0 %v9544
        %13038 = vmatpush1.bf16.msra.mxu0 %v9543
        %13039 = vmatprep.subr.bf16.mxu0 %v9536
        %13040 = vmatpush1.bf16.msra.mxu0 %v9535
        %13041 = vmatprep.subr.bf16.mxu0 %v9528
        %13042 = vmatpush1.bf16.msra.mxu0 %v9527
        %13043 = vmatprep.subr.bf16.mxu0 %v9520
        %13044 = vmatpush1.bf16.msra.mxu0 %v9519
        %13045 = vmatprep.subr.bf16.mxu0 %v9512
        %13046 = vmatpush1.bf16.msra.mxu0 %v9511
        %13047 = vmatprep.subr.bf16.mxu0 %v9504
        %13048 = vmatpush1.bf16.msra.mxu0 %v9503
        %13049 = vmatprep.subr.bf16.mxu0 %v9624
        %13050 = vmatpush2.bf16.msra.mxu0 %v9623
        %13051 = vmatprep.subr.bf16.mxu0 %v9616
        %13052 = vmatpush2.bf16.msra.mxu0 %v9615
        %13053 = vmatprep.subr.bf16.mxu0 %v9608
        %13054 = vmatpush2.bf16.msra.mxu0 %v9607
        %13055 = vmatprep.subr.bf16.mxu0 %v9600
        %13056 = vmatpush2.bf16.msra.mxu0 %v9599
        %13057 = vmatprep.subr.bf16.mxu0 %v9592
        %13058 = vmatpush2.bf16.msra.mxu0 %v9591
        %13059 = vmatprep.subr.bf16.mxu0 %v9584
        %13060 = vmatpush2.bf16.msra.mxu0 %v9583
        %13061 = vmatprep.subr.bf16.mxu0 %v9576
        %13062 = vmatpush2.bf16.msra.mxu0 %v9575
        %13063 = vmatprep.subr.bf16.mxu0 %v9568
        %13064 = vmatpush2.bf16.msra.mxu0 %v9567
        %13065 = vmatprep.mubr.bf16.mxu0 %v4063
        %13066 = vmatmul.mubr.bf16.gmra.mxu0 %v4055
        %v13067 = vpop.f32.mrf.mxu0
        %v13068 = vadd.f32 %v13027, %v13067
        %v13069 = vpop.f32.mrf.mxu0
        %v13070 = vadd.f32 %v13029, %v13069
        %v13071 = vpop.f32.mrf.mxu0
        %v13072 = vpop.f32.mrf.mxu0
        %13073 = vdwg.mxu0
        %13074 = vmatprep.subr.bf16.mxu0 %v9688
        %13075 = vmatpush1.bf16.msra.mxu0 %v9687
        %13076 = vmatprep.subr.bf16.mxu0 %v9680
        %13077 = vmatpush1.bf16.msra.mxu0 %v9679
        %13078 = vmatprep.subr.bf16.mxu0 %v9672
        %13079 = vmatpush1.bf16.msra.mxu0 %v9671
        %13080 = vmatprep.subr.bf16.mxu0 %v9664
        %13081 = vmatpush1.bf16.msra.mxu0 %v9663
        %13082 = vmatprep.subr.bf16.mxu0 %v9656
        %13083 = vmatpush1.bf16.msra.mxu0 %v9655
        %13084 = vmatprep.subr.bf16.mxu0 %v9648
        %13085 = vmatpush1.bf16.msra.mxu0 %v9647
        %13086 = vmatprep.subr.bf16.mxu0 %v9640
        %13087 = vmatpush1.bf16.msra.mxu0 %v9639
        %13088 = vmatprep.subr.bf16.mxu0 %v9632
        %13089 = vmatpush1.bf16.msra.mxu0 %v9631
        %13090 = vmatprep.subr.bf16.mxu0 %v9752
        %13091 = vmatpush2.bf16.msra.mxu0 %v9751
        %13092 = vmatprep.subr.bf16.mxu0 %v9744
        %13093 = vmatpush2.bf16.msra.mxu0 %v9743
        %13094 = vmatprep.subr.bf16.mxu0 %v9736
        %13095 = vmatpush2.bf16.msra.mxu0 %v9735
        %13096 = vmatprep.subr.bf16.mxu0 %v9728
        %13097 = vmatpush2.bf16.msra.mxu0 %v9727
        %13098 = vmatprep.subr.bf16.mxu0 %v9720
        %13099 = vmatpush2.bf16.msra.mxu0 %v9719
        %13100 = vmatprep.subr.bf16.mxu0 %v9712
        %13101 = vmatpush2.bf16.msra.mxu0 %v9711
        %13102 = vmatprep.subr.bf16.mxu0 %v9704
        %13103 = vmatpush2.bf16.msra.mxu0 %v9703
        %13104 = vmatprep.subr.bf16.mxu0 %v9696
        %13105 = vmatpush2.bf16.msra.mxu0 %v9695
        %13106 = vmatprep.mubr.bf16.mxu0 %v4064
        %13107 = vmatmul.mubr.bf16.gmra.mxu0 %v4062
        %v13108 = vpop.f32.mrf.mxu0
        %v13109 = vadd.f32 %v13068, %v13108
        %v13110 = vpop.f32.mrf.mxu0
        %v13111 = vadd.f32 %v13070, %v13110
        %v13112 = vpop.f32.mrf.mxu0
        %v13113 = vpop.f32.mrf.mxu0
        %13114 = vdwg.mxu0
        %13115 = vmatprep.subr.bf16.mxu0 %v9816
        %13116 = vmatpush1.bf16.msra.mxu0 %v9815
        %13117 = vmatprep.subr.bf16.mxu0 %v9808
        %13118 = vmatpush1.bf16.msra.mxu0 %v9807
        %13119 = vmatprep.subr.bf16.mxu0 %v9800
        %13120 = vmatpush1.bf16.msra.mxu0 %v9799
        %13121 = vmatprep.subr.bf16.mxu0 %v9792
        %13122 = vmatpush1.bf16.msra.mxu0 %v9791
        %13123 = vmatprep.subr.bf16.mxu0 %v9784
        %13124 = vmatpush1.bf16.msra.mxu0 %v9783
        %13125 = vmatprep.subr.bf16.mxu0 %v9776
        %13126 = vmatpush1.bf16.msra.mxu0 %v9775
        %13127 = vmatprep.subr.bf16.mxu0 %v9768
        %13128 = vmatpush1.bf16.msra.mxu0 %v9767
        %13129 = vmatprep.subr.bf16.mxu0 %v9760
        %13130 = vmatpush1.bf16.msra.mxu0 %v9759
        %13131 = vmatprep.subr.bf16.mxu0 %v9880
        %13132 = vmatpush2.bf16.msra.mxu0 %v9879
        %13133 = vmatprep.subr.bf16.mxu0 %v9872
        %13134 = vmatpush2.bf16.msra.mxu0 %v9871
        %13135 = vmatprep.subr.bf16.mxu0 %v9864
        %13136 = vmatpush2.bf16.msra.mxu0 %v9863
        %13137 = vmatprep.subr.bf16.mxu0 %v9856
        %13138 = vmatpush2.bf16.msra.mxu0 %v9855
        %13139 = vmatprep.subr.bf16.mxu0 %v9848
        %13140 = vmatpush2.bf16.msra.mxu0 %v9847
        %13141 = vmatprep.subr.bf16.mxu0 %v9840
        %13142 = vmatpush2.bf16.msra.mxu0 %v9839
        %13143 = vmatprep.subr.bf16.mxu0 %v9832
        %13144 = vmatpush2.bf16.msra.mxu0 %v9831
        %13145 = vmatprep.subr.bf16.mxu0 %v9824
        %13146 = vmatpush2.bf16.msra.mxu0 %v9823
        %13147 = vmatprep.mubr.bf16.mxu0 %v4080
        %13148 = vmatmul.mubr.bf16.gmra.mxu0 %v4072
        %v13149 = vpop.f32.mrf.mxu0
        %v13150 = vadd.f32 %v13109, %v13149
        %v13151 = vpop.f32.mrf.mxu0
        %v13152 = vadd.f32 %v13111, %v13151
        %v13153 = vpop.f32.mrf.mxu0
        %v13154 = vpop.f32.mrf.mxu0
        %13155 = vdwg.mxu0
        %13156 = vmatprep.subr.bf16.mxu0 %v9944
        %13157 = vmatpush1.bf16.msra.mxu0 %v9943
        %13158 = vmatprep.subr.bf16.mxu0 %v9936
        %13159 = vmatpush1.bf16.msra.mxu0 %v9935
        %13160 = vmatprep.subr.bf16.mxu0 %v9928
        %13161 = vmatpush1.bf16.msra.mxu0 %v9927
        %13162 = vmatprep.subr.bf16.mxu0 %v9920
        %13163 = vmatpush1.bf16.msra.mxu0 %v9919
        %13164 = vmatprep.subr.bf16.mxu0 %v9912
        %13165 = vmatpush1.bf16.msra.mxu0 %v9911
        %13166 = vmatprep.subr.bf16.mxu0 %v9904
        %13167 = vmatpush1.bf16.msra.mxu0 %v9903
        %13168 = vmatprep.subr.bf16.mxu0 %v9896
        %13169 = vmatpush1.bf16.msra.mxu0 %v9895
        %13170 = vmatprep.subr.bf16.mxu0 %v9888
        %13171 = vmatpush1.bf16.msra.mxu0 %v9887
        %13172 = vmatprep.subr.bf16.mxu0 %v10008
        %13173 = vmatpush2.bf16.msra.mxu0 %v10007
        %13174 = vmatprep.subr.bf16.mxu0 %v10000
        %13175 = vmatpush2.bf16.msra.mxu0 %v9999
        %13176 = vmatprep.subr.bf16.mxu0 %v9992
        %13177 = vmatpush2.bf16.msra.mxu0 %v9991
        %13178 = vmatprep.subr.bf16.mxu0 %v9984
        %13179 = vmatpush2.bf16.msra.mxu0 %v9983
        %13180 = vmatprep.subr.bf16.mxu0 %v9976
        %13181 = vmatpush2.bf16.msra.mxu0 %v9975
        %13182 = vmatprep.subr.bf16.mxu0 %v9968
        %13183 = vmatpush2.bf16.msra.mxu0 %v9967
        %13184 = vmatprep.subr.bf16.mxu0 %v9960
        %13185 = vmatpush2.bf16.msra.mxu0 %v9959
        %13186 = vmatprep.subr.bf16.mxu0 %v9952
        %13187 = vmatpush2.bf16.msra.mxu0 %v9951
        %13188 = vmatprep.mubr.bf16.mxu0 %v4081
        %13189 = vmatmul.mubr.bf16.gmra.mxu0 %v4079
        %v13190 = vpop.f32.mrf.mxu0
        %v13191 = vadd.f32 %v13150, %v13190
        %v13192 = vpop.f32.mrf.mxu0
        %v13193 = vadd.f32 %v13152, %v13192
        %v13194 = vpop.f32.mrf.mxu0
        %v13195 = vpop.f32.mrf.mxu0
        %13196 = vdwg.mxu0
        %13197 = vmatprep.subr.bf16.mxu0 %v10072
        %13198 = vmatpush1.bf16.msra.mxu0 %v10071
        %13199 = vmatprep.subr.bf16.mxu0 %v10064
        %13200 = vmatpush1.bf16.msra.mxu0 %v10063
        %13201 = vmatprep.subr.bf16.mxu0 %v10056
        %13202 = vmatpush1.bf16.msra.mxu0 %v10055
        %13203 = vmatprep.subr.bf16.mxu0 %v10048
        %13204 = vmatpush1.bf16.msra.mxu0 %v10047
        %13205 = vmatprep.subr.bf16.mxu0 %v10040
        %13206 = vmatpush1.bf16.msra.mxu0 %v10039
        %13207 = vmatprep.subr.bf16.mxu0 %v10032
        %13208 = vmatpush1.bf16.msra.mxu0 %v10031
        %13209 = vmatprep.subr.bf16.mxu0 %v10024
        %13210 = vmatpush1.bf16.msra.mxu0 %v10023
        %13211 = vmatprep.subr.bf16.mxu0 %v10016
        %13212 = vmatpush1.bf16.msra.mxu0 %v10015
        %13213 = vmatprep.subr.bf16.mxu0 %v10136
        %13214 = vmatpush2.bf16.msra.mxu0 %v10135
        %13215 = vmatprep.subr.bf16.mxu0 %v10128
        %13216 = vmatpush2.bf16.msra.mxu0 %v10127
        %13217 = vmatprep.subr.bf16.mxu0 %v10120
        %13218 = vmatpush2.bf16.msra.mxu0 %v10119
        %13219 = vmatprep.subr.bf16.mxu0 %v10112
        %13220 = vmatpush2.bf16.msra.mxu0 %v10111
        %13221 = vmatprep.subr.bf16.mxu0 %v10104
        %13222 = vmatpush2.bf16.msra.mxu0 %v10103
        %13223 = vmatprep.subr.bf16.mxu0 %v10096
        %13224 = vmatpush2.bf16.msra.mxu0 %v10095
        %13225 = vmatprep.subr.bf16.mxu0 %v10088
        %13226 = vmatpush2.bf16.msra.mxu0 %v10087
        %13227 = vmatprep.subr.bf16.mxu0 %v10080
        %13228 = vmatpush2.bf16.msra.mxu0 %v10079
        %13229 = vmatprep.mubr.bf16.mxu0 %v4097
        %13230 = vmatmul.mubr.bf16.gmra.mxu0 %v4089
        %v13231 = vpop.f32.mrf.mxu0
        %v13232 = vadd.f32 %v13191, %v13231
        %v13233 = vpop.f32.mrf.mxu0
        %v13234 = vadd.f32 %v13193, %v13233
        %v13235 = vpop.f32.mrf.mxu0
        %v13236 = vpop.f32.mrf.mxu0
        %13237 = vdwg.mxu0
        %13238 = vmatprep.subr.bf16.mxu0 %v10200
        %13239 = vmatpush1.bf16.msra.mxu0 %v10199
        %13240 = vmatprep.subr.bf16.mxu0 %v10192
        %13241 = vmatpush1.bf16.msra.mxu0 %v10191
        %13242 = vmatprep.subr.bf16.mxu0 %v10184
        %13243 = vmatpush1.bf16.msra.mxu0 %v10183
        %13244 = vmatprep.subr.bf16.mxu0 %v10176
        %13245 = vmatpush1.bf16.msra.mxu0 %v10175
        %13246 = vmatprep.subr.bf16.mxu0 %v10168
        %13247 = vmatpush1.bf16.msra.mxu0 %v10167
        %13248 = vmatprep.subr.bf16.mxu0 %v10160
        %13249 = vmatpush1.bf16.msra.mxu0 %v10159
        %13250 = vmatprep.subr.bf16.mxu0 %v10152
        %13251 = vmatpush1.bf16.msra.mxu0 %v10151
        %13252 = vmatprep.subr.bf16.mxu0 %v10144
        %13253 = vmatpush1.bf16.msra.mxu0 %v10143
        %13254 = vmatprep.subr.bf16.mxu0 %v10264
        %13255 = vmatpush2.bf16.msra.mxu0 %v10263
        %13256 = vmatprep.subr.bf16.mxu0 %v10256
        %13257 = vmatpush2.bf16.msra.mxu0 %v10255
        %13258 = vmatprep.subr.bf16.mxu0 %v10248
        %13259 = vmatpush2.bf16.msra.mxu0 %v10247
        %13260 = vmatprep.subr.bf16.mxu0 %v10240
        %13261 = vmatpush2.bf16.msra.mxu0 %v10239
        %13262 = vmatprep.subr.bf16.mxu0 %v10232
        %13263 = vmatpush2.bf16.msra.mxu0 %v10231
        %13264 = vmatprep.subr.bf16.mxu0 %v10224
        %13265 = vmatpush2.bf16.msra.mxu0 %v10223
        %13266 = vmatprep.subr.bf16.mxu0 %v10216
        %13267 = vmatpush2.bf16.msra.mxu0 %v10215
        %13268 = vmatprep.subr.bf16.mxu0 %v10208
        %13269 = vmatpush2.bf16.msra.mxu0 %v10207
        %13270 = vmatprep.mubr.bf16.mxu0 %v4098
        %13271 = vmatmul.mubr.bf16.gmra.mxu0 %v4096
        %v13272 = vpop.f32.mrf.mxu0
        %v13273 = vadd.f32 %v13232, %v13272
        %v13274 = vpop.f32.mrf.mxu0
        %v13275 = vadd.f32 %v13234, %v13274
        %v13276 = vpop.f32.mrf.mxu0
        %v13277 = vpop.f32.mrf.mxu0
        %13278 = vdwg.mxu0
        %13279 = vmatprep.subr.bf16.mxu0 %v8794
        %13280 = vmatpush1.bf16.msra.mxu0 %v8793
        %13281 = vmatprep.subr.bf16.mxu0 %v8786
        %13282 = vmatpush1.bf16.msra.mxu0 %v8785
        %13283 = vmatprep.subr.bf16.mxu0 %v8778
        %13284 = vmatpush1.bf16.msra.mxu0 %v8777
        %13285 = vmatprep.subr.bf16.mxu0 %v8770
        %13286 = vmatpush1.bf16.msra.mxu0 %v8769
        %13287 = vmatprep.subr.bf16.mxu0 %v8762
        %13288 = vmatpush1.bf16.msra.mxu0 %v8761
        %13289 = vmatprep.subr.bf16.mxu0 %v8754
        %13290 = vmatpush1.bf16.msra.mxu0 %v8753
        %13291 = vmatprep.subr.bf16.mxu0 %v8746
        %13292 = vmatpush1.bf16.msra.mxu0 %v8745
        %13293 = vmatprep.subr.bf16.mxu0 %v8738
        %13294 = vmatpush1.bf16.msra.mxu0 %v8737
        %13295 = vmatprep.subr.bf16.mxu0 %v8858
        %13296 = vmatpush2.bf16.msra.mxu0 %v8857
        %13297 = vmatprep.subr.bf16.mxu0 %v8850
        %13298 = vmatpush2.bf16.msra.mxu0 %v8849
        %13299 = vmatprep.subr.bf16.mxu0 %v8842
        %13300 = vmatpush2.bf16.msra.mxu0 %v8841
        %13301 = vmatprep.subr.bf16.mxu0 %v8834
        %13302 = vmatpush2.bf16.msra.mxu0 %v8833
        %13303 = vmatprep.subr.bf16.mxu0 %v8826
        %13304 = vmatpush2.bf16.msra.mxu0 %v8825
        %13305 = vmatprep.subr.bf16.mxu0 %v8818
        %13306 = vmatpush2.bf16.msra.mxu0 %v8817
        %13307 = vmatprep.subr.bf16.mxu0 %v8810
        %13308 = vmatpush2.bf16.msra.mxu0 %v8809
        %13309 = vmatprep.subr.bf16.mxu0 %v8802
        %13310 = vmatpush2.bf16.msra.mxu0 %v8801
        %13311 = vmatprep.mubr.bf16.mxu0 %v4012
        %13312 = vmatmul.mubr.bf16.gmra.mxu0 %v4004
        %v13313 = vpop.f32.mrf.mxu0
        %v13314 = vadd.f32 %v3978, %v13313
        %v13315 = vpop.f32.mrf.mxu0
        %v13316 = vadd.f32 %v3982, %v13315
        %v13317 = vpop.f32.mrf.mxu0
        %v13318 = vpop.f32.mrf.mxu0
        %13319 = vdwg.mxu0
        %13320 = vmatprep.subr.bf16.mxu0 %v8922
        %13321 = vmatpush1.bf16.msra.mxu0 %v8921
        %13322 = vmatprep.subr.bf16.mxu0 %v8914
        %13323 = vmatpush1.bf16.msra.mxu0 %v8913
        %13324 = vmatprep.subr.bf16.mxu0 %v8906
        %13325 = vmatpush1.bf16.msra.mxu0 %v8905
        %13326 = vmatprep.subr.bf16.mxu0 %v8898
        %13327 = vmatpush1.bf16.msra.mxu0 %v8897
        %13328 = vmatprep.subr.bf16.mxu0 %v8890
        %13329 = vmatpush1.bf16.msra.mxu0 %v8889
        %13330 = vmatprep.subr.bf16.mxu0 %v8882
        %13331 = vmatpush1.bf16.msra.mxu0 %v8881
        %13332 = vmatprep.subr.bf16.mxu0 %v8874
        %13333 = vmatpush1.bf16.msra.mxu0 %v8873
        %13334 = vmatprep.subr.bf16.mxu0 %v8866
        %13335 = vmatpush1.bf16.msra.mxu0 %v8865
        %13336 = vmatprep.subr.bf16.mxu0 %v8986
        %13337 = vmatpush2.bf16.msra.mxu0 %v8985
        %13338 = vmatprep.subr.bf16.mxu0 %v8978
        %13339 = vmatpush2.bf16.msra.mxu0 %v8977
        %13340 = vmatprep.subr.bf16.mxu0 %v8970
        %13341 = vmatpush2.bf16.msra.mxu0 %v8969
        %13342 = vmatprep.subr.bf16.mxu0 %v8962
        %13343 = vmatpush2.bf16.msra.mxu0 %v8961
        %13344 = vmatprep.subr.bf16.mxu0 %v8954
        %13345 = vmatpush2.bf16.msra.mxu0 %v8953
        %13346 = vmatprep.subr.bf16.mxu0 %v8946
        %13347 = vmatpush2.bf16.msra.mxu0 %v8945
        %13348 = vmatprep.subr.bf16.mxu0 %v8938
        %13349 = vmatpush2.bf16.msra.mxu0 %v8937
        %13350 = vmatprep.subr.bf16.mxu0 %v8930
        %13351 = vmatpush2.bf16.msra.mxu0 %v8929
        %13352 = vmatprep.mubr.bf16.mxu0 %v4013
        %13353 = vmatmul.mubr.bf16.gmra.mxu0 %v4011
        %v13354 = vpop.f32.mrf.mxu0
        %v13355 = vadd.f32 %v13314, %v13354
        %v13356 = vpop.f32.mrf.mxu0
        %v13357 = vadd.f32 %v13316, %v13356
        %v13358 = vpop.f32.mrf.mxu0
        %v13359 = vpop.f32.mrf.mxu0
        %13360 = vdwg.mxu0
        %13361 = vmatprep.subr.bf16.mxu0 %v9050
        %13362 = vmatpush1.bf16.msra.mxu0 %v9049
        %13363 = vmatprep.subr.bf16.mxu0 %v9042
        %13364 = vmatpush1.bf16.msra.mxu0 %v9041
        %13365 = vmatprep.subr.bf16.mxu0 %v9034
        %13366 = vmatpush1.bf16.msra.mxu0 %v9033
        %13367 = vmatprep.subr.bf16.mxu0 %v9026
        %13368 = vmatpush1.bf16.msra.mxu0 %v9025
        %13369 = vmatprep.subr.bf16.mxu0 %v9018
        %13370 = vmatpush1.bf16.msra.mxu0 %v9017
        %13371 = vmatprep.subr.bf16.mxu0 %v9010
        %13372 = vmatpush1.bf16.msra.mxu0 %v9009
        %13373 = vmatprep.subr.bf16.mxu0 %v9002
        %13374 = vmatpush1.bf16.msra.mxu0 %v9001
        %13375 = vmatprep.subr.bf16.mxu0 %v8994
        %13376 = vmatpush1.bf16.msra.mxu0 %v8993
        %13377 = vmatprep.subr.bf16.mxu0 %v9114
        %13378 = vmatpush2.bf16.msra.mxu0 %v9113
        %13379 = vmatprep.subr.bf16.mxu0 %v9106
        %13380 = vmatpush2.bf16.msra.mxu0 %v9105
        %13381 = vmatprep.subr.bf16.mxu0 %v9098
        %13382 = vmatpush2.bf16.msra.mxu0 %v9097
        %13383 = vmatprep.subr.bf16.mxu0 %v9090
        %13384 = vmatpush2.bf16.msra.mxu0 %v9089
        %13385 = vmatprep.subr.bf16.mxu0 %v9082
        %13386 = vmatpush2.bf16.msra.mxu0 %v9081
        %13387 = vmatprep.subr.bf16.mxu0 %v9074
        %13388 = vmatpush2.bf16.msra.mxu0 %v9073
        %13389 = vmatprep.subr.bf16.mxu0 %v9066
        %13390 = vmatpush2.bf16.msra.mxu0 %v9065
        %13391 = vmatprep.subr.bf16.mxu0 %v9058
        %13392 = vmatpush2.bf16.msra.mxu0 %v9057
        %13393 = vmatprep.mubr.bf16.mxu0 %v4029
        %13394 = vmatmul.mubr.bf16.gmra.mxu0 %v4021
        %v13395 = vpop.f32.mrf.mxu0
        %v13396 = vadd.f32 %v13355, %v13395
        %v13397 = vpop.f32.mrf.mxu0
        %v13398 = vadd.f32 %v13357, %v13397
        %v13399 = vpop.f32.mrf.mxu0
        %v13400 = vpop.f32.mrf.mxu0
        %13401 = vdwg.mxu0
        %13402 = vmatprep.subr.bf16.mxu0 %v9178
        %13403 = vmatpush1.bf16.msra.mxu0 %v9177
        %13404 = vmatprep.subr.bf16.mxu0 %v9170
        %13405 = vmatpush1.bf16.msra.mxu0 %v9169
        %13406 = vmatprep.subr.bf16.mxu0 %v9162
        %13407 = vmatpush1.bf16.msra.mxu0 %v9161
        %13408 = vmatprep.subr.bf16.mxu0 %v9154
        %13409 = vmatpush1.bf16.msra.mxu0 %v9153
        %13410 = vmatprep.subr.bf16.mxu0 %v9146
        %13411 = vmatpush1.bf16.msra.mxu0 %v9145
        %13412 = vmatprep.subr.bf16.mxu0 %v9138
        %13413 = vmatpush1.bf16.msra.mxu0 %v9137
        %13414 = vmatprep.subr.bf16.mxu0 %v9130
        %13415 = vmatpush1.bf16.msra.mxu0 %v9129
        %13416 = vmatprep.subr.bf16.mxu0 %v9122
        %13417 = vmatpush1.bf16.msra.mxu0 %v9121
        %13418 = vmatprep.subr.bf16.mxu0 %v9242
        %13419 = vmatpush2.bf16.msra.mxu0 %v9241
        %13420 = vmatprep.subr.bf16.mxu0 %v9234
        %13421 = vmatpush2.bf16.msra.mxu0 %v9233
        %13422 = vmatprep.subr.bf16.mxu0 %v9226
        %13423 = vmatpush2.bf16.msra.mxu0 %v9225
        %13424 = vmatprep.subr.bf16.mxu0 %v9218
        %13425 = vmatpush2.bf16.msra.mxu0 %v9217
        %13426 = vmatprep.subr.bf16.mxu0 %v9210
        %13427 = vmatpush2.bf16.msra.mxu0 %v9209
        %13428 = vmatprep.subr.bf16.mxu0 %v9202
        %13429 = vmatpush2.bf16.msra.mxu0 %v9201
        %13430 = vmatprep.subr.bf16.mxu0 %v9194
        %13431 = vmatpush2.bf16.msra.mxu0 %v9193
        %13432 = vmatprep.subr.bf16.mxu0 %v9186
        %13433 = vmatpush2.bf16.msra.mxu0 %v9185
        %13434 = vmatprep.mubr.bf16.mxu0 %v4030
        %13435 = vmatmul.mubr.bf16.gmra.mxu0 %v4028
        %v13436 = vpop.f32.mrf.mxu0
        %v13437 = vadd.f32 %v13396, %v13436
        %v13438 = vpop.f32.mrf.mxu0
        %v13439 = vadd.f32 %v13398, %v13438
        %v13440 = vpop.f32.mrf.mxu0
        %v13441 = vpop.f32.mrf.mxu0
        %13442 = vdwg.mxu0
        %13443 = vmatprep.subr.bf16.mxu0 %v9306
        %13444 = vmatpush1.bf16.msra.mxu0 %v9305
        %13445 = vmatprep.subr.bf16.mxu0 %v9298
        %13446 = vmatpush1.bf16.msra.mxu0 %v9297
        %13447 = vmatprep.subr.bf16.mxu0 %v9290
        %13448 = vmatpush1.bf16.msra.mxu0 %v9289
        %13449 = vmatprep.subr.bf16.mxu0 %v9282
        %13450 = vmatpush1.bf16.msra.mxu0 %v9281
        %13451 = vmatprep.subr.bf16.mxu0 %v9274
        %13452 = vmatpush1.bf16.msra.mxu0 %v9273
        %13453 = vmatprep.subr.bf16.mxu0 %v9266
        %13454 = vmatpush1.bf16.msra.mxu0 %v9265
        %13455 = vmatprep.subr.bf16.mxu0 %v9258
        %13456 = vmatpush1.bf16.msra.mxu0 %v9257
        %13457 = vmatprep.subr.bf16.mxu0 %v9250
        %13458 = vmatpush1.bf16.msra.mxu0 %v9249
        %13459 = vmatprep.subr.bf16.mxu0 %v9370
        %13460 = vmatpush2.bf16.msra.mxu0 %v9369
        %13461 = vmatprep.subr.bf16.mxu0 %v9362
        %13462 = vmatpush2.bf16.msra.mxu0 %v9361
        %13463 = vmatprep.subr.bf16.mxu0 %v9354
        %13464 = vmatpush2.bf16.msra.mxu0 %v9353
        %13465 = vmatprep.subr.bf16.mxu0 %v9346
        %13466 = vmatpush2.bf16.msra.mxu0 %v9345
        %13467 = vmatprep.subr.bf16.mxu0 %v9338
        %13468 = vmatpush2.bf16.msra.mxu0 %v9337
        %13469 = vmatprep.subr.bf16.mxu0 %v9330
        %13470 = vmatpush2.bf16.msra.mxu0 %v9329
        %13471 = vmatprep.subr.bf16.mxu0 %v9322
        %13472 = vmatpush2.bf16.msra.mxu0 %v9321
        %13473 = vmatprep.subr.bf16.mxu0 %v9314
        %13474 = vmatpush2.bf16.msra.mxu0 %v9313
        %13475 = vmatprep.mubr.bf16.mxu0 %v4046
        %13476 = vmatmul.mubr.bf16.gmra.mxu0 %v4038
        %v13477 = vpop.f32.mrf.mxu0
        %v13478 = vadd.f32 %v13437, %v13477
        %v13479 = vpop.f32.mrf.mxu0
        %v13480 = vadd.f32 %v13439, %v13479
        %v13481 = vpop.f32.mrf.mxu0
        %v13482 = vpop.f32.mrf.mxu0
        %13483 = vdwg.mxu0
        %13484 = vmatprep.subr.bf16.mxu0 %v9434
        %13485 = vmatpush1.bf16.msra.mxu0 %v9433
        %13486 = vmatprep.subr.bf16.mxu0 %v9426
        %13487 = vmatpush1.bf16.msra.mxu0 %v9425
        %13488 = vmatprep.subr.bf16.mxu0 %v9418
        %13489 = vmatpush1.bf16.msra.mxu0 %v9417
        %13490 = vmatprep.subr.bf16.mxu0 %v9410
        %13491 = vmatpush1.bf16.msra.mxu0 %v9409
        %13492 = vmatprep.subr.bf16.mxu0 %v9402
        %13493 = vmatpush1.bf16.msra.mxu0 %v9401
        %13494 = vmatprep.subr.bf16.mxu0 %v9394
        %13495 = vmatpush1.bf16.msra.mxu0 %v9393
        %13496 = vmatprep.subr.bf16.mxu0 %v9386
        %13497 = vmatpush1.bf16.msra.mxu0 %v9385
        %13498 = vmatprep.subr.bf16.mxu0 %v9378
        %13499 = vmatpush1.bf16.msra.mxu0 %v9377
        %13500 = vmatprep.subr.bf16.mxu0 %v9498
        %13501 = vmatpush2.bf16.msra.mxu0 %v9497
        %13502 = vmatprep.subr.bf16.mxu0 %v9490
        %13503 = vmatpush2.bf16.msra.mxu0 %v9489
        %13504 = vmatprep.subr.bf16.mxu0 %v9482
        %13505 = vmatpush2.bf16.msra.mxu0 %v9481
        %13506 = vmatprep.subr.bf16.mxu0 %v9474
        %13507 = vmatpush2.bf16.msra.mxu0 %v9473
        %13508 = vmatprep.subr.bf16.mxu0 %v9466
        %13509 = vmatpush2.bf16.msra.mxu0 %v9465
        %13510 = vmatprep.subr.bf16.mxu0 %v9458
        %13511 = vmatpush2.bf16.msra.mxu0 %v9457
        %13512 = vmatprep.subr.bf16.mxu0 %v9450
        %13513 = vmatpush2.bf16.msra.mxu0 %v9449
        %13514 = vmatprep.subr.bf16.mxu0 %v9442
        %13515 = vmatpush2.bf16.msra.mxu0 %v9441
        %13516 = vmatprep.mubr.bf16.mxu0 %v4047
        %13517 = vmatmul.mubr.bf16.gmra.mxu0 %v4045
        %v13518 = vpop.f32.mrf.mxu0
        %v13519 = vadd.f32 %v13478, %v13518
        %v13520 = vpop.f32.mrf.mxu0
        %v13521 = vadd.f32 %v13480, %v13520
        %v13522 = vpop.f32.mrf.mxu0
        %v13523 = vpop.f32.mrf.mxu0
        %13524 = vdwg.mxu0
        %13525 = vmatprep.subr.bf16.mxu0 %v9562
        %13526 = vmatpush1.bf16.msra.mxu0 %v9561
        %13527 = vmatprep.subr.bf16.mxu0 %v9554
        %13528 = vmatpush1.bf16.msra.mxu0 %v9553
        %13529 = vmatprep.subr.bf16.mxu0 %v9546
        %13530 = vmatpush1.bf16.msra.mxu0 %v9545
        %13531 = vmatprep.subr.bf16.mxu0 %v9538
        %13532 = vmatpush1.bf16.msra.mxu0 %v9537
        %13533 = vmatprep.subr.bf16.mxu0 %v9530
        %13534 = vmatpush1.bf16.msra.mxu0 %v9529
        %13535 = vmatprep.subr.bf16.mxu0 %v9522
        %13536 = vmatpush1.bf16.msra.mxu0 %v9521
        %13537 = vmatprep.subr.bf16.mxu0 %v9514
        %13538 = vmatpush1.bf16.msra.mxu0 %v9513
        %13539 = vmatprep.subr.bf16.mxu0 %v9506
        %13540 = vmatpush1.bf16.msra.mxu0 %v9505
        %13541 = vmatprep.subr.bf16.mxu0 %v9626
        %13542 = vmatpush2.bf16.msra.mxu0 %v9625
        %13543 = vmatprep.subr.bf16.mxu0 %v9618
        %13544 = vmatpush2.bf16.msra.mxu0 %v9617
        %13545 = vmatprep.subr.bf16.mxu0 %v9610
        %13546 = vmatpush2.bf16.msra.mxu0 %v9609
        %13547 = vmatprep.subr.bf16.mxu0 %v9602
        %13548 = vmatpush2.bf16.msra.mxu0 %v9601
        %13549 = vmatprep.subr.bf16.mxu0 %v9594
        %13550 = vmatpush2.bf16.msra.mxu0 %v9593
        %13551 = vmatprep.subr.bf16.mxu0 %v9586
        %13552 = vmatpush2.bf16.msra.mxu0 %v9585
        %13553 = vmatprep.subr.bf16.mxu0 %v9578
        %13554 = vmatpush2.bf16.msra.mxu0 %v9577
        %13555 = vmatprep.subr.bf16.mxu0 %v9570
        %13556 = vmatpush2.bf16.msra.mxu0 %v9569
        %13557 = vmatprep.mubr.bf16.mxu0 %v4063
        %13558 = vmatmul.mubr.bf16.gmra.mxu0 %v4055
        %v13559 = vpop.f32.mrf.mxu0
        %v13560 = vadd.f32 %v13519, %v13559
        %v13561 = vpop.f32.mrf.mxu0
        %v13562 = vadd.f32 %v13521, %v13561
        %v13563 = vpop.f32.mrf.mxu0
        %v13564 = vpop.f32.mrf.mxu0
        %13565 = vdwg.mxu0
        %13566 = vmatprep.subr.bf16.mxu0 %v9690
        %13567 = vmatpush1.bf16.msra.mxu0 %v9689
        %13568 = vmatprep.subr.bf16.mxu0 %v9682
        %13569 = vmatpush1.bf16.msra.mxu0 %v9681
        %13570 = vmatprep.subr.bf16.mxu0 %v9674
        %13571 = vmatpush1.bf16.msra.mxu0 %v9673
        %13572 = vmatprep.subr.bf16.mxu0 %v9666
        %13573 = vmatpush1.bf16.msra.mxu0 %v9665
        %13574 = vmatprep.subr.bf16.mxu0 %v9658
        %13575 = vmatpush1.bf16.msra.mxu0 %v9657
        %13576 = vmatprep.subr.bf16.mxu0 %v9650
        %13577 = vmatpush1.bf16.msra.mxu0 %v9649
        %13578 = vmatprep.subr.bf16.mxu0 %v9642
        %13579 = vmatpush1.bf16.msra.mxu0 %v9641
        %13580 = vmatprep.subr.bf16.mxu0 %v9634
        %13581 = vmatpush1.bf16.msra.mxu0 %v9633
        %13582 = vmatprep.subr.bf16.mxu0 %v9754
        %13583 = vmatpush2.bf16.msra.mxu0 %v9753
        %13584 = vmatprep.subr.bf16.mxu0 %v9746
        %13585 = vmatpush2.bf16.msra.mxu0 %v9745
        %13586 = vmatprep.subr.bf16.mxu0 %v9738
        %13587 = vmatpush2.bf16.msra.mxu0 %v9737
        %13588 = vmatprep.subr.bf16.mxu0 %v9730
        %13589 = vmatpush2.bf16.msra.mxu0 %v9729
        %13590 = vmatprep.subr.bf16.mxu0 %v9722
        %13591 = vmatpush2.bf16.msra.mxu0 %v9721
        %13592 = vmatprep.subr.bf16.mxu0 %v9714
        %13593 = vmatpush2.bf16.msra.mxu0 %v9713
        %13594 = vmatprep.subr.bf16.mxu0 %v9706
        %13595 = vmatpush2.bf16.msra.mxu0 %v9705
        %13596 = vmatprep.subr.bf16.mxu0 %v9698
        %13597 = vmatpush2.bf16.msra.mxu0 %v9697
        %13598 = vmatprep.mubr.bf16.mxu0 %v4064
        %13599 = vmatmul.mubr.bf16.gmra.mxu0 %v4062
        %v13600 = vpop.f32.mrf.mxu0
        %v13601 = vadd.f32 %v13560, %v13600
        %v13602 = vpop.f32.mrf.mxu0
        %v13603 = vadd.f32 %v13562, %v13602
        %v13604 = vpop.f32.mrf.mxu0
        %v13605 = vpop.f32.mrf.mxu0
        %13606 = vdwg.mxu0
        %13607 = vmatprep.subr.bf16.mxu0 %v9818
        %13608 = vmatpush1.bf16.msra.mxu0 %v9817
        %13609 = vmatprep.subr.bf16.mxu0 %v9810
        %13610 = vmatpush1.bf16.msra.mxu0 %v9809
        %13611 = vmatprep.subr.bf16.mxu0 %v9802
        %13612 = vmatpush1.bf16.msra.mxu0 %v9801
        %13613 = vmatprep.subr.bf16.mxu0 %v9794
        %13614 = vmatpush1.bf16.msra.mxu0 %v9793
        %13615 = vmatprep.subr.bf16.mxu0 %v9786
        %13616 = vmatpush1.bf16.msra.mxu0 %v9785
        %13617 = vmatprep.subr.bf16.mxu0 %v9778
        %13618 = vmatpush1.bf16.msra.mxu0 %v9777
        %13619 = vmatprep.subr.bf16.mxu0 %v9770
        %13620 = vmatpush1.bf16.msra.mxu0 %v9769
        %13621 = vmatprep.subr.bf16.mxu0 %v9762
        %13622 = vmatpush1.bf16.msra.mxu0 %v9761
        %13623 = vmatprep.subr.bf16.mxu0 %v9882
        %13624 = vmatpush2.bf16.msra.mxu0 %v9881
        %13625 = vmatprep.subr.bf16.mxu0 %v9874
        %13626 = vmatpush2.bf16.msra.mxu0 %v9873
        %13627 = vmatprep.subr.bf16.mxu0 %v9866
        %13628 = vmatpush2.bf16.msra.mxu0 %v9865
        %13629 = vmatprep.subr.bf16.mxu0 %v9858
        %13630 = vmatpush2.bf16.msra.mxu0 %v9857
        %13631 = vmatprep.subr.bf16.mxu0 %v9850
        %13632 = vmatpush2.bf16.msra.mxu0 %v9849
        %13633 = vmatprep.subr.bf16.mxu0 %v9842
        %13634 = vmatpush2.bf16.msra.mxu0 %v9841
        %13635 = vmatprep.subr.bf16.mxu0 %v9834
        %13636 = vmatpush2.bf16.msra.mxu0 %v9833
        %13637 = vmatprep.subr.bf16.mxu0 %v9826
        %13638 = vmatpush2.bf16.msra.mxu0 %v9825
        %13639 = vmatprep.mubr.bf16.mxu0 %v4080
        %13640 = vmatmul.mubr.bf16.gmra.mxu0 %v4072
        %v13641 = vpop.f32.mrf.mxu0
        %v13642 = vadd.f32 %v13601, %v13641
        %v13643 = vpop.f32.mrf.mxu0
        %v13644 = vadd.f32 %v13603, %v13643
        %v13645 = vpop.f32.mrf.mxu0
        %v13646 = vpop.f32.mrf.mxu0
        %13647 = vdwg.mxu0
        %13648 = vmatprep.subr.bf16.mxu0 %v9946
        %13649 = vmatpush1.bf16.msra.mxu0 %v9945
        %13650 = vmatprep.subr.bf16.mxu0 %v9938
        %13651 = vmatpush1.bf16.msra.mxu0 %v9937
        %13652 = vmatprep.subr.bf16.mxu0 %v9930
        %13653 = vmatpush1.bf16.msra.mxu0 %v9929
        %13654 = vmatprep.subr.bf16.mxu0 %v9922
        %13655 = vmatpush1.bf16.msra.mxu0 %v9921
        %13656 = vmatprep.subr.bf16.mxu0 %v9914
        %13657 = vmatpush1.bf16.msra.mxu0 %v9913
        %13658 = vmatprep.subr.bf16.mxu0 %v9906
        %13659 = vmatpush1.bf16.msra.mxu0 %v9905
        %13660 = vmatprep.subr.bf16.mxu0 %v9898
        %13661 = vmatpush1.bf16.msra.mxu0 %v9897
        %13662 = vmatprep.subr.bf16.mxu0 %v9890
        %13663 = vmatpush1.bf16.msra.mxu0 %v9889
        %13664 = vmatprep.subr.bf16.mxu0 %v10010
        %13665 = vmatpush2.bf16.msra.mxu0 %v10009
        %13666 = vmatprep.subr.bf16.mxu0 %v10002
        %13667 = vmatpush2.bf16.msra.mxu0 %v10001
        %13668 = vmatprep.subr.bf16.mxu0 %v9994
        %13669 = vmatpush2.bf16.msra.mxu0 %v9993
        %13670 = vmatprep.subr.bf16.mxu0 %v9986
        %13671 = vmatpush2.bf16.msra.mxu0 %v9985
        %13672 = vmatprep.subr.bf16.mxu0 %v9978
        %13673 = vmatpush2.bf16.msra.mxu0 %v9977
        %13674 = vmatprep.subr.bf16.mxu0 %v9970
        %13675 = vmatpush2.bf16.msra.mxu0 %v9969
        %13676 = vmatprep.subr.bf16.mxu0 %v9962
        %13677 = vmatpush2.bf16.msra.mxu0 %v9961
        %13678 = vmatprep.subr.bf16.mxu0 %v9954
        %13679 = vmatpush2.bf16.msra.mxu0 %v9953
        %13680 = vmatprep.mubr.bf16.mxu0 %v4081
        %13681 = vmatmul.mubr.bf16.gmra.mxu0 %v4079
        %v13682 = vpop.f32.mrf.mxu0
        %v13683 = vadd.f32 %v13642, %v13682
        %v13684 = vpop.f32.mrf.mxu0
        %v13685 = vadd.f32 %v13644, %v13684
        %v13686 = vpop.f32.mrf.mxu0
        %v13687 = vpop.f32.mrf.mxu0
        %13688 = vdwg.mxu0
        %13689 = vmatprep.subr.bf16.mxu0 %v10074
        %13690 = vmatpush1.bf16.msra.mxu0 %v10073
        %13691 = vmatprep.subr.bf16.mxu0 %v10066
        %13692 = vmatpush1.bf16.msra.mxu0 %v10065
        %13693 = vmatprep.subr.bf16.mxu0 %v10058
        %13694 = vmatpush1.bf16.msra.mxu0 %v10057
        %13695 = vmatprep.subr.bf16.mxu0 %v10050
        %13696 = vmatpush1.bf16.msra.mxu0 %v10049
        %13697 = vmatprep.subr.bf16.mxu0 %v10042
        %13698 = vmatpush1.bf16.msra.mxu0 %v10041
        %13699 = vmatprep.subr.bf16.mxu0 %v10034
        %13700 = vmatpush1.bf16.msra.mxu0 %v10033
        %13701 = vmatprep.subr.bf16.mxu0 %v10026
        %13702 = vmatpush1.bf16.msra.mxu0 %v10025
        %13703 = vmatprep.subr.bf16.mxu0 %v10018
        %13704 = vmatpush1.bf16.msra.mxu0 %v10017
        %13705 = vmatprep.subr.bf16.mxu0 %v10138
        %13706 = vmatpush2.bf16.msra.mxu0 %v10137
        %13707 = vmatprep.subr.bf16.mxu0 %v10130
        %13708 = vmatpush2.bf16.msra.mxu0 %v10129
        %13709 = vmatprep.subr.bf16.mxu0 %v10122
        %13710 = vmatpush2.bf16.msra.mxu0 %v10121
        %13711 = vmatprep.subr.bf16.mxu0 %v10114
        %13712 = vmatpush2.bf16.msra.mxu0 %v10113
        %13713 = vmatprep.subr.bf16.mxu0 %v10106
        %13714 = vmatpush2.bf16.msra.mxu0 %v10105
        %13715 = vmatprep.subr.bf16.mxu0 %v10098
        %13716 = vmatpush2.bf16.msra.mxu0 %v10097
        %13717 = vmatprep.subr.bf16.mxu0 %v10090
        %13718 = vmatpush2.bf16.msra.mxu0 %v10089
        %13719 = vmatprep.subr.bf16.mxu0 %v10082
        %13720 = vmatpush2.bf16.msra.mxu0 %v10081
        %13721 = vmatprep.mubr.bf16.mxu0 %v4097
        %13722 = vmatmul.mubr.bf16.gmra.mxu0 %v4089
        %v13723 = vpop.f32.mrf.mxu0
        %v13724 = vadd.f32 %v13683, %v13723
        %v13725 = vpop.f32.mrf.mxu0
        %v13726 = vadd.f32 %v13685, %v13725
        %v13727 = vpop.f32.mrf.mxu0
        %v13728 = vpop.f32.mrf.mxu0
        %13729 = vdwg.mxu0
        %13730 = vmatprep.subr.bf16.mxu0 %v10202
        %13731 = vmatpush1.bf16.msra.mxu0 %v10201
        %13732 = vmatprep.subr.bf16.mxu0 %v10194
        %13733 = vmatpush1.bf16.msra.mxu0 %v10193
        %13734 = vmatprep.subr.bf16.mxu0 %v10186
        %13735 = vmatpush1.bf16.msra.mxu0 %v10185
        %13736 = vmatprep.subr.bf16.mxu0 %v10178
        %13737 = vmatpush1.bf16.msra.mxu0 %v10177
        %13738 = vmatprep.subr.bf16.mxu0 %v10170
        %13739 = vmatpush1.bf16.msra.mxu0 %v10169
        %13740 = vmatprep.subr.bf16.mxu0 %v10162
        %13741 = vmatpush1.bf16.msra.mxu0 %v10161
        %13742 = vmatprep.subr.bf16.mxu0 %v10154
        %13743 = vmatpush1.bf16.msra.mxu0 %v10153
        %13744 = vmatprep.subr.bf16.mxu0 %v10146
        %13745 = vmatpush1.bf16.msra.mxu0 %v10145
        %13746 = vmatprep.subr.bf16.mxu0 %v10266
        %13747 = vmatpush2.bf16.msra.mxu0 %v10265
        %13748 = vmatprep.subr.bf16.mxu0 %v10258
        %13749 = vmatpush2.bf16.msra.mxu0 %v10257
        %13750 = vmatprep.subr.bf16.mxu0 %v10250
        %13751 = vmatpush2.bf16.msra.mxu0 %v10249
        %13752 = vmatprep.subr.bf16.mxu0 %v10242
        %13753 = vmatpush2.bf16.msra.mxu0 %v10241
        %13754 = vmatprep.subr.bf16.mxu0 %v10234
        %13755 = vmatpush2.bf16.msra.mxu0 %v10233
        %13756 = vmatprep.subr.bf16.mxu0 %v10226
        %13757 = vmatpush2.bf16.msra.mxu0 %v10225
        %13758 = vmatprep.subr.bf16.mxu0 %v10218
        %13759 = vmatpush2.bf16.msra.mxu0 %v10217
        %13760 = vmatprep.subr.bf16.mxu0 %v10210
        %13761 = vmatpush2.bf16.msra.mxu0 %v10209
        %13762 = vmatprep.mubr.bf16.mxu0 %v4098
        %13763 = vmatmul.mubr.bf16.gmra.mxu0 %v4096
        %v13764 = vpop.f32.mrf.mxu0
        %v13765 = vadd.f32 %v13724, %v13764
        %v13766 = vpop.f32.mrf.mxu0
        %v13767 = vadd.f32 %v13726, %v13766
        %v13768 = vpop.f32.mrf.mxu0
        %v13769 = vpop.f32.mrf.mxu0
        %13770 = vdwg.mxu0
        %v13771 = vmax.f32 %v12289, 0.0
        %v13772 = vmax.f32 %v12291, 0.0
        %v13773 = vmax.f32 %v12781, 0.0
        %v13774 = vmax.f32 %v12783, 0.0
        %v13775 = vmax.f32 %v13273, 0.0
        %v13776 = vmax.f32 %v13275, 0.0
        %v13777 = vmax.f32 %v13765, 0.0
        %v13778 = vmax.f32 %v13767, 0.0
        %v13779 = vld [vmem:[%s387] sm:$0xff]
        %v13780 = vunpack.c.l.bf16 %v13779
        %v13781 = vunpack.c.h.bf16 %v13779
        %v13784 = vlaneseq
        %v13785 = vshrl.u32 %v13784, 7
        %v13786 = vsub.s32 0, %v13785
        %v13787 = vrot.slane %v13780, %v13786
        %v13788 = vlaneseq
        %v13789 = vshrl.u32 %v13788, 7
        %v13790 = vsub.s32 2, %v13789
        %v13791 = vrot.slane %v13780, %v13790
        %v13792 = vlaneseq
        %v13793 = vshrl.u32 %v13792, 7
        %v13794 = vsub.s32 4, %v13793
        %v13795 = vrot.slane %v13780, %v13794
        %v13796 = vlaneseq
        %v13797 = vshrl.u32 %v13796, 7
        %v13798 = vsub.s32 6, %v13797
        %v13799 = vrot.slane %v13780, %v13798
        %v13800 = vlaneseq
        %v13801 = vshrl.u32 %v13800, 7
        %v13802 = vsub.s32 0, %v13801
        %v13803 = vrot.slane %v13781, %v13802
        %v13804 = vlaneseq
        %v13805 = vshrl.u32 %v13804, 7
        %v13806 = vsub.s32 2, %v13805
        %v13807 = vrot.slane %v13781, %v13806
        %v13808 = vlaneseq
        %v13809 = vshrl.u32 %v13808, 7
        %v13810 = vsub.s32 4, %v13809
        %v13811 = vrot.slane %v13781, %v13810
        %v13812 = vlaneseq
        %v13813 = vshrl.u32 %v13812, 7
        %v13814 = vsub.s32 6, %v13813
        %v13815 = vrot.slane %v13781, %v13814
        %v13824 = vlaneseq
        %v13825 = vshrl.u32 %v13824, 7
        %v13826 = vsub.s32 0, %v13825
        %v13827 = vrot.slane %v13787, %v13826
        %v13828 = vlaneseq
        %v13829 = vshrl.u32 %v13828, 7
        %v13830 = vsub.s32 0, %v13829
        %v13831 = vrot.slane %v13791, %v13830
        %v13832 = vlaneseq
        %v13833 = vshrl.u32 %v13832, 7
        %v13834 = vsub.s32 0, %v13833
        %v13835 = vrot.slane %v13795, %v13834
        %v13836 = vlaneseq
        %v13837 = vshrl.u32 %v13836, 7
        %v13838 = vsub.s32 0, %v13837
        %v13839 = vrot.slane %v13799, %v13838
        %v13840 = vlaneseq
        %v13841 = vshrl.u32 %v13840, 7
        %v13842 = vsub.s32 0, %v13841
        %v13843 = vrot.slane %v13803, %v13842
        %v13844 = vlaneseq
        %v13845 = vshrl.u32 %v13844, 7
        %v13846 = vsub.s32 0, %v13845
        %v13847 = vrot.slane %v13807, %v13846
        %v13848 = vlaneseq
        %v13849 = vshrl.u32 %v13848, 7
        %v13850 = vsub.s32 0, %v13849
        %v13851 = vrot.slane %v13811, %v13850
        %v13852 = vlaneseq
        %v13853 = vshrl.u32 %v13852, 7
        %v13854 = vsub.s32 0, %v13853
        %v13855 = vrot.slane %v13815, %v13854
        %v13856 = vmul.f32 %v13771, %v13827
        %v13857 = vmul.f32 %v13772, %v13831
        %v13858 = vmul.f32 %v13773, %v13835
        %v13859 = vmul.f32 %v13774, %v13839
        %v13860 = vmul.f32 %v13775, %v13843
        %v13861 = vmul.f32 %v13776, %v13847
        %v13862 = vmul.f32 %v13777, %v13851
        %v13863 = vmul.f32 %v13778, %v13855
        %vm13864 = vcmask 1043456
        %v13865 = vsel %vm13864, %v13856, 0.0
        %v13866 = vsel %vm13864, %v13857, 0.0
        %v13867 = vadd.f32 %v13865, %v13866
        %v13868 = vsel %vm13864, %v13858, 0.0
        %v13869 = vadd.f32 %v13867, %v13868
        %v13870 = vsel %vm13864, %v13859, 0.0
        %v13871 = vadd.f32 %v13869, %v13870
        %v13872 = vsel %vm13864, %v13860, 0.0
        %v13873 = vadd.f32 %v13871, %v13872
        %v13874 = vsel %vm13864, %v13861, 0.0
        %v13875 = vadd.f32 %v13873, %v13874
        %v13876 = vsel %vm13864, %v13862, 0.0
        %v13877 = vadd.f32 %v13875, %v13876
        %v13878 = vsel %vm13864, %v13863, 0.0
        %v13879 = vadd.f32 %v13877, %v13878
        %13880 = vadd.xlane.f32.xlu0 %v13879
        %v13881 = vpop.xlane.xlu0 %13880
        %v13882 = vld [vmem:[%s433] sm:$0xf]
        %v13883 = vadd.f32 %v13882, %v13881
        %vm13884 = vcmask 3072
        %13885 = vst.msk [vmem:[%s433] sm:$0xf] %vm13884, %v13883
        %p13886 = scmp.lt.s32.totalorder %s32, 0
        %s13887 = scalar_select %p13886, %s32, 0
        %s13888 = smul.addr %s13887, 4
        %s13889 = scalar_lea.vmem %s7, %s13888
        // Predicated region
        $region77: #{_lambda_.1} parent=47 // pred_check
          %p13890 = pneg %p225
        $region78: #{_lambda_.1} parent=47 // pred_check_branch
          %13892 = sbr.rel (%p13890) target = $region80
        $region79: #{_lambda_.1} parent=47 // pred_region
          _
        $region80: #{_lambda_.1} parent=47 // pred_fallthru
          _
        // Predicated region
        $region81: #{_lambda_.1} parent=47 // pred_check
          %p13893 = pneg %p225
        $region82: #{_lambda_.1} parent=47 // pred_check_branch
          %13895 = sbr.rel (%p13893) target = $region84
        $region83: #{_lambda_.1} parent=47 // pred_region
          %p13896 = scmp.lt.s32.totalorder %s32, 0
          %s13897 = scalar_select %p13896, %s32, 0
          %s13898 = smul.addr %s13897, 4
          %s13899 = scalar_lea.vmem %s7, %s13898
        $region84: #{_lambda_.1} parent=47 // pred_fallthru
          _
      $region48: #{_lambda_.1} parent=5 // pred_fallthru
        _
      %p13900 = scmp.le.s32.totalorder 2, %s23
      // Predicated region
      $region85: #{_lambda_.1} parent=5 // pred_check
        %p13901 = pneg %p13900
      $region86: #{_lambda_.1} parent=5 // pred_check_branch
        %13903 = sbr.rel (%p13901) target = $region88
      $region87: #{_lambda_.1} parent=5 // pred_region
        %s13904 = ssub.s32 %s23, 2
      $region88: #{_lambda_.1} parent=5 // pred_fallthru
        _
    $region6: #{_lambda_.1} parent=1 // loop_footer
      %s27 = sadd.s32 1, %s23
    $region7: #{_lambda_.1} parent=1 // loop_footer_branch
      %22 = sbr.rel target = $region3
    $region8: #{_lambda_.1} parent=1 // loop_exit
      _
    %13905 = vsyncpa [#allocation5], 1
    %s13906 = scalar_lea.sflag [#allocation5], 1
    %13907 = vsyncpa %s13906, 1
    %13908 = vsyncpa [#allocation7], 1
    %13909 = vsyncpa [#allocation10], 1
    %s13910 = scalar_lea.sflag [#allocation10], 1
    %13911 = vsyncpa %s13910, 1
    %13912 = vsyncpa [#allocation13], 1
    %s13913 = scalar_lea.sflag [#allocation13], 1
    %13914 = vsyncpa %s13913, 1

</llo_original>
